<compile_context>
chip_gen: v5e
topology: v5e:2x2
jax: 0.10.0
libtpu: 0.0.40
codegen_flags: <defaults>
</compile_context>

<pallas_src>
import functools

import jax
import jax.numpy as jnp
from jax.experimental import pallas as pl
from jax.experimental.pallas import tpu as pltpu

_LANE = 128


def _round_up(x, m):
    return (x + m - 1) // m * m


def _pick_tk(k_dim, m_rows):
    """Contraction tile: lane-aligned, streamed bf16 patch block kept <=~1 MiB."""
    if k_dim % _LANE != 0:
        return k_dim                            # small layer: full-K block
    cands = [t for t in (512, 256, 128) if k_dim % t == 0]
    for t in cands:
        if m_rows * t * 2 <= (1 << 20):
            return t
    return cands[-1]


def _pick_tc(cp):
    """Cout tile: 256 fills the 256-wide MXU on v6e/v7x and, being on a
    'parallel' grid axis, lets v7x's two TensorCores split the layer."""
    if cp % 256 == 0:
        return 256
    return _LANE if cp % _LANE == 0 else cp


def _pick_tm(m):
    return next((t for t in (1024, 512, 256, 128, 64, 32, 16, 8) if m % t == 0), m)


def _vmem_limit(streamed_bytes, resident_bytes):
    # 2x for double-buffered streamed blocks, plus generous slack for
    # Mosaic-internal scratch; clamped to what is safe on every chip
    # (v7x: 32 MiB scoped default of 64 MiB physical).
    need = 2 * streamed_bytes + resident_bytes
    return int(min(max(2 * need, 16 << 20), 32 << 20))


# ----------------------------- Pallas kernels ------------------------------ #

def _phase_matmul_bn_relu_kernel(p_ref, w_ref, o_ref, ysc_ref):
    """One (Cout-tile, phase, K-tile) step of a phase-decomposed ConvTranspose
    with fused BatchNorm(training-mode batch stats) + ReLU.

    p_ref:   (1, M, tk)          bf16 phase patches (streamed)
    w_ref:   (1, tk, tc)         bf16 phase weights (streamed)
    o_ref:   (phases, M, tc)     bf16 output, resident across (phase, K)
    ysc_ref: (phases, M, tc)     f32 scratch: un-normalized matmul result
    """
    ph = pl.program_id(1)
    k = pl.program_id(2)
    part = jnp.dot(p_ref[0], w_ref[0], preferred_element_type=jnp.float32)

    @pl.when(k == 0)
    def _():
        ysc_ref[ph] = part

    @pl.when(k > 0)
    def _():
        ysc_ref[ph] = ysc_ref[ph] + part

    @pl.when((ph == pl.num_programs(1) - 1) & (k == pl.num_programs(2) - 1))
    def _():
        # BatchNorm2d: per-channel batch statistics over all phases and rows
        # (biased variance, gamma=1, beta=0, eps=1e-5), then ReLU.
        y = ysc_ref[...]                                   # (phases, M, tc) f32
        inv_n = 1.0 / (y.shape[0] * y.shape[1])
        mean = jnp.sum(y, axis=(0, 1), keepdims=True) * inv_n
        d = y - mean
        var = jnp.sum(d * d, axis=(0, 1), keepdims=True) * inv_n
        xhat = d * jax.lax.rsqrt(var + 1e-5)
        o_ref[...] = jnp.maximum(xhat, 0.0).astype(o_ref.dtype)


def _phase_matmul_tanh_kernel(p_ref, w_ref, o_ref):
    """Final layer: phase matmul + fused tanh * 0.5 + 0.5 (no BN)."""
    y = jnp.dot(p_ref[0], w_ref[0], preferred_element_type=jnp.float32)
    o_ref[0] = (jnp.tanh(y) * 0.5 + 0.5).astype(o_ref.dtype)


# ----------------------------- kernel wrappers ------------------------------ #

def phase_matmul_bn_relu(patches, wm):
    """Batched-phase matmul + fused BatchNorm + ReLU.

    patches: (P_lhs, M, K) bf16, P_lhs in {1, phases} (1 => LHS shared by all
             phases, e.g. the 1x1-input first layer)
    wm:      (phases, K, Cp) bf16, Cp a multiple of 128
    returns: (phases, M, Cp) bf16
    """
    p_lhs, M, K = patches.shape
    n_ph, _, cp = wm.shape
    tk = _pick_tk(K, M)
    tc = _pick_tc(cp)
    n_k, n_c = K // tk, cp // tc
    shared = p_lhs == 1

    lhs_map = ((lambda c, ph, k: (0, 0, k)) if shared
               else (lambda c, ph, k: (ph, 0, k)))
    streamed = M * tk * 2 + tk * tc * 2
    resident = n_ph * M * tc * (2 + 4)        # bf16 output block + f32 scratch

    return pl.pallas_call(
        _phase_matmul_bn_relu_kernel,
        out_shape=jax.ShapeDtypeStruct((n_ph, M, cp), jnp.bfloat16),
        grid=(n_c, n_ph, n_k),
        in_specs=[pl.BlockSpec((1, M, tk), lhs_map),
                  pl.BlockSpec((1, tk, tc), lambda c, ph, k: (ph, k, c))],
        out_specs=pl.BlockSpec((n_ph, M, tc), lambda c, ph, k: (0, 0, c)),
        scratch_shapes=[pltpu.VMEM((n_ph, M, tc), jnp.float32)],
        compiler_params=pltpu.CompilerParams(
            dimension_semantics=("parallel", "arbitrary", "arbitrary"),
            vmem_limit_bytes=_vmem_limit(streamed, resident)),
    )(patches, wm)


def phase_matmul_tanh(patches, wm):
    """Batched-phase matmul + fused tanh/2 + 0.5 (rows independent, no BN)."""
    n_ph, M, K = patches.shape
    _, _, cp = wm.shape
    tm = _pick_tm(M)
    streamed = tm * K * 2 + K * cp * 2 + tm * cp * 2

    return pl.pallas_call(
        _phase_matmul_tanh_kernel,
        out_shape=jax.ShapeDtypeStruct((n_ph, M, cp), jnp.bfloat16),
        grid=(n_ph, M // tm),
        in_specs=[pl.BlockSpec((1, tm, K), lambda ph, m: (ph, m, 0)),
                  pl.BlockSpec((1, K, cp), lambda ph, m: (ph, 0, 0))],
        out_specs=pl.BlockSpec((1, tm, cp), lambda ph, m: (ph, m, 0)),
        compiler_params=pltpu.CompilerParams(
            dimension_semantics=("parallel", "parallel"),
            vmem_limit_bytes=_vmem_limit(streamed, 0)),
    )(patches, wm)


# ------------------------------- JAX glue ---------------------------------- #

def _phase_patches(x):
    """Sub-pixel patches for a k=4, s=2, p=1 ConvTranspose2d.

    x: (N, H, W, C) -> (4, N*H*W, 4*C).  Phase (ry, rx) covers output pixels
    (2q+ry, 2p+rx); each is an exact 2x2 conv over the 1-padded input, so no
    structural zeros are materialized.
    """
    n, h, w, c = x.shape
    xp = jnp.pad(x, ((0, 0), (1, 1), (1, 1), (0, 0)))
    phases = []
    for ry in range(2):
        for rx in range(2):
            taps = [xp[:, ry + dr:ry + dr + h, rx + dc:rx + dc + w, :]
                    for dr in range(2) for dc in range(2)]
            p = jnp.stack(taps, axis=3)               # (N, H, W, 4, C)
            phases.append(p.reshape(n * h * w, 4 * c))
    return jnp.stack(phases, axis=0)                  # (4, N*H*W, 4*C)


def _interleave_phases(y, n, h, w):
    """(4, N*H*W, C) phase outputs -> (N, 2H, 2W, C)."""
    c = y.shape[-1]
    y = y.reshape(2, 2, n, h, w, c)
    return jnp.transpose(y, (2, 3, 0, 4, 1, 5)).reshape(n, 2 * h, 2 * w, c)


def prepare_generator_weights(weights):
    """PyTorch ConvTranspose2d weights (Cin, Cout, 4, 4) -> per-phase bf16
    matmul matrices (done once, outside jit).

    Layer 0 (stride 1, 1x1 input): phase (y, x) weight = W[:, :, y, x];
      Cin padded 100 -> 128 -> (16, 128, Cout_p).
    Layers 1-4 (stride 2, pad 1): phase (ry, rx), tap (dr, dc) uses kernel
      element (3 - ry - 2*dr, 3 - rx - 2*dc) -> (4, 4*Cin, Cout_p).
    Cout is zero-padded to a multiple of 128 so kernel stores are lane-dense.
    """
    prepped = []
    for li, w in enumerate(weights):
        cin, cout, k, _ = w.shape
        cout_p = _round_up(cout, _LANE)
        if li == 0:
            cin_p = _round_up(cin, _LANE)
            wp = jnp.transpose(w, (2, 3, 0, 1)).reshape(k * k, cin, cout)
            wp = jnp.pad(wp, ((0, 0), (0, cin_p - cin), (0, cout_p - cout)))
        else:
            mats = []
            for ry in range(2):
                for rx in range(2):
                    taps = [w[:, :, 3 - ry - 2 * dr, 3 - rx - 2 * dc]
                            for dr in range(2) for dc in range(2)]
                    mats.append(jnp.stack(taps, axis=0).reshape(4 * cin, cout))
            wp = jnp.stack(mats, axis=0)                      # (4, 4*Cin, Cout)
            wp = jnp.pad(wp, ((0, 0), (0, 0), (0, cout_p - cout)))
        prepped.append(wp.astype(jnp.bfloat16))
    return prepped


def init_generator_params(key, f=16):
    """Deterministic DCGAN-style init (N(0, 0.02)), PyTorch weight layouts."""
    shapes = [
        (100,   f * 8, 4, 4),
        (f * 8, f * 4, 4, 4),
        (f * 4, f * 2, 4, 4),
        (f * 2, f,     4, 4),
        (f,     3,     4, 4),
    ]
    keys = jax.random.split(key, len(shapes))
    return [0.02 * jax.random.normal(k, s, dtype=jnp.float32)
            for k, s in zip(keys, shapes)]


@functools.partial(jax.jit, static_argnums=(2,))
def generator_forward(x_nchw, wms, f=16):
    """Generator forward: ConvT+BN+ReLU x4, ConvT+Tanh, /2 + 0.5 (NCHW f32)."""
    n = x_nchw.shape[0]
    chans = [(100, f * 8), (f * 8, f * 4), (f * 4, f * 2), (f * 2, f), (f, 3)]

    # Layer 0: 1x1 -> 4x4, stride 1, pad 0.  All 16 output positions share the
    # same (N, Cin) LHS; only the per-position weight block changes per step.
    cin, cout = chans[0]
    x0 = x_nchw.reshape(n, cin).astype(jnp.bfloat16)
    x0 = jnp.pad(x0, ((0, 0), (0, _round_up(cin, _LANE) - cin)))
    y = phase_matmul_bn_relu(x0[None], wms[0])                # (16, N, Cp)
    x = jnp.transpose(y.reshape(4, 4, n, y.shape[-1]), (2, 0, 1, 3))[..., :cout]

    # Layers 1-4: k=4, s=2, p=1 ConvTranspose, phase-decomposed (K = 4*Cin).
    for li in range(1, 5):
        cin, cout = chans[li]
        _, h, w, _ = x.shape
        patches = _phase_patches(x)                           # (4, N*h*w, 4*cin)
        if li < 4:
            y = phase_matmul_bn_relu(patches, wms[li])        # fused BN + ReLU
        else:
            y = phase_matmul_tanh(patches, wms[li])           # fused tanh/2+0.5
        # Drop zero-padded channels before the next layer's patches.
        x = _interleave_phases(y, n, h, w)[..., :cout]

    return jnp.transpose(x, (0, 3, 1, 2)).astype(jnp.float32)  # NCHW f32


# --------------------------------- main ------------------------------------ #

if __name__ == "__main__":
    f = 16          # small feature multiplier (module default is 64)
    batch = 2

    key = jax.random.PRNGKey(0)
    k_x, k_w = jax.random.split(key)

    # Generator input: latent noise, NCHW (N, 100, 1, 1)
    x = jax.random.normal(k_x, (batch, 100, 1, 1), dtype=jnp.float32)
    weights = init_generator_params(k_w, f=f)
    wms = prepare_generator_weights(weights)   # packed bf16 per-phase weights

    out = jax.block_until_ready(generator_forward(x, wms, f))

    assert out.shape == (batch, 3, 64, 64), out.shape
    assert bool(jnp.all(jnp.isfinite(out)))
    # Output of tanh/2 + 0.5 must lie in [0, 1].
    assert bool(jnp.all(out >= 0.0)) and bool(jnp.all(out <= 1.0))

    print("KERNEL_OK")
</pallas_src>

<mosaic_0001>
module attributes {stable_mosaic.version = 11 : i64} {
  func.func @_phase_matmul_bn_relu_kernel(%arg0: i32, %arg1: i32, %arg2: i32, %arg3: memref<1x2x128xbf16, #tpu.memory_space<vmem>>, %arg4: memref<1x128x128xbf16, #tpu.memory_space<vmem>>, %arg5: memref<16x2x128xbf16, #tpu.memory_space<vmem>>, %arg6: memref<16x2x128xf32, #tpu.memory_space<vmem>>) attributes {dimension_semantics = [#tpu.dimension_semantics<parallel>, #tpu.dimension_semantics<arbitrary>, #tpu.dimension_semantics<arbitrary>], iteration_bounds = array<i64: 1, 16, 1>, scalar_prefetch = 0 : i64, scratch_operands = 1 : i64, tpu.core_type = #tpu.core_type<tc>, window_params = [{transform_indices = @transform_0, window_bounds = array<i64: 1, 2, 128>}, {transform_indices = @transform_1, window_bounds = array<i64: 1, 128, 128>}, {transform_indices = @transform_2, window_bounds = array<i64: 16, 2, 128>}]} {
    %c0 = arith.constant 0 : index
    %c0_0 = arith.constant 0 : index
    %c0_1 = arith.constant 0 : index
    %0 = vector.load %arg3[%c0, %c0_0, %c0_1] : memref<1x2x128xbf16, #tpu.memory_space<vmem>>, vector<1x2x128xbf16>
    %1 = vector.shape_cast %0 : vector<1x2x128xbf16> to vector<2x128xbf16>
    %c0_2 = arith.constant 0 : index
    %c0_3 = arith.constant 0 : index
    %c0_4 = arith.constant 0 : index
    %2 = vector.load %arg4[%c0_2, %c0_3, %c0_4] : memref<1x128x128xbf16, #tpu.memory_space<vmem>>, vector<1x128x128xbf16>
    %3 = vector.shape_cast %2 : vector<1x128x128xbf16> to vector<128x128xbf16>
    %cst = arith.constant dense<0.000000e+00> : vector<2x128xf32>
    %4 = tpu.matmul %1, %3, %cst {dimension_numbers = #tpu.dot_dimension_numbers<[1], [0], [0], [1], [0, 0, 1, 1], [], []>} : vector<2x128xbf16>, vector<128x128xbf16>, vector<2x128xf32> -> vector<2x128xf32>
    %c0_i32 = arith.constant 0 : i32
    %5 = arith.cmpi eq, %arg2, %c0_i32 : i32
    %6 = arith.extui %5 : i1 to i32
    %c0_i32_5 = arith.constant 0 : i32
    %7 = arith.cmpi ne, %6, %c0_i32_5 : i32
    scf.if %7 {
      %16 = arith.index_cast %arg1 : i32 to index
      %c0_10 = arith.constant 0 : index
      %c0_11 = arith.constant 0 : index
      %17 = vector.load %arg6[%16, %c0_10, %c0_11] : memref<16x2x128xf32, #tpu.memory_space<vmem>>, vector<1x2x128xf32>
      %18 = vector.shape_cast %17 : vector<1x2x128xf32> to vector<2x128xf32>
      %19 = vector.shape_cast %4 : vector<2x128xf32> to vector<1x2x128xf32>
      tpu.vector_store %arg6[%16, %c0_10, %c0_11], %19 {strides = array<i32>} : memref<16x2x128xf32, #tpu.memory_space<vmem>>, vector<1x2x128xf32>,
    } else {
    }
    %c0_i32_6 = arith.constant 0 : i32
    %8 = arith.cmpi sgt, %arg2, %c0_i32_6 : i32
    %9 = arith.extui %8 : i1 to i32
    %c0_i32_7 = arith.constant 0 : i32
    %10 = arith.cmpi ne, %9, %c0_i32_7 : i32
    scf.if %10 {
      %16 = arith.index_cast %arg1 : i32 to index
      %c0_10 = arith.constant 0 : index
      %c0_11 = arith.constant 0 : index
      %17 = vector.load %arg6[%16, %c0_10, %c0_11] : memref<16x2x128xf32, #tpu.memory_space<vmem>>, vector<1x2x128xf32>
      %18 = vector.shape_cast %17 : vector<1x2x128xf32> to vector<2x128xf32>
      %19 = arith.addf %18, %4 : vector<2x128xf32>
      %20 = arith.index_cast %arg1 : i32 to index
      %c0_12 = arith.constant 0 : index
      %c0_13 = arith.constant 0 : index
      %21 = vector.load %arg6[%20, %c0_12, %c0_13] : memref<16x2x128xf32, #tpu.memory_space<vmem>>, vector<1x2x128xf32>
      %22 = vector.shape_cast %21 : vector<1x2x128xf32> to vector<2x128xf32>
      %23 = vector.shape_cast %19 : vector<2x128xf32> to vector<1x2x128xf32>
      tpu.vector_store %arg6[%20, %c0_12, %c0_13], %23 {strides = array<i32>} : memref<16x2x128xf32, #tpu.memory_space<vmem>>, vector<1x2x128xf32>,
    } else {
    }
    %c15_i32 = arith.constant 15 : i32
    %11 = arith.cmpi eq, %arg1, %c15_i32 : i32
    %c0_i32_8 = arith.constant 0 : i32
    %12 = arith.cmpi eq, %arg2, %c0_i32_8 : i32
    %13 = arith.andi %11, %12 : i1
    %14 = arith.extui %13 : i1 to i32
    %c0_i32_9 = arith.constant 0 : i32
    %15 = arith.cmpi ne, %14, %c0_i32_9 : i32
    scf.if %15 {
      %c0_10 = arith.constant 0 : index
      %c0_11 = arith.constant 0 : index
      %c0_12 = arith.constant 0 : index
      %16 = vector.load %arg6[%c0_10, %c0_11, %c0_12] : memref<16x2x128xf32, #tpu.memory_space<vmem>>, vector<16x2x128xf32>
      %cst_13 = arith.constant dense<0.000000e+00> : vector<128xf32>
      %17 = vector.multi_reduction <add>, %16, %cst_13 [0, 1] : vector<16x2x128xf32> to vector<128xf32>
      %18 = vector.shape_cast %17 : vector<128xf32> to vector<1x1x128xf32>
      %cst_14 = arith.constant 3.125000e-02 : f32
      %19 = vector.broadcast %cst_14 : f32 to vector<1x1x128xf32>
      %20 = arith.mulf %18, %19 : vector<1x1x128xf32>
      %21 = vector.broadcast %20 : vector<1x1x128xf32> to vector<16x2x128xf32>
      %22 = arith.subf %16, %21 : vector<16x2x128xf32>
      %23 = arith.mulf %22, %22 : vector<16x2x128xf32>
      %cst_15 = arith.constant dense<0.000000e+00> : vector<128xf32>
      %24 = vector.multi_reduction <add>, %23, %cst_15 [0, 1] : vector<16x2x128xf32> to vector<128xf32>
      %25 = vector.shape_cast %24 : vector<128xf32> to vector<1x1x128xf32>
      %cst_16 = arith.constant 3.125000e-02 : f32
      %26 = vector.broadcast %cst_16 : f32 to vector<1x1x128xf32>
      %27 = arith.mulf %25, %26 : vector<1x1x128xf32>
      %cst_17 = arith.constant 9.99999974E-6 : f32
      %28 = vector.broadcast %cst_17 : f32 to vector<1x1x128xf32>
      %29 = arith.addf %27, %28 : vector<1x1x128xf32>
      %30 = math.rsqrt %29 : vector<1x1x128xf32>
      %31 = vector.broadcast %30 : vector<1x1x128xf32> to vector<16x2x128xf32>
      %32 = arith.mulf %22, %31 : vector<16x2x128xf32>
      %cst_18 = arith.constant 0.000000e+00 : f32
      %33 = vector.broadcast %cst_18 : f32 to vector<16x2x128xf32>
      %34 = arith.maximumf %32, %33 : vector<16x2x128xf32>
      %35 = arith.truncf %34 : vector<16x2x128xf32> to vector<16x2x128xbf16>
      %c0_19 = arith.constant 0 : index
      %c0_20 = arith.constant 0 : index
      %c0_21 = arith.constant 0 : index
      %36 = vector.load %arg5[%c0_19, %c0_20, %c0_21] : memref<16x2x128xbf16, #tpu.memory_space<vmem>>, vector<16x2x128xbf16>
      tpu.vector_store %arg5[%c0_19, %c0_20, %c0_21], %35 {strides = array<i32>} : memref<16x2x128xbf16, #tpu.memory_space<vmem>>, vector<16x2x128xbf16>,
    } else {
    }
    return
  }
  func.func @transform_0(%arg0: i32, %arg1: i32, %arg2: i32) -> (i32, i32, i32) {
    %c0_i32 = arith.constant 0 : i32
    %c0_i32_0 = arith.constant 0 : i32
    %c0_i32_1 = arith.constant 0 : i32
    return %c0_i32, %c0_i32_0, %arg2 : i32, i32, i32
  }
  func.func @transform_1(%arg0: i32, %arg1: i32, %arg2: i32) -> (i32, i32, i32) {
    %c0_i32 = arith.constant 0 : i32
    return %arg1, %arg2, %arg0 : i32, i32, i32
  }
  func.func @transform_2(%arg0: i32, %arg1: i32, %arg2: i32) -> (i32, i32, i32) {
    %c0_i32 = arith.constant 0 : i32
    %c0_i32_0 = arith.constant 0 : i32
    %c0_i32_1 = arith.constant 0 : i32
    return %c0_i32, %c0_i32_0, %arg0 : i32, i32, i32
  }
}

module attributes {stable_mosaic.version = 11 : i64} {
  func.func @_phase_matmul_bn_relu_kernel(%arg0: i32, %arg1: i32, %arg2: i32, %arg3: memref<1x32x512xbf16, #tpu.memory_space<vmem>>, %arg4: memref<1x512x128xbf16, #tpu.memory_space<vmem>>, %arg5: memref<4x32x128xbf16, #tpu.memory_space<vmem>>, %arg6: memref<4x32x128xf32, #tpu.memory_space<vmem>>) attributes {dimension_semantics = [#tpu.dimension_semantics<parallel>, #tpu.dimension_semantics<arbitrary>, #tpu.dimension_semantics<arbitrary>], iteration_bounds = array<i64: 1, 4, 1>, scalar_prefetch = 0 : i64, scratch_operands = 1 : i64, tpu.core_type = #tpu.core_type<tc>, window_params = [{transform_indices = @transform_0, window_bounds = array<i64: 1, 32, 512>}, {transform_indices = @transform_1, window_bounds = array<i64: 1, 512, 128>}, {transform_indices = @transform_2, window_bounds = array<i64: 4, 32, 128>}]} {
    %c0 = arith.constant 0 : index
    %c0_0 = arith.constant 0 : index
    %c0_1 = arith.constant 0 : index
    %0 = vector.load %arg3[%c0, %c0_0, %c0_1] : memref<1x32x512xbf16, #tpu.memory_space<vmem>>, vector<1x32x512xbf16>
    %1 = vector.shape_cast %0 : vector<1x32x512xbf16> to vector<32x512xbf16>
    %c0_2 = arith.constant 0 : index
    %c0_3 = arith.constant 0 : index
    %c0_4 = arith.constant 0 : index
    %2 = vector.load %arg4[%c0_2, %c0_3, %c0_4] : memref<1x512x128xbf16, #tpu.memory_space<vmem>>, vector<1x512x128xbf16>
    %3 = vector.shape_cast %2 : vector<1x512x128xbf16> to vector<512x128xbf16>
    %cst = arith.constant dense<0.000000e+00> : vector<32x128xf32>
    %4 = tpu.matmul %1, %3, %cst {dimension_numbers = #tpu.dot_dimension_numbers<[1], [0], [0], [1], [0, 0, 1, 1], [], []>} : vector<32x512xbf16>, vector<512x128xbf16>, vector<32x128xf32> -> vector<32x128xf32>
    %c0_i32 = arith.constant 0 : i32
    %5 = arith.cmpi eq, %arg2, %c0_i32 : i32
    %6 = arith.extui %5 : i1 to i32
    %c0_i32_5 = arith.constant 0 : i32
    %7 = arith.cmpi ne, %6, %c0_i32_5 : i32
    scf.if %7 {
      %16 = arith.index_cast %arg1 : i32 to index
      %c0_10 = arith.constant 0 : index
      %c0_11 = arith.constant 0 : index
      %17 = vector.load %arg6[%16, %c0_10, %c0_11] : memref<4x32x128xf32, #tpu.memory_space<vmem>>, vector<1x32x128xf32>
      %18 = vector.shape_cast %17 : vector<1x32x128xf32> to vector<32x128xf32>
      %19 = vector.shape_cast %4 : vector<32x128xf32> to vector<1x32x128xf32>
      tpu.vector_store %arg6[%16, %c0_10, %c0_11], %19 {strides = array<i32>} : memref<4x32x128xf32, #tpu.memory_space<vmem>>, vector<1x32x128xf32>,
    } else {
    }
    %c0_i32_6 = arith.constant 0 : i32
    %8 = arith.cmpi sgt, %arg2, %c0_i32_6 : i32
    %9 = arith.extui %8 : i1 to i32
    %c0_i32_7 = arith.constant 0 : i32
    %10 = arith.cmpi ne, %9, %c0_i32_7 : i32
    scf.if %10 {
      %16 = arith.index_cast %arg1 : i32 to index
      %c0_10 = arith.constant 0 : index
      %c0_11 = arith.constant 0 : index
      %17 = vector.load %arg6[%16, %c0_10, %c0_11] : memref<4x32x128xf32, #tpu.memory_space<vmem>>, vector<1x32x128xf32>
      %18 = vector.shape_cast %17 : vector<1x32x128xf32> to vector<32x128xf32>
      %19 = arith.addf %18, %4 : vector<32x128xf32>
      %20 = arith.index_cast %arg1 : i32 to index
      %c0_12 = arith.constant 0 : index
      %c0_13 = arith.constant 0 : index
      %21 = vector.load %arg6[%20, %c0_12, %c0_13] : memref<4x32x128xf32, #tpu.memory_space<vmem>>, vector<1x32x128xf32>
      %22 = vector.shape_cast %21 : vector<1x32x128xf32> to vector<32x128xf32>
      %23 = vector.shape_cast %19 : vector<32x128xf32> to vector<1x32x128xf32>
      tpu.vector_store %arg6[%20, %c0_12, %c0_13], %23 {strides = array<i32>} : memref<4x32x128xf32, #tpu.memory_space<vmem>>, vector<1x32x128xf32>,
    } else {
    }
    %c3_i32 = arith.constant 3 : i32
    %11 = arith.cmpi eq, %arg1, %c3_i32 : i32
    %c0_i32_8 = arith.constant 0 : i32
    %12 = arith.cmpi eq, %arg2, %c0_i32_8 : i32
    %13 = arith.andi %11, %12 : i1
    %14 = arith.extui %13 : i1 to i32
    %c0_i32_9 = arith.constant 0 : i32
    %15 = arith.cmpi ne, %14, %c0_i32_9 : i32
    scf.if %15 {
      %c0_10 = arith.constant 0 : index
      %c0_11 = arith.constant 0 : index
      %c0_12 = arith.constant 0 : index
      %16 = vector.load %arg6[%c0_10, %c0_11, %c0_12] : memref<4x32x128xf32, #tpu.memory_space<vmem>>, vector<4x32x128xf32>
      %cst_13 = arith.constant dense<0.000000e+00> : vector<128xf32>
      %17 = vector.multi_reduction <add>, %16, %cst_13 [0, 1] : vector<4x32x128xf32> to vector<128xf32>
      %18 = vector.shape_cast %17 : vector<128xf32> to vector<1x1x128xf32>
      %cst_14 = arith.constant 7.812500e-03 : f32
      %19 = vector.broadcast %cst_14 : f32 to vector<1x1x128xf32>
      %20 = arith.mulf %18, %19 : vector<1x1x128xf32>
      %21 = vector.broadcast %20 : vector<1x1x128xf32> to vector<4x32x128xf32>
      %22 = arith.subf %16, %21 : vector<4x32x128xf32>
      %23 = arith.mulf %22, %22 : vector<4x32x128xf32>
      %cst_15 = arith.constant dense<0.000000e+00> : vector<128xf32>
      %24 = vector.multi_reduction <add>, %23, %cst_15 [0, 1] : vector<4x32x128xf32> to vector<128xf32>
      %25 = vector.shape_cast %24 : vector<128xf32> to vector<1x1x128xf32>
      %cst_16 = arith.constant 7.812500e-03 : f32
      %26 = vector.broadcast %cst_16 : f32 to vector<1x1x128xf32>
      %27 = arith.mulf %25, %26 : vector<1x1x128xf32>
      %cst_17 = arith.constant 9.99999974E-6 : f32
      %28 = vector.broadcast %cst_17 : f32 to vector<1x1x128xf32>
      %29 = arith.addf %27, %28 : vector<1x1x128xf32>
      %30 = math.rsqrt %29 : vector<1x1x128xf32>
      %31 = vector.broadcast %30 : vector<1x1x128xf32> to vector<4x32x128xf32>
      %32 = arith.mulf %22, %31 : vector<4x32x128xf32>
      %cst_18 = arith.constant 0.000000e+00 : f32
      %33 = vector.broadcast %cst_18 : f32 to vector<4x32x128xf32>
      %34 = arith.maximumf %32, %33 : vector<4x32x128xf32>
      %35 = arith.truncf %34 : vector<4x32x128xf32> to vector<4x32x128xbf16>
      %c0_19 = arith.constant 0 : index
      %c0_20 = arith.constant 0 : index
      %c0_21 = arith.constant 0 : index
      %36 = vector.load %arg5[%c0_19, %c0_20, %c0_21] : memref<4x32x128xbf16, #tpu.memory_space<vmem>>, vector<4x32x128xbf16>
      tpu.vector_store %arg5[%c0_19, %c0_20, %c0_21], %35 {strides = array<i32>} : memref<4x32x128xbf16, #tpu.memory_space<vmem>>, vector<4x32x128xbf16>,
    } else {
    }
    return
  }
  func.func @transform_0(%arg0: i32, %arg1: i32, %arg2: i32) -> (i32, i32, i32) {
    %c0_i32 = arith.constant 0 : i32
    %c0_i32_0 = arith.constant 0 : i32
    return %arg1, %c0_i32, %arg2 : i32, i32, i32
  }
  func.func @transform_1(%arg0: i32, %arg1: i32, %arg2: i32) -> (i32, i32, i32) {
    %c0_i32 = arith.constant 0 : i32
    return %arg1, %arg2, %arg0 : i32, i32, i32
  }
  func.func @transform_2(%arg0: i32, %arg1: i32, %arg2: i32) -> (i32, i32, i32) {
    %c0_i32 = arith.constant 0 : i32
    %c0_i32_0 = arith.constant 0 : i32
    %c0_i32_1 = arith.constant 0 : i32
    return %c0_i32, %c0_i32_0, %arg0 : i32, i32, i32
  }
}

module attributes {stable_mosaic.version = 11 : i64} {
  func.func @_phase_matmul_bn_relu_kernel(%arg0: i32, %arg1: i32, %arg2: i32, %arg3: memref<1x128x256xbf16, #tpu.memory_space<vmem>>, %arg4: memref<1x256x128xbf16, #tpu.memory_space<vmem>>, %arg5: memref<4x128x128xbf16, #tpu.memory_space<vmem>>, %arg6: memref<4x128x128xf32, #tpu.memory_space<vmem>>) attributes {dimension_semantics = [#tpu.dimension_semantics<parallel>, #tpu.dimension_semantics<arbitrary>, #tpu.dimension_semantics<arbitrary>], iteration_bounds = array<i64: 1, 4, 1>, scalar_prefetch = 0 : i64, scratch_operands = 1 : i64, tpu.core_type = #tpu.core_type<tc>, window_params = [{transform_indices = @transform_0, window_bounds = array<i64: 1, 128, 256>}, {transform_indices = @transform_1, window_bounds = array<i64: 1, 256, 128>}, {transform_indices = @transform_2, window_bounds = array<i64: 4, 128, 128>}]} {
    %c0 = arith.constant 0 : index
    %c0_0 = arith.constant 0 : index
    %c0_1 = arith.constant 0 : index
    %0 = vector.load %arg3[%c0, %c0_0, %c0_1] : memref<1x128x256xbf16, #tpu.memory_space<vmem>>, vector<1x128x256xbf16>
    %1 = vector.shape_cast %0 : vector<1x128x256xbf16> to vector<128x256xbf16>
    %c0_2 = arith.constant 0 : index
    %c0_3 = arith.constant 0 : index
    %c0_4 = arith.constant 0 : index
    %2 = vector.load %arg4[%c0_2, %c0_3, %c0_4] : memref<1x256x128xbf16, #tpu.memory_space<vmem>>, vector<1x256x128xbf16>
    %3 = vector.shape_cast %2 : vector<1x256x128xbf16> to vector<256x128xbf16>
    %cst = arith.constant dense<0.000000e+00> : vector<128x128xf32>
    %4 = tpu.matmul %1, %3, %cst {dimension_numbers = #tpu.dot_dimension_numbers<[1], [0], [0], [1], [0, 0, 1, 1], [], []>} : vector<128x256xbf16>, vector<256x128xbf16>, vector<128x128xf32> -> vector<128x128xf32>
    %c0_i32 = arith.constant 0 : i32
    %5 = arith.cmpi eq, %arg2, %c0_i32 : i32
    %6 = arith.extui %5 : i1 to i32
    %c0_i32_5 = arith.constant 0 : i32
    %7 = arith.cmpi ne, %6, %c0_i32_5 : i32
    scf.if %7 {
      %16 = arith.index_cast %arg1 : i32 to index
      %c0_10 = arith.constant 0 : index
      %c0_11 = arith.constant 0 : index
      %17 = vector.load %arg6[%16, %c0_10, %c0_11] : memref<4x128x128xf32, #tpu.memory_space<vmem>>, vector<1x128x128xf32>
      %18 = vector.shape_cast %17 : vector<1x128x128xf32> to vector<128x128xf32>
      %19 = vector.shape_cast %4 : vector<128x128xf32> to vector<1x128x128xf32>
      tpu.vector_store %arg6[%16, %c0_10, %c0_11], %19 {strides = array<i32>} : memref<4x128x128xf32, #tpu.memory_space<vmem>>, vector<1x128x128xf32>,
    } else {
    }
    %c0_i32_6 = arith.constant 0 : i32
    %8 = arith.cmpi sgt, %arg2, %c0_i32_6 : i32
    %9 = arith.extui %8 : i1 to i32
    %c0_i32_7 = arith.constant 0 : i32
    %10 = arith.cmpi ne, %9, %c0_i32_7 : i32
    scf.if %10 {
      %16 = arith.index_cast %arg1 : i32 to index
      %c0_10 = arith.constant 0 : index
      %c0_11 = arith.constant 0 : index
      %17 = vector.load %arg6[%16, %c0_10, %c0_11] : memref<4x128x128xf32, #tpu.memory_space<vmem>>, vector<1x128x128xf32>
      %18 = vector.shape_cast %17 : vector<1x128x128xf32> to vector<128x128xf32>
      %19 = arith.addf %18, %4 : vector<128x128xf32>
      %20 = arith.index_cast %arg1 : i32 to index
      %c0_12 = arith.constant 0 : index
      %c0_13 = arith.constant 0 : index
      %21 = vector.load %arg6[%20, %c0_12, %c0_13] : memref<4x128x128xf32, #tpu.memory_space<vmem>>, vector<1x128x128xf32>
      %22 = vector.shape_cast %21 : vector<1x128x128xf32> to vector<128x128xf32>
      %23 = vector.shape_cast %19 : vector<128x128xf32> to vector<1x128x128xf32>
      tpu.vector_store %arg6[%20, %c0_12, %c0_13], %23 {strides = array<i32>} : memref<4x128x128xf32, #tpu.memory_space<vmem>>, vector<1x128x128xf32>,
    } else {
    }
    %c3_i32 = arith.constant 3 : i32
    %11 = arith.cmpi eq, %arg1, %c3_i32 : i32
    %c0_i32_8 = arith.constant 0 : i32
    %12 = arith.cmpi eq, %arg2, %c0_i32_8 : i32
    %13 = arith.andi %11, %12 : i1
    %14 = arith.extui %13 : i1 to i32
    %c0_i32_9 = arith.constant 0 : i32
    %15 = arith.cmpi ne, %14, %c0_i32_9 : i32
    scf.if %15 {
      %c0_10 = arith.constant 0 : index
      %c0_11 = arith.constant 0 : index
      %c0_12 = arith.constant 0 : index
      %16 = vector.load %arg6[%c0_10, %c0_11, %c0_12] : memref<4x128x128xf32, #tpu.memory_space<vmem>>, vector<4x128x128xf32>
      %cst_13 = arith.constant dense<0.000000e+00> : vector<128xf32>
      %17 = vector.multi_reduction <add>, %16, %cst_13 [0, 1] : vector<4x128x128xf32> to vector<128xf32>
      %18 = vector.shape_cast %17 : vector<128xf32> to vector<1x1x128xf32>
      %cst_14 = arith.constant 0.001953125 : f32
      %19 = vector.broadcast %cst_14 : f32 to vector<1x1x128xf32>
      %20 = arith.mulf %18, %19 : vector<1x1x128xf32>
      %21 = vector.broadcast %20 : vector<1x1x128xf32> to vector<4x128x128xf32>
      %22 = arith.subf %16, %21 : vector<4x128x128xf32>
      %23 = arith.mulf %22, %22 : vector<4x128x128xf32>
      %cst_15 = arith.constant dense<0.000000e+00> : vector<128xf32>
      %24 = vector.multi_reduction <add>, %23, %cst_15 [0, 1] : vector<4x128x128xf32> to vector<128xf32>
      %25 = vector.shape_cast %24 : vector<128xf32> to vector<1x1x128xf32>
      %cst_16 = arith.constant 0.001953125 : f32
      %26 = vector.broadcast %cst_16 : f32 to vector<1x1x128xf32>
      %27 = arith.mulf %25, %26 : vector<1x1x128xf32>
      %cst_17 = arith.constant 9.99999974E-6 : f32
      %28 = vector.broadcast %cst_17 : f32 to vector<1x1x128xf32>
      %29 = arith.addf %27, %28 : vector<1x1x128xf32>
      %30 = math.rsqrt %29 : vector<1x1x128xf32>
      %31 = vector.broadcast %30 : vector<1x1x128xf32> to vector<4x128x128xf32>
      %32 = arith.mulf %22, %31 : vector<4x128x128xf32>
      %cst_18 = arith.constant 0.000000e+00 : f32
      %33 = vector.broadcast %cst_18 : f32 to vector<4x128x128xf32>
      %34 = arith.maximumf %32, %33 : vector<4x128x128xf32>
      %35 = arith.truncf %34 : vector<4x128x128xf32> to vector<4x128x128xbf16>
      %c0_19 = arith.constant 0 : index
      %c0_20 = arith.constant 0 : index
      %c0_21 = arith.constant 0 : index
      %36 = vector.load %arg5[%c0_19, %c0_20, %c0_21] : memref<4x128x128xbf16, #tpu.memory_space<vmem>>, vector<4x128x128xbf16>
      tpu.vector_store %arg5[%c0_19, %c0_20, %c0_21], %35 {strides = array<i32>} : memref<4x128x128xbf16, #tpu.memory_space<vmem>>, vector<4x128x128xbf16>,
    } else {
    }
    return
  }
  func.func @transform_0(%arg0: i32, %arg1: i32, %arg2: i32) -> (i32, i32, i32) {
    %c0_i32 = arith.constant 0 : i32
    %c0_i32_0 = arith.constant 0 : i32
    return %arg1, %c0_i32, %arg2 : i32, i32, i32
  }
  func.func @transform_1(%arg0: i32, %arg1: i32, %arg2: i32) -> (i32, i32, i32) {
    %c0_i32 = arith.constant 0 : i32
    return %arg1, %arg2, %arg0 : i32, i32, i32
  }
  func.func @transform_2(%arg0: i32, %arg1: i32, %arg2: i32) -> (i32, i32, i32) {
    %c0_i32 = arith.constant 0 : i32
    %c0_i32_0 = arith.constant 0 : i32
    %c0_i32_1 = arith.constant 0 : i32
    return %c0_i32, %c0_i32_0, %arg0 : i32, i32, i32
  }
}

module attributes {stable_mosaic.version = 11 : i64} {
  func.func @_phase_matmul_bn_relu_kernel(%arg0: i32, %arg1: i32, %arg2: i32, %arg3: memref<1x512x128xbf16, #tpu.memory_space<vmem>>, %arg4: memref<1x128x128xbf16, #tpu.memory_space<vmem>>, %arg5: memref<4x512x128xbf16, #tpu.memory_space<vmem>>, %arg6: memref<4x512x128xf32, #tpu.memory_space<vmem>>) attributes {dimension_semantics = [#tpu.dimension_semantics<parallel>, #tpu.dimension_semantics<arbitrary>, #tpu.dimension_semantics<arbitrary>], iteration_bounds = array<i64: 1, 4, 1>, scalar_prefetch = 0 : i64, scratch_operands = 1 : i64, tpu.core_type = #tpu.core_type<tc>, window_params = [{transform_indices = @transform_0, window_bounds = array<i64: 1, 512, 128>}, {transform_indices = @transform_1, window_bounds = array<i64: 1, 128, 128>}, {transform_indices = @transform_2, window_bounds = array<i64: 4, 512, 128>}]} {
    %c0 = arith.constant 0 : index
    %c0_0 = arith.constant 0 : index
    %c0_1 = arith.constant 0 : index
    %0 = vector.load %arg3[%c0, %c0_0, %c0_1] : memref<1x512x128xbf16, #tpu.memory_space<vmem>>, vector<1x512x128xbf16>
    %1 = vector.shape_cast %0 : vector<1x512x128xbf16> to vector<512x128xbf16>
    %c0_2 = arith.constant 0 : index
    %c0_3 = arith.constant 0 : index
    %c0_4 = arith.constant 0 : index
    %2 = vector.load %arg4[%c0_2, %c0_3, %c0_4] : memref<1x128x128xbf16, #tpu.memory_space<vmem>>, vector<1x128x128xbf16>
    %3 = vector.shape_cast %2 : vector<1x128x128xbf16> to vector<128x128xbf16>
    %cst = arith.constant dense<0.000000e+00> : vector<512x128xf32>
    %4 = tpu.matmul %1, %3, %cst {dimension_numbers = #tpu.dot_dimension_numbers<[1], [0], [0], [1], [0, 0, 1, 1], [], []>} : vector<512x128xbf16>, vector<128x128xbf16>, vector<512x128xf32> -> vector<512x128xf32>
    %c0_i32 = arith.constant 0 : i32
    %5 = arith.cmpi eq, %arg2, %c0_i32 : i32
    %6 = arith.extui %5 : i1 to i32
    %c0_i32_5 = arith.constant 0 : i32
    %7 = arith.cmpi ne, %6, %c0_i32_5 : i32
    scf.if %7 {
      %16 = arith.index_cast %arg1 : i32 to index
      %c0_10 = arith.constant 0 : index
      %c0_11 = arith.constant 0 : index
      %17 = vector.load %arg6[%16, %c0_10, %c0_11] : memref<4x512x128xf32, #tpu.memory_space<vmem>>, vector<1x512x128xf32>
      %18 = vector.shape_cast %17 : vector<1x512x128xf32> to vector<512x128xf32>
      %19 = vector.shape_cast %4 : vector<512x128xf32> to vector<1x512x128xf32>
      tpu.vector_store %arg6[%16, %c0_10, %c0_11], %19 {strides = array<i32>} : memref<4x512x128xf32, #tpu.memory_space<vmem>>, vector<1x512x128xf32>,
    } else {
    }
    %c0_i32_6 = arith.constant 0 : i32
    %8 = arith.cmpi sgt, %arg2, %c0_i32_6 : i32
    %9 = arith.extui %8 : i1 to i32
    %c0_i32_7 = arith.constant 0 : i32
    %10 = arith.cmpi ne, %9, %c0_i32_7 : i32
    scf.if %10 {
      %16 = arith.index_cast %arg1 : i32 to index
      %c0_10 = arith.constant 0 : index
      %c0_11 = arith.constant 0 : index
      %17 = vector.load %arg6[%16, %c0_10, %c0_11] : memref<4x512x128xf32, #tpu.memory_space<vmem>>, vector<1x512x128xf32>
      %18 = vector.shape_cast %17 : vector<1x512x128xf32> to vector<512x128xf32>
      %19 = arith.addf %18, %4 : vector<512x128xf32>
      %20 = arith.index_cast %arg1 : i32 to index
      %c0_12 = arith.constant 0 : index
      %c0_13 = arith.constant 0 : index
      %21 = vector.load %arg6[%20, %c0_12, %c0_13] : memref<4x512x128xf32, #tpu.memory_space<vmem>>, vector<1x512x128xf32>
      %22 = vector.shape_cast %21 : vector<1x512x128xf32> to vector<512x128xf32>
      %23 = vector.shape_cast %19 : vector<512x128xf32> to vector<1x512x128xf32>
      tpu.vector_store %arg6[%20, %c0_12, %c0_13], %23 {strides = array<i32>} : memref<4x512x128xf32, #tpu.memory_space<vmem>>, vector<1x512x128xf32>,
    } else {
    }
    %c3_i32 = arith.constant 3 : i32
    %11 = arith.cmpi eq, %arg1, %c3_i32 : i32
    %c0_i32_8 = arith.constant 0 : i32
    %12 = arith.cmpi eq, %arg2, %c0_i32_8 : i32
    %13 = arith.andi %11, %12 : i1
    %14 = arith.extui %13 : i1 to i32
    %c0_i32_9 = arith.constant 0 : i32
    %15 = arith.cmpi ne, %14, %c0_i32_9 : i32
    scf.if %15 {
      %c0_10 = arith.constant 0 : index
      %c0_11 = arith.constant 0 : index
      %c0_12 = arith.constant 0 : index
      %16 = vector.load %arg6[%c0_10, %c0_11, %c0_12] : memref<4x512x128xf32, #tpu.memory_space<vmem>>, vector<4x512x128xf32>
      %cst_13 = arith.constant dense<0.000000e+00> : vector<128xf32>
      %17 = vector.multi_reduction <add>, %16, %cst_13 [0, 1] : vector<4x512x128xf32> to vector<128xf32>
      %18 = vector.shape_cast %17 : vector<128xf32> to vector<1x1x128xf32>
      %cst_14 = arith.constant 4.8828125E-4 : f32
      %19 = vector.broadcast %cst_14 : f32 to vector<1x1x128xf32>
      %20 = arith.mulf %18, %19 : vector<1x1x128xf32>
      %21 = vector.broadcast %20 : vector<1x1x128xf32> to vector<4x512x128xf32>
      %22 = arith.subf %16, %21 : vector<4x512x128xf32>
      %23 = arith.mulf %22, %22 : vector<4x512x128xf32>
      %cst_15 = arith.constant dense<0.000000e+00> : vector<128xf32>
      %24 = vector.multi_reduction <add>, %23, %cst_15 [0, 1] : vector<4x512x128xf32> to vector<128xf32>
      %25 = vector.shape_cast %24 : vector<128xf32> to vector<1x1x128xf32>
      %cst_16 = arith.constant 4.8828125E-4 : f32
      %26 = vector.broadcast %cst_16 : f32 to vector<1x1x128xf32>
      %27 = arith.mulf %25, %26 : vector<1x1x128xf32>
      %cst_17 = arith.constant 9.99999974E-6 : f32
      %28 = vector.broadcast %cst_17 : f32 to vector<1x1x128xf32>
      %29 = arith.addf %27, %28 : vector<1x1x128xf32>
      %30 = math.rsqrt %29 : vector<1x1x128xf32>
      %31 = vector.broadcast %30 : vector<1x1x128xf32> to vector<4x512x128xf32>
      %32 = arith.mulf %22, %31 : vector<4x512x128xf32>
      %cst_18 = arith.constant 0.000000e+00 : f32
      %33 = vector.broadcast %cst_18 : f32 to vector<4x512x128xf32>
      %34 = arith.maximumf %32, %33 : vector<4x512x128xf32>
      %35 = arith.truncf %34 : vector<4x512x128xf32> to vector<4x512x128xbf16>
      %c0_19 = arith.constant 0 : index
      %c0_20 = arith.constant 0 : index
      %c0_21 = arith.constant 0 : index
      %36 = vector.load %arg5[%c0_19, %c0_20, %c0_21] : memref<4x512x128xbf16, #tpu.memory_space<vmem>>, vector<4x512x128xbf16>
      tpu.vector_store %arg5[%c0_19, %c0_20, %c0_21], %35 {strides = array<i32>} : memref<4x512x128xbf16, #tpu.memory_space<vmem>>, vector<4x512x128xbf16>,
    } else {
    }
    return
  }
  func.func @transform_0(%arg0: i32, %arg1: i32, %arg2: i32) -> (i32, i32, i32) {
    %c0_i32 = arith.constant 0 : i32
    %c0_i32_0 = arith.constant 0 : i32
    return %arg1, %c0_i32, %arg2 : i32, i32, i32
  }
  func.func @transform_1(%arg0: i32, %arg1: i32, %arg2: i32) -> (i32, i32, i32) {
    %c0_i32 = arith.constant 0 : i32
    return %arg1, %arg2, %arg0 : i32, i32, i32
  }
  func.func @transform_2(%arg0: i32, %arg1: i32, %arg2: i32) -> (i32, i32, i32) {
    %c0_i32 = arith.constant 0 : i32
    %c0_i32_0 = arith.constant 0 : i32
    %c0_i32_1 = arith.constant 0 : i32
    return %c0_i32, %c0_i32_0, %arg0 : i32, i32, i32
  }
}

module attributes {stable_mosaic.version = 11 : i64} {
  func.func @_phase_matmul_tanh_kernel(%arg0: i32, %arg1: i32, %arg2: memref<1x1024x64xbf16, #tpu.memory_space<vmem>>, %arg3: memref<1x64x128xbf16, #tpu.memory_space<vmem>>, %arg4: memref<1x1024x128xbf16, #tpu.memory_space<vmem>>) attributes {dimension_semantics = [#tpu.dimension_semantics<parallel>, #tpu.dimension_semantics<parallel>], iteration_bounds = array<i64: 4, 2>, scalar_prefetch = 0 : i64, scratch_operands = 0 : i64, tpu.core_type = #tpu.core_type<tc>, window_params = [{transform_indices = @transform_0, window_bounds = array<i64: 1, 1024, 64>}, {transform_indices = @transform_1, window_bounds = array<i64: 1, 64, 128>}, {transform_indices = @transform_2, window_bounds = array<i64: 1, 1024, 128>}]} {
    %c0 = arith.constant 0 : index
    %c0_0 = arith.constant 0 : index
    %c0_1 = arith.constant 0 : index
    %0 = vector.load %arg2[%c0, %c0_0, %c0_1] : memref<1x1024x64xbf16, #tpu.memory_space<vmem>>, vector<1x1024x64xbf16>
    %1 = vector.shape_cast %0 : vector<1x1024x64xbf16> to vector<1024x64xbf16>
    %c0_2 = arith.constant 0 : index
    %c0_3 = arith.constant 0 : index
    %c0_4 = arith.constant 0 : index
    %2 = vector.load %arg3[%c0_2, %c0_3, %c0_4] : memref<1x64x128xbf16, #tpu.memory_space<vmem>>, vector<1x64x128xbf16>
    %3 = vector.shape_cast %2 : vector<1x64x128xbf16> to vector<64x128xbf16>
    %cst = arith.constant dense<0.000000e+00> : vector<1024x128xf32>
    %4 = tpu.matmul %1, %3, %cst {dimension_numbers = #tpu.dot_dimension_numbers<[1], [0], [0], [1], [0, 0, 1, 1], [], []>} : vector<1024x64xbf16>, vector<64x128xbf16>, vector<1024x128xf32> -> vector<1024x128xf32>
    %5 = math.tanh %4 : vector<1024x128xf32>
    %cst_5 = arith.constant 5.000000e-01 : f32
    %6 = vector.broadcast %cst_5 : f32 to vector<1024x128xf32>
    %7 = arith.mulf %5, %6 : vector<1024x128xf32>
    %cst_6 = arith.constant 5.000000e-01 : f32
    %8 = vector.broadcast %cst_6 : f32 to vector<1024x128xf32>
    %9 = arith.addf %7, %8 : vector<1024x128xf32>
    %10 = arith.truncf %9 : vector<1024x128xf32> to vector<1024x128xbf16>
    %c0_7 = arith.constant 0 : index
    %c0_8 = arith.constant 0 : index
    %c0_9 = arith.constant 0 : index
    %11 = vector.load %arg4[%c0_7, %c0_8, %c0_9] : memref<1x1024x128xbf16, #tpu.memory_space<vmem>>, vector<1x1024x128xbf16>
    %12 = vector.shape_cast %11 : vector<1x1024x128xbf16> to vector<1024x128xbf16>
    %13 = vector.shape_cast %10 : vector<1024x128xbf16> to vector<1x1024x128xbf16>
    tpu.vector_store %arg4[%c0_7, %c0_8, %c0_9], %13 {strides = array<i32>} : memref<1x1024x128xbf16, #tpu.memory_space<vmem>>, vector<1x1024x128xbf16>,
    return
  }
  func.func @transform_0(%arg0: i32, %arg1: i32) -> (i32, i32, i32) {
    %c0_i32 = arith.constant 0 : i32
    %c0_i32_0 = arith.constant 0 : i32
    return %arg0, %arg1, %c0_i32 : i32, i32, i32
  }
  func.func @transform_1(%arg0: i32, %arg1: i32) -> (i32, i32, i32) {
    %c0_i32 = arith.constant 0 : i32
    %c0_i32_0 = arith.constant 0 : i32
    %c0_i32_1 = arith.constant 0 : i32
    return %arg0, %c0_i32, %c0_i32_0 : i32, i32, i32
  }
  func.func @transform_2(%arg0: i32, %arg1: i32) -> (i32, i32, i32) {
    %c0_i32 = arith.constant 0 : i32
    %c0_i32_0 = arith.constant 0 : i32
    return %arg0, %arg1, %c0_i32 : i32, i32, i32
  }
}

</mosaic_0001>

<llo_original>
// kernel: generator_forward.5
$region0: #{generator_forward.5}
  #allocation0 [shape = 'u32[]', space=smem, size = 0x4, offset = 0x4, fixed_abs, tag = 'smem constant byte address 0x4 - core index']
  #allocation1 [shape = 'u32[72,128]{1,0:T(1,128)}', space=vmem, size = 0x9000, scoped, tag = 'internal scratch']
  #allocation2 [shape = 'f32[16,2,128]{2,1,0:T(2,128)}', space=vmem, size = 0x4000, scoped, tag = 'scratch operand']
  %s0 = inlined_call_operand.vmem [shape: bf16[1,2,128], index: 0, kind: input, shape index: {}]
  %s1 = inlined_call_operand.hbm [shape: bf16[16,128,128], index: 1, kind: input, shape index: {}]
  %s2 = inlined_call_operand.vmem [shape: bf16[16,2,128], index: 2, kind: output, shape index: {}]
  %s3 = sld [smem:[#allocation0]]
  $region57: #{generator_forward.5} parent=0
    _
  %s5 = ssub.s32 1, %s3
  %s6 = scalar_select 0, %s5, %s3
  $region1: #{generator_forward.5} parent=0
    #allocation3 [shape = 'u8[65536]{0}', space=vmem, size = 0x10000, scoped, tag = 'input window, operand 1']
    #allocation4 [shape = 's32[2]{0}', space=sflag, size = 0x8, scoped, tag = 'scoped memory for generator_forward.5']
    %7 = vsyncpa [#allocation4], 0
    %s8 = scalar_lea.sflag [#allocation4], 1
    %9 = vsyncpa %s8, 0
    loop: start=0, step=1, limit=18
    $region2: #{generator_forward.5} parent=1 // loop_pre_header
      _
    $region3: #{generator_forward.5} parent=1 // loop_header
      %s11 = sphi 0, %s15
      %p12 = scmp.ge.s32.totalorder %s11, 18
      %s18 = sphi 0, %s37
      %s19 = sphi 0, %s33
      %s20 = sphi 0, %s29
      %s21 = sphi 0, %s18
      %s22 = sphi 0, %s19
      %s23 = sphi 0, %s20
      %s24 = sphi 0, %s21
      %s25 = sphi 0, %s22
      %s26 = sphi 0, %s23
      %s40 = sphi 0, %s42
      %s43 = sphi 0, %s40
      %s44 = sphi 0, %s43
      %s60 = sphi 0, %s44
      %s70 = sphi 0, %s72
      %s73 = sphi 0, %s70
      %s74 = sphi 0, %s73
      %s90 = sphi 0, %s74
      %s96 = sphi 0, %s98
      %s99 = sphi 0, %s96
      %s100 = sphi 0, %s99
      %s116 = sphi 0, %s100
    $region4: #{generator_forward.5} parent=1 // loop_header_branch
      %14 = sbr.rel (%p12) target = $region8
    $region5: #{generator_forward.5} parent=1 // loop_body
      %s16 = ssub.s32 %s11, 1
      %s17 = ssub.s32 %s11, 2
      %s27 = sadd.s32 1, %s20
      %p28 = scmp.ge.s32.totalorder %s27, 1
      %s29 = scalar_select %p28, 0, %s27
      %s30 = sadd.s32 1, %s19
      %s31 = scalar_select %p28, %s30, %s19
      %p32 = scmp.ge.s32.totalorder %s31, 16
      %s33 = scalar_select %p32, 0, %s31
      %s34 = sadd.s32 1, %s18
      %s35 = scalar_select %p32, %s34, %s18
      %p36 = scmp.ge.s32.totalorder %s35, 1
      %s37 = scalar_select %p36, 0, %s35
      %s38 = ssub.s32 %s20, %s29
      %p39 = scmp.eq.s32.totalorder %s38, 0
      %s41 = sadd.s32 %s40, 1
      %s42 = scalar_select %p39, %s40, %s41
      %p45 = pneg %p39
      %p46 = scmp.eq.s32.totalorder %s11, 15
      %p47 = por %p45, %p46
      %p48 = scmp.ne.s32.totalorder %s40, %s43
      %p49 = scmp.eq.s32.totalorder %s11, 0
      %p50 = por %p48, %p49
      %p51 = scmp.ne.s32.totalorder %s40, %s43
      %p52 = scmp.eq.s32.totalorder %s16, 15
      %p53 = por %p51, %p52
      %p54 = scmp.ne.s32.totalorder %s43, %s44
      %p55 = scmp.eq.s32.totalorder %s16, 0
      %p56 = por %p54, %p55
      %p57 = scmp.ne.s32.totalorder %s43, %s44
      %p58 = scmp.eq.s32.totalorder %s17, 15
      %p59 = por %p57, %p58
      %p61 = scmp.ne.s32.totalorder %s44, %s60
      %p62 = scmp.eq.s32.totalorder %s17, 0
      %p63 = por %p61, %p62
      %s64 = ssub.s32 %s19, %s33
      %s65 = ssub.s32 %s20, %s29
      %s66 = sor.u32 %s64, %s65
      %s67 = ssub.s32 %s18, %s37
      %s68 = sor.u32 %s66, %s67
      %p69 = scmp.eq.s32.totalorder %s68, 0
      %s71 = sadd.s32 %s70, 1
      %s72 = scalar_select %p69, %s70, %s71
      %p75 = pneg %p69
      %p76 = scmp.eq.s32.totalorder %s11, 15
      %p77 = por %p75, %p76
      %p78 = scmp.ne.s32.totalorder %s70, %s73
      %p79 = scmp.eq.s32.totalorder %s11, 0
      %p80 = por %p78, %p79
      %p81 = scmp.ne.s32.totalorder %s70, %s73
      %p82 = scmp.eq.s32.totalorder %s16, 15
      %p83 = por %p81, %p82
      %p84 = scmp.ne.s32.totalorder %s73, %s74
      %p85 = scmp.eq.s32.totalorder %s16, 0
      %p86 = por %p84, %p85
      %p87 = scmp.ne.s32.totalorder %s73, %s74
      %p88 = scmp.eq.s32.totalorder %s17, 15
      %p89 = por %p87, %p88
      %p91 = scmp.ne.s32.totalorder %s74, %s90
      %p92 = scmp.eq.s32.totalorder %s17, 0
      %p93 = por %p91, %p92
      %s94 = ssub.s32 %s18, %s37
      %p95 = scmp.eq.s32.totalorder %s94, 0
      %s97 = sadd.s32 %s96, 1
      %s98 = scalar_select %p95, %s96, %s97
      %p101 = pneg %p95
      %p102 = scmp.eq.s32.totalorder %s11, 15
      %p103 = por %p101, %p102
      %p104 = scmp.ne.s32.totalorder %s96, %s99
      %p105 = scmp.eq.s32.totalorder %s11, 0
      %p106 = por %p104, %p105
      %p107 = scmp.ne.s32.totalorder %s96, %s99
      %p108 = scmp.eq.s32.totalorder %s16, 15
      %p109 = por %p107, %p108
      %p110 = scmp.ne.s32.totalorder %s99, %s100
      %p111 = scmp.eq.s32.totalorder %s16, 0
      %p112 = por %p110, %p111
      %p113 = scmp.ne.s32.totalorder %s99, %s100
      %p114 = scmp.eq.s32.totalorder %s17, 15
      %p115 = por %p113, %p114
      %p117 = scmp.ne.s32.totalorder %s100, %s116
      %p118 = scmp.eq.s32.totalorder %s17, 0
      %p119 = por %p117, %p118
      %p120 = scmp.le.s32.totalorder 1, %s11
      %p121 = scmp.lt.s32.totalorder %s11, 17
      %p122 = pnand %p120, %p121
      %p123 = pneg %p122
      // Predicated region
      $region9: #{generator_forward.5} parent=5 // pred_check
        _
      $region10: #{generator_forward.5} parent=5 // pred_check_branch
        %125 = sbr.rel (%p122) target = $region12
      $region11: #{generator_forward.5} parent=5 // pred_region
        %s126 = ssub.s32 %s11, 1
        // Predicated region
        $region13: #{generator_forward.5} parent=11 // pred_check
          %p127 = pneg %p56
        $region14: #{generator_forward.5} parent=11 // pred_check_branch
          %129 = sbr.rel (%p127) target = $region16
        $region15: #{generator_forward.5} parent=11 // pred_region
          %p130 = scmp.lt.s32.totalorder %s23, 0
          %s131 = scalar_select %p130, %s23, 0
          %s132 = scalar_lea.vmem %s0, %s131
        $region16: #{generator_forward.5} parent=11 // pred_fallthru
          _
      $region12: #{generator_forward.5} parent=5 // pred_fallthru
        _
      %p133 = scmp.lt.s32.totalorder %s11, 16
      // Predicated region
      $region17: #{generator_forward.5} parent=5 // pred_check
        %p134 = pneg %p133
      $region18: #{generator_forward.5} parent=5 // pred_check_branch
        %136 = sbr.rel (%p134) target = $region20
      $region19: #{generator_forward.5} parent=5 // pred_region
        // Predicated region
        $region21: #{generator_forward.5} parent=19 // pred_check
          %p137 = pneg %p80
        $region22: #{generator_forward.5} parent=19 // pred_check_branch
          %139 = sbr.rel (%p137) target = $region24
        $region23: #{generator_forward.5} parent=19 // pred_region
          %s140 = sand.u32 %s70, 1
          %s141 = scalar_lea.sflag [#allocation4], %s140
          %s142 = sand.u32 %s70, 1
          %s143 = smul.addr %s142, 64
          %s144 = scalar_lea.vmem [#allocation3], %s143
          %s145 = smul.u32 16, %s20
          %147 = vsyncadd %s141, 0
          %s148 = sadd.s32 %s18, %s145
          %s149 = smul.addr %s19, 16
          %s150 = sadd.s32 %s148, %s149
          %s151 = smul.addr %s150, 4
          %s152 = scalar_lea.hbm %s1, %s151
          %s153 = sshll.u32 %s152, 4
          %s154 = int_to_ptr.hbm [resolvable:$true] %s153
          %s155 = sshll.u32 %s144, 4
          %s156 = int_to_ptr.vmem [resolvable:$true] %s155
          %161 = dma.hbm_to_vmem [thread:$0]  %s154, 1024, %s156, %s141, 64, 64, 4
        $region24: #{generator_forward.5} parent=19 // pred_fallthru
          _
      $region20: #{generator_forward.5} parent=5 // pred_fallthru
        _
      %p162 = scmp.le.s32.totalorder 1, %s11
      %p163 = scmp.lt.s32.totalorder %s11, 17
      %p164 = pnand %p162, %p163
      %p165 = pneg %p164
      // Predicated region
      $region25: #{generator_forward.5} parent=5 // pred_check
        _
      $region26: #{generator_forward.5} parent=5 // pred_check_branch
        %167 = sbr.rel (%p164) target = $region28
      $region27: #{generator_forward.5} parent=5 // pred_region
        %s168 = ssub.s32 %s11, 1
        %s169 = sand.u32 %s73, 1
        %s170 = scalar_lea.sflag [#allocation4], %s169
        %s171 = sand.u32 %s73, 1
        %s172 = smul.addr %s171, 64
        %s173 = scalar_lea.vmem [#allocation3], %s172
        // Predicated region
        $region29: #{generator_forward.5} parent=27 // pred_check
          %p174 = pneg %p86
        $region30: #{generator_forward.5} parent=27 // pred_check_branch
          %176 = sbr.rel (%p174) target = $region32
        $region31: #{generator_forward.5} parent=27 // pred_region
          %178 = dma.done %s170, 1024
        $region32: #{generator_forward.5} parent=27 // pred_fallthru
          _
        %p179 = scmp.lt.s32.totalorder %s23, 0
        %s180 = scalar_select %p179, %s23, 0
        %s181 = scalar_lea.vmem %s0, %s180
        %p182 = pneg %p56
        %p183 = pneg %p53
        %s184 = sand.u32 %s73, 1
        %s185 = scalar_lea.sflag [#allocation4], %s184
        %s186 = sand.u32 %s73, 1
        %s187 = smul.addr %s186, 64
        %s188 = scalar_lea.vmem [#allocation3], %s187
        %p189 = pneg %p86
        %p190 = pneg %p83
        %p191 = pneg %p112
        %p192 = pneg %p109
        %p193 = scmp.lt.s32.totalorder %s21, 0
        %s194 = scalar_select %p193, %s21, 0
        %s195 = scalar_lea.vmem %s2, %s194
        %p196 = scmp.lt.s32.totalorder %s23, 0
        %s197 = scalar_select %p196, %s23, 0
        %s198 = scalar_lea.vmem %s0, %s197
        %s199 = smul.u32 16, %s23
        %p200 = scmp.lt.s32.totalorder %s21, 0
        %s201 = scalar_select %p200, %s21, 0
        %s202 = scalar_lea.vmem %s2, %s201
        %v203 = vld [vmem:[%s198] sm:$0x1]
        %v204 = vld [vmem:[%s173] sm:$0xf]
        %v205 = vld [vmem:[%s173 + $0x4] sm:$0xf]
        %v206 = vld [vmem:[%s173 + $0x8] sm:$0xf]
        %v207 = vld [vmem:[%s173 + $0xc] sm:$0xf]
        %v208 = vld [vmem:[%s173 + $0x10] sm:$0xf]
        %v209 = vld [vmem:[%s173 + $0x14] sm:$0xf]
        %v210 = vld [vmem:[%s173 + $0x18] sm:$0xf]
        %v211 = vld [vmem:[%s173 + $0x1c] sm:$0xf]
        %v212 = vld [vmem:[%s173 + $0x20] sm:$0xf]
        %v213 = vld [vmem:[%s173 + $0x24] sm:$0xf]
        %v214 = vld [vmem:[%s173 + $0x28] sm:$0xf]
        %v215 = vld [vmem:[%s173 + $0x2c] sm:$0xf]
        %v216 = vld [vmem:[%s173 + $0x30] sm:$0xf]
        %v217 = vld [vmem:[%s173 + $0x34] sm:$0xf]
        %v218 = vld [vmem:[%s173 + $0x38] sm:$0xf]
        %v219 = vld [vmem:[%s173 + $0x3c] sm:$0xf]
        %v236 = vunpack.c.l.b16 %v204
        %v237 = vunpack.c.l.b16 %v205
        %v238 = vunpack.c.l.b16 %v206
        %v239 = vunpack.c.l.b16 %v207
        %v240 = vunpack.c.l.b16 %v208
        %v241 = vunpack.c.l.b16 %v209
        %v242 = vunpack.c.l.b16 %v210
        %v243 = vunpack.c.l.b16 %v211
        %v244 = vunpack.c.l.b16 %v212
        %v245 = vunpack.c.l.b16 %v213
        %v246 = vunpack.c.l.b16 %v214
        %v247 = vunpack.c.l.b16 %v215
        %v248 = vunpack.c.l.b16 %v216
        %v249 = vunpack.c.l.b16 %v217
        %v250 = vunpack.c.l.b16 %v218
        %v251 = vunpack.c.l.b16 %v219
        %v252 = vpack.c.b16 %v237, %v236
        %v253 = vpack.c.b16 %v239, %v238
        %v254 = vpack.c.b16 %v241, %v240
        %v255 = vpack.c.b16 %v243, %v242
        %v256 = vpack.c.b16 %v245, %v244
        %v257 = vpack.c.b16 %v247, %v246
        %v258 = vpack.c.b16 %v249, %v248
        %v259 = vpack.c.b16 %v251, %v250
        %268 = vmatpush.bf16.msra.mxu0 %v259
        %269 = vmatpush.bf16.msra.mxu0 %v258
        %270 = vmatpush.bf16.msra.mxu0 %v257
        %271 = vmatpush.bf16.msra.mxu0 %v256
        %272 = vmatpush.bf16.msra.mxu0 %v255
        %273 = vmatpush.bf16.msra.mxu0 %v254
        %274 = vmatpush.bf16.msra.mxu0 %v253
        %275 = vmatpush.bf16.msra.mxu0 %v252
        %276 = vmatmul.bf16.gmra.mxu0 %v203
        %v277 = vpop.f32.mrf.mxu0
        %v278 = vadd.f32 0.0, %v277
        %v279 = vpop.f32.mrf.mxu0
        %280 = vdwg.mxu0
        %p281 = scmp.eq.s32.totalorder %s23, 0
        // Predicated region
        $region33: #{generator_forward.5} parent=27 // pred_check
          %p282 = pneg %p281
        $region34: #{generator_forward.5} parent=27 // pred_check_branch
          %284 = sbr.rel (%p282) target = $region36
        $region35: #{generator_forward.5} parent=27 // pred_region
          %s285 = smul.u32 %s22, 2
          %s286 = scalar_lea.vmem [#allocation2], %s285
          %287 = vst [vmem:[%s286] sm:$0x3] %v278
        $region36: #{generator_forward.5} parent=27 // pred_fallthru
          _
        %p288 = scmp.gt.s32.totalorder %s23, 0
        // Predicated region
        $region37: #{generator_forward.5} parent=27 // pred_check
          %p289 = pneg %p288
        $region38: #{generator_forward.5} parent=27 // pred_check_branch
          %291 = sbr.rel (%p289) target = $region40
        $region39: #{generator_forward.5} parent=27 // pred_region
          %s292 = smul.u32 %s22, 2
          %s293 = scalar_lea.vmem [#allocation2], %s292
          %v294 = vld [vmem:[%s293] sm:$0x3]
          %v295 = vadd.f32 %v294, %v278
          %296 = vst [vmem:[%s293] sm:$0x3] %v295
        $region40: #{generator_forward.5} parent=27 // pred_fallthru
          _
        %p297 = scmp.eq.s32.totalorder %s22, 15
        %p298 = pnand %p297, %p281
        %p299 = pneg %p298
        // Predicated region
        $region41: #{generator_forward.5} parent=27 // pred_check
          _
        $region42: #{generator_forward.5} parent=27 // pred_check_branch
          %301 = sbr.rel (%p298) target = $region44
        $region43: #{generator_forward.5} parent=27 // pred_region
          %v302 = vld [vmem:[#allocation2] sm:$0x3]
          %v303 = vld [vmem:[#allocation2 + $0x2] sm:$0x3]
          %v304 = vld [vmem:[#allocation2 + $0x4] sm:$0x3]
          %v305 = vld [vmem:[#allocation2 + $0x6] sm:$0x3]
          %v306 = vld [vmem:[#allocation2 + $0x8] sm:$0x3]
          %v307 = vld [vmem:[#allocation2 + $0xa] sm:$0x3]
          %v308 = vld [vmem:[#allocation2 + $0xc] sm:$0x3]
          %v309 = vld [vmem:[#allocation2 + $0xe] sm:$0x3]
          %v310 = vld [vmem:[#allocation2 + $0x10] sm:$0x3]
          %v311 = vld [vmem:[#allocation2 + $0x12] sm:$0x3]
          %v312 = vld [vmem:[#allocation2 + $0x14] sm:$0x3]
          %v313 = vld [vmem:[#allocation2 + $0x16] sm:$0x3]
          %v314 = vld [vmem:[#allocation2 + $0x18] sm:$0x3]
          %v315 = vld [vmem:[#allocation2 + $0x1a] sm:$0x3]
          %v316 = vld [vmem:[#allocation2 + $0x1c] sm:$0x3]
          %v317 = vld [vmem:[#allocation2 + $0x1e] sm:$0x3]
          %vm318 = vcmask 1041408
          %v319 = vsel %vm318, %v302, 0.0
          %v320 = vsel %vm318, %v303, 0.0
          %v321 = vadd.f32 %v319, %v320
          %v322 = vsel %vm318, %v304, 0.0
          %v323 = vadd.f32 %v321, %v322
          %v324 = vsel %vm318, %v305, 0.0
          %v325 = vadd.f32 %v323, %v324
          %v326 = vsel %vm318, %v306, 0.0
          %v327 = vadd.f32 %v325, %v326
          %v328 = vsel %vm318, %v307, 0.0
          %v329 = vadd.f32 %v327, %v328
          %v330 = vsel %vm318, %v308, 0.0
          %v331 = vadd.f32 %v329, %v330
          %v332 = vsel %vm318, %v309, 0.0
          %v333 = vadd.f32 %v331, %v332
          %v334 = vsel %vm318, %v310, 0.0
          %v335 = vadd.f32 %v333, %v334
          %v336 = vsel %vm318, %v311, 0.0
          %v337 = vadd.f32 %v335, %v336
          %v338 = vsel %vm318, %v312, 0.0
          %v339 = vadd.f32 %v337, %v338
          %v340 = vsel %vm318, %v313, 0.0
          %v341 = vadd.f32 %v339, %v340
          %v342 = vsel %vm318, %v314, 0.0
          %v343 = vadd.f32 %v341, %v342
          %v344 = vsel %vm318, %v315, 0.0
          %v345 = vadd.f32 %v343, %v344
          %v346 = vsel %vm318, %v316, 0.0
          %v347 = vadd.f32 %v345, %v346
          %v348 = vsel %vm318, %v317, 0.0
          %v349 = vadd.f32 %v347, %v348
          %v350 = vrot.slane %v349, 4
          %v351 = vadd.f32 %v349, %v350
          %v352 = vrot.slane %v351, 2
          %v353 = vadd.f32 %v351, %v352
          %v354 = vrot.slane %v353, 1
          %v355 = vadd.f32 %v353, %v354
          %v356 = vmul.f32 %v355, 0.03125
          %v357 = vsub.f32 %v302, %v356
          %v358 = vsub.f32 %v303, %v356
          %v359 = vsub.f32 %v304, %v356
          %v360 = vsub.f32 %v305, %v356
          %v361 = vsub.f32 %v306, %v356
          %v362 = vsub.f32 %v307, %v356
          %v363 = vsub.f32 %v308, %v356
          %v364 = vsub.f32 %v309, %v356
          %v365 = vsub.f32 %v310, %v356
          %v366 = vsub.f32 %v311, %v356
          %v367 = vsub.f32 %v312, %v356
          %v368 = vsub.f32 %v313, %v356
          %v369 = vsub.f32 %v314, %v356
          %v370 = vsub.f32 %v315, %v356
          %v371 = vsub.f32 %v316, %v356
          %v372 = vsub.f32 %v317, %v356
          %v373 = vmul.f32 %v357, %v357
          %v374 = vmul.f32 %v358, %v358
          %v375 = vmul.f32 %v359, %v359
          %v376 = vmul.f32 %v360, %v360
          %v377 = vmul.f32 %v361, %v361
          %v378 = vmul.f32 %v362, %v362
          %v379 = vmul.f32 %v363, %v363
          %v380 = vmul.f32 %v364, %v364
          %v381 = vmul.f32 %v365, %v365
          %v382 = vmul.f32 %v366, %v366
          %v383 = vmul.f32 %v367, %v367
          %v384 = vmul.f32 %v368, %v368
          %v385 = vmul.f32 %v369, %v369
          %v386 = vmul.f32 %v370, %v370
          %v387 = vmul.f32 %v371, %v371
          %v388 = vmul.f32 %v372, %v372
          %v389 = vsel %vm318, %v373, 0.0
          %v390 = vsel %vm318, %v374, 0.0
          %v391 = vadd.f32 %v389, %v390
          %v392 = vsel %vm318, %v375, 0.0
          %v393 = vadd.f32 %v391, %v392
          %v394 = vsel %vm318, %v376, 0.0
          %v395 = vadd.f32 %v393, %v394
          %v396 = vsel %vm318, %v377, 0.0
          %v397 = vadd.f32 %v395, %v396
          %v398 = vsel %vm318, %v378, 0.0
          %v399 = vadd.f32 %v397, %v398
          %v400 = vsel %vm318, %v379, 0.0
          %v401 = vadd.f32 %v399, %v400
          %v402 = vsel %vm318, %v380, 0.0
          %v403 = vadd.f32 %v401, %v402
          %v404 = vsel %vm318, %v381, 0.0
          %v405 = vadd.f32 %v403, %v404
          %v406 = vsel %vm318, %v382, 0.0
          %v407 = vadd.f32 %v405, %v406
          %v408 = vsel %vm318, %v383, 0.0
          %v409 = vadd.f32 %v407, %v408
          %v410 = vsel %vm318, %v384, 0.0
          %v411 = vadd.f32 %v409, %v410
          %v412 = vsel %vm318, %v385, 0.0
          %v413 = vadd.f32 %v411, %v412
          %v414 = vsel %vm318, %v386, 0.0
          %v415 = vadd.f32 %v413, %v414
          %v416 = vsel %vm318, %v387, 0.0
          %v417 = vadd.f32 %v415, %v416
          %v418 = vsel %vm318, %v388, 0.0
          %v419 = vadd.f32 %v417, %v418
          %v420 = vrot.slane %v419, 4
          %v421 = vadd.f32 %v419, %v420
          %v422 = vrot.slane %v421, 2
          %v423 = vadd.f32 %v421, %v422
          %v424 = vrot.slane %v423, 1
          %v425 = vadd.f32 %v423, %v424
          %v426 = vmul.f32 %v425, 0.03125
          %v427 = vadd.f32 %v426, 1e-05
          %v428 = vrsqrt.pop %v427
          %v429 = vmul.f32 %v428, %v427
          %v430 = vmul.f32 %v429, %v428
          %v431 = vmul.f32 0.5, %v430
          %v432 = vsub.f32 1.5, %v431
          %v433 = vmul.f32 %v428, %v432
          %vm434 = vweird.f32 %v427
          %vm435 = vweird.f32 %v428
          %vm436 = vmor %vm434, %vm435
          %v437 = vsel %vm436, %v428, %v433
          %v438 = vmul.f32 %v357, %v437
          %v439 = vmul.f32 %v358, %v437
          %v440 = vmul.f32 %v359, %v437
          %v441 = vmul.f32 %v360, %v437
          %v442 = vmul.f32 %v361, %v437
          %v443 = vmul.f32 %v362, %v437
          %v444 = vmul.f32 %v363, %v437
          %v445 = vmul.f32 %v364, %v437
          %v446 = vmul.f32 %v365, %v437
          %v447 = vmul.f32 %v366, %v437
          %v448 = vmul.f32 %v367, %v437
          %v449 = vmul.f32 %v368, %v437
          %v450 = vmul.f32 %v369, %v437
          %v451 = vmul.f32 %v370, %v437
          %v452 = vmul.f32 %v371, %v437
          %v453 = vmul.f32 %v372, %v437
          %v454 = vmax.f32 %v438, 0.0
          %v455 = vmax.f32 %v439, 0.0
          %v456 = vmax.f32 %v440, 0.0
          %v457 = vmax.f32 %v441, 0.0
          %v458 = vmax.f32 %v442, 0.0
          %v459 = vmax.f32 %v443, 0.0
          %v460 = vmax.f32 %v444, 0.0
          %v461 = vmax.f32 %v445, 0.0
          %v462 = vmax.f32 %v446, 0.0
          %v463 = vmax.f32 %v447, 0.0
          %v464 = vmax.f32 %v448, 0.0
          %v465 = vmax.f32 %v449, 0.0
          %v466 = vmax.f32 %v450, 0.0
          %v467 = vmax.f32 %v451, 0.0
          %v468 = vmax.f32 %v452, 0.0
          %v469 = vmax.f32 %v453, 0.0
          %v470 = vpack.c.bf16 %v454, %v454
          %v471 = vpack.c.bf16 %v455, %v455
          %v472 = vpack.c.bf16 %v456, %v456
          %v473 = vpack.c.bf16 %v457, %v457
          %v474 = vpack.c.bf16 %v458, %v458
          %v475 = vpack.c.bf16 %v459, %v459
          %v476 = vpack.c.bf16 %v460, %v460
          %v477 = vpack.c.bf16 %v461, %v461
          %v478 = vpack.c.bf16 %v462, %v462
          %v479 = vpack.c.bf16 %v463, %v463
          %v480 = vpack.c.bf16 %v464, %v464
          %v481 = vpack.c.bf16 %v465, %v465
          %v482 = vpack.c.bf16 %v466, %v466
          %v483 = vpack.c.bf16 %v467, %v467
          %v484 = vpack.c.bf16 %v468, %v468
          %v485 = vpack.c.bf16 %v469, %v469
          %486 = vst [vmem:[%s202] sm:$0x1] %v470
          %487 = vst [vmem:[%s202 + $0x1] sm:$0x1] %v471
          %488 = vst [vmem:[%s202 + $0x2] sm:$0x1] %v472
          %489 = vst [vmem:[%s202 + $0x3] sm:$0x1] %v473
          %490 = vst [vmem:[%s202 + $0x4] sm:$0x1] %v474
          %491 = vst [vmem:[%s202 + $0x5] sm:$0x1] %v475
          %492 = vst [vmem:[%s202 + $0x6] sm:$0x1] %v476
          %493 = vst [vmem:[%s202 + $0x7] sm:$0x1] %v477
          %494 = vst [vmem:[%s202 + $0x8] sm:$0x1] %v478
          %495 = vst [vmem:[%s202 + $0x9] sm:$0x1] %v479
          %496 = vst [vmem:[%s202 + $0xa] sm:$0x1] %v480
          %497 = vst [vmem:[%s202 + $0xb] sm:$0x1] %v481
          %498 = vst [vmem:[%s202 + $0xc] sm:$0x1] %v482
          %499 = vst [vmem:[%s202 + $0xd] sm:$0x1] %v483
          %500 = vst [vmem:[%s202 + $0xe] sm:$0x1] %v484
          %501 = vst [vmem:[%s202 + $0xf] sm:$0x1] %v485
        $region44: #{generator_forward.5} parent=27 // pred_fallthru
          _
        %p502 = scmp.lt.s32.totalorder %s21, 0
        %s503 = scalar_select %p502, %s21, 0
        %s504 = scalar_lea.vmem %s2, %s503
        // Predicated region
        $region45: #{generator_forward.5} parent=27 // pred_check
          %p505 = pneg %p109
        $region46: #{generator_forward.5} parent=27 // pred_check_branch
          %507 = sbr.rel (%p505) target = $region48
        $region47: #{generator_forward.5} parent=27 // pred_region
          _
        $region48: #{generator_forward.5} parent=27 // pred_fallthru
          _
        // Predicated region
        $region49: #{generator_forward.5} parent=27 // pred_check
          %p508 = pneg %p109
        $region50: #{generator_forward.5} parent=27 // pred_check_branch
          %510 = sbr.rel (%p508) target = $region52
        $region51: #{generator_forward.5} parent=27 // pred_region
          %p511 = scmp.lt.s32.totalorder %s21, 0
          %s512 = scalar_select %p511, %s21, 0
          %s513 = scalar_lea.vmem %s2, %s512
        $region52: #{generator_forward.5} parent=27 // pred_fallthru
          _
      $region28: #{generator_forward.5} parent=5 // pred_fallthru
        _
      %p514 = scmp.le.s32.totalorder 2, %s11
      // Predicated region
      $region53: #{generator_forward.5} parent=5 // pred_check
        %p515 = pneg %p514
      $region54: #{generator_forward.5} parent=5 // pred_check_branch
        %517 = sbr.rel (%p515) target = $region56
      $region55: #{generator_forward.5} parent=5 // pred_region
        %s518 = ssub.s32 %s11, 2
      $region56: #{generator_forward.5} parent=5 // pred_fallthru
        _
    $region6: #{generator_forward.5} parent=1 // loop_footer
      %s15 = sadd.s32 1, %s11
    $region7: #{generator_forward.5} parent=1 // loop_footer_branch
      %10 = sbr.rel target = $region3
    $region8: #{generator_forward.5} parent=1 // loop_exit
      _
    %519 = vsyncpa [#allocation4], 1
    %s520 = scalar_lea.sflag [#allocation4], 1
    %521 = vsyncpa %s520, 1

// kernel: generator_forward.6
$region0: #{generator_forward.6}
  #allocation0 [shape = 'u32[]', space=smem, size = 0x4, offset = 0x4, fixed_abs, tag = 'smem constant byte address 0x4 - core index']
  #allocation1 [shape = 'u32[72,128]{1,0:T(1,128)}', space=vmem, size = 0x9000, scoped, tag = 'internal scratch']
  #allocation2 [shape = 'f32[4,32,128]{2,1,0:T(8,128)}', space=vmem, size = 0x10000, scoped, tag = 'scratch operand']
  %s0 = inlined_call_operand.vmem [shape: bf16[4,32,512], index: 0, kind: input, shape index: {}]
  %s1 = inlined_call_operand.hbm [shape: bf16[4,512,128], index: 1, kind: input, shape index: {}]
  %s2 = inlined_call_operand.vmem [shape: bf16[4,32,128], index: 2, kind: output, shape index: {}]
  %s3 = sld [smem:[#allocation0]]
  $region57: #{generator_forward.6} parent=0
    _
  %s5 = ssub.s32 1, %s3
  %s6 = scalar_select 0, %s5, %s3
  $region1: #{generator_forward.6} parent=0
    #allocation3 [shape = 'u8[262144]{0}', space=vmem, size = 0x40000, scoped, tag = 'input window, operand 1']
    #allocation4 [shape = 's32[2]{0}', space=sflag, size = 0x8, scoped, tag = 'scoped memory for generator_forward.6']
    %7 = vsyncpa [#allocation4], 0
    %s8 = scalar_lea.sflag [#allocation4], 1
    %9 = vsyncpa %s8, 0
    loop: start=0, step=1, limit=6
    $region2: #{generator_forward.6} parent=1 // loop_pre_header
      _
    $region3: #{generator_forward.6} parent=1 // loop_header
      %s11 = sphi 0, %s15
      %p12 = scmp.ge.s32.totalorder %s11, 6
      %s18 = sphi 0, %s37
      %s19 = sphi 0, %s33
      %s20 = sphi 0, %s29
      %s21 = sphi 0, %s18
      %s22 = sphi 0, %s19
      %s23 = sphi 0, %s20
      %s24 = sphi 0, %s21
      %s25 = sphi 0, %s22
      %s26 = sphi 0, %s23
      %s42 = sphi 0, %s44
      %s45 = sphi 0, %s42
      %s46 = sphi 0, %s45
      %s62 = sphi 0, %s46
      %s72 = sphi 0, %s74
      %s75 = sphi 0, %s72
      %s76 = sphi 0, %s75
      %s92 = sphi 0, %s76
      %s98 = sphi 0, %s100
      %s101 = sphi 0, %s98
      %s102 = sphi 0, %s101
      %s118 = sphi 0, %s102
    $region4: #{generator_forward.6} parent=1 // loop_header_branch
      %14 = sbr.rel (%p12) target = $region8
    $region5: #{generator_forward.6} parent=1 // loop_body
      %s16 = ssub.s32 %s11, 1
      %s17 = ssub.s32 %s11, 2
      %s27 = sadd.s32 1, %s20
      %p28 = scmp.ge.s32.totalorder %s27, 1
      %s29 = scalar_select %p28, 0, %s27
      %s30 = sadd.s32 1, %s19
      %s31 = scalar_select %p28, %s30, %s19
      %p32 = scmp.ge.s32.totalorder %s31, 4
      %s33 = scalar_select %p32, 0, %s31
      %s34 = sadd.s32 1, %s18
      %s35 = scalar_select %p32, %s34, %s18
      %p36 = scmp.ge.s32.totalorder %s35, 1
      %s37 = scalar_select %p36, 0, %s35
      %s38 = ssub.s32 %s19, %s33
      %s39 = ssub.s32 %s20, %s29
      %s40 = sor.u32 %s38, %s39
      %p41 = scmp.eq.s32.totalorder %s40, 0
      %s43 = sadd.s32 %s42, 1
      %s44 = scalar_select %p41, %s42, %s43
      %p47 = pneg %p41
      %p48 = scmp.eq.s32.totalorder %s11, 3
      %p49 = por %p47, %p48
      %p50 = scmp.ne.s32.totalorder %s42, %s45
      %p51 = scmp.eq.s32.totalorder %s11, 0
      %p52 = por %p50, %p51
      %p53 = scmp.ne.s32.totalorder %s42, %s45
      %p54 = scmp.eq.s32.totalorder %s16, 3
      %p55 = por %p53, %p54
      %p56 = scmp.ne.s32.totalorder %s45, %s46
      %p57 = scmp.eq.s32.totalorder %s16, 0
      %p58 = por %p56, %p57
      %p59 = scmp.ne.s32.totalorder %s45, %s46
      %p60 = scmp.eq.s32.totalorder %s17, 3
      %p61 = por %p59, %p60
      %p63 = scmp.ne.s32.totalorder %s46, %s62
      %p64 = scmp.eq.s32.totalorder %s17, 0
      %p65 = por %p63, %p64
      %s66 = ssub.s32 %s19, %s33
      %s67 = ssub.s32 %s20, %s29
      %s68 = sor.u32 %s66, %s67
      %s69 = ssub.s32 %s18, %s37
      %s70 = sor.u32 %s68, %s69
      %p71 = scmp.eq.s32.totalorder %s70, 0
      %s73 = sadd.s32 %s72, 1
      %s74 = scalar_select %p71, %s72, %s73
      %p77 = pneg %p71
      %p78 = scmp.eq.s32.totalorder %s11, 3
      %p79 = por %p77, %p78
      %p80 = scmp.ne.s32.totalorder %s72, %s75
      %p81 = scmp.eq.s32.totalorder %s11, 0
      %p82 = por %p80, %p81
      %p83 = scmp.ne.s32.totalorder %s72, %s75
      %p84 = scmp.eq.s32.totalorder %s16, 3
      %p85 = por %p83, %p84
      %p86 = scmp.ne.s32.totalorder %s75, %s76
      %p87 = scmp.eq.s32.totalorder %s16, 0
      %p88 = por %p86, %p87
      %p89 = scmp.ne.s32.totalorder %s75, %s76
      %p90 = scmp.eq.s32.totalorder %s17, 3
      %p91 = por %p89, %p90
      %p93 = scmp.ne.s32.totalorder %s76, %s92
      %p94 = scmp.eq.s32.totalorder %s17, 0
      %p95 = por %p93, %p94
      %s96 = ssub.s32 %s18, %s37
      %p97 = scmp.eq.s32.totalorder %s96, 0
      %s99 = sadd.s32 %s98, 1
      %s100 = scalar_select %p97, %s98, %s99
      %p103 = pneg %p97
      %p104 = scmp.eq.s32.totalorder %s11, 3
      %p105 = por %p103, %p104
      %p106 = scmp.ne.s32.totalorder %s98, %s101
      %p107 = scmp.eq.s32.totalorder %s11, 0
      %p108 = por %p106, %p107
      %p109 = scmp.ne.s32.totalorder %s98, %s101
      %p110 = scmp.eq.s32.totalorder %s16, 3
      %p111 = por %p109, %p110
      %p112 = scmp.ne.s32.totalorder %s101, %s102
      %p113 = scmp.eq.s32.totalorder %s16, 0
      %p114 = por %p112, %p113
      %p115 = scmp.ne.s32.totalorder %s101, %s102
      %p116 = scmp.eq.s32.totalorder %s17, 3
      %p117 = por %p115, %p116
      %p119 = scmp.ne.s32.totalorder %s102, %s118
      %p120 = scmp.eq.s32.totalorder %s17, 0
      %p121 = por %p119, %p120
      %p122 = scmp.le.s32.totalorder 1, %s11
      %p123 = scmp.lt.s32.totalorder %s11, 5
      %p124 = pnand %p122, %p123
      %p125 = pneg %p124
      // Predicated region
      $region9: #{generator_forward.6} parent=5 // pred_check
        _
      $region10: #{generator_forward.6} parent=5 // pred_check_branch
        %127 = sbr.rel (%p124) target = $region12
      $region11: #{generator_forward.6} parent=5 // pred_region
        %s128 = ssub.s32 %s11, 1
      $region12: #{generator_forward.6} parent=5 // pred_fallthru
        _
      %p129 = scmp.lt.s32.totalorder %s11, 4
      // Predicated region
      $region13: #{generator_forward.6} parent=5 // pred_check
        %p130 = pneg %p129
      $region14: #{generator_forward.6} parent=5 // pred_check_branch
        %132 = sbr.rel (%p130) target = $region16
      $region15: #{generator_forward.6} parent=5 // pred_region
        // Predicated region
        $region17: #{generator_forward.6} parent=15 // pred_check
          %p133 = pneg %p52
        $region18: #{generator_forward.6} parent=15 // pred_check_branch
          %135 = sbr.rel (%p133) target = $region20
        $region19: #{generator_forward.6} parent=15 // pred_region
          %s136 = smul.u32 4, %s20
          %p137 = scmp.lt.s32.totalorder %s19, 3
          %s138 = scalar_select %p137, %s19, 3
          %p139 = scmp.lt.s32.totalorder %s136, 3
          %s140 = scalar_select %p139, %s136, 3
          %s141 = smul.addr %s138, 16
          %s142 = sadd.s32 %s140, %s141
          %s143 = smul.addr %s142, 4
          %s144 = scalar_lea.vmem %s0, %s143
          %s145 = smul.u32 4, %s20
        $region20: #{generator_forward.6} parent=15 // pred_fallthru
          _
        // Predicated region
        $region21: #{generator_forward.6} parent=15 // pred_check
          %p146 = pneg %p82
        $region22: #{generator_forward.6} parent=15 // pred_check_branch
          %148 = sbr.rel (%p146) target = $region24
        $region23: #{generator_forward.6} parent=15 // pred_region
          %s149 = sand.u32 %s72, 1
          %s150 = scalar_lea.sflag [#allocation4], %s149
          %s151 = sand.u32 %s72, 1
          %s152 = smul.addr %s151, 256
          %s153 = scalar_lea.vmem [#allocation3], %s152
          %s154 = smul.u32 64, %s20
          %156 = vsyncadd %s150, 0
          %s157 = sadd.s32 %s18, %s154
          %s158 = smul.addr %s19, 64
          %s159 = sadd.s32 %s157, %s158
          %s160 = smul.addr %s159, 4
          %s161 = scalar_lea.hbm %s1, %s160
          %s162 = sshll.u32 %s161, 4
          %s163 = int_to_ptr.hbm [resolvable:$true] %s162
          %s164 = sshll.u32 %s153, 4
          %s165 = int_to_ptr.vmem [resolvable:$true] %s164
          %170 = dma.hbm_to_vmem [thread:$0]  %s163, 4096, %s165, %s150, 64, 64, 4
        $region24: #{generator_forward.6} parent=15 // pred_fallthru
          _
      $region16: #{generator_forward.6} parent=5 // pred_fallthru
        _
      %p171 = scmp.le.s32.totalorder 1, %s11
      %p172 = scmp.lt.s32.totalorder %s11, 5
      %p173 = pnand %p171, %p172
      %p174 = pneg %p173
      // Predicated region
      $region25: #{generator_forward.6} parent=5 // pred_check
        _
      $region26: #{generator_forward.6} parent=5 // pred_check_branch
        %176 = sbr.rel (%p173) target = $region28
      $region27: #{generator_forward.6} parent=5 // pred_region
        %s177 = ssub.s32 %s11, 1
        %s178 = sand.u32 %s75, 1
        %s179 = scalar_lea.sflag [#allocation4], %s178
        %s180 = sand.u32 %s75, 1
        %s181 = smul.addr %s180, 256
        %s182 = scalar_lea.vmem [#allocation3], %s181
        // Predicated region
        $region29: #{generator_forward.6} parent=27 // pred_check
          %p183 = pneg %p88
        $region30: #{generator_forward.6} parent=27 // pred_check_branch
          %185 = sbr.rel (%p183) target = $region32
        $region31: #{generator_forward.6} parent=27 // pred_region
          %187 = dma.done %s179, 4096
        $region32: #{generator_forward.6} parent=27 // pred_fallthru
          _
        %s188 = smul.u32 4, %s23
        %p189 = scmp.lt.s32.totalorder %s22, 3
        %s190 = scalar_select %p189, %s22, 3
        %p191 = scmp.lt.s32.totalorder %s188, 3
        %s192 = scalar_select %p191, %s188, 3
        %s193 = smul.addr %s190, 16
        %s194 = sadd.s32 %s192, %s193
        %s195 = smul.addr %s194, 4
        %s196 = scalar_lea.vmem %s0, %s195
        %p197 = pneg %p58
        %p198 = pneg %p55
        %s199 = sand.u32 %s75, 1
        %s200 = scalar_lea.sflag [#allocation4], %s199
        %s201 = sand.u32 %s75, 1
        %s202 = smul.addr %s201, 256
        %s203 = scalar_lea.vmem [#allocation3], %s202
        %p204 = pneg %p88
        %p205 = pneg %p85
        %p206 = pneg %p114
        %p207 = pneg %p111
        %p208 = scmp.lt.s32.totalorder %s21, 0
        %s209 = scalar_select %p208, %s21, 0
        %s210 = smul.addr %s209, 4
        %s211 = scalar_lea.vmem %s2, %s210
        %s212 = smul.u32 4, %s23
        %p213 = scmp.lt.s32.totalorder %s22, 3
        %s214 = scalar_select %p213, %s22, 3
        %p215 = scmp.lt.s32.totalorder %s212, 3
        %s216 = scalar_select %p215, %s212, 3
        %s217 = smul.addr %s214, 16
        %s218 = sadd.s32 %s216, %s217
        %s219 = smul.addr %s218, 4
        %s220 = scalar_lea.vmem %s0, %s219
        %s221 = smul.u32 4, %s23
        %s222 = smul.u32 64, %s23
        %p223 = scmp.lt.s32.totalorder %s21, 0
        %s224 = scalar_select %p223, %s21, 0
        %s225 = smul.addr %s224, 4
        %s226 = scalar_lea.vmem %s2, %s225
        %v227 = vld [vmem:[%s220] sm:$0xff]
        %v228 = vld [vmem:[%s220 + $0x8] sm:$0xff]
        %v229 = vld [vmem:[%s220 + $0x10] sm:$0xff]
        %v230 = vld [vmem:[%s220 + $0x18] sm:$0xff]
        %v231 = vld [vmem:[%s220 + $0x20] sm:$0xff]
        %v232 = vld [vmem:[%s220 + $0x28] sm:$0xff]
        %v233 = vld [vmem:[%s220 + $0x30] sm:$0xff]
        %v234 = vld [vmem:[%s220 + $0x38] sm:$0xff]
        %v235 = vld [vmem:[%s182] sm:$0xf]
        %v236 = vld [vmem:[%s182 + $0x4] sm:$0xf]
        %v237 = vld [vmem:[%s182 + $0x8] sm:$0xf]
        %v238 = vld [vmem:[%s182 + $0xc] sm:$0xf]
        %v239 = vld [vmem:[%s182 + $0x10] sm:$0xf]
        %v240 = vld [vmem:[%s182 + $0x14] sm:$0xf]
        %v241 = vld [vmem:[%s182 + $0x18] sm:$0xf]
        %v242 = vld [vmem:[%s182 + $0x1c] sm:$0xf]
        %v243 = vld [vmem:[%s182 + $0x20] sm:$0xf]
        %v244 = vld [vmem:[%s182 + $0x24] sm:$0xf]
        %v245 = vld [vmem:[%s182 + $0x28] sm:$0xf]
        %v246 = vld [vmem:[%s182 + $0x2c] sm:$0xf]
        %v247 = vld [vmem:[%s182 + $0x30] sm:$0xf]
        %v248 = vld [vmem:[%s182 + $0x34] sm:$0xf]
        %v249 = vld [vmem:[%s182 + $0x38] sm:$0xf]
        %v250 = vld [vmem:[%s182 + $0x3c] sm:$0xf]
        %v251 = vld [vmem:[%s182 + $0x40] sm:$0xf]
        %v252 = vld [vmem:[%s182 + $0x44] sm:$0xf]
        %v253 = vld [vmem:[%s182 + $0x48] sm:$0xf]
        %v254 = vld [vmem:[%s182 + $0x4c] sm:$0xf]
        %v255 = vld [vmem:[%s182 + $0x50] sm:$0xf]
        %v256 = vld [vmem:[%s182 + $0x54] sm:$0xf]
        %v257 = vld [vmem:[%s182 + $0x58] sm:$0xf]
        %v258 = vld [vmem:[%s182 + $0x5c] sm:$0xf]
        %v259 = vld [vmem:[%s182 + $0x60] sm:$0xf]
        %v260 = vld [vmem:[%s182 + $0x64] sm:$0xf]
        %v261 = vld [vmem:[%s182 + $0x68] sm:$0xf]
        %v262 = vld [vmem:[%s182 + $0x6c] sm:$0xf]
        %v263 = vld [vmem:[%s182 + $0x70] sm:$0xf]
        %v264 = vld [vmem:[%s182 + $0x74] sm:$0xf]
        %v265 = vld [vmem:[%s182 + $0x78] sm:$0xf]
        %v266 = vld [vmem:[%s182 + $0x7c] sm:$0xf]
        %v267 = vld [vmem:[%s182 + $0x80] sm:$0xf]
        %v268 = vld [vmem:[%s182 + $0x84] sm:$0xf]
        %v269 = vld [vmem:[%s182 + $0x88] sm:$0xf]
        %v270 = vld [vmem:[%s182 + $0x8c] sm:$0xf]
        %v271 = vld [vmem:[%s182 + $0x90] sm:$0xf]
        %v272 = vld [vmem:[%s182 + $0x94] sm:$0xf]
        %v273 = vld [vmem:[%s182 + $0x98] sm:$0xf]
        %v274 = vld [vmem:[%s182 + $0x9c] sm:$0xf]
        %v275 = vld [vmem:[%s182 + $0xa0] sm:$0xf]
        %v276 = vld [vmem:[%s182 + $0xa4] sm:$0xf]
        %v277 = vld [vmem:[%s182 + $0xa8] sm:$0xf]
        %v278 = vld [vmem:[%s182 + $0xac] sm:$0xf]
        %v279 = vld [vmem:[%s182 + $0xb0] sm:$0xf]
        %v280 = vld [vmem:[%s182 + $0xb4] sm:$0xf]
        %v281 = vld [vmem:[%s182 + $0xb8] sm:$0xf]
        %v282 = vld [vmem:[%s182 + $0xbc] sm:$0xf]
        %v283 = vld [vmem:[%s182 + $0xc0] sm:$0xf]
        %v284 = vld [vmem:[%s182 + $0xc4] sm:$0xf]
        %v285 = vld [vmem:[%s182 + $0xc8] sm:$0xf]
        %v286 = vld [vmem:[%s182 + $0xcc] sm:$0xf]
        %v287 = vld [vmem:[%s182 + $0xd0] sm:$0xf]
        %v288 = vld [vmem:[%s182 + $0xd4] sm:$0xf]
        %v289 = vld [vmem:[%s182 + $0xd8] sm:$0xf]
        %v290 = vld [vmem:[%s182 + $0xdc] sm:$0xf]
        %v291 = vld [vmem:[%s182 + $0xe0] sm:$0xf]
        %v292 = vld [vmem:[%s182 + $0xe4] sm:$0xf]
        %v293 = vld [vmem:[%s182 + $0xe8] sm:$0xf]
        %v294 = vld [vmem:[%s182 + $0xec] sm:$0xf]
        %v295 = vld [vmem:[%s182 + $0xf0] sm:$0xf]
        %v296 = vld [vmem:[%s182 + $0xf4] sm:$0xf]
        %v297 = vld [vmem:[%s182 + $0xf8] sm:$0xf]
        %v298 = vld [vmem:[%s182 + $0xfc] sm:$0xf]
        %v307 = vunpack.c.l.b16 %v227
        %v308 = vunpack.c.h.b16 %v227
        %v309 = vunpack.c.l.b16 %v228
        %v310 = vunpack.c.h.b16 %v228
        %v311 = vunpack.c.l.b16 %v229
        %v312 = vunpack.c.h.b16 %v229
        %v313 = vunpack.c.l.b16 %v230
        %v314 = vunpack.c.h.b16 %v230
        %v315 = vunpack.c.l.b16 %v231
        %v316 = vunpack.c.h.b16 %v231
        %v317 = vunpack.c.l.b16 %v232
        %v318 = vunpack.c.h.b16 %v232
        %v319 = vunpack.c.l.b16 %v233
        %v320 = vunpack.c.h.b16 %v233
        %v321 = vunpack.c.l.b16 %v234
        %v322 = vunpack.c.h.b16 %v234
        %v323 = vpack.c.b16 %v311, %v307
        %v324 = vpack.c.b16 %v312, %v308
        %v325 = vpack.c.b16 %v313, %v309
        %v326 = vpack.c.b16 %v314, %v310
        %v327 = vpack.c.b16 %v319, %v315
        %v328 = vpack.c.b16 %v320, %v316
        %v329 = vpack.c.b16 %v321, %v317
        %v330 = vpack.c.b16 %v322, %v318
        %v403 = vunpack.c.l.b16 %v235
        %v404 = vunpack.c.l.b16 %v236
        %v405 = vunpack.c.l.b16 %v237
        %v406 = vunpack.c.l.b16 %v238
        %v407 = vunpack.c.l.b16 %v239
        %v408 = vunpack.c.l.b16 %v240
        %v409 = vunpack.c.l.b16 %v241
        %v410 = vunpack.c.l.b16 %v242
        %v411 = vunpack.c.l.b16 %v243
        %v412 = vunpack.c.l.b16 %v244
        %v413 = vunpack.c.l.b16 %v245
        %v414 = vunpack.c.l.b16 %v246
        %v415 = vunpack.c.l.b16 %v247
        %v416 = vunpack.c.l.b16 %v248
        %v417 = vunpack.c.l.b16 %v249
        %v418 = vunpack.c.l.b16 %v250
        %v419 = vunpack.c.l.b16 %v251
        %v420 = vunpack.c.l.b16 %v252
        %v421 = vunpack.c.l.b16 %v253
        %v422 = vunpack.c.l.b16 %v254
        %v423 = vunpack.c.l.b16 %v255
        %v424 = vunpack.c.l.b16 %v256
        %v425 = vunpack.c.l.b16 %v257
        %v426 = vunpack.c.l.b16 %v258
        %v427 = vunpack.c.l.b16 %v259
        %v428 = vunpack.c.l.b16 %v260
        %v429 = vunpack.c.l.b16 %v261
        %v430 = vunpack.c.l.b16 %v262
        %v431 = vunpack.c.l.b16 %v263
        %v432 = vunpack.c.l.b16 %v264
        %v433 = vunpack.c.l.b16 %v265
        %v434 = vunpack.c.l.b16 %v266
        %v435 = vunpack.c.l.b16 %v267
        %v436 = vunpack.c.l.b16 %v268
        %v437 = vunpack.c.l.b16 %v269
        %v438 = vunpack.c.l.b16 %v270
        %v439 = vunpack.c.l.b16 %v271
        %v440 = vunpack.c.l.b16 %v272
        %v441 = vunpack.c.l.b16 %v273
        %v442 = vunpack.c.l.b16 %v274
        %v443 = vunpack.c.l.b16 %v275
        %v444 = vunpack.c.l.b16 %v276
        %v445 = vunpack.c.l.b16 %v277
        %v446 = vunpack.c.l.b16 %v278
        %v447 = vunpack.c.l.b16 %v279
        %v448 = vunpack.c.l.b16 %v280
        %v449 = vunpack.c.l.b16 %v281
        %v450 = vunpack.c.l.b16 %v282
        %v451 = vunpack.c.l.b16 %v283
        %v452 = vunpack.c.l.b16 %v284
        %v453 = vunpack.c.l.b16 %v285
        %v454 = vunpack.c.l.b16 %v286
        %v455 = vunpack.c.l.b16 %v287
        %v456 = vunpack.c.l.b16 %v288
        %v457 = vunpack.c.l.b16 %v289
        %v458 = vunpack.c.l.b16 %v290
        %v459 = vunpack.c.l.b16 %v291
        %v460 = vunpack.c.l.b16 %v292
        %v461 = vunpack.c.l.b16 %v293
        %v462 = vunpack.c.l.b16 %v294
        %v463 = vunpack.c.l.b16 %v295
        %v464 = vunpack.c.l.b16 %v296
        %v465 = vunpack.c.l.b16 %v297
        %v466 = vunpack.c.l.b16 %v298
        %v467 = vpack.c.b16 %v404, %v403
        %v468 = vpack.c.b16 %v406, %v405
        %v469 = vpack.c.b16 %v408, %v407
        %v470 = vpack.c.b16 %v410, %v409
        %v471 = vpack.c.b16 %v412, %v411
        %v472 = vpack.c.b16 %v414, %v413
        %v473 = vpack.c.b16 %v416, %v415
        %v474 = vpack.c.b16 %v418, %v417
        %v475 = vpack.c.b16 %v420, %v419
        %v476 = vpack.c.b16 %v422, %v421
        %v477 = vpack.c.b16 %v424, %v423
        %v478 = vpack.c.b16 %v426, %v425
        %v479 = vpack.c.b16 %v428, %v427
        %v480 = vpack.c.b16 %v430, %v429
        %v481 = vpack.c.b16 %v432, %v431
        %v482 = vpack.c.b16 %v434, %v433
        %v483 = vpack.c.b16 %v436, %v435
        %v484 = vpack.c.b16 %v438, %v437
        %v485 = vpack.c.b16 %v440, %v439
        %v486 = vpack.c.b16 %v442, %v441
        %v487 = vpack.c.b16 %v444, %v443
        %v488 = vpack.c.b16 %v446, %v445
        %v489 = vpack.c.b16 %v448, %v447
        %v490 = vpack.c.b16 %v450, %v449
        %v491 = vpack.c.b16 %v452, %v451
        %v492 = vpack.c.b16 %v454, %v453
        %v493 = vpack.c.b16 %v456, %v455
        %v494 = vpack.c.b16 %v458, %v457
        %v495 = vpack.c.b16 %v460, %v459
        %v496 = vpack.c.b16 %v462, %v461
        %v497 = vpack.c.b16 %v464, %v463
        %v498 = vpack.c.b16 %v466, %v465
        %531 = vmatpush.bf16.msra.mxu0 %v474
        %532 = vmatpush.bf16.msra.mxu0 %v473
        %533 = vmatpush.bf16.msra.mxu0 %v472
        %534 = vmatpush.bf16.msra.mxu0 %v471
        %535 = vmatpush.bf16.msra.mxu0 %v470
        %536 = vmatpush.bf16.msra.mxu0 %v469
        %537 = vmatpush.bf16.msra.mxu0 %v468
        %538 = vmatpush.bf16.msra.mxu0 %v467
        %539 = vmatmul.bf16.gmra.mxu0 %v323
        %v540 = vpop.f32.mrf.mxu0
        %v541 = vadd.f32 0.0, %v540
        %v542 = vpop.f32.mrf.mxu0
        %v543 = vadd.f32 0.0, %v542
        %544 = vmatmul.bf16.gmra.mxu0 %v327
        %v545 = vpop.f32.mrf.mxu0
        %v546 = vadd.f32 0.0, %v545
        %v547 = vpop.f32.mrf.mxu0
        %v548 = vadd.f32 0.0, %v547
        %549 = vdwg.mxu0
        %550 = vmatpush.bf16.msra.mxu0 %v482
        %551 = vmatpush.bf16.msra.mxu0 %v481
        %552 = vmatpush.bf16.msra.mxu0 %v480
        %553 = vmatpush.bf16.msra.mxu0 %v479
        %554 = vmatpush.bf16.msra.mxu0 %v478
        %555 = vmatpush.bf16.msra.mxu0 %v477
        %556 = vmatpush.bf16.msra.mxu0 %v476
        %557 = vmatpush.bf16.msra.mxu0 %v475
        %558 = vmatmul.bf16.gmra.mxu0 %v324
        %v559 = vpop.f32.mrf.mxu0
        %v560 = vadd.f32 %v541, %v559
        %v561 = vpop.f32.mrf.mxu0
        %v562 = vadd.f32 %v543, %v561
        %563 = vmatmul.bf16.gmra.mxu0 %v328
        %v564 = vpop.f32.mrf.mxu0
        %v565 = vadd.f32 %v546, %v564
        %v566 = vpop.f32.mrf.mxu0
        %v567 = vadd.f32 %v548, %v566
        %568 = vdwg.mxu0
        %569 = vmatpush.bf16.msra.mxu0 %v490
        %570 = vmatpush.bf16.msra.mxu0 %v489
        %571 = vmatpush.bf16.msra.mxu0 %v488
        %572 = vmatpush.bf16.msra.mxu0 %v487
        %573 = vmatpush.bf16.msra.mxu0 %v486
        %574 = vmatpush.bf16.msra.mxu0 %v485
        %575 = vmatpush.bf16.msra.mxu0 %v484
        %576 = vmatpush.bf16.msra.mxu0 %v483
        %577 = vmatmul.bf16.gmra.mxu0 %v325
        %v578 = vpop.f32.mrf.mxu0
        %v579 = vadd.f32 %v560, %v578
        %v580 = vpop.f32.mrf.mxu0
        %v581 = vadd.f32 %v562, %v580
        %582 = vmatmul.bf16.gmra.mxu0 %v329
        %v583 = vpop.f32.mrf.mxu0
        %v584 = vadd.f32 %v565, %v583
        %v585 = vpop.f32.mrf.mxu0
        %v586 = vadd.f32 %v567, %v585
        %587 = vdwg.mxu0
        %588 = vmatpush.bf16.msra.mxu0 %v498
        %589 = vmatpush.bf16.msra.mxu0 %v497
        %590 = vmatpush.bf16.msra.mxu0 %v496
        %591 = vmatpush.bf16.msra.mxu0 %v495
        %592 = vmatpush.bf16.msra.mxu0 %v494
        %593 = vmatpush.bf16.msra.mxu0 %v493
        %594 = vmatpush.bf16.msra.mxu0 %v492
        %595 = vmatpush.bf16.msra.mxu0 %v491
        %596 = vmatmul.bf16.gmra.mxu0 %v326
        %v597 = vpop.f32.mrf.mxu0
        %v598 = vadd.f32 %v579, %v597
        %v599 = vpop.f32.mrf.mxu0
        %v600 = vadd.f32 %v581, %v599
        %601 = vmatmul.bf16.gmra.mxu0 %v330
        %v602 = vpop.f32.mrf.mxu0
        %v603 = vadd.f32 %v584, %v602
        %v604 = vpop.f32.mrf.mxu0
        %v605 = vadd.f32 %v586, %v604
        %606 = vdwg.mxu0
        %p607 = scmp.eq.s32.totalorder %s23, 0
        // Predicated region
        $region33: #{generator_forward.6} parent=27 // pred_check
          %p608 = pneg %p607
        $region34: #{generator_forward.6} parent=27 // pred_check_branch
          %610 = sbr.rel (%p608) target = $region36
        $region35: #{generator_forward.6} parent=27 // pred_region
          %s611 = smul.u32 %s22, 32
          %s612 = scalar_lea.vmem [#allocation2], %s611
          %613 = vst [vmem:[%s612] sm:$0xff] %v598
          %614 = vst [vmem:[%s612 + $0x8] sm:$0xff] %v600
          %615 = vst [vmem:[%s612 + $0x10] sm:$0xff] %v603
          %616 = vst [vmem:[%s612 + $0x18] sm:$0xff] %v605
        $region36: #{generator_forward.6} parent=27 // pred_fallthru
          _
        %p617 = scmp.gt.s32.totalorder %s23, 0
        // Predicated region
        $region37: #{generator_forward.6} parent=27 // pred_check
          %p618 = pneg %p617
        $region38: #{generator_forward.6} parent=27 // pred_check_branch
          %620 = sbr.rel (%p618) target = $region40
        $region39: #{generator_forward.6} parent=27 // pred_region
          %s621 = smul.u32 %s22, 32
          %s622 = scalar_lea.vmem [#allocation2], %s621
          %v623 = vld [vmem:[%s622] sm:$0xff]
          %v624 = vld [vmem:[%s622 + $0x8] sm:$0xff]
          %v625 = vld [vmem:[%s622 + $0x10] sm:$0xff]
          %v626 = vld [vmem:[%s622 + $0x18] sm:$0xff]
          %v627 = vadd.f32 %v623, %v598
          %v628 = vadd.f32 %v624, %v600
          %v629 = vadd.f32 %v625, %v603
          %v630 = vadd.f32 %v626, %v605
          %631 = vst [vmem:[%s622] sm:$0xff] %v627
          %632 = vst [vmem:[%s622 + $0x8] sm:$0xff] %v628
          %633 = vst [vmem:[%s622 + $0x10] sm:$0xff] %v629
          %634 = vst [vmem:[%s622 + $0x18] sm:$0xff] %v630
        $region40: #{generator_forward.6} parent=27 // pred_fallthru
          _
        %p635 = scmp.eq.s32.totalorder %s22, 3
        %p636 = pnand %p635, %p607
        %p637 = pneg %p636
        // Predicated region
        $region41: #{generator_forward.6} parent=27 // pred_check
          _
        $region42: #{generator_forward.6} parent=27 // pred_check_branch
          %639 = sbr.rel (%p636) target = $region44
        $region43: #{generator_forward.6} parent=27 // pred_region
          %v640 = vld [vmem:[#allocation2] sm:$0xff]
          %v641 = vld [vmem:[#allocation2 + $0x8] sm:$0xff]
          %v642 = vld [vmem:[#allocation2 + $0x10] sm:$0xff]
          %v643 = vld [vmem:[#allocation2 + $0x18] sm:$0xff]
          %v644 = vld [vmem:[#allocation2 + $0x20] sm:$0xff]
          %v645 = vld [vmem:[#allocation2 + $0x28] sm:$0xff]
          %v646 = vld [vmem:[#allocation2 + $0x30] sm:$0xff]
          %v647 = vld [vmem:[#allocation2 + $0x38] sm:$0xff]
          %v648 = vld [vmem:[#allocation2 + $0x40] sm:$0xff]
          %v649 = vld [vmem:[#allocation2 + $0x48] sm:$0xff]
          %v650 = vld [vmem:[#allocation2 + $0x50] sm:$0xff]
          %v651 = vld [vmem:[#allocation2 + $0x58] sm:$0xff]
          %v652 = vld [vmem:[#allocation2 + $0x60] sm:$0xff]
          %v653 = vld [vmem:[#allocation2 + $0x68] sm:$0xff]
          %v654 = vld [vmem:[#allocation2 + $0x70] sm:$0xff]
          %v655 = vld [vmem:[#allocation2 + $0x78] sm:$0xff]
          %v656 = vadd.f32 %v640, %v641
          %v657 = vadd.f32 %v656, %v642
          %v658 = vadd.f32 %v657, %v643
          %v659 = vadd.f32 %v658, %v644
          %v660 = vadd.f32 %v659, %v645
          %v661 = vadd.f32 %v660, %v646
          %v662 = vadd.f32 %v661, %v647
          %v663 = vadd.f32 %v662, %v648
          %v664 = vadd.f32 %v663, %v649
          %v665 = vadd.f32 %v664, %v650
          %v666 = vadd.f32 %v665, %v651
          %v667 = vadd.f32 %v666, %v652
          %v668 = vadd.f32 %v667, %v653
          %v669 = vadd.f32 %v668, %v654
          %v670 = vadd.f32 %v669, %v655
          %v671 = vrot.slane %v670, 4
          %v672 = vadd.f32 %v670, %v671
          %v673 = vrot.slane %v672, 2
          %v674 = vadd.f32 %v672, %v673
          %v675 = vrot.slane %v674, 1
          %v676 = vadd.f32 %v674, %v675
          %v677 = vmul.f32 %v676, 0.0078125
          %v678 = vsub.f32 %v640, %v677
          %v679 = vsub.f32 %v641, %v677
          %v680 = vsub.f32 %v642, %v677
          %v681 = vsub.f32 %v643, %v677
          %v682 = vsub.f32 %v644, %v677
          %v683 = vsub.f32 %v645, %v677
          %v684 = vsub.f32 %v646, %v677
          %v685 = vsub.f32 %v647, %v677
          %v686 = vsub.f32 %v648, %v677
          %v687 = vsub.f32 %v649, %v677
          %v688 = vsub.f32 %v650, %v677
          %v689 = vsub.f32 %v651, %v677
          %v690 = vsub.f32 %v652, %v677
          %v691 = vsub.f32 %v653, %v677
          %v692 = vsub.f32 %v654, %v677
          %v693 = vsub.f32 %v655, %v677
          %v694 = vmul.f32 %v678, %v678
          %v695 = vmul.f32 %v679, %v679
          %v696 = vmul.f32 %v680, %v680
          %v697 = vmul.f32 %v681, %v681
          %v698 = vmul.f32 %v682, %v682
          %v699 = vmul.f32 %v683, %v683
          %v700 = vmul.f32 %v684, %v684
          %v701 = vmul.f32 %v685, %v685
          %v702 = vmul.f32 %v686, %v686
          %v703 = vmul.f32 %v687, %v687
          %v704 = vmul.f32 %v688, %v688
          %v705 = vmul.f32 %v689, %v689
          %v706 = vmul.f32 %v690, %v690
          %v707 = vmul.f32 %v691, %v691
          %v708 = vmul.f32 %v692, %v692
          %v709 = vmul.f32 %v693, %v693
          %v710 = vadd.f32 %v694, %v695
          %v711 = vadd.f32 %v710, %v696
          %v712 = vadd.f32 %v711, %v697
          %v713 = vadd.f32 %v712, %v698
          %v714 = vadd.f32 %v713, %v699
          %v715 = vadd.f32 %v714, %v700
          %v716 = vadd.f32 %v715, %v701
          %v717 = vadd.f32 %v716, %v702
          %v718 = vadd.f32 %v717, %v703
          %v719 = vadd.f32 %v718, %v704
          %v720 = vadd.f32 %v719, %v705
          %v721 = vadd.f32 %v720, %v706
          %v722 = vadd.f32 %v721, %v707
          %v723 = vadd.f32 %v722, %v708
          %v724 = vadd.f32 %v723, %v709
          %v725 = vrot.slane %v724, 4
          %v726 = vadd.f32 %v724, %v725
          %v727 = vrot.slane %v726, 2
          %v728 = vadd.f32 %v726, %v727
          %v729 = vrot.slane %v728, 1
          %v730 = vadd.f32 %v728, %v729
          %v731 = vmul.f32 %v730, 0.0078125
          %v732 = vadd.f32 %v731, 1e-05
          %v733 = vrsqrt.pop %v732
          %v734 = vmul.f32 %v733, %v732
          %v735 = vmul.f32 %v734, %v733
          %v736 = vmul.f32 0.5, %v735
          %v737 = vsub.f32 1.5, %v736
          %v738 = vmul.f32 %v733, %v737
          %vm739 = vweird.f32 %v732
          %vm740 = vweird.f32 %v733
          %vm741 = vmor %vm739, %vm740
          %v742 = vsel %vm741, %v733, %v738
          %v743 = vmul.f32 %v678, %v742
          %v744 = vmul.f32 %v679, %v742
          %v745 = vmul.f32 %v680, %v742
          %v746 = vmul.f32 %v681, %v742
          %v747 = vmul.f32 %v682, %v742
          %v748 = vmul.f32 %v683, %v742
          %v749 = vmul.f32 %v684, %v742
          %v750 = vmul.f32 %v685, %v742
          %v751 = vmul.f32 %v686, %v742
          %v752 = vmul.f32 %v687, %v742
          %v753 = vmul.f32 %v688, %v742
          %v754 = vmul.f32 %v689, %v742
          %v755 = vmul.f32 %v690, %v742
          %v756 = vmul.f32 %v691, %v742
          %v757 = vmul.f32 %v692, %v742
          %v758 = vmul.f32 %v693, %v742
          %v759 = vmax.f32 %v743, 0.0
          %v760 = vmax.f32 %v744, 0.0
          %v761 = vmax.f32 %v745, 0.0
          %v762 = vmax.f32 %v746, 0.0
          %v763 = vmax.f32 %v747, 0.0
          %v764 = vmax.f32 %v748, 0.0
          %v765 = vmax.f32 %v749, 0.0
          %v766 = vmax.f32 %v750, 0.0
          %v767 = vmax.f32 %v751, 0.0
          %v768 = vmax.f32 %v752, 0.0
          %v769 = vmax.f32 %v753, 0.0
          %v770 = vmax.f32 %v754, 0.0
          %v771 = vmax.f32 %v755, 0.0
          %v772 = vmax.f32 %v756, 0.0
          %v773 = vmax.f32 %v757, 0.0
          %v774 = vmax.f32 %v758, 0.0
          %v775 = vpack.c.bf16 %v759, %v759
          %v776 = vpack.c.bf16 %v760, %v760
          %v777 = vpack.c.bf16 %v761, %v761
          %v778 = vpack.c.bf16 %v762, %v762
          %v779 = vpack.c.bf16 %v763, %v763
          %v780 = vpack.c.bf16 %v764, %v764
          %v781 = vpack.c.bf16 %v765, %v765
          %v782 = vpack.c.bf16 %v766, %v766
          %v783 = vpack.c.bf16 %v767, %v767
          %v784 = vpack.c.bf16 %v768, %v768
          %v785 = vpack.c.bf16 %v769, %v769
          %v786 = vpack.c.bf16 %v770, %v770
          %v787 = vpack.c.bf16 %v771, %v771
          %v788 = vpack.c.bf16 %v772, %v772
          %v789 = vpack.c.bf16 %v773, %v773
          %v790 = vpack.c.bf16 %v774, %v774
          %791 = vst [vmem:[%s226] sm:$0xf] %v775
          %792 = vst [vmem:[%s226 + $0x4] sm:$0xf] %v776
          %793 = vst [vmem:[%s226 + $0x8] sm:$0xf] %v777
          %794 = vst [vmem:[%s226 + $0xc] sm:$0xf] %v778
          %795 = vst [vmem:[%s226 + $0x10] sm:$0xf] %v779
          %796 = vst [vmem:[%s226 + $0x14] sm:$0xf] %v780
          %797 = vst [vmem:[%s226 + $0x18] sm:$0xf] %v781
          %798 = vst [vmem:[%s226 + $0x1c] sm:$0xf] %v782
          %799 = vst [vmem:[%s226 + $0x20] sm:$0xf] %v783
          %800 = vst [vmem:[%s226 + $0x24] sm:$0xf] %v784
          %801 = vst [vmem:[%s226 + $0x28] sm:$0xf] %v785
          %802 = vst [vmem:[%s226 + $0x2c] sm:$0xf] %v786
          %803 = vst [vmem:[%s226 + $0x30] sm:$0xf] %v787
          %804 = vst [vmem:[%s226 + $0x34] sm:$0xf] %v788
          %805 = vst [vmem:[%s226 + $0x38] sm:$0xf] %v789
          %806 = vst [vmem:[%s226 + $0x3c] sm:$0xf] %v790
        $region44: #{generator_forward.6} parent=27 // pred_fallthru
          _
        %p807 = scmp.lt.s32.totalorder %s21, 0
        %s808 = scalar_select %p807, %s21, 0
        %s809 = smul.addr %s808, 4
        %s810 = scalar_lea.vmem %s2, %s809
        // Predicated region
        $region45: #{generator_forward.6} parent=27 // pred_check
          %p811 = pneg %p111
        $region46: #{generator_forward.6} parent=27 // pred_check_branch
          %813 = sbr.rel (%p811) target = $region48
        $region47: #{generator_forward.6} parent=27 // pred_region
          _
        $region48: #{generator_forward.6} parent=27 // pred_fallthru
          _
        // Predicated region
        $region49: #{generator_forward.6} parent=27 // pred_check
          %p814 = pneg %p111
        $region50: #{generator_forward.6} parent=27 // pred_check_branch
          %816 = sbr.rel (%p814) target = $region52
        $region51: #{generator_forward.6} parent=27 // pred_region
          %p817 = scmp.lt.s32.totalorder %s21, 0
          %s818 = scalar_select %p817, %s21, 0
          %s819 = smul.addr %s818, 4
          %s820 = scalar_lea.vmem %s2, %s819
        $region52: #{generator_forward.6} parent=27 // pred_fallthru
          _
      $region28: #{generator_forward.6} parent=5 // pred_fallthru
        _
      %p821 = scmp.le.s32.totalorder 2, %s11
      // Predicated region
      $region53: #{generator_forward.6} parent=5 // pred_check
        %p822 = pneg %p821
      $region54: #{generator_forward.6} parent=5 // pred_check_branch
        %824 = sbr.rel (%p822) target = $region56
      $region55: #{generator_forward.6} parent=5 // pred_region
        %s825 = ssub.s32 %s11, 2
      $region56: #{generator_forward.6} parent=5 // pred_fallthru
        _
    $region6: #{generator_forward.6} parent=1 // loop_footer
      %s15 = sadd.s32 1, %s11
    $region7: #{generator_forward.6} parent=1 // loop_footer_branch
      %10 = sbr.rel target = $region3
    $region8: #{generator_forward.6} parent=1 // loop_exit
      _
    %826 = vsyncpa [#allocation4], 1
    %s827 = scalar_lea.sflag [#allocation4], 1
    %828 = vsyncpa %s827, 1

// kernel: generator_forward.7
$region0: #{generator_forward.7}
  #allocation0 [shape = 'u32[]', space=smem, size = 0x4, offset = 0x4, fixed_abs, tag = 'smem constant byte address 0x4 - core index']
  #allocation1 [shape = 'u32[72,128]{1,0:T(1,128)}', space=vmem, size = 0x9000, scoped, tag = 'internal scratch']
  #allocation2 [shape = 'f32[4,128,128]{2,1,0:T(8,128)}', space=vmem, size = 0x40000, scoped, tag = 'scratch operand']
  %s0 = inlined_call_operand.vmem [shape: bf16[4,128,256], index: 0, kind: input, shape index: {}]
  %s1 = inlined_call_operand.vmem [shape: bf16[4,256,128], index: 1, kind: input, shape index: {}]
  %s2 = inlined_call_operand.vmem [shape: bf16[4,128,128], index: 2, kind: output, shape index: {}]
  %s3 = sld [smem:[#allocation0]]
  $region53: #{generator_forward.7} parent=0
    _
  %s5 = ssub.s32 1, %s3
  %s6 = scalar_select 0, %s5, %s3
  loop: start=0, step=1, limit=6
  $region2: #{generator_forward.7} parent=0 // loop_pre_header
    _
  $region3: #{generator_forward.7} parent=0 // loop_header
    %s8 = sphi 0, %s12
    %p9 = scmp.ge.s32.totalorder %s8, 6
    %s15 = sphi 0, %s34
    %s16 = sphi 0, %s30
    %s17 = sphi 0, %s26
    %s18 = sphi 0, %s15
    %s19 = sphi 0, %s16
    %s20 = sphi 0, %s17
    %s21 = sphi 0, %s18
    %s22 = sphi 0, %s19
    %s23 = sphi 0, %s20
    %s39 = sphi 0, %s41
    %s42 = sphi 0, %s39
    %s43 = sphi 0, %s42
    %s59 = sphi 0, %s43
    %s69 = sphi 0, %s71
    %s72 = sphi 0, %s69
    %s73 = sphi 0, %s72
    %s89 = sphi 0, %s73
    %s95 = sphi 0, %s97
    %s98 = sphi 0, %s95
    %s99 = sphi 0, %s98
    %s115 = sphi 0, %s99
  $region4: #{generator_forward.7} parent=0 // loop_header_branch
    %11 = sbr.rel (%p9) target = $region8
  $region5: #{generator_forward.7} parent=0 // loop_body
    %s13 = ssub.s32 %s8, 1
    %s14 = ssub.s32 %s8, 2
    %s24 = sadd.s32 1, %s17
    %p25 = scmp.ge.s32.totalorder %s24, 1
    %s26 = scalar_select %p25, 0, %s24
    %s27 = sadd.s32 1, %s16
    %s28 = scalar_select %p25, %s27, %s16
    %p29 = scmp.ge.s32.totalorder %s28, 4
    %s30 = scalar_select %p29, 0, %s28
    %s31 = sadd.s32 1, %s15
    %s32 = scalar_select %p29, %s31, %s15
    %p33 = scmp.ge.s32.totalorder %s32, 1
    %s34 = scalar_select %p33, 0, %s32
    %s35 = ssub.s32 %s16, %s30
    %s36 = ssub.s32 %s17, %s26
    %s37 = sor.u32 %s35, %s36
    %p38 = scmp.eq.s32.totalorder %s37, 0
    %s40 = sadd.s32 %s39, 1
    %s41 = scalar_select %p38, %s39, %s40
    %p44 = pneg %p38
    %p45 = scmp.eq.s32.totalorder %s8, 3
    %p46 = por %p44, %p45
    %p47 = scmp.ne.s32.totalorder %s39, %s42
    %p48 = scmp.eq.s32.totalorder %s8, 0
    %p49 = por %p47, %p48
    %p50 = scmp.ne.s32.totalorder %s39, %s42
    %p51 = scmp.eq.s32.totalorder %s13, 3
    %p52 = por %p50, %p51
    %p53 = scmp.ne.s32.totalorder %s42, %s43
    %p54 = scmp.eq.s32.totalorder %s13, 0
    %p55 = por %p53, %p54
    %p56 = scmp.ne.s32.totalorder %s42, %s43
    %p57 = scmp.eq.s32.totalorder %s14, 3
    %p58 = por %p56, %p57
    %p60 = scmp.ne.s32.totalorder %s43, %s59
    %p61 = scmp.eq.s32.totalorder %s14, 0
    %p62 = por %p60, %p61
    %s63 = ssub.s32 %s16, %s30
    %s64 = ssub.s32 %s17, %s26
    %s65 = sor.u32 %s63, %s64
    %s66 = ssub.s32 %s15, %s34
    %s67 = sor.u32 %s65, %s66
    %p68 = scmp.eq.s32.totalorder %s67, 0
    %s70 = sadd.s32 %s69, 1
    %s71 = scalar_select %p68, %s69, %s70
    %p74 = pneg %p68
    %p75 = scmp.eq.s32.totalorder %s8, 3
    %p76 = por %p74, %p75
    %p77 = scmp.ne.s32.totalorder %s69, %s72
    %p78 = scmp.eq.s32.totalorder %s8, 0
    %p79 = por %p77, %p78
    %p80 = scmp.ne.s32.totalorder %s69, %s72
    %p81 = scmp.eq.s32.totalorder %s13, 3
    %p82 = por %p80, %p81
    %p83 = scmp.ne.s32.totalorder %s72, %s73
    %p84 = scmp.eq.s32.totalorder %s13, 0
    %p85 = por %p83, %p84
    %p86 = scmp.ne.s32.totalorder %s72, %s73
    %p87 = scmp.eq.s32.totalorder %s14, 3
    %p88 = por %p86, %p87
    %p90 = scmp.ne.s32.totalorder %s73, %s89
    %p91 = scmp.eq.s32.totalorder %s14, 0
    %p92 = por %p90, %p91
    %s93 = ssub.s32 %s15, %s34
    %p94 = scmp.eq.s32.totalorder %s93, 0
    %s96 = sadd.s32 %s95, 1
    %s97 = scalar_select %p94, %s95, %s96
    %p100 = pneg %p94
    %p101 = scmp.eq.s32.totalorder %s8, 3
    %p102 = por %p100, %p101
    %p103 = scmp.ne.s32.totalorder %s95, %s98
    %p104 = scmp.eq.s32.totalorder %s8, 0
    %p105 = por %p103, %p104
    %p106 = scmp.ne.s32.totalorder %s95, %s98
    %p107 = scmp.eq.s32.totalorder %s13, 3
    %p108 = por %p106, %p107
    %p109 = scmp.ne.s32.totalorder %s98, %s99
    %p110 = scmp.eq.s32.totalorder %s13, 0
    %p111 = por %p109, %p110
    %p112 = scmp.ne.s32.totalorder %s98, %s99
    %p113 = scmp.eq.s32.totalorder %s14, 3
    %p114 = por %p112, %p113
    %p116 = scmp.ne.s32.totalorder %s99, %s115
    %p117 = scmp.eq.s32.totalorder %s14, 0
    %p118 = por %p116, %p117
    %p119 = scmp.le.s32.totalorder 1, %s8
    %p120 = scmp.lt.s32.totalorder %s8, 5
    %p121 = pnand %p119, %p120
    %p122 = pneg %p121
    // Predicated region
    $region9: #{generator_forward.7} parent=5 // pred_check
      _
    $region10: #{generator_forward.7} parent=5 // pred_check_branch
      %124 = sbr.rel (%p121) target = $region12
    $region11: #{generator_forward.7} parent=5 // pred_region
      %s125 = ssub.s32 %s8, 1
    $region12: #{generator_forward.7} parent=5 // pred_fallthru
      _
    %p126 = scmp.lt.s32.totalorder %s8, 4
    // Predicated region
    $region13: #{generator_forward.7} parent=5 // pred_check
      %p127 = pneg %p126
    $region14: #{generator_forward.7} parent=5 // pred_check_branch
      %129 = sbr.rel (%p127) target = $region16
    $region15: #{generator_forward.7} parent=5 // pred_region
      // Predicated region
      $region17: #{generator_forward.7} parent=15 // pred_check
        %p130 = pneg %p49
      $region18: #{generator_forward.7} parent=15 // pred_check_branch
        %132 = sbr.rel (%p130) target = $region20
      $region19: #{generator_forward.7} parent=15 // pred_region
        %s133 = smul.u32 2, %s17
        %p134 = scmp.lt.s32.totalorder %s16, 3
        %s135 = scalar_select %p134, %s16, 3
        %p136 = scmp.lt.s32.totalorder %s133, 1
        %s137 = scalar_select %p136, %s133, 1
        %s138 = smul.addr %s135, 32
        %s139 = sadd.s32 %s137, %s138
        %s140 = smul.addr %s139, 4
        %s141 = scalar_lea.vmem %s0, %s140
        %s142 = smul.u32 2, %s17
      $region20: #{generator_forward.7} parent=15 // pred_fallthru
        _
      // Predicated region
      $region21: #{generator_forward.7} parent=15 // pred_check
        %p143 = pneg %p79
      $region22: #{generator_forward.7} parent=15 // pred_check_branch
        %145 = sbr.rel (%p143) target = $region24
      $region23: #{generator_forward.7} parent=15 // pred_region
        %s146 = smul.u32 32, %s17
        %p147 = scmp.lt.s32.totalorder %s16, 3
        %s148 = scalar_select %p147, %s16, 3
        %p149 = scmp.lt.s32.totalorder %s146, 31
        %s150 = scalar_select %p149, %s146, 31
        %p151 = scmp.lt.s32.totalorder %s15, 0
        %s152 = scalar_select %p151, %s15, 0
        %s153 = sadd.s32 %s152, %s150
        %s154 = smul.addr %s148, 32
        %s155 = sadd.s32 %s153, %s154
        %s156 = smul.addr %s155, 4
        %s157 = scalar_lea.vmem %s1, %s156
        %s158 = smul.u32 32, %s17
      $region24: #{generator_forward.7} parent=15 // pred_fallthru
        _
    $region16: #{generator_forward.7} parent=5 // pred_fallthru
      _
    %p159 = scmp.le.s32.totalorder 1, %s8
    %p160 = scmp.lt.s32.totalorder %s8, 5
    %p161 = pnand %p159, %p160
    %p162 = pneg %p161
    // Predicated region
    $region25: #{generator_forward.7} parent=5 // pred_check
      _
    $region26: #{generator_forward.7} parent=5 // pred_check_branch
      %164 = sbr.rel (%p161) target = $region28
    $region27: #{generator_forward.7} parent=5 // pred_region
      %s165 = ssub.s32 %s8, 1
      %s166 = smul.u32 2, %s20
      %p167 = scmp.lt.s32.totalorder %s19, 3
      %s168 = scalar_select %p167, %s19, 3
      %p169 = scmp.lt.s32.totalorder %s166, 1
      %s170 = scalar_select %p169, %s166, 1
      %s171 = smul.addr %s168, 32
      %s172 = sadd.s32 %s170, %s171
      %s173 = smul.addr %s172, 4
      %s174 = scalar_lea.vmem %s0, %s173
      %p175 = pneg %p55
      %p176 = pneg %p52
      %s177 = smul.u32 32, %s20
      %p178 = scmp.lt.s32.totalorder %s19, 3
      %s179 = scalar_select %p178, %s19, 3
      %p180 = scmp.lt.s32.totalorder %s177, 31
      %s181 = scalar_select %p180, %s177, 31
      %p182 = scmp.lt.s32.totalorder %s18, 0
      %s183 = scalar_select %p182, %s18, 0
      %s184 = sadd.s32 %s183, %s181
      %s185 = smul.addr %s179, 32
      %s186 = sadd.s32 %s184, %s185
      %s187 = smul.addr %s186, 4
      %s188 = scalar_lea.vmem %s1, %s187
      %p189 = pneg %p85
      %p190 = pneg %p82
      %p191 = pneg %p111
      %p192 = pneg %p108
      %p193 = scmp.lt.s32.totalorder %s18, 0
      %s194 = scalar_select %p193, %s18, 0
      %s195 = smul.addr %s194, 4
      %s196 = scalar_lea.vmem %s2, %s195
      %s197 = smul.u32 2, %s20
      %p198 = scmp.lt.s32.totalorder %s19, 3
      %s199 = scalar_select %p198, %s19, 3
      %p200 = scmp.lt.s32.totalorder %s197, 1
      %s201 = scalar_select %p200, %s197, 1
      %s202 = smul.addr %s199, 32
      %s203 = sadd.s32 %s201, %s202
      %s204 = smul.addr %s203, 4
      %s205 = scalar_lea.vmem %s0, %s204
      %s206 = smul.u32 2, %s20
      %s207 = smul.u32 32, %s20
      %p208 = scmp.lt.s32.totalorder %s19, 3
      %s209 = scalar_select %p208, %s19, 3
      %p210 = scmp.lt.s32.totalorder %s207, 31
      %s211 = scalar_select %p210, %s207, 31
      %p212 = scmp.lt.s32.totalorder %s18, 0
      %s213 = scalar_select %p212, %s18, 0
      %s214 = sadd.s32 %s213, %s211
      %s215 = smul.addr %s209, 32
      %s216 = sadd.s32 %s214, %s215
      %s217 = smul.addr %s216, 4
      %s218 = scalar_lea.vmem %s1, %s217
      %s219 = smul.u32 32, %s20
      %p220 = scmp.lt.s32.totalorder %s18, 0
      %s221 = scalar_select %p220, %s18, 0
      %s222 = smul.addr %s221, 4
      %s223 = scalar_lea.vmem %s2, %s222
      %v224 = vld [vmem:[%s205] sm:$0xff]
      %v225 = vld [vmem:[%s205 + $0x8] sm:$0xff]
      %v226 = vld [vmem:[%s205 + $0x10] sm:$0xff]
      %v227 = vld [vmem:[%s205 + $0x18] sm:$0xff]
      %v228 = vld [vmem:[%s205 + $0x20] sm:$0xff]
      %v229 = vld [vmem:[%s205 + $0x28] sm:$0xff]
      %v230 = vld [vmem:[%s205 + $0x30] sm:$0xff]
      %v231 = vld [vmem:[%s205 + $0x38] sm:$0xff]
      %v232 = vld [vmem:[%s205 + $0x40] sm:$0xff]
      %v233 = vld [vmem:[%s205 + $0x48] sm:$0xff]
      %v234 = vld [vmem:[%s205 + $0x50] sm:$0xff]
      %v235 = vld [vmem:[%s205 + $0x58] sm:$0xff]
      %v236 = vld [vmem:[%s205 + $0x60] sm:$0xff]
      %v237 = vld [vmem:[%s205 + $0x68] sm:$0xff]
      %v238 = vld [vmem:[%s205 + $0x70] sm:$0xff]
      %v239 = vld [vmem:[%s205 + $0x78] sm:$0xff]
      %v240 = vld [vmem:[%s218] sm:$0xf]
      %v241 = vld [vmem:[%s218 + $0x4] sm:$0xf]
      %v242 = vld [vmem:[%s218 + $0x8] sm:$0xf]
      %v243 = vld [vmem:[%s218 + $0xc] sm:$0xf]
      %v244 = vld [vmem:[%s218 + $0x10] sm:$0xf]
      %v245 = vld [vmem:[%s218 + $0x14] sm:$0xf]
      %v246 = vld [vmem:[%s218 + $0x18] sm:$0xf]
      %v247 = vld [vmem:[%s218 + $0x1c] sm:$0xf]
      %v248 = vld [vmem:[%s218 + $0x20] sm:$0xf]
      %v249 = vld [vmem:[%s218 + $0x24] sm:$0xf]
      %v250 = vld [vmem:[%s218 + $0x28] sm:$0xf]
      %v251 = vld [vmem:[%s218 + $0x2c] sm:$0xf]
      %v252 = vld [vmem:[%s218 + $0x30] sm:$0xf]
      %v253 = vld [vmem:[%s218 + $0x34] sm:$0xf]
      %v254 = vld [vmem:[%s218 + $0x38] sm:$0xf]
      %v255 = vld [vmem:[%s218 + $0x3c] sm:$0xf]
      %v256 = vld [vmem:[%s218 + $0x40] sm:$0xf]
      %v257 = vld [vmem:[%s218 + $0x44] sm:$0xf]
      %v258 = vld [vmem:[%s218 + $0x48] sm:$0xf]
      %v259 = vld [vmem:[%s218 + $0x4c] sm:$0xf]
      %v260 = vld [vmem:[%s218 + $0x50] sm:$0xf]
      %v261 = vld [vmem:[%s218 + $0x54] sm:$0xf]
      %v262 = vld [vmem:[%s218 + $0x58] sm:$0xf]
      %v263 = vld [vmem:[%s218 + $0x5c] sm:$0xf]
      %v264 = vld [vmem:[%s218 + $0x60] sm:$0xf]
      %v265 = vld [vmem:[%s218 + $0x64] sm:$0xf]
      %v266 = vld [vmem:[%s218 + $0x68] sm:$0xf]
      %v267 = vld [vmem:[%s218 + $0x6c] sm:$0xf]
      %v268 = vld [vmem:[%s218 + $0x70] sm:$0xf]
      %v269 = vld [vmem:[%s218 + $0x74] sm:$0xf]
      %v270 = vld [vmem:[%s218 + $0x78] sm:$0xf]
      %v271 = vld [vmem:[%s218 + $0x7c] sm:$0xf]
      %v288 = vunpack.c.l.b16 %v224
      %v289 = vunpack.c.h.b16 %v224
      %v290 = vunpack.c.l.b16 %v225
      %v291 = vunpack.c.h.b16 %v225
      %v292 = vunpack.c.l.b16 %v226
      %v293 = vunpack.c.h.b16 %v226
      %v294 = vunpack.c.l.b16 %v227
      %v295 = vunpack.c.h.b16 %v227
      %v296 = vunpack.c.l.b16 %v228
      %v297 = vunpack.c.h.b16 %v228
      %v298 = vunpack.c.l.b16 %v229
      %v299 = vunpack.c.h.b16 %v229
      %v300 = vunpack.c.l.b16 %v230
      %v301 = vunpack.c.h.b16 %v230
      %v302 = vunpack.c.l.b16 %v231
      %v303 = vunpack.c.h.b16 %v231
      %v304 = vunpack.c.l.b16 %v232
      %v305 = vunpack.c.h.b16 %v232
      %v306 = vunpack.c.l.b16 %v233
      %v307 = vunpack.c.h.b16 %v233
      %v308 = vunpack.c.l.b16 %v234
      %v309 = vunpack.c.h.b16 %v234
      %v310 = vunpack.c.l.b16 %v235
      %v311 = vunpack.c.h.b16 %v235
      %v312 = vunpack.c.l.b16 %v236
      %v313 = vunpack.c.h.b16 %v236
      %v314 = vunpack.c.l.b16 %v237
      %v315 = vunpack.c.h.b16 %v237
      %v316 = vunpack.c.l.b16 %v238
      %v317 = vunpack.c.h.b16 %v238
      %v318 = vunpack.c.l.b16 %v239
      %v319 = vunpack.c.h.b16 %v239
      %v320 = vpack.c.b16 %v290, %v288
      %v321 = vpack.c.b16 %v291, %v289
      %v322 = vpack.c.b16 %v294, %v292
      %v323 = vpack.c.b16 %v295, %v293
      %v324 = vpack.c.b16 %v298, %v296
      %v325 = vpack.c.b16 %v299, %v297
      %v326 = vpack.c.b16 %v302, %v300
      %v327 = vpack.c.b16 %v303, %v301
      %v328 = vpack.c.b16 %v306, %v304
      %v329 = vpack.c.b16 %v307, %v305
      %v330 = vpack.c.b16 %v310, %v308
      %v331 = vpack.c.b16 %v311, %v309
      %v332 = vpack.c.b16 %v314, %v312
      %v333 = vpack.c.b16 %v315, %v313
      %v334 = vpack.c.b16 %v318, %v316
      %v335 = vpack.c.b16 %v319, %v317
      %v384 = vunpack.c.l.b16 %v240
      %v385 = vunpack.c.l.b16 %v241
      %v386 = vunpack.c.l.b16 %v242
      %v387 = vunpack.c.l.b16 %v243
      %v388 = vunpack.c.l.b16 %v244
      %v389 = vunpack.c.l.b16 %v245
      %v390 = vunpack.c.l.b16 %v246
      %v391 = vunpack.c.l.b16 %v247
      %v392 = vunpack.c.l.b16 %v248
      %v393 = vunpack.c.l.b16 %v249
      %v394 = vunpack.c.l.b16 %v250
      %v395 = vunpack.c.l.b16 %v251
      %v396 = vunpack.c.l.b16 %v252
      %v397 = vunpack.c.l.b16 %v253
      %v398 = vunpack.c.l.b16 %v254
      %v399 = vunpack.c.l.b16 %v255
      %v400 = vunpack.c.l.b16 %v256
      %v401 = vunpack.c.l.b16 %v257
      %v402 = vunpack.c.l.b16 %v258
      %v403 = vunpack.c.l.b16 %v259
      %v404 = vunpack.c.l.b16 %v260
      %v405 = vunpack.c.l.b16 %v261
      %v406 = vunpack.c.l.b16 %v262
      %v407 = vunpack.c.l.b16 %v263
      %v408 = vunpack.c.l.b16 %v264
      %v409 = vunpack.c.l.b16 %v265
      %v410 = vunpack.c.l.b16 %v266
      %v411 = vunpack.c.l.b16 %v267
      %v412 = vunpack.c.l.b16 %v268
      %v413 = vunpack.c.l.b16 %v269
      %v414 = vunpack.c.l.b16 %v270
      %v415 = vunpack.c.l.b16 %v271
      %v416 = vpack.c.b16 %v385, %v384
      %v417 = vpack.c.b16 %v387, %v386
      %v418 = vpack.c.b16 %v389, %v388
      %v419 = vpack.c.b16 %v391, %v390
      %v420 = vpack.c.b16 %v393, %v392
      %v421 = vpack.c.b16 %v395, %v394
      %v422 = vpack.c.b16 %v397, %v396
      %v423 = vpack.c.b16 %v399, %v398
      %v424 = vpack.c.b16 %v401, %v400
      %v425 = vpack.c.b16 %v403, %v402
      %v426 = vpack.c.b16 %v405, %v404
      %v427 = vpack.c.b16 %v407, %v406
      %v428 = vpack.c.b16 %v409, %v408
      %v429 = vpack.c.b16 %v411, %v410
      %v430 = vpack.c.b16 %v413, %v412
      %v431 = vpack.c.b16 %v415, %v414
      %448 = vmatpush.bf16.msra.mxu0 %v423
      %449 = vmatpush.bf16.msra.mxu0 %v422
      %450 = vmatpush.bf16.msra.mxu0 %v421
      %451 = vmatpush.bf16.msra.mxu0 %v420
      %452 = vmatpush.bf16.msra.mxu0 %v419
      %453 = vmatpush.bf16.msra.mxu0 %v418
      %454 = vmatpush.bf16.msra.mxu0 %v417
      %455 = vmatpush.bf16.msra.mxu0 %v416
      %456 = vmatmul.bf16.gmra.mxu0 %v320
      %v457 = vpop.f32.mrf.mxu0
      %v458 = vadd.f32 0.0, %v457
      %v459 = vpop.f32.mrf.mxu0
      %v460 = vadd.f32 0.0, %v459
      %461 = vmatmul.bf16.gmra.mxu0 %v322
      %v462 = vpop.f32.mrf.mxu0
      %v463 = vadd.f32 0.0, %v462
      %v464 = vpop.f32.mrf.mxu0
      %v465 = vadd.f32 0.0, %v464
      %466 = vmatmul.bf16.gmra.mxu0 %v324
      %v467 = vpop.f32.mrf.mxu0
      %v468 = vadd.f32 0.0, %v467
      %v469 = vpop.f32.mrf.mxu0
      %v470 = vadd.f32 0.0, %v469
      %471 = vmatmul.bf16.gmra.mxu0 %v326
      %v472 = vpop.f32.mrf.mxu0
      %v473 = vadd.f32 0.0, %v472
      %v474 = vpop.f32.mrf.mxu0
      %v475 = vadd.f32 0.0, %v474
      %476 = vmatmul.bf16.gmra.mxu0 %v328
      %v477 = vpop.f32.mrf.mxu0
      %v478 = vadd.f32 0.0, %v477
      %v479 = vpop.f32.mrf.mxu0
      %v480 = vadd.f32 0.0, %v479
      %481 = vmatmul.bf16.gmra.mxu0 %v330
      %v482 = vpop.f32.mrf.mxu0
      %v483 = vadd.f32 0.0, %v482
      %v484 = vpop.f32.mrf.mxu0
      %v485 = vadd.f32 0.0, %v484
      %486 = vmatmul.bf16.gmra.mxu0 %v332
      %v487 = vpop.f32.mrf.mxu0
      %v488 = vadd.f32 0.0, %v487
      %v489 = vpop.f32.mrf.mxu0
      %v490 = vadd.f32 0.0, %v489
      %491 = vmatmul.bf16.gmra.mxu0 %v334
      %v492 = vpop.f32.mrf.mxu0
      %v493 = vadd.f32 0.0, %v492
      %v494 = vpop.f32.mrf.mxu0
      %v495 = vadd.f32 0.0, %v494
      %496 = vdwg.mxu0
      %497 = vmatpush.bf16.msra.mxu0 %v431
      %498 = vmatpush.bf16.msra.mxu0 %v430
      %499 = vmatpush.bf16.msra.mxu0 %v429
      %500 = vmatpush.bf16.msra.mxu0 %v428
      %501 = vmatpush.bf16.msra.mxu0 %v427
      %502 = vmatpush.bf16.msra.mxu0 %v426
      %503 = vmatpush.bf16.msra.mxu0 %v425
      %504 = vmatpush.bf16.msra.mxu0 %v424
      %505 = vmatmul.bf16.gmra.mxu0 %v321
      %v506 = vpop.f32.mrf.mxu0
      %v507 = vadd.f32 %v458, %v506
      %v508 = vpop.f32.mrf.mxu0
      %v509 = vadd.f32 %v460, %v508
      %510 = vmatmul.bf16.gmra.mxu0 %v323
      %v511 = vpop.f32.mrf.mxu0
      %v512 = vadd.f32 %v463, %v511
      %v513 = vpop.f32.mrf.mxu0
      %v514 = vadd.f32 %v465, %v513
      %515 = vmatmul.bf16.gmra.mxu0 %v325
      %v516 = vpop.f32.mrf.mxu0
      %v517 = vadd.f32 %v468, %v516
      %v518 = vpop.f32.mrf.mxu0
      %v519 = vadd.f32 %v470, %v518
      %520 = vmatmul.bf16.gmra.mxu0 %v327
      %v521 = vpop.f32.mrf.mxu0
      %v522 = vadd.f32 %v473, %v521
      %v523 = vpop.f32.mrf.mxu0
      %v524 = vadd.f32 %v475, %v523
      %525 = vmatmul.bf16.gmra.mxu0 %v329
      %v526 = vpop.f32.mrf.mxu0
      %v527 = vadd.f32 %v478, %v526
      %v528 = vpop.f32.mrf.mxu0
      %v529 = vadd.f32 %v480, %v528
      %530 = vmatmul.bf16.gmra.mxu0 %v331
      %v531 = vpop.f32.mrf.mxu0
      %v532 = vadd.f32 %v483, %v531
      %v533 = vpop.f32.mrf.mxu0
      %v534 = vadd.f32 %v485, %v533
      %535 = vmatmul.bf16.gmra.mxu0 %v333
      %v536 = vpop.f32.mrf.mxu0
      %v537 = vadd.f32 %v488, %v536
      %v538 = vpop.f32.mrf.mxu0
      %v539 = vadd.f32 %v490, %v538
      %540 = vmatmul.bf16.gmra.mxu0 %v335
      %v541 = vpop.f32.mrf.mxu0
      %v542 = vadd.f32 %v493, %v541
      %v543 = vpop.f32.mrf.mxu0
      %v544 = vadd.f32 %v495, %v543
      %545 = vdwg.mxu0
      %p546 = scmp.eq.s32.totalorder %s20, 0
      // Predicated region
      $region29: #{generator_forward.7} parent=27 // pred_check
        %p547 = pneg %p546
      $region30: #{generator_forward.7} parent=27 // pred_check_branch
        %549 = sbr.rel (%p547) target = $region32
      $region31: #{generator_forward.7} parent=27 // pred_region
        %s550 = smul.u32 %s19, 128
        %s551 = scalar_lea.vmem [#allocation2], %s550
        %552 = vst [vmem:[%s551] sm:$0xff] %v507
        %553 = vst [vmem:[%s551 + $0x8] sm:$0xff] %v509
        %554 = vst [vmem:[%s551 + $0x10] sm:$0xff] %v512
        %555 = vst [vmem:[%s551 + $0x18] sm:$0xff] %v514
        %556 = vst [vmem:[%s551 + $0x20] sm:$0xff] %v517
        %557 = vst [vmem:[%s551 + $0x28] sm:$0xff] %v519
        %558 = vst [vmem:[%s551 + $0x30] sm:$0xff] %v522
        %559 = vst [vmem:[%s551 + $0x38] sm:$0xff] %v524
        %560 = vst [vmem:[%s551 + $0x40] sm:$0xff] %v527
        %561 = vst [vmem:[%s551 + $0x48] sm:$0xff] %v529
        %562 = vst [vmem:[%s551 + $0x50] sm:$0xff] %v532
        %563 = vst [vmem:[%s551 + $0x58] sm:$0xff] %v534
        %564 = vst [vmem:[%s551 + $0x60] sm:$0xff] %v537
        %565 = vst [vmem:[%s551 + $0x68] sm:$0xff] %v539
        %566 = vst [vmem:[%s551 + $0x70] sm:$0xff] %v542
        %567 = vst [vmem:[%s551 + $0x78] sm:$0xff] %v544
      $region32: #{generator_forward.7} parent=27 // pred_fallthru
        _
      %p568 = scmp.gt.s32.totalorder %s20, 0
      // Predicated region
      $region33: #{generator_forward.7} parent=27 // pred_check
        %p569 = pneg %p568
      $region34: #{generator_forward.7} parent=27 // pred_check_branch
        %571 = sbr.rel (%p569) target = $region36
      $region35: #{generator_forward.7} parent=27 // pred_region
        %s572 = smul.u32 %s19, 128
        %s573 = scalar_lea.vmem [#allocation2], %s572
        %v574 = vld [vmem:[%s573] sm:$0xff]
        %v575 = vld [vmem:[%s573 + $0x8] sm:$0xff]
        %v576 = vld [vmem:[%s573 + $0x10] sm:$0xff]
        %v577 = vld [vmem:[%s573 + $0x18] sm:$0xff]
        %v578 = vld [vmem:[%s573 + $0x20] sm:$0xff]
        %v579 = vld [vmem:[%s573 + $0x28] sm:$0xff]
        %v580 = vld [vmem:[%s573 + $0x30] sm:$0xff]
        %v581 = vld [vmem:[%s573 + $0x38] sm:$0xff]
        %v582 = vld [vmem:[%s573 + $0x40] sm:$0xff]
        %v583 = vld [vmem:[%s573 + $0x48] sm:$0xff]
        %v584 = vld [vmem:[%s573 + $0x50] sm:$0xff]
        %v585 = vld [vmem:[%s573 + $0x58] sm:$0xff]
        %v586 = vld [vmem:[%s573 + $0x60] sm:$0xff]
        %v587 = vld [vmem:[%s573 + $0x68] sm:$0xff]
        %v588 = vld [vmem:[%s573 + $0x70] sm:$0xff]
        %v589 = vld [vmem:[%s573 + $0x78] sm:$0xff]
        %v590 = vadd.f32 %v574, %v507
        %v591 = vadd.f32 %v575, %v509
        %v592 = vadd.f32 %v576, %v512
        %v593 = vadd.f32 %v577, %v514
        %v594 = vadd.f32 %v578, %v517
        %v595 = vadd.f32 %v579, %v519
        %v596 = vadd.f32 %v580, %v522
        %v597 = vadd.f32 %v581, %v524
        %v598 = vadd.f32 %v582, %v527
        %v599 = vadd.f32 %v583, %v529
        %v600 = vadd.f32 %v584, %v532
        %v601 = vadd.f32 %v585, %v534
        %v602 = vadd.f32 %v586, %v537
        %v603 = vadd.f32 %v587, %v539
        %v604 = vadd.f32 %v588, %v542
        %v605 = vadd.f32 %v589, %v544
        %606 = vst [vmem:[%s573] sm:$0xff] %v590
        %607 = vst [vmem:[%s573 + $0x8] sm:$0xff] %v591
        %608 = vst [vmem:[%s573 + $0x10] sm:$0xff] %v592
        %609 = vst [vmem:[%s573 + $0x18] sm:$0xff] %v593
        %610 = vst [vmem:[%s573 + $0x20] sm:$0xff] %v594
        %611 = vst [vmem:[%s573 + $0x28] sm:$0xff] %v595
        %612 = vst [vmem:[%s573 + $0x30] sm:$0xff] %v596
        %613 = vst [vmem:[%s573 + $0x38] sm:$0xff] %v597
        %614 = vst [vmem:[%s573 + $0x40] sm:$0xff] %v598
        %615 = vst [vmem:[%s573 + $0x48] sm:$0xff] %v599
        %616 = vst [vmem:[%s573 + $0x50] sm:$0xff] %v600
        %617 = vst [vmem:[%s573 + $0x58] sm:$0xff] %v601
        %618 = vst [vmem:[%s573 + $0x60] sm:$0xff] %v602
        %619 = vst [vmem:[%s573 + $0x68] sm:$0xff] %v603
        %620 = vst [vmem:[%s573 + $0x70] sm:$0xff] %v604
        %621 = vst [vmem:[%s573 + $0x78] sm:$0xff] %v605
      $region36: #{generator_forward.7} parent=27 // pred_fallthru
        _
      %p622 = scmp.eq.s32.totalorder %s19, 3
      %p623 = pnand %p622, %p546
      %p624 = pneg %p623
      // Predicated region
      $region37: #{generator_forward.7} parent=27 // pred_check
        _
      $region38: #{generator_forward.7} parent=27 // pred_check_branch
        %626 = sbr.rel (%p623) target = $region40
      $region39: #{generator_forward.7} parent=27 // pred_region
        %v627 = vld [vmem:[#allocation2] sm:$0xff]
        %v628 = vld [vmem:[#allocation2 + $0x8] sm:$0xff]
        %v629 = vld [vmem:[#allocation2 + $0x10] sm:$0xff]
        %v630 = vld [vmem:[#allocation2 + $0x18] sm:$0xff]
        %v631 = vld [vmem:[#allocation2 + $0x20] sm:$0xff]
        %v632 = vld [vmem:[#allocation2 + $0x28] sm:$0xff]
        %v633 = vld [vmem:[#allocation2 + $0x30] sm:$0xff]
        %v634 = vld [vmem:[#allocation2 + $0x38] sm:$0xff]
        %v635 = vld [vmem:[#allocation2 + $0x40] sm:$0xff]
        %v636 = vld [vmem:[#allocation2 + $0x48] sm:$0xff]
        %v637 = vld [vmem:[#allocation2 + $0x50] sm:$0xff]
        %v638 = vld [vmem:[#allocation2 + $0x58] sm:$0xff]
        %v639 = vld [vmem:[#allocation2 + $0x60] sm:$0xff]
        %v640 = vld [vmem:[#allocation2 + $0x68] sm:$0xff]
        %v641 = vld [vmem:[#allocation2 + $0x70] sm:$0xff]
        %v642 = vld [vmem:[#allocation2 + $0x78] sm:$0xff]
        %v643 = vld [vmem:[#allocation2 + $0x80] sm:$0xff]
        %v644 = vld [vmem:[#allocation2 + $0x88] sm:$0xff]
        %v645 = vld [vmem:[#allocation2 + $0x90] sm:$0xff]
        %v646 = vld [vmem:[#allocation2 + $0x98] sm:$0xff]
        %v647 = vld [vmem:[#allocation2 + $0xa0] sm:$0xff]
        %v648 = vld [vmem:[#allocation2 + $0xa8] sm:$0xff]
        %v649 = vld [vmem:[#allocation2 + $0xb0] sm:$0xff]
        %v650 = vld [vmem:[#allocation2 + $0xb8] sm:$0xff]
        %v651 = vld [vmem:[#allocation2 + $0xc0] sm:$0xff]
        %v652 = vld [vmem:[#allocation2 + $0xc8] sm:$0xff]
        %v653 = vld [vmem:[#allocation2 + $0xd0] sm:$0xff]
        %v654 = vld [vmem:[#allocation2 + $0xd8] sm:$0xff]
        %v655 = vld [vmem:[#allocation2 + $0xe0] sm:$0xff]
        %v656 = vld [vmem:[#allocation2 + $0xe8] sm:$0xff]
        %v657 = vld [vmem:[#allocation2 + $0xf0] sm:$0xff]
        %v658 = vld [vmem:[#allocation2 + $0xf8] sm:$0xff]
        %v659 = vld [vmem:[#allocation2 + $0x100] sm:$0xff]
        %v660 = vld [vmem:[#allocation2 + $0x108] sm:$0xff]
        %v661 = vld [vmem:[#allocation2 + $0x110] sm:$0xff]
        %v662 = vld [vmem:[#allocation2 + $0x118] sm:$0xff]
        %v663 = vld [vmem:[#allocation2 + $0x120] sm:$0xff]
        %v664 = vld [vmem:[#allocation2 + $0x128] sm:$0xff]
        %v665 = vld [vmem:[#allocation2 + $0x130] sm:$0xff]
        %v666 = vld [vmem:[#allocation2 + $0x138] sm:$0xff]
        %v667 = vld [vmem:[#allocation2 + $0x140] sm:$0xff]
        %v668 = vld [vmem:[#allocation2 + $0x148] sm:$0xff]
        %v669 = vld [vmem:[#allocation2 + $0x150] sm:$0xff]
        %v670 = vld [vmem:[#allocation2 + $0x158] sm:$0xff]
        %v671 = vld [vmem:[#allocation2 + $0x160] sm:$0xff]
        %v672 = vld [vmem:[#allocation2 + $0x168] sm:$0xff]
        %v673 = vld [vmem:[#allocation2 + $0x170] sm:$0xff]
        %v674 = vld [vmem:[#allocation2 + $0x178] sm:$0xff]
        %v675 = vld [vmem:[#allocation2 + $0x180] sm:$0xff]
        %v676 = vld [vmem:[#allocation2 + $0x188] sm:$0xff]
        %v677 = vld [vmem:[#allocation2 + $0x190] sm:$0xff]
        %v678 = vld [vmem:[#allocation2 + $0x198] sm:$0xff]
        %v679 = vld [vmem:[#allocation2 + $0x1a0] sm:$0xff]
        %v680 = vld [vmem:[#allocation2 + $0x1a8] sm:$0xff]
        %v681 = vld [vmem:[#allocation2 + $0x1b0] sm:$0xff]
        %v682 = vld [vmem:[#allocation2 + $0x1b8] sm:$0xff]
        %v683 = vld [vmem:[#allocation2 + $0x1c0] sm:$0xff]
        %v684 = vld [vmem:[#allocation2 + $0x1c8] sm:$0xff]
        %v685 = vld [vmem:[#allocation2 + $0x1d0] sm:$0xff]
        %v686 = vld [vmem:[#allocation2 + $0x1d8] sm:$0xff]
        %v687 = vld [vmem:[#allocation2 + $0x1e0] sm:$0xff]
        %v688 = vld [vmem:[#allocation2 + $0x1e8] sm:$0xff]
        %v689 = vld [vmem:[#allocation2 + $0x1f0] sm:$0xff]
        %v690 = vld [vmem:[#allocation2 + $0x1f8] sm:$0xff]
        %v691 = vadd.f32 %v627, %v628
        %v692 = vadd.f32 %v691, %v629
        %v693 = vadd.f32 %v692, %v630
        %v694 = vadd.f32 %v693, %v631
        %v695 = vadd.f32 %v694, %v632
        %v696 = vadd.f32 %v695, %v633
        %v697 = vadd.f32 %v696, %v634
        %v698 = vadd.f32 %v697, %v635
        %v699 = vadd.f32 %v698, %v636
        %v700 = vadd.f32 %v699, %v637
        %v701 = vadd.f32 %v700, %v638
        %v702 = vadd.f32 %v701, %v639
        %v703 = vadd.f32 %v702, %v640
        %v704 = vadd.f32 %v703, %v641
        %v705 = vadd.f32 %v704, %v642
        %v706 = vadd.f32 %v705, %v643
        %v707 = vadd.f32 %v706, %v644
        %v708 = vadd.f32 %v707, %v645
        %v709 = vadd.f32 %v708, %v646
        %v710 = vadd.f32 %v709, %v647
        %v711 = vadd.f32 %v710, %v648
        %v712 = vadd.f32 %v711, %v649
        %v713 = vadd.f32 %v712, %v650
        %v714 = vadd.f32 %v713, %v651
        %v715 = vadd.f32 %v714, %v652
        %v716 = vadd.f32 %v715, %v653
        %v717 = vadd.f32 %v716, %v654
        %v718 = vadd.f32 %v717, %v655
        %v719 = vadd.f32 %v718, %v656
        %v720 = vadd.f32 %v719, %v657
        %v721 = vadd.f32 %v720, %v658
        %v722 = vadd.f32 %v721, %v659
        %v723 = vadd.f32 %v722, %v660
        %v724 = vadd.f32 %v723, %v661
        %v725 = vadd.f32 %v724, %v662
        %v726 = vadd.f32 %v725, %v663
        %v727 = vadd.f32 %v726, %v664
        %v728 = vadd.f32 %v727, %v665
        %v729 = vadd.f32 %v728, %v666
        %v730 = vadd.f32 %v729, %v667
        %v731 = vadd.f32 %v730, %v668
        %v732 = vadd.f32 %v731, %v669
        %v733 = vadd.f32 %v732, %v670
        %v734 = vadd.f32 %v733, %v671
        %v735 = vadd.f32 %v734, %v672
        %v736 = vadd.f32 %v735, %v673
        %v737 = vadd.f32 %v736, %v674
        %v738 = vadd.f32 %v737, %v675
        %v739 = vadd.f32 %v738, %v676
        %v740 = vadd.f32 %v739, %v677
        %v741 = vadd.f32 %v740, %v678
        %v742 = vadd.f32 %v741, %v679
        %v743 = vadd.f32 %v742, %v680
        %v744 = vadd.f32 %v743, %v681
        %v745 = vadd.f32 %v744, %v682
        %v746 = vadd.f32 %v745, %v683
        %v747 = vadd.f32 %v746, %v684
        %v748 = vadd.f32 %v747, %v685
        %v749 = vadd.f32 %v748, %v686
        %v750 = vadd.f32 %v749, %v687
        %v751 = vadd.f32 %v750, %v688
        %v752 = vadd.f32 %v751, %v689
        %v753 = vadd.f32 %v752, %v690
        %v754 = vrot.slane %v753, 4
        %v755 = vadd.f32 %v753, %v754
        %v756 = vrot.slane %v755, 2
        %v757 = vadd.f32 %v755, %v756
        %v758 = vrot.slane %v757, 1
        %v759 = vadd.f32 %v757, %v758
        %v760 = vmul.f32 %v759, 0.001953125
        %v761 = vsub.f32 %v627, %v760
        %v762 = vsub.f32 %v628, %v760
        %v763 = vsub.f32 %v629, %v760
        %v764 = vsub.f32 %v630, %v760
        %v765 = vsub.f32 %v631, %v760
        %v766 = vsub.f32 %v632, %v760
        %v767 = vsub.f32 %v633, %v760
        %v768 = vsub.f32 %v634, %v760
        %v769 = vsub.f32 %v635, %v760
        %v770 = vsub.f32 %v636, %v760
        %v771 = vsub.f32 %v637, %v760
        %v772 = vsub.f32 %v638, %v760
        %v773 = vsub.f32 %v639, %v760
        %v774 = vsub.f32 %v640, %v760
        %v775 = vsub.f32 %v641, %v760
        %v776 = vsub.f32 %v642, %v760
        %v777 = vsub.f32 %v643, %v760
        %v778 = vsub.f32 %v644, %v760
        %v779 = vsub.f32 %v645, %v760
        %v780 = vsub.f32 %v646, %v760
        %v781 = vsub.f32 %v647, %v760
        %v782 = vsub.f32 %v648, %v760
        %v783 = vsub.f32 %v649, %v760
        %v784 = vsub.f32 %v650, %v760
        %v785 = vsub.f32 %v651, %v760
        %v786 = vsub.f32 %v652, %v760
        %v787 = vsub.f32 %v653, %v760
        %v788 = vsub.f32 %v654, %v760
        %v789 = vsub.f32 %v655, %v760
        %v790 = vsub.f32 %v656, %v760
        %v791 = vsub.f32 %v657, %v760
        %v792 = vsub.f32 %v658, %v760
        %v793 = vsub.f32 %v659, %v760
        %v794 = vsub.f32 %v660, %v760
        %v795 = vsub.f32 %v661, %v760
        %v796 = vsub.f32 %v662, %v760
        %v797 = vsub.f32 %v663, %v760
        %v798 = vsub.f32 %v664, %v760
        %v799 = vsub.f32 %v665, %v760
        %v800 = vsub.f32 %v666, %v760
        %v801 = vsub.f32 %v667, %v760
        %v802 = vsub.f32 %v668, %v760
        %v803 = vsub.f32 %v669, %v760
        %v804 = vsub.f32 %v670, %v760
        %v805 = vsub.f32 %v671, %v760
        %v806 = vsub.f32 %v672, %v760
        %v807 = vsub.f32 %v673, %v760
        %v808 = vsub.f32 %v674, %v760
        %v809 = vsub.f32 %v675, %v760
        %v810 = vsub.f32 %v676, %v760
        %v811 = vsub.f32 %v677, %v760
        %v812 = vsub.f32 %v678, %v760
        %v813 = vsub.f32 %v679, %v760
        %v814 = vsub.f32 %v680, %v760
        %v815 = vsub.f32 %v681, %v760
        %v816 = vsub.f32 %v682, %v760
        %v817 = vsub.f32 %v683, %v760
        %v818 = vsub.f32 %v684, %v760
        %v819 = vsub.f32 %v685, %v760
        %v820 = vsub.f32 %v686, %v760
        %v821 = vsub.f32 %v687, %v760
        %v822 = vsub.f32 %v688, %v760
        %v823 = vsub.f32 %v689, %v760
        %v824 = vsub.f32 %v690, %v760
        %v825 = vmul.f32 %v761, %v761
        %v826 = vmul.f32 %v762, %v762
        %v827 = vmul.f32 %v763, %v763
        %v828 = vmul.f32 %v764, %v764
        %v829 = vmul.f32 %v765, %v765
        %v830 = vmul.f32 %v766, %v766
        %v831 = vmul.f32 %v767, %v767
        %v832 = vmul.f32 %v768, %v768
        %v833 = vmul.f32 %v769, %v769
        %v834 = vmul.f32 %v770, %v770
        %v835 = vmul.f32 %v771, %v771
        %v836 = vmul.f32 %v772, %v772
        %v837 = vmul.f32 %v773, %v773
        %v838 = vmul.f32 %v774, %v774
        %v839 = vmul.f32 %v775, %v775
        %v840 = vmul.f32 %v776, %v776
        %v841 = vmul.f32 %v777, %v777
        %v842 = vmul.f32 %v778, %v778
        %v843 = vmul.f32 %v779, %v779
        %v844 = vmul.f32 %v780, %v780
        %v845 = vmul.f32 %v781, %v781
        %v846 = vmul.f32 %v782, %v782
        %v847 = vmul.f32 %v783, %v783
        %v848 = vmul.f32 %v784, %v784
        %v849 = vmul.f32 %v785, %v785
        %v850 = vmul.f32 %v786, %v786
        %v851 = vmul.f32 %v787, %v787
        %v852 = vmul.f32 %v788, %v788
        %v853 = vmul.f32 %v789, %v789
        %v854 = vmul.f32 %v790, %v790
        %v855 = vmul.f32 %v791, %v791
        %v856 = vmul.f32 %v792, %v792
        %v857 = vmul.f32 %v793, %v793
        %v858 = vmul.f32 %v794, %v794
        %v859 = vmul.f32 %v795, %v795
        %v860 = vmul.f32 %v796, %v796
        %v861 = vmul.f32 %v797, %v797
        %v862 = vmul.f32 %v798, %v798
        %v863 = vmul.f32 %v799, %v799
        %v864 = vmul.f32 %v800, %v800
        %v865 = vmul.f32 %v801, %v801
        %v866 = vmul.f32 %v802, %v802
        %v867 = vmul.f32 %v803, %v803
        %v868 = vmul.f32 %v804, %v804
        %v869 = vmul.f32 %v805, %v805
        %v870 = vmul.f32 %v806, %v806
        %v871 = vmul.f32 %v807, %v807
        %v872 = vmul.f32 %v808, %v808
        %v873 = vmul.f32 %v809, %v809
        %v874 = vmul.f32 %v810, %v810
        %v875 = vmul.f32 %v811, %v811
        %v876 = vmul.f32 %v812, %v812
        %v877 = vmul.f32 %v813, %v813
        %v878 = vmul.f32 %v814, %v814
        %v879 = vmul.f32 %v815, %v815
        %v880 = vmul.f32 %v816, %v816
        %v881 = vmul.f32 %v817, %v817
        %v882 = vmul.f32 %v818, %v818
        %v883 = vmul.f32 %v819, %v819
        %v884 = vmul.f32 %v820, %v820
        %v885 = vmul.f32 %v821, %v821
        %v886 = vmul.f32 %v822, %v822
        %v887 = vmul.f32 %v823, %v823
        %v888 = vmul.f32 %v824, %v824
        %v889 = vadd.f32 %v825, %v826
        %v890 = vadd.f32 %v889, %v827
        %v891 = vadd.f32 %v890, %v828
        %v892 = vadd.f32 %v891, %v829
        %v893 = vadd.f32 %v892, %v830
        %v894 = vadd.f32 %v893, %v831
        %v895 = vadd.f32 %v894, %v832
        %v896 = vadd.f32 %v895, %v833
        %v897 = vadd.f32 %v896, %v834
        %v898 = vadd.f32 %v897, %v835
        %v899 = vadd.f32 %v898, %v836
        %v900 = vadd.f32 %v899, %v837
        %v901 = vadd.f32 %v900, %v838
        %v902 = vadd.f32 %v901, %v839
        %v903 = vadd.f32 %v902, %v840
        %v904 = vadd.f32 %v903, %v841
        %v905 = vadd.f32 %v904, %v842
        %v906 = vadd.f32 %v905, %v843
        %v907 = vadd.f32 %v906, %v844
        %v908 = vadd.f32 %v907, %v845
        %v909 = vadd.f32 %v908, %v846
        %v910 = vadd.f32 %v909, %v847
        %v911 = vadd.f32 %v910, %v848
        %v912 = vadd.f32 %v911, %v849
        %v913 = vadd.f32 %v912, %v850
        %v914 = vadd.f32 %v913, %v851
        %v915 = vadd.f32 %v914, %v852
        %v916 = vadd.f32 %v915, %v853
        %v917 = vadd.f32 %v916, %v854
        %v918 = vadd.f32 %v917, %v855
        %v919 = vadd.f32 %v918, %v856
        %v920 = vadd.f32 %v919, %v857
        %v921 = vadd.f32 %v920, %v858
        %v922 = vadd.f32 %v921, %v859
        %v923 = vadd.f32 %v922, %v860
        %v924 = vadd.f32 %v923, %v861
        %v925 = vadd.f32 %v924, %v862
        %v926 = vadd.f32 %v925, %v863
        %v927 = vadd.f32 %v926, %v864
        %v928 = vadd.f32 %v927, %v865
        %v929 = vadd.f32 %v928, %v866
        %v930 = vadd.f32 %v929, %v867
        %v931 = vadd.f32 %v930, %v868
        %v932 = vadd.f32 %v931, %v869
        %v933 = vadd.f32 %v932, %v870
        %v934 = vadd.f32 %v933, %v871
        %v935 = vadd.f32 %v934, %v872
        %v936 = vadd.f32 %v935, %v873
        %v937 = vadd.f32 %v936, %v874
        %v938 = vadd.f32 %v937, %v875
        %v939 = vadd.f32 %v938, %v876
        %v940 = vadd.f32 %v939, %v877
        %v941 = vadd.f32 %v940, %v878
        %v942 = vadd.f32 %v941, %v879
        %v943 = vadd.f32 %v942, %v880
        %v944 = vadd.f32 %v943, %v881
        %v945 = vadd.f32 %v944, %v882
        %v946 = vadd.f32 %v945, %v883
        %v947 = vadd.f32 %v946, %v884
        %v948 = vadd.f32 %v947, %v885
        %v949 = vadd.f32 %v948, %v886
        %v950 = vadd.f32 %v949, %v887
        %v951 = vadd.f32 %v950, %v888
        %v952 = vrot.slane %v951, 4
        %v953 = vadd.f32 %v951, %v952
        %v954 = vrot.slane %v953, 2
        %v955 = vadd.f32 %v953, %v954
        %v956 = vrot.slane %v955, 1
        %v957 = vadd.f32 %v955, %v956
        %v958 = vmul.f32 %v957, 0.001953125
        %v959 = vadd.f32 %v958, 1e-05
        %v960 = vrsqrt.pop %v959
        %v961 = vmul.f32 %v960, %v959
        %v962 = vmul.f32 %v961, %v960
        %v963 = vmul.f32 0.5, %v962
        %v964 = vsub.f32 1.5, %v963
        %v965 = vmul.f32 %v960, %v964
        %vm966 = vweird.f32 %v959
        %vm967 = vweird.f32 %v960
        %vm968 = vmor %vm966, %vm967
        %v969 = vsel %vm968, %v960, %v965
        %v970 = vmul.f32 %v761, %v969
        %v971 = vmul.f32 %v762, %v969
        %v972 = vmul.f32 %v763, %v969
        %v973 = vmul.f32 %v764, %v969
        %v974 = vmul.f32 %v765, %v969
        %v975 = vmul.f32 %v766, %v969
        %v976 = vmul.f32 %v767, %v969
        %v977 = vmul.f32 %v768, %v969
        %v978 = vmul.f32 %v769, %v969
        %v979 = vmul.f32 %v770, %v969
        %v980 = vmul.f32 %v771, %v969
        %v981 = vmul.f32 %v772, %v969
        %v982 = vmul.f32 %v773, %v969
        %v983 = vmul.f32 %v774, %v969
        %v984 = vmul.f32 %v775, %v969
        %v985 = vmul.f32 %v776, %v969
        %v986 = vmul.f32 %v777, %v969
        %v987 = vmul.f32 %v778, %v969
        %v988 = vmul.f32 %v779, %v969
        %v989 = vmul.f32 %v780, %v969
        %v990 = vmul.f32 %v781, %v969
        %v991 = vmul.f32 %v782, %v969
        %v992 = vmul.f32 %v783, %v969
        %v993 = vmul.f32 %v784, %v969
        %v994 = vmul.f32 %v785, %v969
        %v995 = vmul.f32 %v786, %v969
        %v996 = vmul.f32 %v787, %v969
        %v997 = vmul.f32 %v788, %v969
        %v998 = vmul.f32 %v789, %v969
        %v999 = vmul.f32 %v790, %v969
        %v1000 = vmul.f32 %v791, %v969
        %v1001 = vmul.f32 %v792, %v969
        %v1002 = vmul.f32 %v793, %v969
        %v1003 = vmul.f32 %v794, %v969
        %v1004 = vmul.f32 %v795, %v969
        %v1005 = vmul.f32 %v796, %v969
        %v1006 = vmul.f32 %v797, %v969
        %v1007 = vmul.f32 %v798, %v969
        %v1008 = vmul.f32 %v799, %v969
        %v1009 = vmul.f32 %v800, %v969
        %v1010 = vmul.f32 %v801, %v969
        %v1011 = vmul.f32 %v802, %v969
        %v1012 = vmul.f32 %v803, %v969
        %v1013 = vmul.f32 %v804, %v969
        %v1014 = vmul.f32 %v805, %v969
        %v1015 = vmul.f32 %v806, %v969
        %v1016 = vmul.f32 %v807, %v969
        %v1017 = vmul.f32 %v808, %v969
        %v1018 = vmul.f32 %v809, %v969
        %v1019 = vmul.f32 %v810, %v969
        %v1020 = vmul.f32 %v811, %v969
        %v1021 = vmul.f32 %v812, %v969
        %v1022 = vmul.f32 %v813, %v969
        %v1023 = vmul.f32 %v814, %v969
        %v1024 = vmul.f32 %v815, %v969
        %v1025 = vmul.f32 %v816, %v969
        %v1026 = vmul.f32 %v817, %v969
        %v1027 = vmul.f32 %v818, %v969
        %v1028 = vmul.f32 %v819, %v969
        %v1029 = vmul.f32 %v820, %v969
        %v1030 = vmul.f32 %v821, %v969
        %v1031 = vmul.f32 %v822, %v969
        %v1032 = vmul.f32 %v823, %v969
        %v1033 = vmul.f32 %v824, %v969
        %v1034 = vmax.f32 %v970, 0.0
        %v1035 = vmax.f32 %v971, 0.0
        %v1036 = vmax.f32 %v972, 0.0
        %v1037 = vmax.f32 %v973, 0.0
        %v1038 = vmax.f32 %v974, 0.0
        %v1039 = vmax.f32 %v975, 0.0
        %v1040 = vmax.f32 %v976, 0.0
        %v1041 = vmax.f32 %v977, 0.0
        %v1042 = vmax.f32 %v978, 0.0
        %v1043 = vmax.f32 %v979, 0.0
        %v1044 = vmax.f32 %v980, 0.0
        %v1045 = vmax.f32 %v981, 0.0
        %v1046 = vmax.f32 %v982, 0.0
        %v1047 = vmax.f32 %v983, 0.0
        %v1048 = vmax.f32 %v984, 0.0
        %v1049 = vmax.f32 %v985, 0.0
        %v1050 = vmax.f32 %v986, 0.0
        %v1051 = vmax.f32 %v987, 0.0
        %v1052 = vmax.f32 %v988, 0.0
        %v1053 = vmax.f32 %v989, 0.0
        %v1054 = vmax.f32 %v990, 0.0
        %v1055 = vmax.f32 %v991, 0.0
        %v1056 = vmax.f32 %v992, 0.0
        %v1057 = vmax.f32 %v993, 0.0
        %v1058 = vmax.f32 %v994, 0.0
        %v1059 = vmax.f32 %v995, 0.0
        %v1060 = vmax.f32 %v996, 0.0
        %v1061 = vmax.f32 %v997, 0.0
        %v1062 = vmax.f32 %v998, 0.0
        %v1063 = vmax.f32 %v999, 0.0
        %v1064 = vmax.f32 %v1000, 0.0
        %v1065 = vmax.f32 %v1001, 0.0
        %v1066 = vmax.f32 %v1002, 0.0
        %v1067 = vmax.f32 %v1003, 0.0
        %v1068 = vmax.f32 %v1004, 0.0
        %v1069 = vmax.f32 %v1005, 0.0
        %v1070 = vmax.f32 %v1006, 0.0
        %v1071 = vmax.f32 %v1007, 0.0
        %v1072 = vmax.f32 %v1008, 0.0
        %v1073 = vmax.f32 %v1009, 0.0
        %v1074 = vmax.f32 %v1010, 0.0
        %v1075 = vmax.f32 %v1011, 0.0
        %v1076 = vmax.f32 %v1012, 0.0
        %v1077 = vmax.f32 %v1013, 0.0
        %v1078 = vmax.f32 %v1014, 0.0
        %v1079 = vmax.f32 %v1015, 0.0
        %v1080 = vmax.f32 %v1016, 0.0
        %v1081 = vmax.f32 %v1017, 0.0
        %v1082 = vmax.f32 %v1018, 0.0
        %v1083 = vmax.f32 %v1019, 0.0
        %v1084 = vmax.f32 %v1020, 0.0
        %v1085 = vmax.f32 %v1021, 0.0
        %v1086 = vmax.f32 %v1022, 0.0
        %v1087 = vmax.f32 %v1023, 0.0
        %v1088 = vmax.f32 %v1024, 0.0
        %v1089 = vmax.f32 %v1025, 0.0
        %v1090 = vmax.f32 %v1026, 0.0
        %v1091 = vmax.f32 %v1027, 0.0
        %v1092 = vmax.f32 %v1028, 0.0
        %v1093 = vmax.f32 %v1029, 0.0
        %v1094 = vmax.f32 %v1030, 0.0
        %v1095 = vmax.f32 %v1031, 0.0
        %v1096 = vmax.f32 %v1032, 0.0
        %v1097 = vmax.f32 %v1033, 0.0
        %v1098 = vpack.c.bf16 %v1034, %v1034
        %v1099 = vpack.c.bf16 %v1035, %v1035
        %v1100 = vpack.c.bf16 %v1036, %v1036
        %v1101 = vpack.c.bf16 %v1037, %v1037
        %v1102 = vpack.c.bf16 %v1038, %v1038
        %v1103 = vpack.c.bf16 %v1039, %v1039
        %v1104 = vpack.c.bf16 %v1040, %v1040
        %v1105 = vpack.c.bf16 %v1041, %v1041
        %v1106 = vpack.c.bf16 %v1042, %v1042
        %v1107 = vpack.c.bf16 %v1043, %v1043
        %v1108 = vpack.c.bf16 %v1044, %v1044
        %v1109 = vpack.c.bf16 %v1045, %v1045
        %v1110 = vpack.c.bf16 %v1046, %v1046
        %v1111 = vpack.c.bf16 %v1047, %v1047
        %v1112 = vpack.c.bf16 %v1048, %v1048
        %v1113 = vpack.c.bf16 %v1049, %v1049
        %v1114 = vpack.c.bf16 %v1050, %v1050
        %v1115 = vpack.c.bf16 %v1051, %v1051
        %v1116 = vpack.c.bf16 %v1052, %v1052
        %v1117 = vpack.c.bf16 %v1053, %v1053
        %v1118 = vpack.c.bf16 %v1054, %v1054
        %v1119 = vpack.c.bf16 %v1055, %v1055
        %v1120 = vpack.c.bf16 %v1056, %v1056
        %v1121 = vpack.c.bf16 %v1057, %v1057
        %v1122 = vpack.c.bf16 %v1058, %v1058
        %v1123 = vpack.c.bf16 %v1059, %v1059
        %v1124 = vpack.c.bf16 %v1060, %v1060
        %v1125 = vpack.c.bf16 %v1061, %v1061
        %v1126 = vpack.c.bf16 %v1062, %v1062
        %v1127 = vpack.c.bf16 %v1063, %v1063
        %v1128 = vpack.c.bf16 %v1064, %v1064
        %v1129 = vpack.c.bf16 %v1065, %v1065
        %v1130 = vpack.c.bf16 %v1066, %v1066
        %v1131 = vpack.c.bf16 %v1067, %v1067
        %v1132 = vpack.c.bf16 %v1068, %v1068
        %v1133 = vpack.c.bf16 %v1069, %v1069
        %v1134 = vpack.c.bf16 %v1070, %v1070
        %v1135 = vpack.c.bf16 %v1071, %v1071
        %v1136 = vpack.c.bf16 %v1072, %v1072
        %v1137 = vpack.c.bf16 %v1073, %v1073
        %v1138 = vpack.c.bf16 %v1074, %v1074
        %v1139 = vpack.c.bf16 %v1075, %v1075
        %v1140 = vpack.c.bf16 %v1076, %v1076
        %v1141 = vpack.c.bf16 %v1077, %v1077
        %v1142 = vpack.c.bf16 %v1078, %v1078
        %v1143 = vpack.c.bf16 %v1079, %v1079
        %v1144 = vpack.c.bf16 %v1080, %v1080
        %v1145 = vpack.c.bf16 %v1081, %v1081
        %v1146 = vpack.c.bf16 %v1082, %v1082
        %v1147 = vpack.c.bf16 %v1083, %v1083
        %v1148 = vpack.c.bf16 %v1084, %v1084
        %v1149 = vpack.c.bf16 %v1085, %v1085
        %v1150 = vpack.c.bf16 %v1086, %v1086
        %v1151 = vpack.c.bf16 %v1087, %v1087
        %v1152 = vpack.c.bf16 %v1088, %v1088
        %v1153 = vpack.c.bf16 %v1089, %v1089
        %v1154 = vpack.c.bf16 %v1090, %v1090
        %v1155 = vpack.c.bf16 %v1091, %v1091
        %v1156 = vpack.c.bf16 %v1092, %v1092
        %v1157 = vpack.c.bf16 %v1093, %v1093
        %v1158 = vpack.c.bf16 %v1094, %v1094
        %v1159 = vpack.c.bf16 %v1095, %v1095
        %v1160 = vpack.c.bf16 %v1096, %v1096
        %v1161 = vpack.c.bf16 %v1097, %v1097
        %1162 = vst [vmem:[%s223] sm:$0xf] %v1098
        %1163 = vst [vmem:[%s223 + $0x4] sm:$0xf] %v1099
        %1164 = vst [vmem:[%s223 + $0x8] sm:$0xf] %v1100
        %1165 = vst [vmem:[%s223 + $0xc] sm:$0xf] %v1101
        %1166 = vst [vmem:[%s223 + $0x10] sm:$0xf] %v1102
        %1167 = vst [vmem:[%s223 + $0x14] sm:$0xf] %v1103
        %1168 = vst [vmem:[%s223 + $0x18] sm:$0xf] %v1104
        %1169 = vst [vmem:[%s223 + $0x1c] sm:$0xf] %v1105
        %1170 = vst [vmem:[%s223 + $0x20] sm:$0xf] %v1106
        %1171 = vst [vmem:[%s223 + $0x24] sm:$0xf] %v1107
        %1172 = vst [vmem:[%s223 + $0x28] sm:$0xf] %v1108
        %1173 = vst [vmem:[%s223 + $0x2c] sm:$0xf] %v1109
        %1174 = vst [vmem:[%s223 + $0x30] sm:$0xf] %v1110
        %1175 = vst [vmem:[%s223 + $0x34] sm:$0xf] %v1111
        %1176 = vst [vmem:[%s223 + $0x38] sm:$0xf] %v1112
        %1177 = vst [vmem:[%s223 + $0x3c] sm:$0xf] %v1113
        %1178 = vst [vmem:[%s223 + $0x40] sm:$0xf] %v1114
        %1179 = vst [vmem:[%s223 + $0x44] sm:$0xf] %v1115
        %1180 = vst [vmem:[%s223 + $0x48] sm:$0xf] %v1116
        %1181 = vst [vmem:[%s223 + $0x4c] sm:$0xf] %v1117
        %1182 = vst [vmem:[%s223 + $0x50] sm:$0xf] %v1118
        %1183 = vst [vmem:[%s223 + $0x54] sm:$0xf] %v1119
        %1184 = vst [vmem:[%s223 + $0x58] sm:$0xf] %v1120
        %1185 = vst [vmem:[%s223 + $0x5c] sm:$0xf] %v1121
        %1186 = vst [vmem:[%s223 + $0x60] sm:$0xf] %v1122
        %1187 = vst [vmem:[%s223 + $0x64] sm:$0xf] %v1123
        %1188 = vst [vmem:[%s223 + $0x68] sm:$0xf] %v1124
        %1189 = vst [vmem:[%s223 + $0x6c] sm:$0xf] %v1125
        %1190 = vst [vmem:[%s223 + $0x70] sm:$0xf] %v1126
        %1191 = vst [vmem:[%s223 + $0x74] sm:$0xf] %v1127
        %1192 = vst [vmem:[%s223 + $0x78] sm:$0xf] %v1128
        %1193 = vst [vmem:[%s223 + $0x7c] sm:$0xf] %v1129
        %1194 = vst [vmem:[%s223 + $0x80] sm:$0xf] %v1130
        %1195 = vst [vmem:[%s223 + $0x84] sm:$0xf] %v1131
        %1196 = vst [vmem:[%s223 + $0x88] sm:$0xf] %v1132
        %1197 = vst [vmem:[%s223 + $0x8c] sm:$0xf] %v1133
        %1198 = vst [vmem:[%s223 + $0x90] sm:$0xf] %v1134
        %1199 = vst [vmem:[%s223 + $0x94] sm:$0xf] %v1135
        %1200 = vst [vmem:[%s223 + $0x98] sm:$0xf] %v1136
        %1201 = vst [vmem:[%s223 + $0x9c] sm:$0xf] %v1137
        %1202 = vst [vmem:[%s223 + $0xa0] sm:$0xf] %v1138
        %1203 = vst [vmem:[%s223 + $0xa4] sm:$0xf] %v1139
        %1204 = vst [vmem:[%s223 + $0xa8] sm:$0xf] %v1140
        %1205 = vst [vmem:[%s223 + $0xac] sm:$0xf] %v1141
        %1206 = vst [vmem:[%s223 + $0xb0] sm:$0xf] %v1142
        %1207 = vst [vmem:[%s223 + $0xb4] sm:$0xf] %v1143
        %1208 = vst [vmem:[%s223 + $0xb8] sm:$0xf] %v1144
        %1209 = vst [vmem:[%s223 + $0xbc] sm:$0xf] %v1145
        %1210 = vst [vmem:[%s223 + $0xc0] sm:$0xf] %v1146
        %1211 = vst [vmem:[%s223 + $0xc4] sm:$0xf] %v1147
        %1212 = vst [vmem:[%s223 + $0xc8] sm:$0xf] %v1148
        %1213 = vst [vmem:[%s223 + $0xcc] sm:$0xf] %v1149
        %1214 = vst [vmem:[%s223 + $0xd0] sm:$0xf] %v1150
        %1215 = vst [vmem:[%s223 + $0xd4] sm:$0xf] %v1151
        %1216 = vst [vmem:[%s223 + $0xd8] sm:$0xf] %v1152
        %1217 = vst [vmem:[%s223 + $0xdc] sm:$0xf] %v1153
        %1218 = vst [vmem:[%s223 + $0xe0] sm:$0xf] %v1154
        %1219 = vst [vmem:[%s223 + $0xe4] sm:$0xf] %v1155
        %1220 = vst [vmem:[%s223 + $0xe8] sm:$0xf] %v1156
        %1221 = vst [vmem:[%s223 + $0xec] sm:$0xf] %v1157
        %1222 = vst [vmem:[%s223 + $0xf0] sm:$0xf] %v1158
        %1223 = vst [vmem:[%s223 + $0xf4] sm:$0xf] %v1159
        %1224 = vst [vmem:[%s223 + $0xf8] sm:$0xf] %v1160
        %1225 = vst [vmem:[%s223 + $0xfc] sm:$0xf] %v1161
      $region40: #{generator_forward.7} parent=27 // pred_fallthru
        _
      %p1226 = scmp.lt.s32.totalorder %s18, 0
      %s1227 = scalar_select %p1226, %s18, 0
      %s1228 = smul.addr %s1227, 4
      %s1229 = scalar_lea.vmem %s2, %s1228
      // Predicated region
      $region41: #{generator_forward.7} parent=27 // pred_check
        %p1230 = pneg %p108
      $region42: #{generator_forward.7} parent=27 // pred_check_branch
        %1232 = sbr.rel (%p1230) target = $region44
      $region43: #{generator_forward.7} parent=27 // pred_region
        _
      $region44: #{generator_forward.7} parent=27 // pred_fallthru
        _
      // Predicated region
      $region45: #{generator_forward.7} parent=27 // pred_check
        %p1233 = pneg %p108
      $region46: #{generator_forward.7} parent=27 // pred_check_branch
        %1235 = sbr.rel (%p1233) target = $region48
      $region47: #{generator_forward.7} parent=27 // pred_region
        %p1236 = scmp.lt.s32.totalorder %s18, 0
        %s1237 = scalar_select %p1236, %s18, 0
        %s1238 = smul.addr %s1237, 4
        %s1239 = scalar_lea.vmem %s2, %s1238
      $region48: #{generator_forward.7} parent=27 // pred_fallthru
        _
    $region28: #{generator_forward.7} parent=5 // pred_fallthru
      _
    %p1240 = scmp.le.s32.totalorder 2, %s8
    // Predicated region
    $region49: #{generator_forward.7} parent=5 // pred_check
      %p1241 = pneg %p1240
    $region50: #{generator_forward.7} parent=5 // pred_check_branch
      %1243 = sbr.rel (%p1241) target = $region52
    $region51: #{generator_forward.7} parent=5 // pred_region
      %s1244 = ssub.s32 %s8, 2
    $region52: #{generator_forward.7} parent=5 // pred_fallthru
      _
  $region6: #{generator_forward.7} parent=0 // loop_footer
    %s12 = sadd.s32 1, %s8
  $region7: #{generator_forward.7} parent=0 // loop_footer_branch
    %7 = sbr.rel target = $region3
  $region8: #{generator_forward.7} parent=0 // loop_exit
    _

// kernel: generator_forward.8
$region0: #{generator_forward.8}
  #allocation0 [shape = 'u32[]', space=smem, size = 0x4, offset = 0x4, fixed_abs, tag = 'smem constant byte address 0x4 - core index']
  #allocation1 [shape = 'u32[72,128]{1,0:T(1,128)}', space=vmem, size = 0x9000, scoped, tag = 'internal scratch']
  #allocation2 [shape = 'f32[4,512,128]{2,1,0:T(8,128)}', space=vmem, size = 0x100000, scoped, tag = 'scratch operand']
  %s0 = inlined_call_operand.vmem [shape: bf16[4,512,128], index: 0, kind: input, shape index: {}]
  %s1 = inlined_call_operand.vmem [shape: bf16[4,128,128], index: 1, kind: input, shape index: {}]
  %s2 = inlined_call_operand.vmem [shape: bf16[4,512,128], index: 2, kind: output, shape index: {}]
  %s3 = sld [smem:[#allocation0]]
  $region53: #{generator_forward.8} parent=0
    _
  %s5 = ssub.s32 1, %s3
  %s6 = scalar_select 0, %s5, %s3
  loop: start=0, step=1, limit=6
  $region2: #{generator_forward.8} parent=0 // loop_pre_header
    _
  $region3: #{generator_forward.8} parent=0 // loop_header
    %s8 = sphi 0, %s12
    %p9 = scmp.ge.s32.totalorder %s8, 6
    %s15 = sphi 0, %s34
    %s16 = sphi 0, %s30
    %s17 = sphi 0, %s26
    %s18 = sphi 0, %s15
    %s19 = sphi 0, %s16
    %s20 = sphi 0, %s17
    %s21 = sphi 0, %s18
    %s22 = sphi 0, %s19
    %s23 = sphi 0, %s20
    %s39 = sphi 0, %s41
    %s42 = sphi 0, %s39
    %s43 = sphi 0, %s42
    %s59 = sphi 0, %s43
    %s69 = sphi 0, %s71
    %s72 = sphi 0, %s69
    %s73 = sphi 0, %s72
    %s89 = sphi 0, %s73
    %s95 = sphi 0, %s97
    %s98 = sphi 0, %s95
    %s99 = sphi 0, %s98
    %s115 = sphi 0, %s99
  $region4: #{generator_forward.8} parent=0 // loop_header_branch
    %11 = sbr.rel (%p9) target = $region8
  $region5: #{generator_forward.8} parent=0 // loop_body
    %s13 = ssub.s32 %s8, 1
    %s14 = ssub.s32 %s8, 2
    %s24 = sadd.s32 1, %s17
    %p25 = scmp.ge.s32.totalorder %s24, 1
    %s26 = scalar_select %p25, 0, %s24
    %s27 = sadd.s32 1, %s16
    %s28 = scalar_select %p25, %s27, %s16
    %p29 = scmp.ge.s32.totalorder %s28, 4
    %s30 = scalar_select %p29, 0, %s28
    %s31 = sadd.s32 1, %s15
    %s32 = scalar_select %p29, %s31, %s15
    %p33 = scmp.ge.s32.totalorder %s32, 1
    %s34 = scalar_select %p33, 0, %s32
    %s35 = ssub.s32 %s16, %s30
    %s36 = ssub.s32 %s17, %s26
    %s37 = sor.u32 %s35, %s36
    %p38 = scmp.eq.s32.totalorder %s37, 0
    %s40 = sadd.s32 %s39, 1
    %s41 = scalar_select %p38, %s39, %s40
    %p44 = pneg %p38
    %p45 = scmp.eq.s32.totalorder %s8, 3
    %p46 = por %p44, %p45
    %p47 = scmp.ne.s32.totalorder %s39, %s42
    %p48 = scmp.eq.s32.totalorder %s8, 0
    %p49 = por %p47, %p48
    %p50 = scmp.ne.s32.totalorder %s39, %s42
    %p51 = scmp.eq.s32.totalorder %s13, 3
    %p52 = por %p50, %p51
    %p53 = scmp.ne.s32.totalorder %s42, %s43
    %p54 = scmp.eq.s32.totalorder %s13, 0
    %p55 = por %p53, %p54
    %p56 = scmp.ne.s32.totalorder %s42, %s43
    %p57 = scmp.eq.s32.totalorder %s14, 3
    %p58 = por %p56, %p57
    %p60 = scmp.ne.s32.totalorder %s43, %s59
    %p61 = scmp.eq.s32.totalorder %s14, 0
    %p62 = por %p60, %p61
    %s63 = ssub.s32 %s16, %s30
    %s64 = ssub.s32 %s17, %s26
    %s65 = sor.u32 %s63, %s64
    %s66 = ssub.s32 %s15, %s34
    %s67 = sor.u32 %s65, %s66
    %p68 = scmp.eq.s32.totalorder %s67, 0
    %s70 = sadd.s32 %s69, 1
    %s71 = scalar_select %p68, %s69, %s70
    %p74 = pneg %p68
    %p75 = scmp.eq.s32.totalorder %s8, 3
    %p76 = por %p74, %p75
    %p77 = scmp.ne.s32.totalorder %s69, %s72
    %p78 = scmp.eq.s32.totalorder %s8, 0
    %p79 = por %p77, %p78
    %p80 = scmp.ne.s32.totalorder %s69, %s72
    %p81 = scmp.eq.s32.totalorder %s13, 3
    %p82 = por %p80, %p81
    %p83 = scmp.ne.s32.totalorder %s72, %s73
    %p84 = scmp.eq.s32.totalorder %s13, 0
    %p85 = por %p83, %p84
    %p86 = scmp.ne.s32.totalorder %s72, %s73
    %p87 = scmp.eq.s32.totalorder %s14, 3
    %p88 = por %p86, %p87
    %p90 = scmp.ne.s32.totalorder %s73, %s89
    %p91 = scmp.eq.s32.totalorder %s14, 0
    %p92 = por %p90, %p91
    %s93 = ssub.s32 %s15, %s34
    %p94 = scmp.eq.s32.totalorder %s93, 0
    %s96 = sadd.s32 %s95, 1
    %s97 = scalar_select %p94, %s95, %s96
    %p100 = pneg %p94
    %p101 = scmp.eq.s32.totalorder %s8, 3
    %p102 = por %p100, %p101
    %p103 = scmp.ne.s32.totalorder %s95, %s98
    %p104 = scmp.eq.s32.totalorder %s8, 0
    %p105 = por %p103, %p104
    %p106 = scmp.ne.s32.totalorder %s95, %s98
    %p107 = scmp.eq.s32.totalorder %s13, 3
    %p108 = por %p106, %p107
    %p109 = scmp.ne.s32.totalorder %s98, %s99
    %p110 = scmp.eq.s32.totalorder %s13, 0
    %p111 = por %p109, %p110
    %p112 = scmp.ne.s32.totalorder %s98, %s99
    %p113 = scmp.eq.s32.totalorder %s14, 3
    %p114 = por %p112, %p113
    %p116 = scmp.ne.s32.totalorder %s99, %s115
    %p117 = scmp.eq.s32.totalorder %s14, 0
    %p118 = por %p116, %p117
    %p119 = scmp.le.s32.totalorder 1, %s8
    %p120 = scmp.lt.s32.totalorder %s8, 5
    %p121 = pnand %p119, %p120
    %p122 = pneg %p121
    // Predicated region
    $region9: #{generator_forward.8} parent=5 // pred_check
      _
    $region10: #{generator_forward.8} parent=5 // pred_check_branch
      %124 = sbr.rel (%p121) target = $region12
    $region11: #{generator_forward.8} parent=5 // pred_region
      %s125 = ssub.s32 %s8, 1
    $region12: #{generator_forward.8} parent=5 // pred_fallthru
      _
    %p126 = scmp.lt.s32.totalorder %s8, 4
    // Predicated region
    $region13: #{generator_forward.8} parent=5 // pred_check
      %p127 = pneg %p126
    $region14: #{generator_forward.8} parent=5 // pred_check_branch
      %129 = sbr.rel (%p127) target = $region16
    $region15: #{generator_forward.8} parent=5 // pred_region
      // Predicated region
      $region17: #{generator_forward.8} parent=15 // pred_check
        %p130 = pneg %p49
      $region18: #{generator_forward.8} parent=15 // pred_check_branch
        %132 = sbr.rel (%p130) target = $region20
      $region19: #{generator_forward.8} parent=15 // pred_region
        %p133 = scmp.lt.s32.totalorder %s16, 3
        %s134 = scalar_select %p133, %s16, 3
        %p135 = scmp.lt.s32.totalorder %s17, 0
        %s136 = scalar_select %p135, %s17, 0
        %s137 = smul.addr %s134, 64
        %s138 = sadd.s32 %s136, %s137
        %s139 = smul.addr %s138, 4
        %s140 = scalar_lea.vmem %s0, %s139
      $region20: #{generator_forward.8} parent=15 // pred_fallthru
        _
      // Predicated region
      $region21: #{generator_forward.8} parent=15 // pred_check
        %p141 = pneg %p79
      $region22: #{generator_forward.8} parent=15 // pred_check_branch
        %143 = sbr.rel (%p141) target = $region24
      $region23: #{generator_forward.8} parent=15 // pred_region
        %s144 = smul.u32 16, %s17
        %p145 = scmp.lt.s32.totalorder %s16, 3
        %s146 = scalar_select %p145, %s16, 3
        %p147 = scmp.lt.s32.totalorder %s144, 15
        %s148 = scalar_select %p147, %s144, 15
        %p149 = scmp.lt.s32.totalorder %s15, 0
        %s150 = scalar_select %p149, %s15, 0
        %s151 = sadd.s32 %s150, %s148
        %s152 = smul.addr %s146, 16
        %s153 = sadd.s32 %s151, %s152
        %s154 = smul.addr %s153, 4
        %s155 = scalar_lea.vmem %s1, %s154
        %s156 = smul.u32 16, %s17
      $region24: #{generator_forward.8} parent=15 // pred_fallthru
        _
    $region16: #{generator_forward.8} parent=5 // pred_fallthru
      _
    %p157 = scmp.le.s32.totalorder 1, %s8
    %p158 = scmp.lt.s32.totalorder %s8, 5
    %p159 = pnand %p157, %p158
    %p160 = pneg %p159
    // Predicated region
    $region25: #{generator_forward.8} parent=5 // pred_check
      _
    $region26: #{generator_forward.8} parent=5 // pred_check_branch
      %162 = sbr.rel (%p159) target = $region28
    $region27: #{generator_forward.8} parent=5 // pred_region
      %s163 = ssub.s32 %s8, 1
      %p164 = scmp.lt.s32.totalorder %s19, 3
      %s165 = scalar_select %p164, %s19, 3
      %p166 = scmp.lt.s32.totalorder %s20, 0
      %s167 = scalar_select %p166, %s20, 0
      %s168 = smul.addr %s165, 64
      %s169 = sadd.s32 %s167, %s168
      %s170 = smul.addr %s169, 4
      %s171 = scalar_lea.vmem %s0, %s170
      %p172 = pneg %p55
      %p173 = pneg %p52
      %s174 = smul.u32 16, %s20
      %p175 = scmp.lt.s32.totalorder %s19, 3
      %s176 = scalar_select %p175, %s19, 3
      %p177 = scmp.lt.s32.totalorder %s174, 15
      %s178 = scalar_select %p177, %s174, 15
      %p179 = scmp.lt.s32.totalorder %s18, 0
      %s180 = scalar_select %p179, %s18, 0
      %s181 = sadd.s32 %s180, %s178
      %s182 = smul.addr %s176, 16
      %s183 = sadd.s32 %s181, %s182
      %s184 = smul.addr %s183, 4
      %s185 = scalar_lea.vmem %s1, %s184
      %p186 = pneg %p85
      %p187 = pneg %p82
      %p188 = pneg %p111
      %p189 = pneg %p108
      %p190 = scmp.lt.s32.totalorder %s18, 0
      %s191 = scalar_select %p190, %s18, 0
      %s192 = smul.addr %s191, 4
      %s193 = scalar_lea.vmem %s2, %s192
      %p194 = scmp.lt.s32.totalorder %s19, 3
      %s195 = scalar_select %p194, %s19, 3
      %p196 = scmp.lt.s32.totalorder %s20, 0
      %s197 = scalar_select %p196, %s20, 0
      %s198 = smul.addr %s195, 64
      %s199 = sadd.s32 %s197, %s198
      %s200 = smul.addr %s199, 4
      %s201 = scalar_lea.vmem %s0, %s200
      %s202 = smul.u32 16, %s20
      %p203 = scmp.lt.s32.totalorder %s19, 3
      %s204 = scalar_select %p203, %s19, 3
      %p205 = scmp.lt.s32.totalorder %s202, 15
      %s206 = scalar_select %p205, %s202, 15
      %p207 = scmp.lt.s32.totalorder %s18, 0
      %s208 = scalar_select %p207, %s18, 0
      %s209 = sadd.s32 %s208, %s206
      %s210 = smul.addr %s204, 16
      %s211 = sadd.s32 %s209, %s210
      %s212 = smul.addr %s211, 4
      %s213 = scalar_lea.vmem %s1, %s212
      %s214 = smul.u32 16, %s20
      %p215 = scmp.lt.s32.totalorder %s18, 0
      %s216 = scalar_select %p215, %s18, 0
      %s217 = smul.addr %s216, 4
      %s218 = scalar_lea.vmem %s2, %s217
      %v219 = vld [vmem:[%s201] sm:$0xf]
      %v220 = vld [vmem:[%s201 + $0x4] sm:$0xf]
      %v221 = vld [vmem:[%s201 + $0x8] sm:$0xf]
      %v222 = vld [vmem:[%s201 + $0xc] sm:$0xf]
      %v223 = vld [vmem:[%s201 + $0x10] sm:$0xf]
      %v224 = vld [vmem:[%s201 + $0x14] sm:$0xf]
      %v225 = vld [vmem:[%s201 + $0x18] sm:$0xf]
      %v226 = vld [vmem:[%s201 + $0x1c] sm:$0xf]
      %v227 = vld [vmem:[%s201 + $0x20] sm:$0xf]
      %v228 = vld [vmem:[%s201 + $0x24] sm:$0xf]
      %v229 = vld [vmem:[%s201 + $0x28] sm:$0xf]
      %v230 = vld [vmem:[%s201 + $0x2c] sm:$0xf]
      %v231 = vld [vmem:[%s201 + $0x30] sm:$0xf]
      %v232 = vld [vmem:[%s201 + $0x34] sm:$0xf]
      %v233 = vld [vmem:[%s201 + $0x38] sm:$0xf]
      %v234 = vld [vmem:[%s201 + $0x3c] sm:$0xf]
      %v235 = vld [vmem:[%s201 + $0x40] sm:$0xf]
      %v236 = vld [vmem:[%s201 + $0x44] sm:$0xf]
      %v237 = vld [vmem:[%s201 + $0x48] sm:$0xf]
      %v238 = vld [vmem:[%s201 + $0x4c] sm:$0xf]
      %v239 = vld [vmem:[%s201 + $0x50] sm:$0xf]
      %v240 = vld [vmem:[%s201 + $0x54] sm:$0xf]
      %v241 = vld [vmem:[%s201 + $0x58] sm:$0xf]
      %v242 = vld [vmem:[%s201 + $0x5c] sm:$0xf]
      %v243 = vld [vmem:[%s201 + $0x60] sm:$0xf]
      %v244 = vld [vmem:[%s201 + $0x64] sm:$0xf]
      %v245 = vld [vmem:[%s201 + $0x68] sm:$0xf]
      %v246 = vld [vmem:[%s201 + $0x6c] sm:$0xf]
      %v247 = vld [vmem:[%s201 + $0x70] sm:$0xf]
      %v248 = vld [vmem:[%s201 + $0x74] sm:$0xf]
      %v249 = vld [vmem:[%s201 + $0x78] sm:$0xf]
      %v250 = vld [vmem:[%s201 + $0x7c] sm:$0xf]
      %v251 = vld [vmem:[%s201 + $0x80] sm:$0xf]
      %v252 = vld [vmem:[%s201 + $0x84] sm:$0xf]
      %v253 = vld [vmem:[%s201 + $0x88] sm:$0xf]
      %v254 = vld [vmem:[%s201 + $0x8c] sm:$0xf]
      %v255 = vld [vmem:[%s201 + $0x90] sm:$0xf]
      %v256 = vld [vmem:[%s201 + $0x94] sm:$0xf]
      %v257 = vld [vmem:[%s201 + $0x98] sm:$0xf]
      %v258 = vld [vmem:[%s201 + $0x9c] sm:$0xf]
      %v259 = vld [vmem:[%s201 + $0xa0] sm:$0xf]
      %v260 = vld [vmem:[%s201 + $0xa4] sm:$0xf]
      %v261 = vld [vmem:[%s201 + $0xa8] sm:$0xf]
      %v262 = vld [vmem:[%s201 + $0xac] sm:$0xf]
      %v263 = vld [vmem:[%s201 + $0xb0] sm:$0xf]
      %v264 = vld [vmem:[%s201 + $0xb4] sm:$0xf]
      %v265 = vld [vmem:[%s201 + $0xb8] sm:$0xf]
      %v266 = vld [vmem:[%s201 + $0xbc] sm:$0xf]
      %v267 = vld [vmem:[%s201 + $0xc0] sm:$0xf]
      %v268 = vld [vmem:[%s201 + $0xc4] sm:$0xf]
      %v269 = vld [vmem:[%s201 + $0xc8] sm:$0xf]
      %v270 = vld [vmem:[%s201 + $0xcc] sm:$0xf]
      %v271 = vld [vmem:[%s201 + $0xd0] sm:$0xf]
      %v272 = vld [vmem:[%s201 + $0xd4] sm:$0xf]
      %v273 = vld [vmem:[%s201 + $0xd8] sm:$0xf]
      %v274 = vld [vmem:[%s201 + $0xdc] sm:$0xf]
      %v275 = vld [vmem:[%s201 + $0xe0] sm:$0xf]
      %v276 = vld [vmem:[%s201 + $0xe4] sm:$0xf]
      %v277 = vld [vmem:[%s201 + $0xe8] sm:$0xf]
      %v278 = vld [vmem:[%s201 + $0xec] sm:$0xf]
      %v279 = vld [vmem:[%s201 + $0xf0] sm:$0xf]
      %v280 = vld [vmem:[%s201 + $0xf4] sm:$0xf]
      %v281 = vld [vmem:[%s201 + $0xf8] sm:$0xf]
      %v282 = vld [vmem:[%s201 + $0xfc] sm:$0xf]
      %v283 = vld [vmem:[%s213] sm:$0xf]
      %v284 = vld [vmem:[%s213 + $0x4] sm:$0xf]
      %v285 = vld [vmem:[%s213 + $0x8] sm:$0xf]
      %v286 = vld [vmem:[%s213 + $0xc] sm:$0xf]
      %v287 = vld [vmem:[%s213 + $0x10] sm:$0xf]
      %v288 = vld [vmem:[%s213 + $0x14] sm:$0xf]
      %v289 = vld [vmem:[%s213 + $0x18] sm:$0xf]
      %v290 = vld [vmem:[%s213 + $0x1c] sm:$0xf]
      %v291 = vld [vmem:[%s213 + $0x20] sm:$0xf]
      %v292 = vld [vmem:[%s213 + $0x24] sm:$0xf]
      %v293 = vld [vmem:[%s213 + $0x28] sm:$0xf]
      %v294 = vld [vmem:[%s213 + $0x2c] sm:$0xf]
      %v295 = vld [vmem:[%s213 + $0x30] sm:$0xf]
      %v296 = vld [vmem:[%s213 + $0x34] sm:$0xf]
      %v297 = vld [vmem:[%s213 + $0x38] sm:$0xf]
      %v298 = vld [vmem:[%s213 + $0x3c] sm:$0xf]
      %v363 = vunpack.c.l.b16 %v219
      %v364 = vunpack.c.l.b16 %v220
      %v365 = vunpack.c.l.b16 %v221
      %v366 = vunpack.c.l.b16 %v222
      %v367 = vunpack.c.l.b16 %v223
      %v368 = vunpack.c.l.b16 %v224
      %v369 = vunpack.c.l.b16 %v225
      %v370 = vunpack.c.l.b16 %v226
      %v371 = vunpack.c.l.b16 %v227
      %v372 = vunpack.c.l.b16 %v228
      %v373 = vunpack.c.l.b16 %v229
      %v374 = vunpack.c.l.b16 %v230
      %v375 = vunpack.c.l.b16 %v231
      %v376 = vunpack.c.l.b16 %v232
      %v377 = vunpack.c.l.b16 %v233
      %v378 = vunpack.c.l.b16 %v234
      %v379 = vunpack.c.l.b16 %v235
      %v380 = vunpack.c.l.b16 %v236
      %v381 = vunpack.c.l.b16 %v237
      %v382 = vunpack.c.l.b16 %v238
      %v383 = vunpack.c.l.b16 %v239
      %v384 = vunpack.c.l.b16 %v240
      %v385 = vunpack.c.l.b16 %v241
      %v386 = vunpack.c.l.b16 %v242
      %v387 = vunpack.c.l.b16 %v243
      %v388 = vunpack.c.l.b16 %v244
      %v389 = vunpack.c.l.b16 %v245
      %v390 = vunpack.c.l.b16 %v246
      %v391 = vunpack.c.l.b16 %v247
      %v392 = vunpack.c.l.b16 %v248
      %v393 = vunpack.c.l.b16 %v249
      %v394 = vunpack.c.l.b16 %v250
      %v395 = vunpack.c.l.b16 %v251
      %v396 = vunpack.c.l.b16 %v252
      %v397 = vunpack.c.l.b16 %v253
      %v398 = vunpack.c.l.b16 %v254
      %v399 = vunpack.c.l.b16 %v255
      %v400 = vunpack.c.l.b16 %v256
      %v401 = vunpack.c.l.b16 %v257
      %v402 = vunpack.c.l.b16 %v258
      %v403 = vunpack.c.l.b16 %v259
      %v404 = vunpack.c.l.b16 %v260
      %v405 = vunpack.c.l.b16 %v261
      %v406 = vunpack.c.l.b16 %v262
      %v407 = vunpack.c.l.b16 %v263
      %v408 = vunpack.c.l.b16 %v264
      %v409 = vunpack.c.l.b16 %v265
      %v410 = vunpack.c.l.b16 %v266
      %v411 = vunpack.c.l.b16 %v267
      %v412 = vunpack.c.l.b16 %v268
      %v413 = vunpack.c.l.b16 %v269
      %v414 = vunpack.c.l.b16 %v270
      %v415 = vunpack.c.l.b16 %v271
      %v416 = vunpack.c.l.b16 %v272
      %v417 = vunpack.c.l.b16 %v273
      %v418 = vunpack.c.l.b16 %v274
      %v419 = vunpack.c.l.b16 %v275
      %v420 = vunpack.c.l.b16 %v276
      %v421 = vunpack.c.l.b16 %v277
      %v422 = vunpack.c.l.b16 %v278
      %v423 = vunpack.c.l.b16 %v279
      %v424 = vunpack.c.l.b16 %v280
      %v425 = vunpack.c.l.b16 %v281
      %v426 = vunpack.c.l.b16 %v282
      %v427 = vpack.c.b16 %v364, %v363
      %v428 = vpack.c.b16 %v366, %v365
      %v429 = vpack.c.b16 %v368, %v367
      %v430 = vpack.c.b16 %v370, %v369
      %v431 = vpack.c.b16 %v372, %v371
      %v432 = vpack.c.b16 %v374, %v373
      %v433 = vpack.c.b16 %v376, %v375
      %v434 = vpack.c.b16 %v378, %v377
      %v435 = vpack.c.b16 %v380, %v379
      %v436 = vpack.c.b16 %v382, %v381
      %v437 = vpack.c.b16 %v384, %v383
      %v438 = vpack.c.b16 %v386, %v385
      %v439 = vpack.c.b16 %v388, %v387
      %v440 = vpack.c.b16 %v390, %v389
      %v441 = vpack.c.b16 %v392, %v391
      %v442 = vpack.c.b16 %v394, %v393
      %v443 = vpack.c.b16 %v396, %v395
      %v444 = vpack.c.b16 %v398, %v397
      %v445 = vpack.c.b16 %v400, %v399
      %v446 = vpack.c.b16 %v402, %v401
      %v447 = vpack.c.b16 %v404, %v403
      %v448 = vpack.c.b16 %v406, %v405
      %v449 = vpack.c.b16 %v408, %v407
      %v450 = vpack.c.b16 %v410, %v409
      %v451 = vpack.c.b16 %v412, %v411
      %v452 = vpack.c.b16 %v414, %v413
      %v453 = vpack.c.b16 %v416, %v415
      %v454 = vpack.c.b16 %v418, %v417
      %v455 = vpack.c.b16 %v420, %v419
      %v456 = vpack.c.b16 %v422, %v421
      %v457 = vpack.c.b16 %v424, %v423
      %v458 = vpack.c.b16 %v426, %v425
      %v507 = vunpack.c.l.b16 %v283
      %v508 = vunpack.c.l.b16 %v284
      %v509 = vunpack.c.l.b16 %v285
      %v510 = vunpack.c.l.b16 %v286
      %v511 = vunpack.c.l.b16 %v287
      %v512 = vunpack.c.l.b16 %v288
      %v513 = vunpack.c.l.b16 %v289
      %v514 = vunpack.c.l.b16 %v290
      %v515 = vunpack.c.l.b16 %v291
      %v516 = vunpack.c.l.b16 %v292
      %v517 = vunpack.c.l.b16 %v293
      %v518 = vunpack.c.l.b16 %v294
      %v519 = vunpack.c.l.b16 %v295
      %v520 = vunpack.c.l.b16 %v296
      %v521 = vunpack.c.l.b16 %v297
      %v522 = vunpack.c.l.b16 %v298
      %v523 = vpack.c.b16 %v508, %v507
      %v524 = vpack.c.b16 %v510, %v509
      %v525 = vpack.c.b16 %v512, %v511
      %v526 = vpack.c.b16 %v514, %v513
      %v527 = vpack.c.b16 %v516, %v515
      %v528 = vpack.c.b16 %v518, %v517
      %v529 = vpack.c.b16 %v520, %v519
      %v530 = vpack.c.b16 %v522, %v521
      %539 = vmatpush.bf16.msra.mxu0 %v530
      %540 = vmatpush.bf16.msra.mxu0 %v529
      %541 = vmatpush.bf16.msra.mxu0 %v528
      %542 = vmatpush.bf16.msra.mxu0 %v527
      %543 = vmatpush.bf16.msra.mxu0 %v526
      %544 = vmatpush.bf16.msra.mxu0 %v525
      %545 = vmatpush.bf16.msra.mxu0 %v524
      %546 = vmatpush.bf16.msra.mxu0 %v523
      %547 = vmatmul.bf16.gmra.mxu0 %v427
      %v548 = vpop.f32.mrf.mxu0
      %v549 = vadd.f32 0.0, %v548
      %v550 = vpop.f32.mrf.mxu0
      %v551 = vadd.f32 0.0, %v550
      %552 = vmatmul.bf16.gmra.mxu0 %v428
      %v553 = vpop.f32.mrf.mxu0
      %v554 = vadd.f32 0.0, %v553
      %v555 = vpop.f32.mrf.mxu0
      %v556 = vadd.f32 0.0, %v555
      %557 = vmatmul.bf16.gmra.mxu0 %v429
      %v558 = vpop.f32.mrf.mxu0
      %v559 = vadd.f32 0.0, %v558
      %v560 = vpop.f32.mrf.mxu0
      %v561 = vadd.f32 0.0, %v560
      %562 = vmatmul.bf16.gmra.mxu0 %v430
      %v563 = vpop.f32.mrf.mxu0
      %v564 = vadd.f32 0.0, %v563
      %v565 = vpop.f32.mrf.mxu0
      %v566 = vadd.f32 0.0, %v565
      %567 = vmatmul.bf16.gmra.mxu0 %v431
      %v568 = vpop.f32.mrf.mxu0
      %v569 = vadd.f32 0.0, %v568
      %v570 = vpop.f32.mrf.mxu0
      %v571 = vadd.f32 0.0, %v570
      %572 = vmatmul.bf16.gmra.mxu0 %v432
      %v573 = vpop.f32.mrf.mxu0
      %v574 = vadd.f32 0.0, %v573
      %v575 = vpop.f32.mrf.mxu0
      %v576 = vadd.f32 0.0, %v575
      %577 = vmatmul.bf16.gmra.mxu0 %v433
      %v578 = vpop.f32.mrf.mxu0
      %v579 = vadd.f32 0.0, %v578
      %v580 = vpop.f32.mrf.mxu0
      %v581 = vadd.f32 0.0, %v580
      %582 = vmatmul.bf16.gmra.mxu0 %v434
      %v583 = vpop.f32.mrf.mxu0
      %v584 = vadd.f32 0.0, %v583
      %v585 = vpop.f32.mrf.mxu0
      %v586 = vadd.f32 0.0, %v585
      %587 = vmatmul.bf16.gmra.mxu0 %v435
      %v588 = vpop.f32.mrf.mxu0
      %v589 = vadd.f32 0.0, %v588
      %v590 = vpop.f32.mrf.mxu0
      %v591 = vadd.f32 0.0, %v590
      %592 = vmatmul.bf16.gmra.mxu0 %v436
      %v593 = vpop.f32.mrf.mxu0
      %v594 = vadd.f32 0.0, %v593
      %v595 = vpop.f32.mrf.mxu0
      %v596 = vadd.f32 0.0, %v595
      %597 = vmatmul.bf16.gmra.mxu0 %v437
      %v598 = vpop.f32.mrf.mxu0
      %v599 = vadd.f32 0.0, %v598
      %v600 = vpop.f32.mrf.mxu0
      %v601 = vadd.f32 0.0, %v600
      %602 = vmatmul.bf16.gmra.mxu0 %v438
      %v603 = vpop.f32.mrf.mxu0
      %v604 = vadd.f32 0.0, %v603
      %v605 = vpop.f32.mrf.mxu0
      %v606 = vadd.f32 0.0, %v605
      %607 = vmatmul.bf16.gmra.mxu0 %v439
      %v608 = vpop.f32.mrf.mxu0
      %v609 = vadd.f32 0.0, %v608
      %v610 = vpop.f32.mrf.mxu0
      %v611 = vadd.f32 0.0, %v610
      %612 = vmatmul.bf16.gmra.mxu0 %v440
      %v613 = vpop.f32.mrf.mxu0
      %v614 = vadd.f32 0.0, %v613
      %v615 = vpop.f32.mrf.mxu0
      %v616 = vadd.f32 0.0, %v615
      %617 = vmatmul.bf16.gmra.mxu0 %v441
      %v618 = vpop.f32.mrf.mxu0
      %v619 = vadd.f32 0.0, %v618
      %v620 = vpop.f32.mrf.mxu0
      %v621 = vadd.f32 0.0, %v620
      %622 = vmatmul.bf16.gmra.mxu0 %v442
      %v623 = vpop.f32.mrf.mxu0
      %v624 = vadd.f32 0.0, %v623
      %v625 = vpop.f32.mrf.mxu0
      %v626 = vadd.f32 0.0, %v625
      %627 = vmatmul.bf16.gmra.mxu0 %v443
      %v628 = vpop.f32.mrf.mxu0
      %v629 = vadd.f32 0.0, %v628
      %v630 = vpop.f32.mrf.mxu0
      %v631 = vadd.f32 0.0, %v630
      %632 = vmatmul.bf16.gmra.mxu0 %v444
      %v633 = vpop.f32.mrf.mxu0
      %v634 = vadd.f32 0.0, %v633
      %v635 = vpop.f32.mrf.mxu0
      %v636 = vadd.f32 0.0, %v635
      %637 = vmatmul.bf16.gmra.mxu0 %v445
      %v638 = vpop.f32.mrf.mxu0
      %v639 = vadd.f32 0.0, %v638
      %v640 = vpop.f32.mrf.mxu0
      %v641 = vadd.f32 0.0, %v640
      %642 = vmatmul.bf16.gmra.mxu0 %v446
      %v643 = vpop.f32.mrf.mxu0
      %v644 = vadd.f32 0.0, %v643
      %v645 = vpop.f32.mrf.mxu0
      %v646 = vadd.f32 0.0, %v645
      %647 = vmatmul.bf16.gmra.mxu0 %v447
      %v648 = vpop.f32.mrf.mxu0
      %v649 = vadd.f32 0.0, %v648
      %v650 = vpop.f32.mrf.mxu0
      %v651 = vadd.f32 0.0, %v650
      %652 = vmatmul.bf16.gmra.mxu0 %v448
      %v653 = vpop.f32.mrf.mxu0
      %v654 = vadd.f32 0.0, %v653
      %v655 = vpop.f32.mrf.mxu0
      %v656 = vadd.f32 0.0, %v655
      %657 = vmatmul.bf16.gmra.mxu0 %v449
      %v658 = vpop.f32.mrf.mxu0
      %v659 = vadd.f32 0.0, %v658
      %v660 = vpop.f32.mrf.mxu0
      %v661 = vadd.f32 0.0, %v660
      %662 = vmatmul.bf16.gmra.mxu0 %v450
      %v663 = vpop.f32.mrf.mxu0
      %v664 = vadd.f32 0.0, %v663
      %v665 = vpop.f32.mrf.mxu0
      %v666 = vadd.f32 0.0, %v665
      %667 = vmatmul.bf16.gmra.mxu0 %v451
      %v668 = vpop.f32.mrf.mxu0
      %v669 = vadd.f32 0.0, %v668
      %v670 = vpop.f32.mrf.mxu0
      %v671 = vadd.f32 0.0, %v670
      %672 = vmatmul.bf16.gmra.mxu0 %v452
      %v673 = vpop.f32.mrf.mxu0
      %v674 = vadd.f32 0.0, %v673
      %v675 = vpop.f32.mrf.mxu0
      %v676 = vadd.f32 0.0, %v675
      %677 = vmatmul.bf16.gmra.mxu0 %v453
      %v678 = vpop.f32.mrf.mxu0
      %v679 = vadd.f32 0.0, %v678
      %v680 = vpop.f32.mrf.mxu0
      %v681 = vadd.f32 0.0, %v680
      %682 = vmatmul.bf16.gmra.mxu0 %v454
      %v683 = vpop.f32.mrf.mxu0
      %v684 = vadd.f32 0.0, %v683
      %v685 = vpop.f32.mrf.mxu0
      %v686 = vadd.f32 0.0, %v685
      %687 = vmatmul.bf16.gmra.mxu0 %v455
      %v688 = vpop.f32.mrf.mxu0
      %v689 = vadd.f32 0.0, %v688
      %v690 = vpop.f32.mrf.mxu0
      %v691 = vadd.f32 0.0, %v690
      %692 = vmatmul.bf16.gmra.mxu0 %v456
      %v693 = vpop.f32.mrf.mxu0
      %v694 = vadd.f32 0.0, %v693
      %v695 = vpop.f32.mrf.mxu0
      %v696 = vadd.f32 0.0, %v695
      %697 = vmatmul.bf16.gmra.mxu0 %v457
      %v698 = vpop.f32.mrf.mxu0
      %v699 = vadd.f32 0.0, %v698
      %v700 = vpop.f32.mrf.mxu0
      %v701 = vadd.f32 0.0, %v700
      %702 = vmatmul.bf16.gmra.mxu0 %v458
      %v703 = vpop.f32.mrf.mxu0
      %v704 = vadd.f32 0.0, %v703
      %v705 = vpop.f32.mrf.mxu0
      %v706 = vadd.f32 0.0, %v705
      %707 = vdwg.mxu0
      %p708 = scmp.eq.s32.totalorder %s20, 0
      // Predicated region
      $region29: #{generator_forward.8} parent=27 // pred_check
        %p709 = pneg %p708
      $region30: #{generator_forward.8} parent=27 // pred_check_branch
        %711 = sbr.rel (%p709) target = $region32
      $region31: #{generator_forward.8} parent=27 // pred_region
        %s712 = smul.u32 %s19, 512
        %s713 = scalar_lea.vmem [#allocation2], %s712
        %714 = vst [vmem:[%s713] sm:$0xff] %v549
        %715 = vst [vmem:[%s713 + $0x8] sm:$0xff] %v551
        %716 = vst [vmem:[%s713 + $0x10] sm:$0xff] %v554
        %717 = vst [vmem:[%s713 + $0x18] sm:$0xff] %v556
        %718 = vst [vmem:[%s713 + $0x20] sm:$0xff] %v559
        %719 = vst [vmem:[%s713 + $0x28] sm:$0xff] %v561
        %720 = vst [vmem:[%s713 + $0x30] sm:$0xff] %v564
        %721 = vst [vmem:[%s713 + $0x38] sm:$0xff] %v566
        %722 = vst [vmem:[%s713 + $0x40] sm:$0xff] %v569
        %723 = vst [vmem:[%s713 + $0x48] sm:$0xff] %v571
        %724 = vst [vmem:[%s713 + $0x50] sm:$0xff] %v574
        %725 = vst [vmem:[%s713 + $0x58] sm:$0xff] %v576
        %726 = vst [vmem:[%s713 + $0x60] sm:$0xff] %v579
        %727 = vst [vmem:[%s713 + $0x68] sm:$0xff] %v581
        %728 = vst [vmem:[%s713 + $0x70] sm:$0xff] %v584
        %729 = vst [vmem:[%s713 + $0x78] sm:$0xff] %v586
        %730 = vst [vmem:[%s713 + $0x80] sm:$0xff] %v589
        %731 = vst [vmem:[%s713 + $0x88] sm:$0xff] %v591
        %732 = vst [vmem:[%s713 + $0x90] sm:$0xff] %v594
        %733 = vst [vmem:[%s713 + $0x98] sm:$0xff] %v596
        %734 = vst [vmem:[%s713 + $0xa0] sm:$0xff] %v599
        %735 = vst [vmem:[%s713 + $0xa8] sm:$0xff] %v601
        %736 = vst [vmem:[%s713 + $0xb0] sm:$0xff] %v604
        %737 = vst [vmem:[%s713 + $0xb8] sm:$0xff] %v606
        %738 = vst [vmem:[%s713 + $0xc0] sm:$0xff] %v609
        %739 = vst [vmem:[%s713 + $0xc8] sm:$0xff] %v611
        %740 = vst [vmem:[%s713 + $0xd0] sm:$0xff] %v614
        %741 = vst [vmem:[%s713 + $0xd8] sm:$0xff] %v616
        %742 = vst [vmem:[%s713 + $0xe0] sm:$0xff] %v619
        %743 = vst [vmem:[%s713 + $0xe8] sm:$0xff] %v621
        %744 = vst [vmem:[%s713 + $0xf0] sm:$0xff] %v624
        %745 = vst [vmem:[%s713 + $0xf8] sm:$0xff] %v626
        %746 = vst [vmem:[%s713 + $0x100] sm:$0xff] %v629
        %747 = vst [vmem:[%s713 + $0x108] sm:$0xff] %v631
        %748 = vst [vmem:[%s713 + $0x110] sm:$0xff] %v634
        %749 = vst [vmem:[%s713 + $0x118] sm:$0xff] %v636
        %750 = vst [vmem:[%s713 + $0x120] sm:$0xff] %v639
        %751 = vst [vmem:[%s713 + $0x128] sm:$0xff] %v641
        %752 = vst [vmem:[%s713 + $0x130] sm:$0xff] %v644
        %753 = vst [vmem:[%s713 + $0x138] sm:$0xff] %v646
        %754 = vst [vmem:[%s713 + $0x140] sm:$0xff] %v649
        %755 = vst [vmem:[%s713 + $0x148] sm:$0xff] %v651
        %756 = vst [vmem:[%s713 + $0x150] sm:$0xff] %v654
        %757 = vst [vmem:[%s713 + $0x158] sm:$0xff] %v656
        %758 = vst [vmem:[%s713 + $0x160] sm:$0xff] %v659
        %759 = vst [vmem:[%s713 + $0x168] sm:$0xff] %v661
        %760 = vst [vmem:[%s713 + $0x170] sm:$0xff] %v664
        %761 = vst [vmem:[%s713 + $0x178] sm:$0xff] %v666
        %762 = vst [vmem:[%s713 + $0x180] sm:$0xff] %v669
        %763 = vst [vmem:[%s713 + $0x188] sm:$0xff] %v671
        %764 = vst [vmem:[%s713 + $0x190] sm:$0xff] %v674
        %765 = vst [vmem:[%s713 + $0x198] sm:$0xff] %v676
        %766 = vst [vmem:[%s713 + $0x1a0] sm:$0xff] %v679
        %767 = vst [vmem:[%s713 + $0x1a8] sm:$0xff] %v681
        %768 = vst [vmem:[%s713 + $0x1b0] sm:$0xff] %v684
        %769 = vst [vmem:[%s713 + $0x1b8] sm:$0xff] %v686
        %770 = vst [vmem:[%s713 + $0x1c0] sm:$0xff] %v689
        %771 = vst [vmem:[%s713 + $0x1c8] sm:$0xff] %v691
        %772 = vst [vmem:[%s713 + $0x1d0] sm:$0xff] %v694
        %773 = vst [vmem:[%s713 + $0x1d8] sm:$0xff] %v696
        %774 = vst [vmem:[%s713 + $0x1e0] sm:$0xff] %v699
        %775 = vst [vmem:[%s713 + $0x1e8] sm:$0xff] %v701
        %776 = vst [vmem:[%s713 + $0x1f0] sm:$0xff] %v704
        %777 = vst [vmem:[%s713 + $0x1f8] sm:$0xff] %v706
      $region32: #{generator_forward.8} parent=27 // pred_fallthru
        _
      %p778 = scmp.gt.s32.totalorder %s20, 0
      // Predicated region
      $region33: #{generator_forward.8} parent=27 // pred_check
        %p779 = pneg %p778
      $region34: #{generator_forward.8} parent=27 // pred_check_branch
        %781 = sbr.rel (%p779) target = $region36
      $region35: #{generator_forward.8} parent=27 // pred_region
        %s782 = smul.u32 %s19, 512
        %s783 = scalar_lea.vmem [#allocation2], %s782
        %v784 = vld [vmem:[%s783] sm:$0xff]
        %v785 = vld [vmem:[%s783 + $0x8] sm:$0xff]
        %v786 = vld [vmem:[%s783 + $0x10] sm:$0xff]
        %v787 = vld [vmem:[%s783 + $0x18] sm:$0xff]
        %v788 = vld [vmem:[%s783 + $0x20] sm:$0xff]
        %v789 = vld [vmem:[%s783 + $0x28] sm:$0xff]
        %v790 = vld [vmem:[%s783 + $0x30] sm:$0xff]
        %v791 = vld [vmem:[%s783 + $0x38] sm:$0xff]
        %v792 = vld [vmem:[%s783 + $0x40] sm:$0xff]
        %v793 = vld [vmem:[%s783 + $0x48] sm:$0xff]
        %v794 = vld [vmem:[%s783 + $0x50] sm:$0xff]
        %v795 = vld [vmem:[%s783 + $0x58] sm:$0xff]
        %v796 = vld [vmem:[%s783 + $0x60] sm:$0xff]
        %v797 = vld [vmem:[%s783 + $0x68] sm:$0xff]
        %v798 = vld [vmem:[%s783 + $0x70] sm:$0xff]
        %v799 = vld [vmem:[%s783 + $0x78] sm:$0xff]
        %v800 = vld [vmem:[%s783 + $0x80] sm:$0xff]
        %v801 = vld [vmem:[%s783 + $0x88] sm:$0xff]
        %v802 = vld [vmem:[%s783 + $0x90] sm:$0xff]
        %v803 = vld [vmem:[%s783 + $0x98] sm:$0xff]
        %v804 = vld [vmem:[%s783 + $0xa0] sm:$0xff]
        %v805 = vld [vmem:[%s783 + $0xa8] sm:$0xff]
        %v806 = vld [vmem:[%s783 + $0xb0] sm:$0xff]
        %v807 = vld [vmem:[%s783 + $0xb8] sm:$0xff]
        %v808 = vld [vmem:[%s783 + $0xc0] sm:$0xff]
        %v809 = vld [vmem:[%s783 + $0xc8] sm:$0xff]
        %v810 = vld [vmem:[%s783 + $0xd0] sm:$0xff]
        %v811 = vld [vmem:[%s783 + $0xd8] sm:$0xff]
        %v812 = vld [vmem:[%s783 + $0xe0] sm:$0xff]
        %v813 = vld [vmem:[%s783 + $0xe8] sm:$0xff]
        %v814 = vld [vmem:[%s783 + $0xf0] sm:$0xff]
        %v815 = vld [vmem:[%s783 + $0xf8] sm:$0xff]
        %v816 = vld [vmem:[%s783 + $0x100] sm:$0xff]
        %v817 = vld [vmem:[%s783 + $0x108] sm:$0xff]
        %v818 = vld [vmem:[%s783 + $0x110] sm:$0xff]
        %v819 = vld [vmem:[%s783 + $0x118] sm:$0xff]
        %v820 = vld [vmem:[%s783 + $0x120] sm:$0xff]
        %v821 = vld [vmem:[%s783 + $0x128] sm:$0xff]
        %v822 = vld [vmem:[%s783 + $0x130] sm:$0xff]
        %v823 = vld [vmem:[%s783 + $0x138] sm:$0xff]
        %v824 = vld [vmem:[%s783 + $0x140] sm:$0xff]
        %v825 = vld [vmem:[%s783 + $0x148] sm:$0xff]
        %v826 = vld [vmem:[%s783 + $0x150] sm:$0xff]
        %v827 = vld [vmem:[%s783 + $0x158] sm:$0xff]
        %v828 = vld [vmem:[%s783 + $0x160] sm:$0xff]
        %v829 = vld [vmem:[%s783 + $0x168] sm:$0xff]
        %v830 = vld [vmem:[%s783 + $0x170] sm:$0xff]
        %v831 = vld [vmem:[%s783 + $0x178] sm:$0xff]
        %v832 = vld [vmem:[%s783 + $0x180] sm:$0xff]
        %v833 = vld [vmem:[%s783 + $0x188] sm:$0xff]
        %v834 = vld [vmem:[%s783 + $0x190] sm:$0xff]
        %v835 = vld [vmem:[%s783 + $0x198] sm:$0xff]
        %v836 = vld [vmem:[%s783 + $0x1a0] sm:$0xff]
        %v837 = vld [vmem:[%s783 + $0x1a8] sm:$0xff]
        %v838 = vld [vmem:[%s783 + $0x1b0] sm:$0xff]
        %v839 = vld [vmem:[%s783 + $0x1b8] sm:$0xff]
        %v840 = vld [vmem:[%s783 + $0x1c0] sm:$0xff]
        %v841 = vld [vmem:[%s783 + $0x1c8] sm:$0xff]
        %v842 = vld [vmem:[%s783 + $0x1d0] sm:$0xff]
        %v843 = vld [vmem:[%s783 + $0x1d8] sm:$0xff]
        %v844 = vld [vmem:[%s783 + $0x1e0] sm:$0xff]
        %v845 = vld [vmem:[%s783 + $0x1e8] sm:$0xff]
        %v846 = vld [vmem:[%s783 + $0x1f0] sm:$0xff]
        %v847 = vld [vmem:[%s783 + $0x1f8] sm:$0xff]
        %v848 = vadd.f32 %v784, %v549
        %v849 = vadd.f32 %v785, %v551
        %v850 = vadd.f32 %v786, %v554
        %v851 = vadd.f32 %v787, %v556
        %v852 = vadd.f32 %v788, %v559
        %v853 = vadd.f32 %v789, %v561
        %v854 = vadd.f32 %v790, %v564
        %v855 = vadd.f32 %v791, %v566
        %v856 = vadd.f32 %v792, %v569
        %v857 = vadd.f32 %v793, %v571
        %v858 = vadd.f32 %v794, %v574
        %v859 = vadd.f32 %v795, %v576
        %v860 = vadd.f32 %v796, %v579
        %v861 = vadd.f32 %v797, %v581
        %v862 = vadd.f32 %v798, %v584
        %v863 = vadd.f32 %v799, %v586
        %v864 = vadd.f32 %v800, %v589
        %v865 = vadd.f32 %v801, %v591
        %v866 = vadd.f32 %v802, %v594
        %v867 = vadd.f32 %v803, %v596
        %v868 = vadd.f32 %v804, %v599
        %v869 = vadd.f32 %v805, %v601
        %v870 = vadd.f32 %v806, %v604
        %v871 = vadd.f32 %v807, %v606
        %v872 = vadd.f32 %v808, %v609
        %v873 = vadd.f32 %v809, %v611
        %v874 = vadd.f32 %v810, %v614
        %v875 = vadd.f32 %v811, %v616
        %v876 = vadd.f32 %v812, %v619
        %v877 = vadd.f32 %v813, %v621
        %v878 = vadd.f32 %v814, %v624
        %v879 = vadd.f32 %v815, %v626
        %v880 = vadd.f32 %v816, %v629
        %v881 = vadd.f32 %v817, %v631
        %v882 = vadd.f32 %v818, %v634
        %v883 = vadd.f32 %v819, %v636
        %v884 = vadd.f32 %v820, %v639
        %v885 = vadd.f32 %v821, %v641
        %v886 = vadd.f32 %v822, %v644
        %v887 = vadd.f32 %v823, %v646
        %v888 = vadd.f32 %v824, %v649
        %v889 = vadd.f32 %v825, %v651
        %v890 = vadd.f32 %v826, %v654
        %v891 = vadd.f32 %v827, %v656
        %v892 = vadd.f32 %v828, %v659
        %v893 = vadd.f32 %v829, %v661
        %v894 = vadd.f32 %v830, %v664
        %v895 = vadd.f32 %v831, %v666
        %v896 = vadd.f32 %v832, %v669
        %v897 = vadd.f32 %v833, %v671
        %v898 = vadd.f32 %v834, %v674
        %v899 = vadd.f32 %v835, %v676
        %v900 = vadd.f32 %v836, %v679
        %v901 = vadd.f32 %v837, %v681
        %v902 = vadd.f32 %v838, %v684
        %v903 = vadd.f32 %v839, %v686
        %v904 = vadd.f32 %v840, %v689
        %v905 = vadd.f32 %v841, %v691
        %v906 = vadd.f32 %v842, %v694
        %v907 = vadd.f32 %v843, %v696
        %v908 = vadd.f32 %v844, %v699
        %v909 = vadd.f32 %v845, %v701
        %v910 = vadd.f32 %v846, %v704
        %v911 = vadd.f32 %v847, %v706
        %912 = vst [vmem:[%s783] sm:$0xff] %v848
        %913 = vst [vmem:[%s783 + $0x8] sm:$0xff] %v849
        %914 = vst [vmem:[%s783 + $0x10] sm:$0xff] %v850
        %915 = vst [vmem:[%s783 + $0x18] sm:$0xff] %v851
        %916 = vst [vmem:[%s783 + $0x20] sm:$0xff] %v852
        %917 = vst [vmem:[%s783 + $0x28] sm:$0xff] %v853
        %918 = vst [vmem:[%s783 + $0x30] sm:$0xff] %v854
        %919 = vst [vmem:[%s783 + $0x38] sm:$0xff] %v855
        %920 = vst [vmem:[%s783 + $0x40] sm:$0xff] %v856
        %921 = vst [vmem:[%s783 + $0x48] sm:$0xff] %v857
        %922 = vst [vmem:[%s783 + $0x50] sm:$0xff] %v858
        %923 = vst [vmem:[%s783 + $0x58] sm:$0xff] %v859
        %924 = vst [vmem:[%s783 + $0x60] sm:$0xff] %v860
        %925 = vst [vmem:[%s783 + $0x68] sm:$0xff] %v861
        %926 = vst [vmem:[%s783 + $0x70] sm:$0xff] %v862
        %927 = vst [vmem:[%s783 + $0x78] sm:$0xff] %v863
        %928 = vst [vmem:[%s783 + $0x80] sm:$0xff] %v864
        %929 = vst [vmem:[%s783 + $0x88] sm:$0xff] %v865
        %930 = vst [vmem:[%s783 + $0x90] sm:$0xff] %v866
        %931 = vst [vmem:[%s783 + $0x98] sm:$0xff] %v867
        %932 = vst [vmem:[%s783 + $0xa0] sm:$0xff] %v868
        %933 = vst [vmem:[%s783 + $0xa8] sm:$0xff] %v869
        %934 = vst [vmem:[%s783 + $0xb0] sm:$0xff] %v870
        %935 = vst [vmem:[%s783 + $0xb8] sm:$0xff] %v871
        %936 = vst [vmem:[%s783 + $0xc0] sm:$0xff] %v872
        %937 = vst [vmem:[%s783 + $0xc8] sm:$0xff] %v873
        %938 = vst [vmem:[%s783 + $0xd0] sm:$0xff] %v874
        %939 = vst [vmem:[%s783 + $0xd8] sm:$0xff] %v875
        %940 = vst [vmem:[%s783 + $0xe0] sm:$0xff] %v876
        %941 = vst [vmem:[%s783 + $0xe8] sm:$0xff] %v877
        %942 = vst [vmem:[%s783 + $0xf0] sm:$0xff] %v878
        %943 = vst [vmem:[%s783 + $0xf8] sm:$0xff] %v879
        %944 = vst [vmem:[%s783 + $0x100] sm:$0xff] %v880
        %945 = vst [vmem:[%s783 + $0x108] sm:$0xff] %v881
        %946 = vst [vmem:[%s783 + $0x110] sm:$0xff] %v882
        %947 = vst [vmem:[%s783 + $0x118] sm:$0xff] %v883
        %948 = vst [vmem:[%s783 + $0x120] sm:$0xff] %v884
        %949 = vst [vmem:[%s783 + $0x128] sm:$0xff] %v885
        %950 = vst [vmem:[%s783 + $0x130] sm:$0xff] %v886
        %951 = vst [vmem:[%s783 + $0x138] sm:$0xff] %v887
        %952 = vst [vmem:[%s783 + $0x140] sm:$0xff] %v888
        %953 = vst [vmem:[%s783 + $0x148] sm:$0xff] %v889
        %954 = vst [vmem:[%s783 + $0x150] sm:$0xff] %v890
        %955 = vst [vmem:[%s783 + $0x158] sm:$0xff] %v891
        %956 = vst [vmem:[%s783 + $0x160] sm:$0xff] %v892
        %957 = vst [vmem:[%s783 + $0x168] sm:$0xff] %v893
        %958 = vst [vmem:[%s783 + $0x170] sm:$0xff] %v894
        %959 = vst [vmem:[%s783 + $0x178] sm:$0xff] %v895
        %960 = vst [vmem:[%s783 + $0x180] sm:$0xff] %v896
        %961 = vst [vmem:[%s783 + $0x188] sm:$0xff] %v897
        %962 = vst [vmem:[%s783 + $0x190] sm:$0xff] %v898
        %963 = vst [vmem:[%s783 + $0x198] sm:$0xff] %v899
        %964 = vst [vmem:[%s783 + $0x1a0] sm:$0xff] %v900
        %965 = vst [vmem:[%s783 + $0x1a8] sm:$0xff] %v901
        %966 = vst [vmem:[%s783 + $0x1b0] sm:$0xff] %v902
        %967 = vst [vmem:[%s783 + $0x1b8] sm:$0xff] %v903
        %968 = vst [vmem:[%s783 + $0x1c0] sm:$0xff] %v904
        %969 = vst [vmem:[%s783 + $0x1c8] sm:$0xff] %v905
        %970 = vst [vmem:[%s783 + $0x1d0] sm:$0xff] %v906
        %971 = vst [vmem:[%s783 + $0x1d8] sm:$0xff] %v907
        %972 = vst [vmem:[%s783 + $0x1e0] sm:$0xff] %v908
        %973 = vst [vmem:[%s783 + $0x1e8] sm:$0xff] %v909
        %974 = vst [vmem:[%s783 + $0x1f0] sm:$0xff] %v910
        %975 = vst [vmem:[%s783 + $0x1f8] sm:$0xff] %v911
      $region36: #{generator_forward.8} parent=27 // pred_fallthru
        _
      %p976 = scmp.eq.s32.totalorder %s19, 3
      %p977 = pnand %p976, %p708
      %p978 = pneg %p977
      // Predicated region
      $region37: #{generator_forward.8} parent=27 // pred_check
        _
      $region38: #{generator_forward.8} parent=27 // pred_check_branch
        %980 = sbr.rel (%p977) target = $region40
      $region39: #{generator_forward.8} parent=27 // pred_region
        %v981 = vld [vmem:[#allocation2] sm:$0xff]
        %v982 = vld [vmem:[#allocation2 + $0x8] sm:$0xff]
        %v983 = vld [vmem:[#allocation2 + $0x10] sm:$0xff]
        %v984 = vld [vmem:[#allocation2 + $0x18] sm:$0xff]
        %v985 = vld [vmem:[#allocation2 + $0x20] sm:$0xff]
        %v986 = vld [vmem:[#allocation2 + $0x28] sm:$0xff]
        %v987 = vld [vmem:[#allocation2 + $0x30] sm:$0xff]
        %v988 = vld [vmem:[#allocation2 + $0x38] sm:$0xff]
        %v989 = vld [vmem:[#allocation2 + $0x40] sm:$0xff]
        %v990 = vld [vmem:[#allocation2 + $0x48] sm:$0xff]
        %v991 = vld [vmem:[#allocation2 + $0x50] sm:$0xff]
        %v992 = vld [vmem:[#allocation2 + $0x58] sm:$0xff]
        %v993 = vld [vmem:[#allocation2 + $0x60] sm:$0xff]
        %v994 = vld [vmem:[#allocation2 + $0x68] sm:$0xff]
        %v995 = vld [vmem:[#allocation2 + $0x70] sm:$0xff]
        %v996 = vld [vmem:[#allocation2 + $0x78] sm:$0xff]
        %v997 = vld [vmem:[#allocation2 + $0x80] sm:$0xff]
        %v998 = vld [vmem:[#allocation2 + $0x88] sm:$0xff]
        %v999 = vld [vmem:[#allocation2 + $0x90] sm:$0xff]
        %v1000 = vld [vmem:[#allocation2 + $0x98] sm:$0xff]
        %v1001 = vld [vmem:[#allocation2 + $0xa0] sm:$0xff]
        %v1002 = vld [vmem:[#allocation2 + $0xa8] sm:$0xff]
        %v1003 = vld [vmem:[#allocation2 + $0xb0] sm:$0xff]
        %v1004 = vld [vmem:[#allocation2 + $0xb8] sm:$0xff]
        %v1005 = vld [vmem:[#allocation2 + $0xc0] sm:$0xff]
        %v1006 = vld [vmem:[#allocation2 + $0xc8] sm:$0xff]
        %v1007 = vld [vmem:[#allocation2 + $0xd0] sm:$0xff]
        %v1008 = vld [vmem:[#allocation2 + $0xd8] sm:$0xff]
        %v1009 = vld [vmem:[#allocation2 + $0xe0] sm:$0xff]
        %v1010 = vld [vmem:[#allocation2 + $0xe8] sm:$0xff]
        %v1011 = vld [vmem:[#allocation2 + $0xf0] sm:$0xff]
        %v1012 = vld [vmem:[#allocation2 + $0xf8] sm:$0xff]
        %v1013 = vld [vmem:[#allocation2 + $0x100] sm:$0xff]
        %v1014 = vld [vmem:[#allocation2 + $0x108] sm:$0xff]
        %v1015 = vld [vmem:[#allocation2 + $0x110] sm:$0xff]
        %v1016 = vld [vmem:[#allocation2 + $0x118] sm:$0xff]
        %v1017 = vld [vmem:[#allocation2 + $0x120] sm:$0xff]
        %v1018 = vld [vmem:[#allocation2 + $0x128] sm:$0xff]
        %v1019 = vld [vmem:[#allocation2 + $0x130] sm:$0xff]
        %v1020 = vld [vmem:[#allocation2 + $0x138] sm:$0xff]
        %v1021 = vld [vmem:[#allocation2 + $0x140] sm:$0xff]
        %v1022 = vld [vmem:[#allocation2 + $0x148] sm:$0xff]
        %v1023 = vld [vmem:[#allocation2 + $0x150] sm:$0xff]
        %v1024 = vld [vmem:[#allocation2 + $0x158] sm:$0xff]
        %v1025 = vld [vmem:[#allocation2 + $0x160] sm:$0xff]
        %v1026 = vld [vmem:[#allocation2 + $0x168] sm:$0xff]
        %v1027 = vld [vmem:[#allocation2 + $0x170] sm:$0xff]
        %v1028 = vld [vmem:[#allocation2 + $0x178] sm:$0xff]
        %v1029 = vld [vmem:[#allocation2 + $0x180] sm:$0xff]
        %v1030 = vld [vmem:[#allocation2 + $0x188] sm:$0xff]
        %v1031 = vld [vmem:[#allocation2 + $0x190] sm:$0xff]
        %v1032 = vld [vmem:[#allocation2 + $0x198] sm:$0xff]
        %v1033 = vld [vmem:[#allocation2 + $0x1a0] sm:$0xff]
        %v1034 = vld [vmem:[#allocation2 + $0x1a8] sm:$0xff]
        %v1035 = vld [vmem:[#allocation2 + $0x1b0] sm:$0xff]
        %v1036 = vld [vmem:[#allocation2 + $0x1b8] sm:$0xff]
        %v1037 = vld [vmem:[#allocation2 + $0x1c0] sm:$0xff]
        %v1038 = vld [vmem:[#allocation2 + $0x1c8] sm:$0xff]
        %v1039 = vld [vmem:[#allocation2 + $0x1d0] sm:$0xff]
        %v1040 = vld [vmem:[#allocation2 + $0x1d8] sm:$0xff]
        %v1041 = vld [vmem:[#allocation2 + $0x1e0] sm:$0xff]
        %v1042 = vld [vmem:[#allocation2 + $0x1e8] sm:$0xff]
        %v1043 = vld [vmem:[#allocation2 + $0x1f0] sm:$0xff]
        %v1044 = vld [vmem:[#allocation2 + $0x1f8] sm:$0xff]
        %v1045 = vld [vmem:[#allocation2 + $0x200] sm:$0xff]
        %v1046 = vld [vmem:[#allocation2 + $0x208] sm:$0xff]
        %v1047 = vld [vmem:[#allocation2 + $0x210] sm:$0xff]
        %v1048 = vld [vmem:[#allocation2 + $0x218] sm:$0xff]
        %v1049 = vld [vmem:[#allocation2 + $0x220] sm:$0xff]
        %v1050 = vld [vmem:[#allocation2 + $0x228] sm:$0xff]
        %v1051 = vld [vmem:[#allocation2 + $0x230] sm:$0xff]
        %v1052 = vld [vmem:[#allocation2 + $0x238] sm:$0xff]
        %v1053 = vld [vmem:[#allocation2 + $0x240] sm:$0xff]
        %v1054 = vld [vmem:[#allocation2 + $0x248] sm:$0xff]
        %v1055 = vld [vmem:[#allocation2 + $0x250] sm:$0xff]
        %v1056 = vld [vmem:[#allocation2 + $0x258] sm:$0xff]
        %v1057 = vld [vmem:[#allocation2 + $0x260] sm:$0xff]
        %v1058 = vld [vmem:[#allocation2 + $0x268] sm:$0xff]
        %v1059 = vld [vmem:[#allocation2 + $0x270] sm:$0xff]
        %v1060 = vld [vmem:[#allocation2 + $0x278] sm:$0xff]
        %v1061 = vld [vmem:[#allocation2 + $0x280] sm:$0xff]
        %v1062 = vld [vmem:[#allocation2 + $0x288] sm:$0xff]
        %v1063 = vld [vmem:[#allocation2 + $0x290] sm:$0xff]
        %v1064 = vld [vmem:[#allocation2 + $0x298] sm:$0xff]
        %v1065 = vld [vmem:[#allocation2 + $0x2a0] sm:$0xff]
        %v1066 = vld [vmem:[#allocation2 + $0x2a8] sm:$0xff]
        %v1067 = vld [vmem:[#allocation2 + $0x2b0] sm:$0xff]
        %v1068 = vld [vmem:[#allocation2 + $0x2b8] sm:$0xff]
        %v1069 = vld [vmem:[#allocation2 + $0x2c0] sm:$0xff]
        %v1070 = vld [vmem:[#allocation2 + $0x2c8] sm:$0xff]
        %v1071 = vld [vmem:[#allocation2 + $0x2d0] sm:$0xff]
        %v1072 = vld [vmem:[#allocation2 + $0x2d8] sm:$0xff]
        %v1073 = vld [vmem:[#allocation2 + $0x2e0] sm:$0xff]
        %v1074 = vld [vmem:[#allocation2 + $0x2e8] sm:$0xff]
        %v1075 = vld [vmem:[#allocation2 + $0x2f0] sm:$0xff]
        %v1076 = vld [vmem:[#allocation2 + $0x2f8] sm:$0xff]
        %v1077 = vld [vmem:[#allocation2 + $0x300] sm:$0xff]
        %v1078 = vld [vmem:[#allocation2 + $0x308] sm:$0xff]
        %v1079 = vld [vmem:[#allocation2 + $0x310] sm:$0xff]
        %v1080 = vld [vmem:[#allocation2 + $0x318] sm:$0xff]
        %v1081 = vld [vmem:[#allocation2 + $0x320] sm:$0xff]
        %v1082 = vld [vmem:[#allocation2 + $0x328] sm:$0xff]
        %v1083 = vld [vmem:[#allocation2 + $0x330] sm:$0xff]
        %v1084 = vld [vmem:[#allocation2 + $0x338] sm:$0xff]
        %v1085 = vld [vmem:[#allocation2 + $0x340] sm:$0xff]
        %v1086 = vld [vmem:[#allocation2 + $0x348] sm:$0xff]
        %v1087 = vld [vmem:[#allocation2 + $0x350] sm:$0xff]
        %v1088 = vld [vmem:[#allocation2 + $0x358] sm:$0xff]
        %v1089 = vld [vmem:[#allocation2 + $0x360] sm:$0xff]
        %v1090 = vld [vmem:[#allocation2 + $0x368] sm:$0xff]
        %v1091 = vld [vmem:[#allocation2 + $0x370] sm:$0xff]
        %v1092 = vld [vmem:[#allocation2 + $0x378] sm:$0xff]
        %v1093 = vld [vmem:[#allocation2 + $0x380] sm:$0xff]
        %v1094 = vld [vmem:[#allocation2 + $0x388] sm:$0xff]
        %v1095 = vld [vmem:[#allocation2 + $0x390] sm:$0xff]
        %v1096 = vld [vmem:[#allocation2 + $0x398] sm:$0xff]
        %v1097 = vld [vmem:[#allocation2 + $0x3a0] sm:$0xff]
        %v1098 = vld [vmem:[#allocation2 + $0x3a8] sm:$0xff]
        %v1099 = vld [vmem:[#allocation2 + $0x3b0] sm:$0xff]
        %v1100 = vld [vmem:[#allocation2 + $0x3b8] sm:$0xff]
        %v1101 = vld [vmem:[#allocation2 + $0x3c0] sm:$0xff]
        %v1102 = vld [vmem:[#allocation2 + $0x3c8] sm:$0xff]
        %v1103 = vld [vmem:[#allocation2 + $0x3d0] sm:$0xff]
        %v1104 = vld [vmem:[#allocation2 + $0x3d8] sm:$0xff]
        %v1105 = vld [vmem:[#allocation2 + $0x3e0] sm:$0xff]
        %v1106 = vld [vmem:[#allocation2 + $0x3e8] sm:$0xff]
        %v1107 = vld [vmem:[#allocation2 + $0x3f0] sm:$0xff]
        %v1108 = vld [vmem:[#allocation2 + $0x3f8] sm:$0xff]
        %v1109 = vld [vmem:[#allocation2 + $0x400] sm:$0xff]
        %v1110 = vld [vmem:[#allocation2 + $0x408] sm:$0xff]
        %v1111 = vld [vmem:[#allocation2 + $0x410] sm:$0xff]
        %v1112 = vld [vmem:[#allocation2 + $0x418] sm:$0xff]
        %v1113 = vld [vmem:[#allocation2 + $0x420] sm:$0xff]
        %v1114 = vld [vmem:[#allocation2 + $0x428] sm:$0xff]
        %v1115 = vld [vmem:[#allocation2 + $0x430] sm:$0xff]
        %v1116 = vld [vmem:[#allocation2 + $0x438] sm:$0xff]
        %v1117 = vld [vmem:[#allocation2 + $0x440] sm:$0xff]
        %v1118 = vld [vmem:[#allocation2 + $0x448] sm:$0xff]
        %v1119 = vld [vmem:[#allocation2 + $0x450] sm:$0xff]
        %v1120 = vld [vmem:[#allocation2 + $0x458] sm:$0xff]
        %v1121 = vld [vmem:[#allocation2 + $0x460] sm:$0xff]
        %v1122 = vld [vmem:[#allocation2 + $0x468] sm:$0xff]
        %v1123 = vld [vmem:[#allocation2 + $0x470] sm:$0xff]
        %v1124 = vld [vmem:[#allocation2 + $0x478] sm:$0xff]
        %v1125 = vld [vmem:[#allocation2 + $0x480] sm:$0xff]
        %v1126 = vld [vmem:[#allocation2 + $0x488] sm:$0xff]
        %v1127 = vld [vmem:[#allocation2 + $0x490] sm:$0xff]
        %v1128 = vld [vmem:[#allocation2 + $0x498] sm:$0xff]
        %v1129 = vld [vmem:[#allocation2 + $0x4a0] sm:$0xff]
        %v1130 = vld [vmem:[#allocation2 + $0x4a8] sm:$0xff]
        %v1131 = vld [vmem:[#allocation2 + $0x4b0] sm:$0xff]
        %v1132 = vld [vmem:[#allocation2 + $0x4b8] sm:$0xff]
        %v1133 = vld [vmem:[#allocation2 + $0x4c0] sm:$0xff]
        %v1134 = vld [vmem:[#allocation2 + $0x4c8] sm:$0xff]
        %v1135 = vld [vmem:[#allocation2 + $0x4d0] sm:$0xff]
        %v1136 = vld [vmem:[#allocation2 + $0x4d8] sm:$0xff]
        %v1137 = vld [vmem:[#allocation2 + $0x4e0] sm:$0xff]
        %v1138 = vld [vmem:[#allocation2 + $0x4e8] sm:$0xff]
        %v1139 = vld [vmem:[#allocation2 + $0x4f0] sm:$0xff]
        %v1140 = vld [vmem:[#allocation2 + $0x4f8] sm:$0xff]
        %v1141 = vld [vmem:[#allocation2 + $0x500] sm:$0xff]
        %v1142 = vld [vmem:[#allocation2 + $0x508] sm:$0xff]
        %v1143 = vld [vmem:[#allocation2 + $0x510] sm:$0xff]
        %v1144 = vld [vmem:[#allocation2 + $0x518] sm:$0xff]
        %v1145 = vld [vmem:[#allocation2 + $0x520] sm:$0xff]
        %v1146 = vld [vmem:[#allocation2 + $0x528] sm:$0xff]
        %v1147 = vld [vmem:[#allocation2 + $0x530] sm:$0xff]
        %v1148 = vld [vmem:[#allocation2 + $0x538] sm:$0xff]
        %v1149 = vld [vmem:[#allocation2 + $0x540] sm:$0xff]
        %v1150 = vld [vmem:[#allocation2 + $0x548] sm:$0xff]
        %v1151 = vld [vmem:[#allocation2 + $0x550] sm:$0xff]
        %v1152 = vld [vmem:[#allocation2 + $0x558] sm:$0xff]
        %v1153 = vld [vmem:[#allocation2 + $0x560] sm:$0xff]
        %v1154 = vld [vmem:[#allocation2 + $0x568] sm:$0xff]
        %v1155 = vld [vmem:[#allocation2 + $0x570] sm:$0xff]
        %v1156 = vld [vmem:[#allocation2 + $0x578] sm:$0xff]
        %v1157 = vld [vmem:[#allocation2 + $0x580] sm:$0xff]
        %v1158 = vld [vmem:[#allocation2 + $0x588] sm:$0xff]
        %v1159 = vld [vmem:[#allocation2 + $0x590] sm:$0xff]
        %v1160 = vld [vmem:[#allocation2 + $0x598] sm:$0xff]
        %v1161 = vld [vmem:[#allocation2 + $0x5a0] sm:$0xff]
        %v1162 = vld [vmem:[#allocation2 + $0x5a8] sm:$0xff]
        %v1163 = vld [vmem:[#allocation2 + $0x5b0] sm:$0xff]
        %v1164 = vld [vmem:[#allocation2 + $0x5b8] sm:$0xff]
        %v1165 = vld [vmem:[#allocation2 + $0x5c0] sm:$0xff]
        %v1166 = vld [vmem:[#allocation2 + $0x5c8] sm:$0xff]
        %v1167 = vld [vmem:[#allocation2 + $0x5d0] sm:$0xff]
        %v1168 = vld [vmem:[#allocation2 + $0x5d8] sm:$0xff]
        %v1169 = vld [vmem:[#allocation2 + $0x5e0] sm:$0xff]
        %v1170 = vld [vmem:[#allocation2 + $0x5e8] sm:$0xff]
        %v1171 = vld [vmem:[#allocation2 + $0x5f0] sm:$0xff]
        %v1172 = vld [vmem:[#allocation2 + $0x5f8] sm:$0xff]
        %v1173 = vld [vmem:[#allocation2 + $0x600] sm:$0xff]
        %v1174 = vld [vmem:[#allocation2 + $0x608] sm:$0xff]
        %v1175 = vld [vmem:[#allocation2 + $0x610] sm:$0xff]
        %v1176 = vld [vmem:[#allocation2 + $0x618] sm:$0xff]
        %v1177 = vld [vmem:[#allocation2 + $0x620] sm:$0xff]
        %v1178 = vld [vmem:[#allocation2 + $0x628] sm:$0xff]
        %v1179 = vld [vmem:[#allocation2 + $0x630] sm:$0xff]
        %v1180 = vld [vmem:[#allocation2 + $0x638] sm:$0xff]
        %v1181 = vld [vmem:[#allocation2 + $0x640] sm:$0xff]
        %v1182 = vld [vmem:[#allocation2 + $0x648] sm:$0xff]
        %v1183 = vld [vmem:[#allocation2 + $0x650] sm:$0xff]
        %v1184 = vld [vmem:[#allocation2 + $0x658] sm:$0xff]
        %v1185 = vld [vmem:[#allocation2 + $0x660] sm:$0xff]
        %v1186 = vld [vmem:[#allocation2 + $0x668] sm:$0xff]
        %v1187 = vld [vmem:[#allocation2 + $0x670] sm:$0xff]
        %v1188 = vld [vmem:[#allocation2 + $0x678] sm:$0xff]
        %v1189 = vld [vmem:[#allocation2 + $0x680] sm:$0xff]
        %v1190 = vld [vmem:[#allocation2 + $0x688] sm:$0xff]
        %v1191 = vld [vmem:[#allocation2 + $0x690] sm:$0xff]
        %v1192 = vld [vmem:[#allocation2 + $0x698] sm:$0xff]
        %v1193 = vld [vmem:[#allocation2 + $0x6a0] sm:$0xff]
        %v1194 = vld [vmem:[#allocation2 + $0x6a8] sm:$0xff]
        %v1195 = vld [vmem:[#allocation2 + $0x6b0] sm:$0xff]
        %v1196 = vld [vmem:[#allocation2 + $0x6b8] sm:$0xff]
        %v1197 = vld [vmem:[#allocation2 + $0x6c0] sm:$0xff]
        %v1198 = vld [vmem:[#allocation2 + $0x6c8] sm:$0xff]
        %v1199 = vld [vmem:[#allocation2 + $0x6d0] sm:$0xff]
        %v1200 = vld [vmem:[#allocation2 + $0x6d8] sm:$0xff]
        %v1201 = vld [vmem:[#allocation2 + $0x6e0] sm:$0xff]
        %v1202 = vld [vmem:[#allocation2 + $0x6e8] sm:$0xff]
        %v1203 = vld [vmem:[#allocation2 + $0x6f0] sm:$0xff]
        %v1204 = vld [vmem:[#allocation2 + $0x6f8] sm:$0xff]
        %v1205 = vld [vmem:[#allocation2 + $0x700] sm:$0xff]
        %v1206 = vld [vmem:[#allocation2 + $0x708] sm:$0xff]
        %v1207 = vld [vmem:[#allocation2 + $0x710] sm:$0xff]
        %v1208 = vld [vmem:[#allocation2 + $0x718] sm:$0xff]
        %v1209 = vld [vmem:[#allocation2 + $0x720] sm:$0xff]
        %v1210 = vld [vmem:[#allocation2 + $0x728] sm:$0xff]
        %v1211 = vld [vmem:[#allocation2 + $0x730] sm:$0xff]
        %v1212 = vld [vmem:[#allocation2 + $0x738] sm:$0xff]
        %v1213 = vld [vmem:[#allocation2 + $0x740] sm:$0xff]
        %v1214 = vld [vmem:[#allocation2 + $0x748] sm:$0xff]
        %v1215 = vld [vmem:[#allocation2 + $0x750] sm:$0xff]
        %v1216 = vld [vmem:[#allocation2 + $0x758] sm:$0xff]
        %v1217 = vld [vmem:[#allocation2 + $0x760] sm:$0xff]
        %v1218 = vld [vmem:[#allocation2 + $0x768] sm:$0xff]
        %v1219 = vld [vmem:[#allocation2 + $0x770] sm:$0xff]
        %v1220 = vld [vmem:[#allocation2 + $0x778] sm:$0xff]
        %v1221 = vld [vmem:[#allocation2 + $0x780] sm:$0xff]
        %v1222 = vld [vmem:[#allocation2 + $0x788] sm:$0xff]
        %v1223 = vld [vmem:[#allocation2 + $0x790] sm:$0xff]
        %v1224 = vld [vmem:[#allocation2 + $0x798] sm:$0xff]
        %v1225 = vld [vmem:[#allocation2 + $0x7a0] sm:$0xff]
        %v1226 = vld [vmem:[#allocation2 + $0x7a8] sm:$0xff]
        %v1227 = vld [vmem:[#allocation2 + $0x7b0] sm:$0xff]
        %v1228 = vld [vmem:[#allocation2 + $0x7b8] sm:$0xff]
        %v1229 = vld [vmem:[#allocation2 + $0x7c0] sm:$0xff]
        %v1230 = vld [vmem:[#allocation2 + $0x7c8] sm:$0xff]
        %v1231 = vld [vmem:[#allocation2 + $0x7d0] sm:$0xff]
        %v1232 = vld [vmem:[#allocation2 + $0x7d8] sm:$0xff]
        %v1233 = vld [vmem:[#allocation2 + $0x7e0] sm:$0xff]
        %v1234 = vld [vmem:[#allocation2 + $0x7e8] sm:$0xff]
        %v1235 = vld [vmem:[#allocation2 + $0x7f0] sm:$0xff]
        %v1236 = vld [vmem:[#allocation2 + $0x7f8] sm:$0xff]
        %v1237 = vadd.f32 %v981, %v982
        %v1238 = vadd.f32 %v1237, %v983
        %v1239 = vadd.f32 %v1238, %v984
        %v1240 = vadd.f32 %v1239, %v985
        %v1241 = vadd.f32 %v1240, %v986
        %v1242 = vadd.f32 %v1241, %v987
        %v1243 = vadd.f32 %v1242, %v988
        %v1244 = vadd.f32 %v1243, %v989
        %v1245 = vadd.f32 %v1244, %v990
        %v1246 = vadd.f32 %v1245, %v991
        %v1247 = vadd.f32 %v1246, %v992
        %v1248 = vadd.f32 %v1247, %v993
        %v1249 = vadd.f32 %v1248, %v994
        %v1250 = vadd.f32 %v1249, %v995
        %v1251 = vadd.f32 %v1250, %v996
        %v1252 = vadd.f32 %v1251, %v997
        %v1253 = vadd.f32 %v1252, %v998
        %v1254 = vadd.f32 %v1253, %v999
        %v1255 = vadd.f32 %v1254, %v1000
        %v1256 = vadd.f32 %v1255, %v1001
        %v1257 = vadd.f32 %v1256, %v1002
        %v1258 = vadd.f32 %v1257, %v1003
        %v1259 = vadd.f32 %v1258, %v1004
        %v1260 = vadd.f32 %v1259, %v1005
        %v1261 = vadd.f32 %v1260, %v1006
        %v1262 = vadd.f32 %v1261, %v1007
        %v1263 = vadd.f32 %v1262, %v1008
        %v1264 = vadd.f32 %v1263, %v1009
        %v1265 = vadd.f32 %v1264, %v1010
        %v1266 = vadd.f32 %v1265, %v1011
        %v1267 = vadd.f32 %v1266, %v1012
        %v1268 = vadd.f32 %v1267, %v1013
        %v1269 = vadd.f32 %v1268, %v1014
        %v1270 = vadd.f32 %v1269, %v1015
        %v1271 = vadd.f32 %v1270, %v1016
        %v1272 = vadd.f32 %v1271, %v1017
        %v1273 = vadd.f32 %v1272, %v1018
        %v1274 = vadd.f32 %v1273, %v1019
        %v1275 = vadd.f32 %v1274, %v1020
        %v1276 = vadd.f32 %v1275, %v1021
        %v1277 = vadd.f32 %v1276, %v1022
        %v1278 = vadd.f32 %v1277, %v1023
        %v1279 = vadd.f32 %v1278, %v1024
        %v1280 = vadd.f32 %v1279, %v1025
        %v1281 = vadd.f32 %v1280, %v1026
        %v1282 = vadd.f32 %v1281, %v1027
        %v1283 = vadd.f32 %v1282, %v1028
        %v1284 = vadd.f32 %v1283, %v1029
        %v1285 = vadd.f32 %v1284, %v1030
        %v1286 = vadd.f32 %v1285, %v1031
        %v1287 = vadd.f32 %v1286, %v1032
        %v1288 = vadd.f32 %v1287, %v1033
        %v1289 = vadd.f32 %v1288, %v1034
        %v1290 = vadd.f32 %v1289, %v1035
        %v1291 = vadd.f32 %v1290, %v1036
        %v1292 = vadd.f32 %v1291, %v1037
        %v1293 = vadd.f32 %v1292, %v1038
        %v1294 = vadd.f32 %v1293, %v1039
        %v1295 = vadd.f32 %v1294, %v1040
        %v1296 = vadd.f32 %v1295, %v1041
        %v1297 = vadd.f32 %v1296, %v1042
        %v1298 = vadd.f32 %v1297, %v1043
        %v1299 = vadd.f32 %v1298, %v1044
        %v1300 = vadd.f32 %v1299, %v1045
        %v1301 = vadd.f32 %v1300, %v1046
        %v1302 = vadd.f32 %v1301, %v1047
        %v1303 = vadd.f32 %v1302, %v1048
        %v1304 = vadd.f32 %v1303, %v1049
        %v1305 = vadd.f32 %v1304, %v1050
        %v1306 = vadd.f32 %v1305, %v1051
        %v1307 = vadd.f32 %v1306, %v1052
        %v1308 = vadd.f32 %v1307, %v1053
        %v1309 = vadd.f32 %v1308, %v1054
        %v1310 = vadd.f32 %v1309, %v1055
        %v1311 = vadd.f32 %v1310, %v1056
        %v1312 = vadd.f32 %v1311, %v1057
        %v1313 = vadd.f32 %v1312, %v1058
        %v1314 = vadd.f32 %v1313, %v1059
        %v1315 = vadd.f32 %v1314, %v1060
        %v1316 = vadd.f32 %v1315, %v1061
        %v1317 = vadd.f32 %v1316, %v1062
        %v1318 = vadd.f32 %v1317, %v1063
        %v1319 = vadd.f32 %v1318, %v1064
        %v1320 = vadd.f32 %v1319, %v1065
        %v1321 = vadd.f32 %v1320, %v1066
        %v1322 = vadd.f32 %v1321, %v1067
        %v1323 = vadd.f32 %v1322, %v1068
        %v1324 = vadd.f32 %v1323, %v1069
        %v1325 = vadd.f32 %v1324, %v1070
        %v1326 = vadd.f32 %v1325, %v1071
        %v1327 = vadd.f32 %v1326, %v1072
        %v1328 = vadd.f32 %v1327, %v1073
        %v1329 = vadd.f32 %v1328, %v1074
        %v1330 = vadd.f32 %v1329, %v1075
        %v1331 = vadd.f32 %v1330, %v1076
        %v1332 = vadd.f32 %v1331, %v1077
        %v1333 = vadd.f32 %v1332, %v1078
        %v1334 = vadd.f32 %v1333, %v1079
        %v1335 = vadd.f32 %v1334, %v1080
        %v1336 = vadd.f32 %v1335, %v1081
        %v1337 = vadd.f32 %v1336, %v1082
        %v1338 = vadd.f32 %v1337, %v1083
        %v1339 = vadd.f32 %v1338, %v1084
        %v1340 = vadd.f32 %v1339, %v1085
        %v1341 = vadd.f32 %v1340, %v1086
        %v1342 = vadd.f32 %v1341, %v1087
        %v1343 = vadd.f32 %v1342, %v1088
        %v1344 = vadd.f32 %v1343, %v1089
        %v1345 = vadd.f32 %v1344, %v1090
        %v1346 = vadd.f32 %v1345, %v1091
        %v1347 = vadd.f32 %v1346, %v1092
        %v1348 = vadd.f32 %v1347, %v1093
        %v1349 = vadd.f32 %v1348, %v1094
        %v1350 = vadd.f32 %v1349, %v1095
        %v1351 = vadd.f32 %v1350, %v1096
        %v1352 = vadd.f32 %v1351, %v1097
        %v1353 = vadd.f32 %v1352, %v1098
        %v1354 = vadd.f32 %v1353, %v1099
        %v1355 = vadd.f32 %v1354, %v1100
        %v1356 = vadd.f32 %v1355, %v1101
        %v1357 = vadd.f32 %v1356, %v1102
        %v1358 = vadd.f32 %v1357, %v1103
        %v1359 = vadd.f32 %v1358, %v1104
        %v1360 = vadd.f32 %v1359, %v1105
        %v1361 = vadd.f32 %v1360, %v1106
        %v1362 = vadd.f32 %v1361, %v1107
        %v1363 = vadd.f32 %v1362, %v1108
        %v1364 = vadd.f32 %v1363, %v1109
        %v1365 = vadd.f32 %v1364, %v1110
        %v1366 = vadd.f32 %v1365, %v1111
        %v1367 = vadd.f32 %v1366, %v1112
        %v1368 = vadd.f32 %v1367, %v1113
        %v1369 = vadd.f32 %v1368, %v1114
        %v1370 = vadd.f32 %v1369, %v1115
        %v1371 = vadd.f32 %v1370, %v1116
        %v1372 = vadd.f32 %v1371, %v1117
        %v1373 = vadd.f32 %v1372, %v1118
        %v1374 = vadd.f32 %v1373, %v1119
        %v1375 = vadd.f32 %v1374, %v1120
        %v1376 = vadd.f32 %v1375, %v1121
        %v1377 = vadd.f32 %v1376, %v1122
        %v1378 = vadd.f32 %v1377, %v1123
        %v1379 = vadd.f32 %v1378, %v1124
        %v1380 = vadd.f32 %v1379, %v1125
        %v1381 = vadd.f32 %v1380, %v1126
        %v1382 = vadd.f32 %v1381, %v1127
        %v1383 = vadd.f32 %v1382, %v1128
        %v1384 = vadd.f32 %v1383, %v1129
        %v1385 = vadd.f32 %v1384, %v1130
        %v1386 = vadd.f32 %v1385, %v1131
        %v1387 = vadd.f32 %v1386, %v1132
        %v1388 = vadd.f32 %v1387, %v1133
        %v1389 = vadd.f32 %v1388, %v1134
        %v1390 = vadd.f32 %v1389, %v1135
        %v1391 = vadd.f32 %v1390, %v1136
        %v1392 = vadd.f32 %v1391, %v1137
        %v1393 = vadd.f32 %v1392, %v1138
        %v1394 = vadd.f32 %v1393, %v1139
        %v1395 = vadd.f32 %v1394, %v1140
        %v1396 = vadd.f32 %v1395, %v1141
        %v1397 = vadd.f32 %v1396, %v1142
        %v1398 = vadd.f32 %v1397, %v1143
        %v1399 = vadd.f32 %v1398, %v1144
        %v1400 = vadd.f32 %v1399, %v1145
        %v1401 = vadd.f32 %v1400, %v1146
        %v1402 = vadd.f32 %v1401, %v1147
        %v1403 = vadd.f32 %v1402, %v1148
        %v1404 = vadd.f32 %v1403, %v1149
        %v1405 = vadd.f32 %v1404, %v1150
        %v1406 = vadd.f32 %v1405, %v1151
        %v1407 = vadd.f32 %v1406, %v1152
        %v1408 = vadd.f32 %v1407, %v1153
        %v1409 = vadd.f32 %v1408, %v1154
        %v1410 = vadd.f32 %v1409, %v1155
        %v1411 = vadd.f32 %v1410, %v1156
        %v1412 = vadd.f32 %v1411, %v1157
        %v1413 = vadd.f32 %v1412, %v1158
        %v1414 = vadd.f32 %v1413, %v1159
        %v1415 = vadd.f32 %v1414, %v1160
        %v1416 = vadd.f32 %v1415, %v1161
        %v1417 = vadd.f32 %v1416, %v1162
        %v1418 = vadd.f32 %v1417, %v1163
        %v1419 = vadd.f32 %v1418, %v1164
        %v1420 = vadd.f32 %v1419, %v1165
        %v1421 = vadd.f32 %v1420, %v1166
        %v1422 = vadd.f32 %v1421, %v1167
        %v1423 = vadd.f32 %v1422, %v1168
        %v1424 = vadd.f32 %v1423, %v1169
        %v1425 = vadd.f32 %v1424, %v1170
        %v1426 = vadd.f32 %v1425, %v1171
        %v1427 = vadd.f32 %v1426, %v1172
        %v1428 = vadd.f32 %v1427, %v1173
        %v1429 = vadd.f32 %v1428, %v1174
        %v1430 = vadd.f32 %v1429, %v1175
        %v1431 = vadd.f32 %v1430, %v1176
        %v1432 = vadd.f32 %v1431, %v1177
        %v1433 = vadd.f32 %v1432, %v1178
        %v1434 = vadd.f32 %v1433, %v1179
        %v1435 = vadd.f32 %v1434, %v1180
        %v1436 = vadd.f32 %v1435, %v1181
        %v1437 = vadd.f32 %v1436, %v1182
        %v1438 = vadd.f32 %v1437, %v1183
        %v1439 = vadd.f32 %v1438, %v1184
        %v1440 = vadd.f32 %v1439, %v1185
        %v1441 = vadd.f32 %v1440, %v1186
        %v1442 = vadd.f32 %v1441, %v1187
        %v1443 = vadd.f32 %v1442, %v1188
        %v1444 = vadd.f32 %v1443, %v1189
        %v1445 = vadd.f32 %v1444, %v1190
        %v1446 = vadd.f32 %v1445, %v1191
        %v1447 = vadd.f32 %v1446, %v1192
        %v1448 = vadd.f32 %v1447, %v1193
        %v1449 = vadd.f32 %v1448, %v1194
        %v1450 = vadd.f32 %v1449, %v1195
        %v1451 = vadd.f32 %v1450, %v1196
        %v1452 = vadd.f32 %v1451, %v1197
        %v1453 = vadd.f32 %v1452, %v1198
        %v1454 = vadd.f32 %v1453, %v1199
        %v1455 = vadd.f32 %v1454, %v1200
        %v1456 = vadd.f32 %v1455, %v1201
        %v1457 = vadd.f32 %v1456, %v1202
        %v1458 = vadd.f32 %v1457, %v1203
        %v1459 = vadd.f32 %v1458, %v1204
        %v1460 = vadd.f32 %v1459, %v1205
        %v1461 = vadd.f32 %v1460, %v1206
        %v1462 = vadd.f32 %v1461, %v1207
        %v1463 = vadd.f32 %v1462, %v1208
        %v1464 = vadd.f32 %v1463, %v1209
        %v1465 = vadd.f32 %v1464, %v1210
        %v1466 = vadd.f32 %v1465, %v1211
        %v1467 = vadd.f32 %v1466, %v1212
        %v1468 = vadd.f32 %v1467, %v1213
        %v1469 = vadd.f32 %v1468, %v1214
        %v1470 = vadd.f32 %v1469, %v1215
        %v1471 = vadd.f32 %v1470, %v1216
        %v1472 = vadd.f32 %v1471, %v1217
        %v1473 = vadd.f32 %v1472, %v1218
        %v1474 = vadd.f32 %v1473, %v1219
        %v1475 = vadd.f32 %v1474, %v1220
        %v1476 = vadd.f32 %v1475, %v1221
        %v1477 = vadd.f32 %v1476, %v1222
        %v1478 = vadd.f32 %v1477, %v1223
        %v1479 = vadd.f32 %v1478, %v1224
        %v1480 = vadd.f32 %v1479, %v1225
        %v1481 = vadd.f32 %v1480, %v1226
        %v1482 = vadd.f32 %v1481, %v1227
        %v1483 = vadd.f32 %v1482, %v1228
        %v1484 = vadd.f32 %v1483, %v1229
        %v1485 = vadd.f32 %v1484, %v1230
        %v1486 = vadd.f32 %v1485, %v1231
        %v1487 = vadd.f32 %v1486, %v1232
        %v1488 = vadd.f32 %v1487, %v1233
        %v1489 = vadd.f32 %v1488, %v1234
        %v1490 = vadd.f32 %v1489, %v1235
        %v1491 = vadd.f32 %v1490, %v1236
        %v1492 = vrot.slane %v1491, 4
        %v1493 = vadd.f32 %v1491, %v1492
        %v1494 = vrot.slane %v1493, 2
        %v1495 = vadd.f32 %v1493, %v1494
        %v1496 = vrot.slane %v1495, 1
        %v1497 = vadd.f32 %v1495, %v1496
        %v1498 = vmul.f32 %v1497, 0.00048828125
        %v1499 = vsub.f32 %v981, %v1498
        %v1500 = vsub.f32 %v982, %v1498
        %v1501 = vsub.f32 %v983, %v1498
        %v1502 = vsub.f32 %v984, %v1498
        %v1503 = vsub.f32 %v985, %v1498
        %v1504 = vsub.f32 %v986, %v1498
        %v1505 = vsub.f32 %v987, %v1498
        %v1506 = vsub.f32 %v988, %v1498
        %v1507 = vsub.f32 %v989, %v1498
        %v1508 = vsub.f32 %v990, %v1498
        %v1509 = vsub.f32 %v991, %v1498
        %v1510 = vsub.f32 %v992, %v1498
        %v1511 = vsub.f32 %v993, %v1498
        %v1512 = vsub.f32 %v994, %v1498
        %v1513 = vsub.f32 %v995, %v1498
        %v1514 = vsub.f32 %v996, %v1498
        %v1515 = vsub.f32 %v997, %v1498
        %v1516 = vsub.f32 %v998, %v1498
        %v1517 = vsub.f32 %v999, %v1498
        %v1518 = vsub.f32 %v1000, %v1498
        %v1519 = vsub.f32 %v1001, %v1498
        %v1520 = vsub.f32 %v1002, %v1498
        %v1521 = vsub.f32 %v1003, %v1498
        %v1522 = vsub.f32 %v1004, %v1498
        %v1523 = vsub.f32 %v1005, %v1498
        %v1524 = vsub.f32 %v1006, %v1498
        %v1525 = vsub.f32 %v1007, %v1498
        %v1526 = vsub.f32 %v1008, %v1498
        %v1527 = vsub.f32 %v1009, %v1498
        %v1528 = vsub.f32 %v1010, %v1498
        %v1529 = vsub.f32 %v1011, %v1498
        %v1530 = vsub.f32 %v1012, %v1498
        %v1531 = vsub.f32 %v1013, %v1498
        %v1532 = vsub.f32 %v1014, %v1498
        %v1533 = vsub.f32 %v1015, %v1498
        %v1534 = vsub.f32 %v1016, %v1498
        %v1535 = vsub.f32 %v1017, %v1498
        %v1536 = vsub.f32 %v1018, %v1498
        %v1537 = vsub.f32 %v1019, %v1498
        %v1538 = vsub.f32 %v1020, %v1498
        %v1539 = vsub.f32 %v1021, %v1498
        %v1540 = vsub.f32 %v1022, %v1498
        %v1541 = vsub.f32 %v1023, %v1498
        %v1542 = vsub.f32 %v1024, %v1498
        %v1543 = vsub.f32 %v1025, %v1498
        %v1544 = vsub.f32 %v1026, %v1498
        %v1545 = vsub.f32 %v1027, %v1498
        %v1546 = vsub.f32 %v1028, %v1498
        %v1547 = vsub.f32 %v1029, %v1498
        %v1548 = vsub.f32 %v1030, %v1498
        %v1549 = vsub.f32 %v1031, %v1498
        %v1550 = vsub.f32 %v1032, %v1498
        %v1551 = vsub.f32 %v1033, %v1498
        %v1552 = vsub.f32 %v1034, %v1498
        %v1553 = vsub.f32 %v1035, %v1498
        %v1554 = vsub.f32 %v1036, %v1498
        %v1555 = vsub.f32 %v1037, %v1498
        %v1556 = vsub.f32 %v1038, %v1498
        %v1557 = vsub.f32 %v1039, %v1498
        %v1558 = vsub.f32 %v1040, %v1498
        %v1559 = vsub.f32 %v1041, %v1498
        %v1560 = vsub.f32 %v1042, %v1498
        %v1561 = vsub.f32 %v1043, %v1498
        %v1562 = vsub.f32 %v1044, %v1498
        %v1563 = vsub.f32 %v1045, %v1498
        %v1564 = vsub.f32 %v1046, %v1498
        %v1565 = vsub.f32 %v1047, %v1498
        %v1566 = vsub.f32 %v1048, %v1498
        %v1567 = vsub.f32 %v1049, %v1498
        %v1568 = vsub.f32 %v1050, %v1498
        %v1569 = vsub.f32 %v1051, %v1498
        %v1570 = vsub.f32 %v1052, %v1498
        %v1571 = vsub.f32 %v1053, %v1498
        %v1572 = vsub.f32 %v1054, %v1498
        %v1573 = vsub.f32 %v1055, %v1498
        %v1574 = vsub.f32 %v1056, %v1498
        %v1575 = vsub.f32 %v1057, %v1498
        %v1576 = vsub.f32 %v1058, %v1498
        %v1577 = vsub.f32 %v1059, %v1498
        %v1578 = vsub.f32 %v1060, %v1498
        %v1579 = vsub.f32 %v1061, %v1498
        %v1580 = vsub.f32 %v1062, %v1498
        %v1581 = vsub.f32 %v1063, %v1498
        %v1582 = vsub.f32 %v1064, %v1498
        %v1583 = vsub.f32 %v1065, %v1498
        %v1584 = vsub.f32 %v1066, %v1498
        %v1585 = vsub.f32 %v1067, %v1498
        %v1586 = vsub.f32 %v1068, %v1498
        %v1587 = vsub.f32 %v1069, %v1498
        %v1588 = vsub.f32 %v1070, %v1498
        %v1589 = vsub.f32 %v1071, %v1498
        %v1590 = vsub.f32 %v1072, %v1498
        %v1591 = vsub.f32 %v1073, %v1498
        %v1592 = vsub.f32 %v1074, %v1498
        %v1593 = vsub.f32 %v1075, %v1498
        %v1594 = vsub.f32 %v1076, %v1498
        %v1595 = vsub.f32 %v1077, %v1498
        %v1596 = vsub.f32 %v1078, %v1498
        %v1597 = vsub.f32 %v1079, %v1498
        %v1598 = vsub.f32 %v1080, %v1498
        %v1599 = vsub.f32 %v1081, %v1498
        %v1600 = vsub.f32 %v1082, %v1498
        %v1601 = vsub.f32 %v1083, %v1498
        %v1602 = vsub.f32 %v1084, %v1498
        %v1603 = vsub.f32 %v1085, %v1498
        %v1604 = vsub.f32 %v1086, %v1498
        %v1605 = vsub.f32 %v1087, %v1498
        %v1606 = vsub.f32 %v1088, %v1498
        %v1607 = vsub.f32 %v1089, %v1498
        %v1608 = vsub.f32 %v1090, %v1498
        %v1609 = vsub.f32 %v1091, %v1498
        %v1610 = vsub.f32 %v1092, %v1498
        %v1611 = vsub.f32 %v1093, %v1498
        %v1612 = vsub.f32 %v1094, %v1498
        %v1613 = vsub.f32 %v1095, %v1498
        %v1614 = vsub.f32 %v1096, %v1498
        %v1615 = vsub.f32 %v1097, %v1498
        %v1616 = vsub.f32 %v1098, %v1498
        %v1617 = vsub.f32 %v1099, %v1498
        %v1618 = vsub.f32 %v1100, %v1498
        %v1619 = vsub.f32 %v1101, %v1498
        %v1620 = vsub.f32 %v1102, %v1498
        %v1621 = vsub.f32 %v1103, %v1498
        %v1622 = vsub.f32 %v1104, %v1498
        %v1623 = vsub.f32 %v1105, %v1498
        %v1624 = vsub.f32 %v1106, %v1498
        %v1625 = vsub.f32 %v1107, %v1498
        %v1626 = vsub.f32 %v1108, %v1498
        %v1627 = vsub.f32 %v1109, %v1498
        %v1628 = vsub.f32 %v1110, %v1498
        %v1629 = vsub.f32 %v1111, %v1498
        %v1630 = vsub.f32 %v1112, %v1498
        %v1631 = vsub.f32 %v1113, %v1498
        %v1632 = vsub.f32 %v1114, %v1498
        %v1633 = vsub.f32 %v1115, %v1498
        %v1634 = vsub.f32 %v1116, %v1498
        %v1635 = vsub.f32 %v1117, %v1498
        %v1636 = vsub.f32 %v1118, %v1498
        %v1637 = vsub.f32 %v1119, %v1498
        %v1638 = vsub.f32 %v1120, %v1498
        %v1639 = vsub.f32 %v1121, %v1498
        %v1640 = vsub.f32 %v1122, %v1498
        %v1641 = vsub.f32 %v1123, %v1498
        %v1642 = vsub.f32 %v1124, %v1498
        %v1643 = vsub.f32 %v1125, %v1498
        %v1644 = vsub.f32 %v1126, %v1498
        %v1645 = vsub.f32 %v1127, %v1498
        %v1646 = vsub.f32 %v1128, %v1498
        %v1647 = vsub.f32 %v1129, %v1498
        %v1648 = vsub.f32 %v1130, %v1498
        %v1649 = vsub.f32 %v1131, %v1498
        %v1650 = vsub.f32 %v1132, %v1498
        %v1651 = vsub.f32 %v1133, %v1498
        %v1652 = vsub.f32 %v1134, %v1498
        %v1653 = vsub.f32 %v1135, %v1498
        %v1654 = vsub.f32 %v1136, %v1498
        %v1655 = vsub.f32 %v1137, %v1498
        %v1656 = vsub.f32 %v1138, %v1498
        %v1657 = vsub.f32 %v1139, %v1498
        %v1658 = vsub.f32 %v1140, %v1498
        %v1659 = vsub.f32 %v1141, %v1498
        %v1660 = vsub.f32 %v1142, %v1498
        %v1661 = vsub.f32 %v1143, %v1498
        %v1662 = vsub.f32 %v1144, %v1498
        %v1663 = vsub.f32 %v1145, %v1498
        %v1664 = vsub.f32 %v1146, %v1498
        %v1665 = vsub.f32 %v1147, %v1498
        %v1666 = vsub.f32 %v1148, %v1498
        %v1667 = vsub.f32 %v1149, %v1498
        %v1668 = vsub.f32 %v1150, %v1498
        %v1669 = vsub.f32 %v1151, %v1498
        %v1670 = vsub.f32 %v1152, %v1498
        %v1671 = vsub.f32 %v1153, %v1498
        %v1672 = vsub.f32 %v1154, %v1498
        %v1673 = vsub.f32 %v1155, %v1498
        %v1674 = vsub.f32 %v1156, %v1498
        %v1675 = vsub.f32 %v1157, %v1498
        %v1676 = vsub.f32 %v1158, %v1498
        %v1677 = vsub.f32 %v1159, %v1498
        %v1678 = vsub.f32 %v1160, %v1498
        %v1679 = vsub.f32 %v1161, %v1498
        %v1680 = vsub.f32 %v1162, %v1498
        %v1681 = vsub.f32 %v1163, %v1498
        %v1682 = vsub.f32 %v1164, %v1498
        %v1683 = vsub.f32 %v1165, %v1498
        %v1684 = vsub.f32 %v1166, %v1498
        %v1685 = vsub.f32 %v1167, %v1498
        %v1686 = vsub.f32 %v1168, %v1498
        %v1687 = vsub.f32 %v1169, %v1498
        %v1688 = vsub.f32 %v1170, %v1498
        %v1689 = vsub.f32 %v1171, %v1498
        %v1690 = vsub.f32 %v1172, %v1498
        %v1691 = vsub.f32 %v1173, %v1498
        %v1692 = vsub.f32 %v1174, %v1498
        %v1693 = vsub.f32 %v1175, %v1498
        %v1694 = vsub.f32 %v1176, %v1498
        %v1695 = vsub.f32 %v1177, %v1498
        %v1696 = vsub.f32 %v1178, %v1498
        %v1697 = vsub.f32 %v1179, %v1498
        %v1698 = vsub.f32 %v1180, %v1498
        %v1699 = vsub.f32 %v1181, %v1498
        %v1700 = vsub.f32 %v1182, %v1498
        %v1701 = vsub.f32 %v1183, %v1498
        %v1702 = vsub.f32 %v1184, %v1498
        %v1703 = vsub.f32 %v1185, %v1498
        %v1704 = vsub.f32 %v1186, %v1498
        %v1705 = vsub.f32 %v1187, %v1498
        %v1706 = vsub.f32 %v1188, %v1498
        %v1707 = vsub.f32 %v1189, %v1498
        %v1708 = vsub.f32 %v1190, %v1498
        %v1709 = vsub.f32 %v1191, %v1498
        %v1710 = vsub.f32 %v1192, %v1498
        %v1711 = vsub.f32 %v1193, %v1498
        %v1712 = vsub.f32 %v1194, %v1498
        %v1713 = vsub.f32 %v1195, %v1498
        %v1714 = vsub.f32 %v1196, %v1498
        %v1715 = vsub.f32 %v1197, %v1498
        %v1716 = vsub.f32 %v1198, %v1498
        %v1717 = vsub.f32 %v1199, %v1498
        %v1718 = vsub.f32 %v1200, %v1498
        %v1719 = vsub.f32 %v1201, %v1498
        %v1720 = vsub.f32 %v1202, %v1498
        %v1721 = vsub.f32 %v1203, %v1498
        %v1722 = vsub.f32 %v1204, %v1498
        %v1723 = vsub.f32 %v1205, %v1498
        %v1724 = vsub.f32 %v1206, %v1498
        %v1725 = vsub.f32 %v1207, %v1498
        %v1726 = vsub.f32 %v1208, %v1498
        %v1727 = vsub.f32 %v1209, %v1498
        %v1728 = vsub.f32 %v1210, %v1498
        %v1729 = vsub.f32 %v1211, %v1498
        %v1730 = vsub.f32 %v1212, %v1498
        %v1731 = vsub.f32 %v1213, %v1498
        %v1732 = vsub.f32 %v1214, %v1498
        %v1733 = vsub.f32 %v1215, %v1498
        %v1734 = vsub.f32 %v1216, %v1498
        %v1735 = vsub.f32 %v1217, %v1498
        %v1736 = vsub.f32 %v1218, %v1498
        %v1737 = vsub.f32 %v1219, %v1498
        %v1738 = vsub.f32 %v1220, %v1498
        %v1739 = vsub.f32 %v1221, %v1498
        %v1740 = vsub.f32 %v1222, %v1498
        %v1741 = vsub.f32 %v1223, %v1498
        %v1742 = vsub.f32 %v1224, %v1498
        %v1743 = vsub.f32 %v1225, %v1498
        %v1744 = vsub.f32 %v1226, %v1498
        %v1745 = vsub.f32 %v1227, %v1498
        %v1746 = vsub.f32 %v1228, %v1498
        %v1747 = vsub.f32 %v1229, %v1498
        %v1748 = vsub.f32 %v1230, %v1498
        %v1749 = vsub.f32 %v1231, %v1498
        %v1750 = vsub.f32 %v1232, %v1498
        %v1751 = vsub.f32 %v1233, %v1498
        %v1752 = vsub.f32 %v1234, %v1498
        %v1753 = vsub.f32 %v1235, %v1498
        %v1754 = vsub.f32 %v1236, %v1498
        %v1755 = vmul.f32 %v1499, %v1499
        %v1756 = vmul.f32 %v1500, %v1500
        %v1757 = vmul.f32 %v1501, %v1501
        %v1758 = vmul.f32 %v1502, %v1502
        %v1759 = vmul.f32 %v1503, %v1503
        %v1760 = vmul.f32 %v1504, %v1504
        %v1761 = vmul.f32 %v1505, %v1505
        %v1762 = vmul.f32 %v1506, %v1506
        %v1763 = vmul.f32 %v1507, %v1507
        %v1764 = vmul.f32 %v1508, %v1508
        %v1765 = vmul.f32 %v1509, %v1509
        %v1766 = vmul.f32 %v1510, %v1510
        %v1767 = vmul.f32 %v1511, %v1511
        %v1768 = vmul.f32 %v1512, %v1512
        %v1769 = vmul.f32 %v1513, %v1513
        %v1770 = vmul.f32 %v1514, %v1514
        %v1771 = vmul.f32 %v1515, %v1515
        %v1772 = vmul.f32 %v1516, %v1516
        %v1773 = vmul.f32 %v1517, %v1517
        %v1774 = vmul.f32 %v1518, %v1518
        %v1775 = vmul.f32 %v1519, %v1519
        %v1776 = vmul.f32 %v1520, %v1520
        %v1777 = vmul.f32 %v1521, %v1521
        %v1778 = vmul.f32 %v1522, %v1522
        %v1779 = vmul.f32 %v1523, %v1523
        %v1780 = vmul.f32 %v1524, %v1524
        %v1781 = vmul.f32 %v1525, %v1525
        %v1782 = vmul.f32 %v1526, %v1526
        %v1783 = vmul.f32 %v1527, %v1527
        %v1784 = vmul.f32 %v1528, %v1528
        %v1785 = vmul.f32 %v1529, %v1529
        %v1786 = vmul.f32 %v1530, %v1530
        %v1787 = vmul.f32 %v1531, %v1531
        %v1788 = vmul.f32 %v1532, %v1532
        %v1789 = vmul.f32 %v1533, %v1533
        %v1790 = vmul.f32 %v1534, %v1534
        %v1791 = vmul.f32 %v1535, %v1535
        %v1792 = vmul.f32 %v1536, %v1536
        %v1793 = vmul.f32 %v1537, %v1537
        %v1794 = vmul.f32 %v1538, %v1538
        %v1795 = vmul.f32 %v1539, %v1539
        %v1796 = vmul.f32 %v1540, %v1540
        %v1797 = vmul.f32 %v1541, %v1541
        %v1798 = vmul.f32 %v1542, %v1542
        %v1799 = vmul.f32 %v1543, %v1543
        %v1800 = vmul.f32 %v1544, %v1544
        %v1801 = vmul.f32 %v1545, %v1545
        %v1802 = vmul.f32 %v1546, %v1546
        %v1803 = vmul.f32 %v1547, %v1547
        %v1804 = vmul.f32 %v1548, %v1548
        %v1805 = vmul.f32 %v1549, %v1549
        %v1806 = vmul.f32 %v1550, %v1550
        %v1807 = vmul.f32 %v1551, %v1551
        %v1808 = vmul.f32 %v1552, %v1552
        %v1809 = vmul.f32 %v1553, %v1553
        %v1810 = vmul.f32 %v1554, %v1554
        %v1811 = vmul.f32 %v1555, %v1555
        %v1812 = vmul.f32 %v1556, %v1556
        %v1813 = vmul.f32 %v1557, %v1557
        %v1814 = vmul.f32 %v1558, %v1558
        %v1815 = vmul.f32 %v1559, %v1559
        %v1816 = vmul.f32 %v1560, %v1560
        %v1817 = vmul.f32 %v1561, %v1561
        %v1818 = vmul.f32 %v1562, %v1562
        %v1819 = vmul.f32 %v1563, %v1563
        %v1820 = vmul.f32 %v1564, %v1564
        %v1821 = vmul.f32 %v1565, %v1565
        %v1822 = vmul.f32 %v1566, %v1566
        %v1823 = vmul.f32 %v1567, %v1567
        %v1824 = vmul.f32 %v1568, %v1568
        %v1825 = vmul.f32 %v1569, %v1569
        %v1826 = vmul.f32 %v1570, %v1570
        %v1827 = vmul.f32 %v1571, %v1571
        %v1828 = vmul.f32 %v1572, %v1572
        %v1829 = vmul.f32 %v1573, %v1573
        %v1830 = vmul.f32 %v1574, %v1574
        %v1831 = vmul.f32 %v1575, %v1575
        %v1832 = vmul.f32 %v1576, %v1576
        %v1833 = vmul.f32 %v1577, %v1577
        %v1834 = vmul.f32 %v1578, %v1578
        %v1835 = vmul.f32 %v1579, %v1579
        %v1836 = vmul.f32 %v1580, %v1580
        %v1837 = vmul.f32 %v1581, %v1581
        %v1838 = vmul.f32 %v1582, %v1582
        %v1839 = vmul.f32 %v1583, %v1583
        %v1840 = vmul.f32 %v1584, %v1584
        %v1841 = vmul.f32 %v1585, %v1585
        %v1842 = vmul.f32 %v1586, %v1586
        %v1843 = vmul.f32 %v1587, %v1587
        %v1844 = vmul.f32 %v1588, %v1588
        %v1845 = vmul.f32 %v1589, %v1589
        %v1846 = vmul.f32 %v1590, %v1590
        %v1847 = vmul.f32 %v1591, %v1591
        %v1848 = vmul.f32 %v1592, %v1592
        %v1849 = vmul.f32 %v1593, %v1593
        %v1850 = vmul.f32 %v1594, %v1594
        %v1851 = vmul.f32 %v1595, %v1595
        %v1852 = vmul.f32 %v1596, %v1596
        %v1853 = vmul.f32 %v1597, %v1597
        %v1854 = vmul.f32 %v1598, %v1598
        %v1855 = vmul.f32 %v1599, %v1599
        %v1856 = vmul.f32 %v1600, %v1600
        %v1857 = vmul.f32 %v1601, %v1601
        %v1858 = vmul.f32 %v1602, %v1602
        %v1859 = vmul.f32 %v1603, %v1603
        %v1860 = vmul.f32 %v1604, %v1604
        %v1861 = vmul.f32 %v1605, %v1605
        %v1862 = vmul.f32 %v1606, %v1606
        %v1863 = vmul.f32 %v1607, %v1607
        %v1864 = vmul.f32 %v1608, %v1608
        %v1865 = vmul.f32 %v1609, %v1609
        %v1866 = vmul.f32 %v1610, %v1610
        %v1867 = vmul.f32 %v1611, %v1611
        %v1868 = vmul.f32 %v1612, %v1612
        %v1869 = vmul.f32 %v1613, %v1613
        %v1870 = vmul.f32 %v1614, %v1614
        %v1871 = vmul.f32 %v1615, %v1615
        %v1872 = vmul.f32 %v1616, %v1616
        %v1873 = vmul.f32 %v1617, %v1617
        %v1874 = vmul.f32 %v1618, %v1618
        %v1875 = vmul.f32 %v1619, %v1619
        %v1876 = vmul.f32 %v1620, %v1620
        %v1877 = vmul.f32 %v1621, %v1621
        %v1878 = vmul.f32 %v1622, %v1622
        %v1879 = vmul.f32 %v1623, %v1623
        %v1880 = vmul.f32 %v1624, %v1624
        %v1881 = vmul.f32 %v1625, %v1625
        %v1882 = vmul.f32 %v1626, %v1626
        %v1883 = vmul.f32 %v1627, %v1627
        %v1884 = vmul.f32 %v1628, %v1628
        %v1885 = vmul.f32 %v1629, %v1629
        %v1886 = vmul.f32 %v1630, %v1630
        %v1887 = vmul.f32 %v1631, %v1631
        %v1888 = vmul.f32 %v1632, %v1632
        %v1889 = vmul.f32 %v1633, %v1633
        %v1890 = vmul.f32 %v1634, %v1634
        %v1891 = vmul.f32 %v1635, %v1635
        %v1892 = vmul.f32 %v1636, %v1636
        %v1893 = vmul.f32 %v1637, %v1637
        %v1894 = vmul.f32 %v1638, %v1638
        %v1895 = vmul.f32 %v1639, %v1639
        %v1896 = vmul.f32 %v1640, %v1640
        %v1897 = vmul.f32 %v1641, %v1641
        %v1898 = vmul.f32 %v1642, %v1642
        %v1899 = vmul.f32 %v1643, %v1643
        %v1900 = vmul.f32 %v1644, %v1644
        %v1901 = vmul.f32 %v1645, %v1645
        %v1902 = vmul.f32 %v1646, %v1646
        %v1903 = vmul.f32 %v1647, %v1647
        %v1904 = vmul.f32 %v1648, %v1648
        %v1905 = vmul.f32 %v1649, %v1649
        %v1906 = vmul.f32 %v1650, %v1650
        %v1907 = vmul.f32 %v1651, %v1651
        %v1908 = vmul.f32 %v1652, %v1652
        %v1909 = vmul.f32 %v1653, %v1653
        %v1910 = vmul.f32 %v1654, %v1654
        %v1911 = vmul.f32 %v1655, %v1655
        %v1912 = vmul.f32 %v1656, %v1656
        %v1913 = vmul.f32 %v1657, %v1657
        %v1914 = vmul.f32 %v1658, %v1658
        %v1915 = vmul.f32 %v1659, %v1659
        %v1916 = vmul.f32 %v1660, %v1660
        %v1917 = vmul.f32 %v1661, %v1661
        %v1918 = vmul.f32 %v1662, %v1662
        %v1919 = vmul.f32 %v1663, %v1663
        %v1920 = vmul.f32 %v1664, %v1664
        %v1921 = vmul.f32 %v1665, %v1665
        %v1922 = vmul.f32 %v1666, %v1666
        %v1923 = vmul.f32 %v1667, %v1667
        %v1924 = vmul.f32 %v1668, %v1668
        %v1925 = vmul.f32 %v1669, %v1669
        %v1926 = vmul.f32 %v1670, %v1670
        %v1927 = vmul.f32 %v1671, %v1671
        %v1928 = vmul.f32 %v1672, %v1672
        %v1929 = vmul.f32 %v1673, %v1673
        %v1930 = vmul.f32 %v1674, %v1674
        %v1931 = vmul.f32 %v1675, %v1675
        %v1932 = vmul.f32 %v1676, %v1676
        %v1933 = vmul.f32 %v1677, %v1677
        %v1934 = vmul.f32 %v1678, %v1678
        %v1935 = vmul.f32 %v1679, %v1679
        %v1936 = vmul.f32 %v1680, %v1680
        %v1937 = vmul.f32 %v1681, %v1681
        %v1938 = vmul.f32 %v1682, %v1682
        %v1939 = vmul.f32 %v1683, %v1683
        %v1940 = vmul.f32 %v1684, %v1684
        %v1941 = vmul.f32 %v1685, %v1685
        %v1942 = vmul.f32 %v1686, %v1686
        %v1943 = vmul.f32 %v1687, %v1687
        %v1944 = vmul.f32 %v1688, %v1688
        %v1945 = vmul.f32 %v1689, %v1689
        %v1946 = vmul.f32 %v1690, %v1690
        %v1947 = vmul.f32 %v1691, %v1691
        %v1948 = vmul.f32 %v1692, %v1692
        %v1949 = vmul.f32 %v1693, %v1693
        %v1950 = vmul.f32 %v1694, %v1694
        %v1951 = vmul.f32 %v1695, %v1695
        %v1952 = vmul.f32 %v1696, %v1696
        %v1953 = vmul.f32 %v1697, %v1697
        %v1954 = vmul.f32 %v1698, %v1698
        %v1955 = vmul.f32 %v1699, %v1699
        %v1956 = vmul.f32 %v1700, %v1700
        %v1957 = vmul.f32 %v1701, %v1701
        %v1958 = vmul.f32 %v1702, %v1702
        %v1959 = vmul.f32 %v1703, %v1703
        %v1960 = vmul.f32 %v1704, %v1704
        %v1961 = vmul.f32 %v1705, %v1705
        %v1962 = vmul.f32 %v1706, %v1706
        %v1963 = vmul.f32 %v1707, %v1707
        %v1964 = vmul.f32 %v1708, %v1708
        %v1965 = vmul.f32 %v1709, %v1709
        %v1966 = vmul.f32 %v1710, %v1710
        %v1967 = vmul.f32 %v1711, %v1711
        %v1968 = vmul.f32 %v1712, %v1712
        %v1969 = vmul.f32 %v1713, %v1713
        %v1970 = vmul.f32 %v1714, %v1714
        %v1971 = vmul.f32 %v1715, %v1715
        %v1972 = vmul.f32 %v1716, %v1716
        %v1973 = vmul.f32 %v1717, %v1717
        %v1974 = vmul.f32 %v1718, %v1718
        %v1975 = vmul.f32 %v1719, %v1719
        %v1976 = vmul.f32 %v1720, %v1720
        %v1977 = vmul.f32 %v1721, %v1721
        %v1978 = vmul.f32 %v1722, %v1722
        %v1979 = vmul.f32 %v1723, %v1723
        %v1980 = vmul.f32 %v1724, %v1724
        %v1981 = vmul.f32 %v1725, %v1725
        %v1982 = vmul.f32 %v1726, %v1726
        %v1983 = vmul.f32 %v1727, %v1727
        %v1984 = vmul.f32 %v1728, %v1728
        %v1985 = vmul.f32 %v1729, %v1729
        %v1986 = vmul.f32 %v1730, %v1730
        %v1987 = vmul.f32 %v1731, %v1731
        %v1988 = vmul.f32 %v1732, %v1732
        %v1989 = vmul.f32 %v1733, %v1733
        %v1990 = vmul.f32 %v1734, %v1734
        %v1991 = vmul.f32 %v1735, %v1735
        %v1992 = vmul.f32 %v1736, %v1736
        %v1993 = vmul.f32 %v1737, %v1737
        %v1994 = vmul.f32 %v1738, %v1738
        %v1995 = vmul.f32 %v1739, %v1739
        %v1996 = vmul.f32 %v1740, %v1740
        %v1997 = vmul.f32 %v1741, %v1741
        %v1998 = vmul.f32 %v1742, %v1742
        %v1999 = vmul.f32 %v1743, %v1743
        %v2000 = vmul.f32 %v1744, %v1744
        %v2001 = vmul.f32 %v1745, %v1745
        %v2002 = vmul.f32 %v1746, %v1746
        %v2003 = vmul.f32 %v1747, %v1747
        %v2004 = vmul.f32 %v1748, %v1748
        %v2005 = vmul.f32 %v1749, %v1749
        %v2006 = vmul.f32 %v1750, %v1750
        %v2007 = vmul.f32 %v1751, %v1751
        %v2008 = vmul.f32 %v1752, %v1752
        %v2009 = vmul.f32 %v1753, %v1753
        %v2010 = vmul.f32 %v1754, %v1754
        %v2011 = vadd.f32 %v1755, %v1756
        %v2012 = vadd.f32 %v2011, %v1757
        %v2013 = vadd.f32 %v2012, %v1758
        %v2014 = vadd.f32 %v2013, %v1759
        %v2015 = vadd.f32 %v2014, %v1760
        %v2016 = vadd.f32 %v2015, %v1761
        %v2017 = vadd.f32 %v2016, %v1762
        %v2018 = vadd.f32 %v2017, %v1763
        %v2019 = vadd.f32 %v2018, %v1764
        %v2020 = vadd.f32 %v2019, %v1765
        %v2021 = vadd.f32 %v2020, %v1766
        %v2022 = vadd.f32 %v2021, %v1767
        %v2023 = vadd.f32 %v2022, %v1768
        %v2024 = vadd.f32 %v2023, %v1769
        %v2025 = vadd.f32 %v2024, %v1770
        %v2026 = vadd.f32 %v2025, %v1771
        %v2027 = vadd.f32 %v2026, %v1772
        %v2028 = vadd.f32 %v2027, %v1773
        %v2029 = vadd.f32 %v2028, %v1774
        %v2030 = vadd.f32 %v2029, %v1775
        %v2031 = vadd.f32 %v2030, %v1776
        %v2032 = vadd.f32 %v2031, %v1777
        %v2033 = vadd.f32 %v2032, %v1778
        %v2034 = vadd.f32 %v2033, %v1779
        %v2035 = vadd.f32 %v2034, %v1780
        %v2036 = vadd.f32 %v2035, %v1781
        %v2037 = vadd.f32 %v2036, %v1782
        %v2038 = vadd.f32 %v2037, %v1783
        %v2039 = vadd.f32 %v2038, %v1784
        %v2040 = vadd.f32 %v2039, %v1785
        %v2041 = vadd.f32 %v2040, %v1786
        %v2042 = vadd.f32 %v2041, %v1787
        %v2043 = vadd.f32 %v2042, %v1788
        %v2044 = vadd.f32 %v2043, %v1789
        %v2045 = vadd.f32 %v2044, %v1790
        %v2046 = vadd.f32 %v2045, %v1791
        %v2047 = vadd.f32 %v2046, %v1792
        %v2048 = vadd.f32 %v2047, %v1793
        %v2049 = vadd.f32 %v2048, %v1794
        %v2050 = vadd.f32 %v2049, %v1795
        %v2051 = vadd.f32 %v2050, %v1796
        %v2052 = vadd.f32 %v2051, %v1797
        %v2053 = vadd.f32 %v2052, %v1798
        %v2054 = vadd.f32 %v2053, %v1799
        %v2055 = vadd.f32 %v2054, %v1800
        %v2056 = vadd.f32 %v2055, %v1801
        %v2057 = vadd.f32 %v2056, %v1802
        %v2058 = vadd.f32 %v2057, %v1803
        %v2059 = vadd.f32 %v2058, %v1804
        %v2060 = vadd.f32 %v2059, %v1805
        %v2061 = vadd.f32 %v2060, %v1806
        %v2062 = vadd.f32 %v2061, %v1807
        %v2063 = vadd.f32 %v2062, %v1808
        %v2064 = vadd.f32 %v2063, %v1809
        %v2065 = vadd.f32 %v2064, %v1810
        %v2066 = vadd.f32 %v2065, %v1811
        %v2067 = vadd.f32 %v2066, %v1812
        %v2068 = vadd.f32 %v2067, %v1813
        %v2069 = vadd.f32 %v2068, %v1814
        %v2070 = vadd.f32 %v2069, %v1815
        %v2071 = vadd.f32 %v2070, %v1816
        %v2072 = vadd.f32 %v2071, %v1817
        %v2073 = vadd.f32 %v2072, %v1818
        %v2074 = vadd.f32 %v2073, %v1819
        %v2075 = vadd.f32 %v2074, %v1820
        %v2076 = vadd.f32 %v2075, %v1821
        %v2077 = vadd.f32 %v2076, %v1822
        %v2078 = vadd.f32 %v2077, %v1823
        %v2079 = vadd.f32 %v2078, %v1824
        %v2080 = vadd.f32 %v2079, %v1825
        %v2081 = vadd.f32 %v2080, %v1826
        %v2082 = vadd.f32 %v2081, %v1827
        %v2083 = vadd.f32 %v2082, %v1828
        %v2084 = vadd.f32 %v2083, %v1829
        %v2085 = vadd.f32 %v2084, %v1830
        %v2086 = vadd.f32 %v2085, %v1831
        %v2087 = vadd.f32 %v2086, %v1832
        %v2088 = vadd.f32 %v2087, %v1833
        %v2089 = vadd.f32 %v2088, %v1834
        %v2090 = vadd.f32 %v2089, %v1835
        %v2091 = vadd.f32 %v2090, %v1836
        %v2092 = vadd.f32 %v2091, %v1837
        %v2093 = vadd.f32 %v2092, %v1838
        %v2094 = vadd.f32 %v2093, %v1839
        %v2095 = vadd.f32 %v2094, %v1840
        %v2096 = vadd.f32 %v2095, %v1841
        %v2097 = vadd.f32 %v2096, %v1842
        %v2098 = vadd.f32 %v2097, %v1843
        %v2099 = vadd.f32 %v2098, %v1844
        %v2100 = vadd.f32 %v2099, %v1845
        %v2101 = vadd.f32 %v2100, %v1846
        %v2102 = vadd.f32 %v2101, %v1847
        %v2103 = vadd.f32 %v2102, %v1848
        %v2104 = vadd.f32 %v2103, %v1849
        %v2105 = vadd.f32 %v2104, %v1850
        %v2106 = vadd.f32 %v2105, %v1851
        %v2107 = vadd.f32 %v2106, %v1852
        %v2108 = vadd.f32 %v2107, %v1853
        %v2109 = vadd.f32 %v2108, %v1854
        %v2110 = vadd.f32 %v2109, %v1855
        %v2111 = vadd.f32 %v2110, %v1856
        %v2112 = vadd.f32 %v2111, %v1857
        %v2113 = vadd.f32 %v2112, %v1858
        %v2114 = vadd.f32 %v2113, %v1859
        %v2115 = vadd.f32 %v2114, %v1860
        %v2116 = vadd.f32 %v2115, %v1861
        %v2117 = vadd.f32 %v2116, %v1862
        %v2118 = vadd.f32 %v2117, %v1863
        %v2119 = vadd.f32 %v2118, %v1864
        %v2120 = vadd.f32 %v2119, %v1865
        %v2121 = vadd.f32 %v2120, %v1866
        %v2122 = vadd.f32 %v2121, %v1867
        %v2123 = vadd.f32 %v2122, %v1868
        %v2124 = vadd.f32 %v2123, %v1869
        %v2125 = vadd.f32 %v2124, %v1870
        %v2126 = vadd.f32 %v2125, %v1871
        %v2127 = vadd.f32 %v2126, %v1872
        %v2128 = vadd.f32 %v2127, %v1873
        %v2129 = vadd.f32 %v2128, %v1874
        %v2130 = vadd.f32 %v2129, %v1875
        %v2131 = vadd.f32 %v2130, %v1876
        %v2132 = vadd.f32 %v2131, %v1877
        %v2133 = vadd.f32 %v2132, %v1878
        %v2134 = vadd.f32 %v2133, %v1879
        %v2135 = vadd.f32 %v2134, %v1880
        %v2136 = vadd.f32 %v2135, %v1881
        %v2137 = vadd.f32 %v2136, %v1882
        %v2138 = vadd.f32 %v2137, %v1883
        %v2139 = vadd.f32 %v2138, %v1884
        %v2140 = vadd.f32 %v2139, %v1885
        %v2141 = vadd.f32 %v2140, %v1886
        %v2142 = vadd.f32 %v2141, %v1887
        %v2143 = vadd.f32 %v2142, %v1888
        %v2144 = vadd.f32 %v2143, %v1889
        %v2145 = vadd.f32 %v2144, %v1890
        %v2146 = vadd.f32 %v2145, %v1891
        %v2147 = vadd.f32 %v2146, %v1892
        %v2148 = vadd.f32 %v2147, %v1893
        %v2149 = vadd.f32 %v2148, %v1894
        %v2150 = vadd.f32 %v2149, %v1895
        %v2151 = vadd.f32 %v2150, %v1896
        %v2152 = vadd.f32 %v2151, %v1897
        %v2153 = vadd.f32 %v2152, %v1898
        %v2154 = vadd.f32 %v2153, %v1899
        %v2155 = vadd.f32 %v2154, %v1900
        %v2156 = vadd.f32 %v2155, %v1901
        %v2157 = vadd.f32 %v2156, %v1902
        %v2158 = vadd.f32 %v2157, %v1903
        %v2159 = vadd.f32 %v2158, %v1904
        %v2160 = vadd.f32 %v2159, %v1905
        %v2161 = vadd.f32 %v2160, %v1906
        %v2162 = vadd.f32 %v2161, %v1907
        %v2163 = vadd.f32 %v2162, %v1908
        %v2164 = vadd.f32 %v2163, %v1909
        %v2165 = vadd.f32 %v2164, %v1910
        %v2166 = vadd.f32 %v2165, %v1911
        %v2167 = vadd.f32 %v2166, %v1912
        %v2168 = vadd.f32 %v2167, %v1913
        %v2169 = vadd.f32 %v2168, %v1914
        %v2170 = vadd.f32 %v2169, %v1915
        %v2171 = vadd.f32 %v2170, %v1916
        %v2172 = vadd.f32 %v2171, %v1917
        %v2173 = vadd.f32 %v2172, %v1918
        %v2174 = vadd.f32 %v2173, %v1919
        %v2175 = vadd.f32 %v2174, %v1920
        %v2176 = vadd.f32 %v2175, %v1921
        %v2177 = vadd.f32 %v2176, %v1922
        %v2178 = vadd.f32 %v2177, %v1923
        %v2179 = vadd.f32 %v2178, %v1924
        %v2180 = vadd.f32 %v2179, %v1925
        %v2181 = vadd.f32 %v2180, %v1926
        %v2182 = vadd.f32 %v2181, %v1927
        %v2183 = vadd.f32 %v2182, %v1928
        %v2184 = vadd.f32 %v2183, %v1929
        %v2185 = vadd.f32 %v2184, %v1930
        %v2186 = vadd.f32 %v2185, %v1931
        %v2187 = vadd.f32 %v2186, %v1932
        %v2188 = vadd.f32 %v2187, %v1933
        %v2189 = vadd.f32 %v2188, %v1934
        %v2190 = vadd.f32 %v2189, %v1935
        %v2191 = vadd.f32 %v2190, %v1936
        %v2192 = vadd.f32 %v2191, %v1937
        %v2193 = vadd.f32 %v2192, %v1938
        %v2194 = vadd.f32 %v2193, %v1939
        %v2195 = vadd.f32 %v2194, %v1940
        %v2196 = vadd.f32 %v2195, %v1941
        %v2197 = vadd.f32 %v2196, %v1942
        %v2198 = vadd.f32 %v2197, %v1943
        %v2199 = vadd.f32 %v2198, %v1944
        %v2200 = vadd.f32 %v2199, %v1945
        %v2201 = vadd.f32 %v2200, %v1946
        %v2202 = vadd.f32 %v2201, %v1947
        %v2203 = vadd.f32 %v2202, %v1948
        %v2204 = vadd.f32 %v2203, %v1949
        %v2205 = vadd.f32 %v2204, %v1950
        %v2206 = vadd.f32 %v2205, %v1951
        %v2207 = vadd.f32 %v2206, %v1952
        %v2208 = vadd.f32 %v2207, %v1953
        %v2209 = vadd.f32 %v2208, %v1954
        %v2210 = vadd.f32 %v2209, %v1955
        %v2211 = vadd.f32 %v2210, %v1956
        %v2212 = vadd.f32 %v2211, %v1957
        %v2213 = vadd.f32 %v2212, %v1958
        %v2214 = vadd.f32 %v2213, %v1959
        %v2215 = vadd.f32 %v2214, %v1960
        %v2216 = vadd.f32 %v2215, %v1961
        %v2217 = vadd.f32 %v2216, %v1962
        %v2218 = vadd.f32 %v2217, %v1963
        %v2219 = vadd.f32 %v2218, %v1964
        %v2220 = vadd.f32 %v2219, %v1965
        %v2221 = vadd.f32 %v2220, %v1966
        %v2222 = vadd.f32 %v2221, %v1967
        %v2223 = vadd.f32 %v2222, %v1968
        %v2224 = vadd.f32 %v2223, %v1969
        %v2225 = vadd.f32 %v2224, %v1970
        %v2226 = vadd.f32 %v2225, %v1971
        %v2227 = vadd.f32 %v2226, %v1972
        %v2228 = vadd.f32 %v2227, %v1973
        %v2229 = vadd.f32 %v2228, %v1974
        %v2230 = vadd.f32 %v2229, %v1975
        %v2231 = vadd.f32 %v2230, %v1976
        %v2232 = vadd.f32 %v2231, %v1977
        %v2233 = vadd.f32 %v2232, %v1978
        %v2234 = vadd.f32 %v2233, %v1979
        %v2235 = vadd.f32 %v2234, %v1980
        %v2236 = vadd.f32 %v2235, %v1981
        %v2237 = vadd.f32 %v2236, %v1982
        %v2238 = vadd.f32 %v2237, %v1983
        %v2239 = vadd.f32 %v2238, %v1984
        %v2240 = vadd.f32 %v2239, %v1985
        %v2241 = vadd.f32 %v2240, %v1986
        %v2242 = vadd.f32 %v2241, %v1987
        %v2243 = vadd.f32 %v2242, %v1988
        %v2244 = vadd.f32 %v2243, %v1989
        %v2245 = vadd.f32 %v2244, %v1990
        %v2246 = vadd.f32 %v2245, %v1991
        %v2247 = vadd.f32 %v2246, %v1992
        %v2248 = vadd.f32 %v2247, %v1993
        %v2249 = vadd.f32 %v2248, %v1994
        %v2250 = vadd.f32 %v2249, %v1995
        %v2251 = vadd.f32 %v2250, %v1996
        %v2252 = vadd.f32 %v2251, %v1997
        %v2253 = vadd.f32 %v2252, %v1998
        %v2254 = vadd.f32 %v2253, %v1999
        %v2255 = vadd.f32 %v2254, %v2000
        %v2256 = vadd.f32 %v2255, %v2001
        %v2257 = vadd.f32 %v2256, %v2002
        %v2258 = vadd.f32 %v2257, %v2003
        %v2259 = vadd.f32 %v2258, %v2004
        %v2260 = vadd.f32 %v2259, %v2005
        %v2261 = vadd.f32 %v2260, %v2006
        %v2262 = vadd.f32 %v2261, %v2007
        %v2263 = vadd.f32 %v2262, %v2008
        %v2264 = vadd.f32 %v2263, %v2009
        %v2265 = vadd.f32 %v2264, %v2010
        %v2266 = vrot.slane %v2265, 4
        %v2267 = vadd.f32 %v2265, %v2266
        %v2268 = vrot.slane %v2267, 2
        %v2269 = vadd.f32 %v2267, %v2268
        %v2270 = vrot.slane %v2269, 1
        %v2271 = vadd.f32 %v2269, %v2270
        %v2272 = vmul.f32 %v2271, 0.00048828125
        %v2273 = vadd.f32 %v2272, 1e-05
        %v2274 = vrsqrt.pop %v2273
        %v2275 = vmul.f32 %v2274, %v2273
        %v2276 = vmul.f32 %v2275, %v2274
        %v2277 = vmul.f32 0.5, %v2276
        %v2278 = vsub.f32 1.5, %v2277
        %v2279 = vmul.f32 %v2274, %v2278
        %vm2280 = vweird.f32 %v2273
        %vm2281 = vweird.f32 %v2274
        %vm2282 = vmor %vm2280, %vm2281
        %v2283 = vsel %vm2282, %v2274, %v2279
        %v2284 = vmul.f32 %v1499, %v2283
        %v2285 = vmul.f32 %v1500, %v2283
        %v2286 = vmul.f32 %v1501, %v2283
        %v2287 = vmul.f32 %v1502, %v2283
        %v2288 = vmul.f32 %v1503, %v2283
        %v2289 = vmul.f32 %v1504, %v2283
        %v2290 = vmul.f32 %v1505, %v2283
        %v2291 = vmul.f32 %v1506, %v2283
        %v2292 = vmul.f32 %v1507, %v2283
        %v2293 = vmul.f32 %v1508, %v2283
        %v2294 = vmul.f32 %v1509, %v2283
        %v2295 = vmul.f32 %v1510, %v2283
        %v2296 = vmul.f32 %v1511, %v2283
        %v2297 = vmul.f32 %v1512, %v2283
        %v2298 = vmul.f32 %v1513, %v2283
        %v2299 = vmul.f32 %v1514, %v2283
        %v2300 = vmul.f32 %v1515, %v2283
        %v2301 = vmul.f32 %v1516, %v2283
        %v2302 = vmul.f32 %v1517, %v2283
        %v2303 = vmul.f32 %v1518, %v2283
        %v2304 = vmul.f32 %v1519, %v2283
        %v2305 = vmul.f32 %v1520, %v2283
        %v2306 = vmul.f32 %v1521, %v2283
        %v2307 = vmul.f32 %v1522, %v2283
        %v2308 = vmul.f32 %v1523, %v2283
        %v2309 = vmul.f32 %v1524, %v2283
        %v2310 = vmul.f32 %v1525, %v2283
        %v2311 = vmul.f32 %v1526, %v2283
        %v2312 = vmul.f32 %v1527, %v2283
        %v2313 = vmul.f32 %v1528, %v2283
        %v2314 = vmul.f32 %v1529, %v2283
        %v2315 = vmul.f32 %v1530, %v2283
        %v2316 = vmul.f32 %v1531, %v2283
        %v2317 = vmul.f32 %v1532, %v2283
        %v2318 = vmul.f32 %v1533, %v2283
        %v2319 = vmul.f32 %v1534, %v2283
        %v2320 = vmul.f32 %v1535, %v2283
        %v2321 = vmul.f32 %v1536, %v2283
        %v2322 = vmul.f32 %v1537, %v2283
        %v2323 = vmul.f32 %v1538, %v2283
        %v2324 = vmul.f32 %v1539, %v2283
        %v2325 = vmul.f32 %v1540, %v2283
        %v2326 = vmul.f32 %v1541, %v2283
        %v2327 = vmul.f32 %v1542, %v2283
        %v2328 = vmul.f32 %v1543, %v2283
        %v2329 = vmul.f32 %v1544, %v2283
        %v2330 = vmul.f32 %v1545, %v2283
        %v2331 = vmul.f32 %v1546, %v2283
        %v2332 = vmul.f32 %v1547, %v2283
        %v2333 = vmul.f32 %v1548, %v2283
        %v2334 = vmul.f32 %v1549, %v2283
        %v2335 = vmul.f32 %v1550, %v2283
        %v2336 = vmul.f32 %v1551, %v2283
        %v2337 = vmul.f32 %v1552, %v2283
        %v2338 = vmul.f32 %v1553, %v2283
        %v2339 = vmul.f32 %v1554, %v2283
        %v2340 = vmul.f32 %v1555, %v2283
        %v2341 = vmul.f32 %v1556, %v2283
        %v2342 = vmul.f32 %v1557, %v2283
        %v2343 = vmul.f32 %v1558, %v2283
        %v2344 = vmul.f32 %v1559, %v2283
        %v2345 = vmul.f32 %v1560, %v2283
        %v2346 = vmul.f32 %v1561, %v2283
        %v2347 = vmul.f32 %v1562, %v2283
        %v2348 = vmul.f32 %v1563, %v2283
        %v2349 = vmul.f32 %v1564, %v2283
        %v2350 = vmul.f32 %v1565, %v2283
        %v2351 = vmul.f32 %v1566, %v2283
        %v2352 = vmul.f32 %v1567, %v2283
        %v2353 = vmul.f32 %v1568, %v2283
        %v2354 = vmul.f32 %v1569, %v2283
        %v2355 = vmul.f32 %v1570, %v2283
        %v2356 = vmul.f32 %v1571, %v2283
        %v2357 = vmul.f32 %v1572, %v2283
        %v2358 = vmul.f32 %v1573, %v2283
        %v2359 = vmul.f32 %v1574, %v2283
        %v2360 = vmul.f32 %v1575, %v2283
        %v2361 = vmul.f32 %v1576, %v2283
        %v2362 = vmul.f32 %v1577, %v2283
        %v2363 = vmul.f32 %v1578, %v2283
        %v2364 = vmul.f32 %v1579, %v2283
        %v2365 = vmul.f32 %v1580, %v2283
        %v2366 = vmul.f32 %v1581, %v2283
        %v2367 = vmul.f32 %v1582, %v2283
        %v2368 = vmul.f32 %v1583, %v2283
        %v2369 = vmul.f32 %v1584, %v2283
        %v2370 = vmul.f32 %v1585, %v2283
        %v2371 = vmul.f32 %v1586, %v2283
        %v2372 = vmul.f32 %v1587, %v2283
        %v2373 = vmul.f32 %v1588, %v2283
        %v2374 = vmul.f32 %v1589, %v2283
        %v2375 = vmul.f32 %v1590, %v2283
        %v2376 = vmul.f32 %v1591, %v2283
        %v2377 = vmul.f32 %v1592, %v2283
        %v2378 = vmul.f32 %v1593, %v2283
        %v2379 = vmul.f32 %v1594, %v2283
        %v2380 = vmul.f32 %v1595, %v2283
        %v2381 = vmul.f32 %v1596, %v2283
        %v2382 = vmul.f32 %v1597, %v2283
        %v2383 = vmul.f32 %v1598, %v2283
        %v2384 = vmul.f32 %v1599, %v2283
        %v2385 = vmul.f32 %v1600, %v2283
        %v2386 = vmul.f32 %v1601, %v2283
        %v2387 = vmul.f32 %v1602, %v2283
        %v2388 = vmul.f32 %v1603, %v2283
        %v2389 = vmul.f32 %v1604, %v2283
        %v2390 = vmul.f32 %v1605, %v2283
        %v2391 = vmul.f32 %v1606, %v2283
        %v2392 = vmul.f32 %v1607, %v2283
        %v2393 = vmul.f32 %v1608, %v2283
        %v2394 = vmul.f32 %v1609, %v2283
        %v2395 = vmul.f32 %v1610, %v2283
        %v2396 = vmul.f32 %v1611, %v2283
        %v2397 = vmul.f32 %v1612, %v2283
        %v2398 = vmul.f32 %v1613, %v2283
        %v2399 = vmul.f32 %v1614, %v2283
        %v2400 = vmul.f32 %v1615, %v2283
        %v2401 = vmul.f32 %v1616, %v2283
        %v2402 = vmul.f32 %v1617, %v2283
        %v2403 = vmul.f32 %v1618, %v2283
        %v2404 = vmul.f32 %v1619, %v2283
        %v2405 = vmul.f32 %v1620, %v2283
        %v2406 = vmul.f32 %v1621, %v2283
        %v2407 = vmul.f32 %v1622, %v2283
        %v2408 = vmul.f32 %v1623, %v2283
        %v2409 = vmul.f32 %v1624, %v2283
        %v2410 = vmul.f32 %v1625, %v2283
        %v2411 = vmul.f32 %v1626, %v2283
        %v2412 = vmul.f32 %v1627, %v2283
        %v2413 = vmul.f32 %v1628, %v2283
        %v2414 = vmul.f32 %v1629, %v2283
        %v2415 = vmul.f32 %v1630, %v2283
        %v2416 = vmul.f32 %v1631, %v2283
        %v2417 = vmul.f32 %v1632, %v2283
        %v2418 = vmul.f32 %v1633, %v2283
        %v2419 = vmul.f32 %v1634, %v2283
        %v2420 = vmul.f32 %v1635, %v2283
        %v2421 = vmul.f32 %v1636, %v2283
        %v2422 = vmul.f32 %v1637, %v2283
        %v2423 = vmul.f32 %v1638, %v2283
        %v2424 = vmul.f32 %v1639, %v2283
        %v2425 = vmul.f32 %v1640, %v2283
        %v2426 = vmul.f32 %v1641, %v2283
        %v2427 = vmul.f32 %v1642, %v2283
        %v2428 = vmul.f32 %v1643, %v2283
        %v2429 = vmul.f32 %v1644, %v2283
        %v2430 = vmul.f32 %v1645, %v2283
        %v2431 = vmul.f32 %v1646, %v2283
        %v2432 = vmul.f32 %v1647, %v2283
        %v2433 = vmul.f32 %v1648, %v2283
        %v2434 = vmul.f32 %v1649, %v2283
        %v2435 = vmul.f32 %v1650, %v2283
        %v2436 = vmul.f32 %v1651, %v2283
        %v2437 = vmul.f32 %v1652, %v2283
        %v2438 = vmul.f32 %v1653, %v2283
        %v2439 = vmul.f32 %v1654, %v2283
        %v2440 = vmul.f32 %v1655, %v2283
        %v2441 = vmul.f32 %v1656, %v2283
        %v2442 = vmul.f32 %v1657, %v2283
        %v2443 = vmul.f32 %v1658, %v2283
        %v2444 = vmul.f32 %v1659, %v2283
        %v2445 = vmul.f32 %v1660, %v2283
        %v2446 = vmul.f32 %v1661, %v2283
        %v2447 = vmul.f32 %v1662, %v2283
        %v2448 = vmul.f32 %v1663, %v2283
        %v2449 = vmul.f32 %v1664, %v2283
        %v2450 = vmul.f32 %v1665, %v2283
        %v2451 = vmul.f32 %v1666, %v2283
        %v2452 = vmul.f32 %v1667, %v2283
        %v2453 = vmul.f32 %v1668, %v2283
        %v2454 = vmul.f32 %v1669, %v2283
        %v2455 = vmul.f32 %v1670, %v2283
        %v2456 = vmul.f32 %v1671, %v2283
        %v2457 = vmul.f32 %v1672, %v2283
        %v2458 = vmul.f32 %v1673, %v2283
        %v2459 = vmul.f32 %v1674, %v2283
        %v2460 = vmul.f32 %v1675, %v2283
        %v2461 = vmul.f32 %v1676, %v2283
        %v2462 = vmul.f32 %v1677, %v2283
        %v2463 = vmul.f32 %v1678, %v2283
        %v2464 = vmul.f32 %v1679, %v2283
        %v2465 = vmul.f32 %v1680, %v2283
        %v2466 = vmul.f32 %v1681, %v2283
        %v2467 = vmul.f32 %v1682, %v2283
        %v2468 = vmul.f32 %v1683, %v2283
        %v2469 = vmul.f32 %v1684, %v2283
        %v2470 = vmul.f32 %v1685, %v2283
        %v2471 = vmul.f32 %v1686, %v2283
        %v2472 = vmul.f32 %v1687, %v2283
        %v2473 = vmul.f32 %v1688, %v2283
        %v2474 = vmul.f32 %v1689, %v2283
        %v2475 = vmul.f32 %v1690, %v2283
        %v2476 = vmul.f32 %v1691, %v2283
        %v2477 = vmul.f32 %v1692, %v2283
        %v2478 = vmul.f32 %v1693, %v2283
        %v2479 = vmul.f32 %v1694, %v2283
        %v2480 = vmul.f32 %v1695, %v2283
        %v2481 = vmul.f32 %v1696, %v2283
        %v2482 = vmul.f32 %v1697, %v2283
        %v2483 = vmul.f32 %v1698, %v2283
        %v2484 = vmul.f32 %v1699, %v2283
        %v2485 = vmul.f32 %v1700, %v2283
        %v2486 = vmul.f32 %v1701, %v2283
        %v2487 = vmul.f32 %v1702, %v2283
        %v2488 = vmul.f32 %v1703, %v2283
        %v2489 = vmul.f32 %v1704, %v2283
        %v2490 = vmul.f32 %v1705, %v2283
        %v2491 = vmul.f32 %v1706, %v2283
        %v2492 = vmul.f32 %v1707, %v2283
        %v2493 = vmul.f32 %v1708, %v2283
        %v2494 = vmul.f32 %v1709, %v2283
        %v2495 = vmul.f32 %v1710, %v2283
        %v2496 = vmul.f32 %v1711, %v2283
        %v2497 = vmul.f32 %v1712, %v2283
        %v2498 = vmul.f32 %v1713, %v2283
        %v2499 = vmul.f32 %v1714, %v2283
        %v2500 = vmul.f32 %v1715, %v2283
        %v2501 = vmul.f32 %v1716, %v2283
        %v2502 = vmul.f32 %v1717, %v2283
        %v2503 = vmul.f32 %v1718, %v2283
        %v2504 = vmul.f32 %v1719, %v2283
        %v2505 = vmul.f32 %v1720, %v2283
        %v2506 = vmul.f32 %v1721, %v2283
        %v2507 = vmul.f32 %v1722, %v2283
        %v2508 = vmul.f32 %v1723, %v2283
        %v2509 = vmul.f32 %v1724, %v2283
        %v2510 = vmul.f32 %v1725, %v2283
        %v2511 = vmul.f32 %v1726, %v2283
        %v2512 = vmul.f32 %v1727, %v2283
        %v2513 = vmul.f32 %v1728, %v2283
        %v2514 = vmul.f32 %v1729, %v2283
        %v2515 = vmul.f32 %v1730, %v2283
        %v2516 = vmul.f32 %v1731, %v2283
        %v2517 = vmul.f32 %v1732, %v2283
        %v2518 = vmul.f32 %v1733, %v2283
        %v2519 = vmul.f32 %v1734, %v2283
        %v2520 = vmul.f32 %v1735, %v2283
        %v2521 = vmul.f32 %v1736, %v2283
        %v2522 = vmul.f32 %v1737, %v2283
        %v2523 = vmul.f32 %v1738, %v2283
        %v2524 = vmul.f32 %v1739, %v2283
        %v2525 = vmul.f32 %v1740, %v2283
        %v2526 = vmul.f32 %v1741, %v2283
        %v2527 = vmul.f32 %v1742, %v2283
        %v2528 = vmul.f32 %v1743, %v2283
        %v2529 = vmul.f32 %v1744, %v2283
        %v2530 = vmul.f32 %v1745, %v2283
        %v2531 = vmul.f32 %v1746, %v2283
        %v2532 = vmul.f32 %v1747, %v2283
        %v2533 = vmul.f32 %v1748, %v2283
        %v2534 = vmul.f32 %v1749, %v2283
        %v2535 = vmul.f32 %v1750, %v2283
        %v2536 = vmul.f32 %v1751, %v2283
        %v2537 = vmul.f32 %v1752, %v2283
        %v2538 = vmul.f32 %v1753, %v2283
        %v2539 = vmul.f32 %v1754, %v2283
        %v2540 = vmax.f32 %v2284, 0.0
        %v2541 = vmax.f32 %v2285, 0.0
        %v2542 = vmax.f32 %v2286, 0.0
        %v2543 = vmax.f32 %v2287, 0.0
        %v2544 = vmax.f32 %v2288, 0.0
        %v2545 = vmax.f32 %v2289, 0.0
        %v2546 = vmax.f32 %v2290, 0.0
        %v2547 = vmax.f32 %v2291, 0.0
        %v2548 = vmax.f32 %v2292, 0.0
        %v2549 = vmax.f32 %v2293, 0.0
        %v2550 = vmax.f32 %v2294, 0.0
        %v2551 = vmax.f32 %v2295, 0.0
        %v2552 = vmax.f32 %v2296, 0.0
        %v2553 = vmax.f32 %v2297, 0.0
        %v2554 = vmax.f32 %v2298, 0.0
        %v2555 = vmax.f32 %v2299, 0.0
        %v2556 = vmax.f32 %v2300, 0.0
        %v2557 = vmax.f32 %v2301, 0.0
        %v2558 = vmax.f32 %v2302, 0.0
        %v2559 = vmax.f32 %v2303, 0.0
        %v2560 = vmax.f32 %v2304, 0.0
        %v2561 = vmax.f32 %v2305, 0.0
        %v2562 = vmax.f32 %v2306, 0.0
        %v2563 = vmax.f32 %v2307, 0.0
        %v2564 = vmax.f32 %v2308, 0.0
        %v2565 = vmax.f32 %v2309, 0.0
        %v2566 = vmax.f32 %v2310, 0.0
        %v2567 = vmax.f32 %v2311, 0.0
        %v2568 = vmax.f32 %v2312, 0.0
        %v2569 = vmax.f32 %v2313, 0.0
        %v2570 = vmax.f32 %v2314, 0.0
        %v2571 = vmax.f32 %v2315, 0.0
        %v2572 = vmax.f32 %v2316, 0.0
        %v2573 = vmax.f32 %v2317, 0.0
        %v2574 = vmax.f32 %v2318, 0.0
        %v2575 = vmax.f32 %v2319, 0.0
        %v2576 = vmax.f32 %v2320, 0.0
        %v2577 = vmax.f32 %v2321, 0.0
        %v2578 = vmax.f32 %v2322, 0.0
        %v2579 = vmax.f32 %v2323, 0.0
        %v2580 = vmax.f32 %v2324, 0.0
        %v2581 = vmax.f32 %v2325, 0.0
        %v2582 = vmax.f32 %v2326, 0.0
        %v2583 = vmax.f32 %v2327, 0.0
        %v2584 = vmax.f32 %v2328, 0.0
        %v2585 = vmax.f32 %v2329, 0.0
        %v2586 = vmax.f32 %v2330, 0.0
        %v2587 = vmax.f32 %v2331, 0.0
        %v2588 = vmax.f32 %v2332, 0.0
        %v2589 = vmax.f32 %v2333, 0.0
        %v2590 = vmax.f32 %v2334, 0.0
        %v2591 = vmax.f32 %v2335, 0.0
        %v2592 = vmax.f32 %v2336, 0.0
        %v2593 = vmax.f32 %v2337, 0.0
        %v2594 = vmax.f32 %v2338, 0.0
        %v2595 = vmax.f32 %v2339, 0.0
        %v2596 = vmax.f32 %v2340, 0.0
        %v2597 = vmax.f32 %v2341, 0.0
        %v2598 = vmax.f32 %v2342, 0.0
        %v2599 = vmax.f32 %v2343, 0.0
        %v2600 = vmax.f32 %v2344, 0.0
        %v2601 = vmax.f32 %v2345, 0.0
        %v2602 = vmax.f32 %v2346, 0.0
        %v2603 = vmax.f32 %v2347, 0.0
        %v2604 = vmax.f32 %v2348, 0.0
        %v2605 = vmax.f32 %v2349, 0.0
        %v2606 = vmax.f32 %v2350, 0.0
        %v2607 = vmax.f32 %v2351, 0.0
        %v2608 = vmax.f32 %v2352, 0.0
        %v2609 = vmax.f32 %v2353, 0.0
        %v2610 = vmax.f32 %v2354, 0.0
        %v2611 = vmax.f32 %v2355, 0.0
        %v2612 = vmax.f32 %v2356, 0.0
        %v2613 = vmax.f32 %v2357, 0.0
        %v2614 = vmax.f32 %v2358, 0.0
        %v2615 = vmax.f32 %v2359, 0.0
        %v2616 = vmax.f32 %v2360, 0.0
        %v2617 = vmax.f32 %v2361, 0.0
        %v2618 = vmax.f32 %v2362, 0.0
        %v2619 = vmax.f32 %v2363, 0.0
        %v2620 = vmax.f32 %v2364, 0.0
        %v2621 = vmax.f32 %v2365, 0.0
        %v2622 = vmax.f32 %v2366, 0.0
        %v2623 = vmax.f32 %v2367, 0.0
        %v2624 = vmax.f32 %v2368, 0.0
        %v2625 = vmax.f32 %v2369, 0.0
        %v2626 = vmax.f32 %v2370, 0.0
        %v2627 = vmax.f32 %v2371, 0.0
        %v2628 = vmax.f32 %v2372, 0.0
        %v2629 = vmax.f32 %v2373, 0.0
        %v2630 = vmax.f32 %v2374, 0.0
        %v2631 = vmax.f32 %v2375, 0.0
        %v2632 = vmax.f32 %v2376, 0.0
        %v2633 = vmax.f32 %v2377, 0.0
        %v2634 = vmax.f32 %v2378, 0.0
        %v2635 = vmax.f32 %v2379, 0.0
        %v2636 = vmax.f32 %v2380, 0.0
        %v2637 = vmax.f32 %v2381, 0.0
        %v2638 = vmax.f32 %v2382, 0.0
        %v2639 = vmax.f32 %v2383, 0.0
        %v2640 = vmax.f32 %v2384, 0.0
        %v2641 = vmax.f32 %v2385, 0.0
        %v2642 = vmax.f32 %v2386, 0.0
        %v2643 = vmax.f32 %v2387, 0.0
        %v2644 = vmax.f32 %v2388, 0.0
        %v2645 = vmax.f32 %v2389, 0.0
        %v2646 = vmax.f32 %v2390, 0.0
        %v2647 = vmax.f32 %v2391, 0.0
        %v2648 = vmax.f32 %v2392, 0.0
        %v2649 = vmax.f32 %v2393, 0.0
        %v2650 = vmax.f32 %v2394, 0.0
        %v2651 = vmax.f32 %v2395, 0.0
        %v2652 = vmax.f32 %v2396, 0.0
        %v2653 = vmax.f32 %v2397, 0.0
        %v2654 = vmax.f32 %v2398, 0.0
        %v2655 = vmax.f32 %v2399, 0.0
        %v2656 = vmax.f32 %v2400, 0.0
        %v2657 = vmax.f32 %v2401, 0.0
        %v2658 = vmax.f32 %v2402, 0.0
        %v2659 = vmax.f32 %v2403, 0.0
        %v2660 = vmax.f32 %v2404, 0.0
        %v2661 = vmax.f32 %v2405, 0.0
        %v2662 = vmax.f32 %v2406, 0.0
        %v2663 = vmax.f32 %v2407, 0.0
        %v2664 = vmax.f32 %v2408, 0.0
        %v2665 = vmax.f32 %v2409, 0.0
        %v2666 = vmax.f32 %v2410, 0.0
        %v2667 = vmax.f32 %v2411, 0.0
        %v2668 = vmax.f32 %v2412, 0.0
        %v2669 = vmax.f32 %v2413, 0.0
        %v2670 = vmax.f32 %v2414, 0.0
        %v2671 = vmax.f32 %v2415, 0.0
        %v2672 = vmax.f32 %v2416, 0.0
        %v2673 = vmax.f32 %v2417, 0.0
        %v2674 = vmax.f32 %v2418, 0.0
        %v2675 = vmax.f32 %v2419, 0.0
        %v2676 = vmax.f32 %v2420, 0.0
        %v2677 = vmax.f32 %v2421, 0.0
        %v2678 = vmax.f32 %v2422, 0.0
        %v2679 = vmax.f32 %v2423, 0.0
        %v2680 = vmax.f32 %v2424, 0.0
        %v2681 = vmax.f32 %v2425, 0.0
        %v2682 = vmax.f32 %v2426, 0.0
        %v2683 = vmax.f32 %v2427, 0.0
        %v2684 = vmax.f32 %v2428, 0.0
        %v2685 = vmax.f32 %v2429, 0.0
        %v2686 = vmax.f32 %v2430, 0.0
        %v2687 = vmax.f32 %v2431, 0.0
        %v2688 = vmax.f32 %v2432, 0.0
        %v2689 = vmax.f32 %v2433, 0.0
        %v2690 = vmax.f32 %v2434, 0.0
        %v2691 = vmax.f32 %v2435, 0.0
        %v2692 = vmax.f32 %v2436, 0.0
        %v2693 = vmax.f32 %v2437, 0.0
        %v2694 = vmax.f32 %v2438, 0.0
        %v2695 = vmax.f32 %v2439, 0.0
        %v2696 = vmax.f32 %v2440, 0.0
        %v2697 = vmax.f32 %v2441, 0.0
        %v2698 = vmax.f32 %v2442, 0.0
        %v2699 = vmax.f32 %v2443, 0.0
        %v2700 = vmax.f32 %v2444, 0.0
        %v2701 = vmax.f32 %v2445, 0.0
        %v2702 = vmax.f32 %v2446, 0.0
        %v2703 = vmax.f32 %v2447, 0.0
        %v2704 = vmax.f32 %v2448, 0.0
        %v2705 = vmax.f32 %v2449, 0.0
        %v2706 = vmax.f32 %v2450, 0.0
        %v2707 = vmax.f32 %v2451, 0.0
        %v2708 = vmax.f32 %v2452, 0.0
        %v2709 = vmax.f32 %v2453, 0.0
        %v2710 = vmax.f32 %v2454, 0.0
        %v2711 = vmax.f32 %v2455, 0.0
        %v2712 = vmax.f32 %v2456, 0.0
        %v2713 = vmax.f32 %v2457, 0.0
        %v2714 = vmax.f32 %v2458, 0.0
        %v2715 = vmax.f32 %v2459, 0.0
        %v2716 = vmax.f32 %v2460, 0.0
        %v2717 = vmax.f32 %v2461, 0.0
        %v2718 = vmax.f32 %v2462, 0.0
        %v2719 = vmax.f32 %v2463, 0.0
        %v2720 = vmax.f32 %v2464, 0.0
        %v2721 = vmax.f32 %v2465, 0.0
        %v2722 = vmax.f32 %v2466, 0.0
        %v2723 = vmax.f32 %v2467, 0.0
        %v2724 = vmax.f32 %v2468, 0.0
        %v2725 = vmax.f32 %v2469, 0.0
        %v2726 = vmax.f32 %v2470, 0.0
        %v2727 = vmax.f32 %v2471, 0.0
        %v2728 = vmax.f32 %v2472, 0.0
        %v2729 = vmax.f32 %v2473, 0.0
        %v2730 = vmax.f32 %v2474, 0.0
        %v2731 = vmax.f32 %v2475, 0.0
        %v2732 = vmax.f32 %v2476, 0.0
        %v2733 = vmax.f32 %v2477, 0.0
        %v2734 = vmax.f32 %v2478, 0.0
        %v2735 = vmax.f32 %v2479, 0.0
        %v2736 = vmax.f32 %v2480, 0.0
        %v2737 = vmax.f32 %v2481, 0.0
        %v2738 = vmax.f32 %v2482, 0.0
        %v2739 = vmax.f32 %v2483, 0.0
        %v2740 = vmax.f32 %v2484, 0.0
        %v2741 = vmax.f32 %v2485, 0.0
        %v2742 = vmax.f32 %v2486, 0.0
        %v2743 = vmax.f32 %v2487, 0.0
        %v2744 = vmax.f32 %v2488, 0.0
        %v2745 = vmax.f32 %v2489, 0.0
        %v2746 = vmax.f32 %v2490, 0.0
        %v2747 = vmax.f32 %v2491, 0.0
        %v2748 = vmax.f32 %v2492, 0.0
        %v2749 = vmax.f32 %v2493, 0.0
        %v2750 = vmax.f32 %v2494, 0.0
        %v2751 = vmax.f32 %v2495, 0.0
        %v2752 = vmax.f32 %v2496, 0.0
        %v2753 = vmax.f32 %v2497, 0.0
        %v2754 = vmax.f32 %v2498, 0.0
        %v2755 = vmax.f32 %v2499, 0.0
        %v2756 = vmax.f32 %v2500, 0.0
        %v2757 = vmax.f32 %v2501, 0.0
        %v2758 = vmax.f32 %v2502, 0.0
        %v2759 = vmax.f32 %v2503, 0.0
        %v2760 = vmax.f32 %v2504, 0.0
        %v2761 = vmax.f32 %v2505, 0.0
        %v2762 = vmax.f32 %v2506, 0.0
        %v2763 = vmax.f32 %v2507, 0.0
        %v2764 = vmax.f32 %v2508, 0.0
        %v2765 = vmax.f32 %v2509, 0.0
        %v2766 = vmax.f32 %v2510, 0.0
        %v2767 = vmax.f32 %v2511, 0.0
        %v2768 = vmax.f32 %v2512, 0.0
        %v2769 = vmax.f32 %v2513, 0.0
        %v2770 = vmax.f32 %v2514, 0.0
        %v2771 = vmax.f32 %v2515, 0.0
        %v2772 = vmax.f32 %v2516, 0.0
        %v2773 = vmax.f32 %v2517, 0.0
        %v2774 = vmax.f32 %v2518, 0.0
        %v2775 = vmax.f32 %v2519, 0.0
        %v2776 = vmax.f32 %v2520, 0.0
        %v2777 = vmax.f32 %v2521, 0.0
        %v2778 = vmax.f32 %v2522, 0.0
        %v2779 = vmax.f32 %v2523, 0.0
        %v2780 = vmax.f32 %v2524, 0.0
        %v2781 = vmax.f32 %v2525, 0.0
        %v2782 = vmax.f32 %v2526, 0.0
        %v2783 = vmax.f32 %v2527, 0.0
        %v2784 = vmax.f32 %v2528, 0.0
        %v2785 = vmax.f32 %v2529, 0.0
        %v2786 = vmax.f32 %v2530, 0.0
        %v2787 = vmax.f32 %v2531, 0.0
        %v2788 = vmax.f32 %v2532, 0.0
        %v2789 = vmax.f32 %v2533, 0.0
        %v2790 = vmax.f32 %v2534, 0.0
        %v2791 = vmax.f32 %v2535, 0.0
        %v2792 = vmax.f32 %v2536, 0.0
        %v2793 = vmax.f32 %v2537, 0.0
        %v2794 = vmax.f32 %v2538, 0.0
        %v2795 = vmax.f32 %v2539, 0.0
        %v2796 = vpack.c.bf16 %v2540, %v2540
        %v2797 = vpack.c.bf16 %v2541, %v2541
        %v2798 = vpack.c.bf16 %v2542, %v2542
        %v2799 = vpack.c.bf16 %v2543, %v2543
        %v2800 = vpack.c.bf16 %v2544, %v2544
        %v2801 = vpack.c.bf16 %v2545, %v2545
        %v2802 = vpack.c.bf16 %v2546, %v2546
        %v2803 = vpack.c.bf16 %v2547, %v2547
        %v2804 = vpack.c.bf16 %v2548, %v2548
        %v2805 = vpack.c.bf16 %v2549, %v2549
        %v2806 = vpack.c.bf16 %v2550, %v2550
        %v2807 = vpack.c.bf16 %v2551, %v2551
        %v2808 = vpack.c.bf16 %v2552, %v2552
        %v2809 = vpack.c.bf16 %v2553, %v2553
        %v2810 = vpack.c.bf16 %v2554, %v2554
        %v2811 = vpack.c.bf16 %v2555, %v2555
        %v2812 = vpack.c.bf16 %v2556, %v2556
        %v2813 = vpack.c.bf16 %v2557, %v2557
        %v2814 = vpack.c.bf16 %v2558, %v2558
        %v2815 = vpack.c.bf16 %v2559, %v2559
        %v2816 = vpack.c.bf16 %v2560, %v2560
        %v2817 = vpack.c.bf16 %v2561, %v2561
        %v2818 = vpack.c.bf16 %v2562, %v2562
        %v2819 = vpack.c.bf16 %v2563, %v2563
        %v2820 = vpack.c.bf16 %v2564, %v2564
        %v2821 = vpack.c.bf16 %v2565, %v2565
        %v2822 = vpack.c.bf16 %v2566, %v2566
        %v2823 = vpack.c.bf16 %v2567, %v2567
        %v2824 = vpack.c.bf16 %v2568, %v2568
        %v2825 = vpack.c.bf16 %v2569, %v2569
        %v2826 = vpack.c.bf16 %v2570, %v2570
        %v2827 = vpack.c.bf16 %v2571, %v2571
        %v2828 = vpack.c.bf16 %v2572, %v2572
        %v2829 = vpack.c.bf16 %v2573, %v2573
        %v2830 = vpack.c.bf16 %v2574, %v2574
        %v2831 = vpack.c.bf16 %v2575, %v2575
        %v2832 = vpack.c.bf16 %v2576, %v2576
        %v2833 = vpack.c.bf16 %v2577, %v2577
        %v2834 = vpack.c.bf16 %v2578, %v2578
        %v2835 = vpack.c.bf16 %v2579, %v2579
        %v2836 = vpack.c.bf16 %v2580, %v2580
        %v2837 = vpack.c.bf16 %v2581, %v2581
        %v2838 = vpack.c.bf16 %v2582, %v2582
        %v2839 = vpack.c.bf16 %v2583, %v2583
        %v2840 = vpack.c.bf16 %v2584, %v2584
        %v2841 = vpack.c.bf16 %v2585, %v2585
        %v2842 = vpack.c.bf16 %v2586, %v2586
        %v2843 = vpack.c.bf16 %v2587, %v2587
        %v2844 = vpack.c.bf16 %v2588, %v2588
        %v2845 = vpack.c.bf16 %v2589, %v2589
        %v2846 = vpack.c.bf16 %v2590, %v2590
        %v2847 = vpack.c.bf16 %v2591, %v2591
        %v2848 = vpack.c.bf16 %v2592, %v2592
        %v2849 = vpack.c.bf16 %v2593, %v2593
        %v2850 = vpack.c.bf16 %v2594, %v2594
        %v2851 = vpack.c.bf16 %v2595, %v2595
        %v2852 = vpack.c.bf16 %v2596, %v2596
        %v2853 = vpack.c.bf16 %v2597, %v2597
        %v2854 = vpack.c.bf16 %v2598, %v2598
        %v2855 = vpack.c.bf16 %v2599, %v2599
        %v2856 = vpack.c.bf16 %v2600, %v2600
        %v2857 = vpack.c.bf16 %v2601, %v2601
        %v2858 = vpack.c.bf16 %v2602, %v2602
        %v2859 = vpack.c.bf16 %v2603, %v2603
        %v2860 = vpack.c.bf16 %v2604, %v2604
        %v2861 = vpack.c.bf16 %v2605, %v2605
        %v2862 = vpack.c.bf16 %v2606, %v2606
        %v2863 = vpack.c.bf16 %v2607, %v2607
        %v2864 = vpack.c.bf16 %v2608, %v2608
        %v2865 = vpack.c.bf16 %v2609, %v2609
        %v2866 = vpack.c.bf16 %v2610, %v2610
        %v2867 = vpack.c.bf16 %v2611, %v2611
        %v2868 = vpack.c.bf16 %v2612, %v2612
        %v2869 = vpack.c.bf16 %v2613, %v2613
        %v2870 = vpack.c.bf16 %v2614, %v2614
        %v2871 = vpack.c.bf16 %v2615, %v2615
        %v2872 = vpack.c.bf16 %v2616, %v2616
        %v2873 = vpack.c.bf16 %v2617, %v2617
        %v2874 = vpack.c.bf16 %v2618, %v2618
        %v2875 = vpack.c.bf16 %v2619, %v2619
        %v2876 = vpack.c.bf16 %v2620, %v2620
        %v2877 = vpack.c.bf16 %v2621, %v2621
        %v2878 = vpack.c.bf16 %v2622, %v2622
        %v2879 = vpack.c.bf16 %v2623, %v2623
        %v2880 = vpack.c.bf16 %v2624, %v2624
        %v2881 = vpack.c.bf16 %v2625, %v2625
        %v2882 = vpack.c.bf16 %v2626, %v2626
        %v2883 = vpack.c.bf16 %v2627, %v2627
        %v2884 = vpack.c.bf16 %v2628, %v2628
        %v2885 = vpack.c.bf16 %v2629, %v2629
        %v2886 = vpack.c.bf16 %v2630, %v2630
        %v2887 = vpack.c.bf16 %v2631, %v2631
        %v2888 = vpack.c.bf16 %v2632, %v2632
        %v2889 = vpack.c.bf16 %v2633, %v2633
        %v2890 = vpack.c.bf16 %v2634, %v2634
        %v2891 = vpack.c.bf16 %v2635, %v2635
        %v2892 = vpack.c.bf16 %v2636, %v2636
        %v2893 = vpack.c.bf16 %v2637, %v2637
        %v2894 = vpack.c.bf16 %v2638, %v2638
        %v2895 = vpack.c.bf16 %v2639, %v2639
        %v2896 = vpack.c.bf16 %v2640, %v2640
        %v2897 = vpack.c.bf16 %v2641, %v2641
        %v2898 = vpack.c.bf16 %v2642, %v2642
        %v2899 = vpack.c.bf16 %v2643, %v2643
        %v2900 = vpack.c.bf16 %v2644, %v2644
        %v2901 = vpack.c.bf16 %v2645, %v2645
        %v2902 = vpack.c.bf16 %v2646, %v2646
        %v2903 = vpack.c.bf16 %v2647, %v2647
        %v2904 = vpack.c.bf16 %v2648, %v2648
        %v2905 = vpack.c.bf16 %v2649, %v2649
        %v2906 = vpack.c.bf16 %v2650, %v2650
        %v2907 = vpack.c.bf16 %v2651, %v2651
        %v2908 = vpack.c.bf16 %v2652, %v2652
        %v2909 = vpack.c.bf16 %v2653, %v2653
        %v2910 = vpack.c.bf16 %v2654, %v2654
        %v2911 = vpack.c.bf16 %v2655, %v2655
        %v2912 = vpack.c.bf16 %v2656, %v2656
        %v2913 = vpack.c.bf16 %v2657, %v2657
        %v2914 = vpack.c.bf16 %v2658, %v2658
        %v2915 = vpack.c.bf16 %v2659, %v2659
        %v2916 = vpack.c.bf16 %v2660, %v2660
        %v2917 = vpack.c.bf16 %v2661, %v2661
        %v2918 = vpack.c.bf16 %v2662, %v2662
        %v2919 = vpack.c.bf16 %v2663, %v2663
        %v2920 = vpack.c.bf16 %v2664, %v2664
        %v2921 = vpack.c.bf16 %v2665, %v2665
        %v2922 = vpack.c.bf16 %v2666, %v2666
        %v2923 = vpack.c.bf16 %v2667, %v2667
        %v2924 = vpack.c.bf16 %v2668, %v2668
        %v2925 = vpack.c.bf16 %v2669, %v2669
        %v2926 = vpack.c.bf16 %v2670, %v2670
        %v2927 = vpack.c.bf16 %v2671, %v2671
        %v2928 = vpack.c.bf16 %v2672, %v2672
        %v2929 = vpack.c.bf16 %v2673, %v2673
        %v2930 = vpack.c.bf16 %v2674, %v2674
        %v2931 = vpack.c.bf16 %v2675, %v2675
        %v2932 = vpack.c.bf16 %v2676, %v2676
        %v2933 = vpack.c.bf16 %v2677, %v2677
        %v2934 = vpack.c.bf16 %v2678, %v2678
        %v2935 = vpack.c.bf16 %v2679, %v2679
        %v2936 = vpack.c.bf16 %v2680, %v2680
        %v2937 = vpack.c.bf16 %v2681, %v2681
        %v2938 = vpack.c.bf16 %v2682, %v2682
        %v2939 = vpack.c.bf16 %v2683, %v2683
        %v2940 = vpack.c.bf16 %v2684, %v2684
        %v2941 = vpack.c.bf16 %v2685, %v2685
        %v2942 = vpack.c.bf16 %v2686, %v2686
        %v2943 = vpack.c.bf16 %v2687, %v2687
        %v2944 = vpack.c.bf16 %v2688, %v2688
        %v2945 = vpack.c.bf16 %v2689, %v2689
        %v2946 = vpack.c.bf16 %v2690, %v2690
        %v2947 = vpack.c.bf16 %v2691, %v2691
        %v2948 = vpack.c.bf16 %v2692, %v2692
        %v2949 = vpack.c.bf16 %v2693, %v2693
        %v2950 = vpack.c.bf16 %v2694, %v2694
        %v2951 = vpack.c.bf16 %v2695, %v2695
        %v2952 = vpack.c.bf16 %v2696, %v2696
        %v2953 = vpack.c.bf16 %v2697, %v2697
        %v2954 = vpack.c.bf16 %v2698, %v2698
        %v2955 = vpack.c.bf16 %v2699, %v2699
        %v2956 = vpack.c.bf16 %v2700, %v2700
        %v2957 = vpack.c.bf16 %v2701, %v2701
        %v2958 = vpack.c.bf16 %v2702, %v2702
        %v2959 = vpack.c.bf16 %v2703, %v2703
        %v2960 = vpack.c.bf16 %v2704, %v2704
        %v2961 = vpack.c.bf16 %v2705, %v2705
        %v2962 = vpack.c.bf16 %v2706, %v2706
        %v2963 = vpack.c.bf16 %v2707, %v2707
        %v2964 = vpack.c.bf16 %v2708, %v2708
        %v2965 = vpack.c.bf16 %v2709, %v2709
        %v2966 = vpack.c.bf16 %v2710, %v2710
        %v2967 = vpack.c.bf16 %v2711, %v2711
        %v2968 = vpack.c.bf16 %v2712, %v2712
        %v2969 = vpack.c.bf16 %v2713, %v2713
        %v2970 = vpack.c.bf16 %v2714, %v2714
        %v2971 = vpack.c.bf16 %v2715, %v2715
        %v2972 = vpack.c.bf16 %v2716, %v2716
        %v2973 = vpack.c.bf16 %v2717, %v2717
        %v2974 = vpack.c.bf16 %v2718, %v2718
        %v2975 = vpack.c.bf16 %v2719, %v2719
        %v2976 = vpack.c.bf16 %v2720, %v2720
        %v2977 = vpack.c.bf16 %v2721, %v2721
        %v2978 = vpack.c.bf16 %v2722, %v2722
        %v2979 = vpack.c.bf16 %v2723, %v2723
        %v2980 = vpack.c.bf16 %v2724, %v2724
        %v2981 = vpack.c.bf16 %v2725, %v2725
        %v2982 = vpack.c.bf16 %v2726, %v2726
        %v2983 = vpack.c.bf16 %v2727, %v2727
        %v2984 = vpack.c.bf16 %v2728, %v2728
        %v2985 = vpack.c.bf16 %v2729, %v2729
        %v2986 = vpack.c.bf16 %v2730, %v2730
        %v2987 = vpack.c.bf16 %v2731, %v2731
        %v2988 = vpack.c.bf16 %v2732, %v2732
        %v2989 = vpack.c.bf16 %v2733, %v2733
        %v2990 = vpack.c.bf16 %v2734, %v2734
        %v2991 = vpack.c.bf16 %v2735, %v2735
        %v2992 = vpack.c.bf16 %v2736, %v2736
        %v2993 = vpack.c.bf16 %v2737, %v2737
        %v2994 = vpack.c.bf16 %v2738, %v2738
        %v2995 = vpack.c.bf16 %v2739, %v2739
        %v2996 = vpack.c.bf16 %v2740, %v2740
        %v2997 = vpack.c.bf16 %v2741, %v2741
        %v2998 = vpack.c.bf16 %v2742, %v2742
        %v2999 = vpack.c.bf16 %v2743, %v2743
        %v3000 = vpack.c.bf16 %v2744, %v2744
        %v3001 = vpack.c.bf16 %v2745, %v2745
        %v3002 = vpack.c.bf16 %v2746, %v2746
        %v3003 = vpack.c.bf16 %v2747, %v2747
        %v3004 = vpack.c.bf16 %v2748, %v2748
        %v3005 = vpack.c.bf16 %v2749, %v2749
        %v3006 = vpack.c.bf16 %v2750, %v2750
        %v3007 = vpack.c.bf16 %v2751, %v2751
        %v3008 = vpack.c.bf16 %v2752, %v2752
        %v3009 = vpack.c.bf16 %v2753, %v2753
        %v3010 = vpack.c.bf16 %v2754, %v2754
        %v3011 = vpack.c.bf16 %v2755, %v2755
        %v3012 = vpack.c.bf16 %v2756, %v2756
        %v3013 = vpack.c.bf16 %v2757, %v2757
        %v3014 = vpack.c.bf16 %v2758, %v2758
        %v3015 = vpack.c.bf16 %v2759, %v2759
        %v3016 = vpack.c.bf16 %v2760, %v2760
        %v3017 = vpack.c.bf16 %v2761, %v2761
        %v3018 = vpack.c.bf16 %v2762, %v2762
        %v3019 = vpack.c.bf16 %v2763, %v2763
        %v3020 = vpack.c.bf16 %v2764, %v2764
        %v3021 = vpack.c.bf16 %v2765, %v2765
        %v3022 = vpack.c.bf16 %v2766, %v2766
        %v3023 = vpack.c.bf16 %v2767, %v2767
        %v3024 = vpack.c.bf16 %v2768, %v2768
        %v3025 = vpack.c.bf16 %v2769, %v2769
        %v3026 = vpack.c.bf16 %v2770, %v2770
        %v3027 = vpack.c.bf16 %v2771, %v2771
        %v3028 = vpack.c.bf16 %v2772, %v2772
        %v3029 = vpack.c.bf16 %v2773, %v2773
        %v3030 = vpack.c.bf16 %v2774, %v2774
        %v3031 = vpack.c.bf16 %v2775, %v2775
        %v3032 = vpack.c.bf16 %v2776, %v2776
        %v3033 = vpack.c.bf16 %v2777, %v2777
        %v3034 = vpack.c.bf16 %v2778, %v2778
        %v3035 = vpack.c.bf16 %v2779, %v2779
        %v3036 = vpack.c.bf16 %v2780, %v2780
        %v3037 = vpack.c.bf16 %v2781, %v2781
        %v3038 = vpack.c.bf16 %v2782, %v2782
        %v3039 = vpack.c.bf16 %v2783, %v2783
        %v3040 = vpack.c.bf16 %v2784, %v2784
        %v3041 = vpack.c.bf16 %v2785, %v2785
        %v3042 = vpack.c.bf16 %v2786, %v2786
        %v3043 = vpack.c.bf16 %v2787, %v2787
        %v3044 = vpack.c.bf16 %v2788, %v2788
        %v3045 = vpack.c.bf16 %v2789, %v2789
        %v3046 = vpack.c.bf16 %v2790, %v2790
        %v3047 = vpack.c.bf16 %v2791, %v2791
        %v3048 = vpack.c.bf16 %v2792, %v2792
        %v3049 = vpack.c.bf16 %v2793, %v2793
        %v3050 = vpack.c.bf16 %v2794, %v2794
        %v3051 = vpack.c.bf16 %v2795, %v2795
        %3052 = vst [vmem:[%s218] sm:$0xf] %v2796
        %3053 = vst [vmem:[%s218 + $0x4] sm:$0xf] %v2797
        %3054 = vst [vmem:[%s218 + $0x8] sm:$0xf] %v2798
        %3055 = vst [vmem:[%s218 + $0xc] sm:$0xf] %v2799
        %3056 = vst [vmem:[%s218 + $0x10] sm:$0xf] %v2800
        %3057 = vst [vmem:[%s218 + $0x14] sm:$0xf] %v2801
        %3058 = vst [vmem:[%s218 + $0x18] sm:$0xf] %v2802
        %3059 = vst [vmem:[%s218 + $0x1c] sm:$0xf] %v2803
        %3060 = vst [vmem:[%s218 + $0x20] sm:$0xf] %v2804
        %3061 = vst [vmem:[%s218 + $0x24] sm:$0xf] %v2805
        %3062 = vst [vmem:[%s218 + $0x28] sm:$0xf] %v2806
        %3063 = vst [vmem:[%s218 + $0x2c] sm:$0xf] %v2807
        %3064 = vst [vmem:[%s218 + $0x30] sm:$0xf] %v2808
        %3065 = vst [vmem:[%s218 + $0x34] sm:$0xf] %v2809
        %3066 = vst [vmem:[%s218 + $0x38] sm:$0xf] %v2810
        %3067 = vst [vmem:[%s218 + $0x3c] sm:$0xf] %v2811
        %3068 = vst [vmem:[%s218 + $0x40] sm:$0xf] %v2812
        %3069 = vst [vmem:[%s218 + $0x44] sm:$0xf] %v2813
        %3070 = vst [vmem:[%s218 + $0x48] sm:$0xf] %v2814
        %3071 = vst [vmem:[%s218 + $0x4c] sm:$0xf] %v2815
        %3072 = vst [vmem:[%s218 + $0x50] sm:$0xf] %v2816
        %3073 = vst [vmem:[%s218 + $0x54] sm:$0xf] %v2817
        %3074 = vst [vmem:[%s218 + $0x58] sm:$0xf] %v2818
        %3075 = vst [vmem:[%s218 + $0x5c] sm:$0xf] %v2819
        %3076 = vst [vmem:[%s218 + $0x60] sm:$0xf] %v2820
        %3077 = vst [vmem:[%s218 + $0x64] sm:$0xf] %v2821
        %3078 = vst [vmem:[%s218 + $0x68] sm:$0xf] %v2822
        %3079 = vst [vmem:[%s218 + $0x6c] sm:$0xf] %v2823
        %3080 = vst [vmem:[%s218 + $0x70] sm:$0xf] %v2824
        %3081 = vst [vmem:[%s218 + $0x74] sm:$0xf] %v2825
        %3082 = vst [vmem:[%s218 + $0x78] sm:$0xf] %v2826
        %3083 = vst [vmem:[%s218 + $0x7c] sm:$0xf] %v2827
        %3084 = vst [vmem:[%s218 + $0x80] sm:$0xf] %v2828
        %3085 = vst [vmem:[%s218 + $0x84] sm:$0xf] %v2829
        %3086 = vst [vmem:[%s218 + $0x88] sm:$0xf] %v2830
        %3087 = vst [vmem:[%s218 + $0x8c] sm:$0xf] %v2831
        %3088 = vst [vmem:[%s218 + $0x90] sm:$0xf] %v2832
        %3089 = vst [vmem:[%s218 + $0x94] sm:$0xf] %v2833
        %3090 = vst [vmem:[%s218 + $0x98] sm:$0xf] %v2834
        %3091 = vst [vmem:[%s218 + $0x9c] sm:$0xf] %v2835
        %3092 = vst [vmem:[%s218 + $0xa0] sm:$0xf] %v2836
        %3093 = vst [vmem:[%s218 + $0xa4] sm:$0xf] %v2837
        %3094 = vst [vmem:[%s218 + $0xa8] sm:$0xf] %v2838
        %3095 = vst [vmem:[%s218 + $0xac] sm:$0xf] %v2839
        %3096 = vst [vmem:[%s218 + $0xb0] sm:$0xf] %v2840
        %3097 = vst [vmem:[%s218 + $0xb4] sm:$0xf] %v2841
        %3098 = vst [vmem:[%s218 + $0xb8] sm:$0xf] %v2842
        %3099 = vst [vmem:[%s218 + $0xbc] sm:$0xf] %v2843
        %3100 = vst [vmem:[%s218 + $0xc0] sm:$0xf] %v2844
        %3101 = vst [vmem:[%s218 + $0xc4] sm:$0xf] %v2845
        %3102 = vst [vmem:[%s218 + $0xc8] sm:$0xf] %v2846
        %3103 = vst [vmem:[%s218 + $0xcc] sm:$0xf] %v2847
        %3104 = vst [vmem:[%s218 + $0xd0] sm:$0xf] %v2848
        %3105 = vst [vmem:[%s218 + $0xd4] sm:$0xf] %v2849
        %3106 = vst [vmem:[%s218 + $0xd8] sm:$0xf] %v2850
        %3107 = vst [vmem:[%s218 + $0xdc] sm:$0xf] %v2851
        %3108 = vst [vmem:[%s218 + $0xe0] sm:$0xf] %v2852
        %3109 = vst [vmem:[%s218 + $0xe4] sm:$0xf] %v2853
        %3110 = vst [vmem:[%s218 + $0xe8] sm:$0xf] %v2854
        %3111 = vst [vmem:[%s218 + $0xec] sm:$0xf] %v2855
        %3112 = vst [vmem:[%s218 + $0xf0] sm:$0xf] %v2856
        %3113 = vst [vmem:[%s218 + $0xf4] sm:$0xf] %v2857
        %3114 = vst [vmem:[%s218 + $0xf8] sm:$0xf] %v2858
        %3115 = vst [vmem:[%s218 + $0xfc] sm:$0xf] %v2859
        %3116 = vst [vmem:[%s218 + $0x100] sm:$0xf] %v2860
        %3117 = vst [vmem:[%s218 + $0x104] sm:$0xf] %v2861
        %3118 = vst [vmem:[%s218 + $0x108] sm:$0xf] %v2862
        %3119 = vst [vmem:[%s218 + $0x10c] sm:$0xf] %v2863
        %3120 = vst [vmem:[%s218 + $0x110] sm:$0xf] %v2864
        %3121 = vst [vmem:[%s218 + $0x114] sm:$0xf] %v2865
        %3122 = vst [vmem:[%s218 + $0x118] sm:$0xf] %v2866
        %3123 = vst [vmem:[%s218 + $0x11c] sm:$0xf] %v2867
        %3124 = vst [vmem:[%s218 + $0x120] sm:$0xf] %v2868
        %3125 = vst [vmem:[%s218 + $0x124] sm:$0xf] %v2869
        %3126 = vst [vmem:[%s218 + $0x128] sm:$0xf] %v2870
        %3127 = vst [vmem:[%s218 + $0x12c] sm:$0xf] %v2871
        %3128 = vst [vmem:[%s218 + $0x130] sm:$0xf] %v2872
        %3129 = vst [vmem:[%s218 + $0x134] sm:$0xf] %v2873
        %3130 = vst [vmem:[%s218 + $0x138] sm:$0xf] %v2874
        %3131 = vst [vmem:[%s218 + $0x13c] sm:$0xf] %v2875
        %3132 = vst [vmem:[%s218 + $0x140] sm:$0xf] %v2876
        %3133 = vst [vmem:[%s218 + $0x144] sm:$0xf] %v2877
        %3134 = vst [vmem:[%s218 + $0x148] sm:$0xf] %v2878
        %3135 = vst [vmem:[%s218 + $0x14c] sm:$0xf] %v2879
        %3136 = vst [vmem:[%s218 + $0x150] sm:$0xf] %v2880
        %3137 = vst [vmem:[%s218 + $0x154] sm:$0xf] %v2881
        %3138 = vst [vmem:[%s218 + $0x158] sm:$0xf] %v2882
        %3139 = vst [vmem:[%s218 + $0x15c] sm:$0xf] %v2883
        %3140 = vst [vmem:[%s218 + $0x160] sm:$0xf] %v2884
        %3141 = vst [vmem:[%s218 + $0x164] sm:$0xf] %v2885
        %3142 = vst [vmem:[%s218 + $0x168] sm:$0xf] %v2886
        %3143 = vst [vmem:[%s218 + $0x16c] sm:$0xf] %v2887
        %3144 = vst [vmem:[%s218 + $0x170] sm:$0xf] %v2888
        %3145 = vst [vmem:[%s218 + $0x174] sm:$0xf] %v2889
        %3146 = vst [vmem:[%s218 + $0x178] sm:$0xf] %v2890
        %3147 = vst [vmem:[%s218 + $0x17c] sm:$0xf] %v2891
        %3148 = vst [vmem:[%s218 + $0x180] sm:$0xf] %v2892
        %3149 = vst [vmem:[%s218 + $0x184] sm:$0xf] %v2893
        %3150 = vst [vmem:[%s218 + $0x188] sm:$0xf] %v2894
        %3151 = vst [vmem:[%s218 + $0x18c] sm:$0xf] %v2895
        %3152 = vst [vmem:[%s218 + $0x190] sm:$0xf] %v2896
        %3153 = vst [vmem:[%s218 + $0x194] sm:$0xf] %v2897
        %3154 = vst [vmem:[%s218 + $0x198] sm:$0xf] %v2898
        %3155 = vst [vmem:[%s218 + $0x19c] sm:$0xf] %v2899
        %3156 = vst [vmem:[%s218 + $0x1a0] sm:$0xf] %v2900
        %3157 = vst [vmem:[%s218 + $0x1a4] sm:$0xf] %v2901
        %3158 = vst [vmem:[%s218 + $0x1a8] sm:$0xf] %v2902
        %3159 = vst [vmem:[%s218 + $0x1ac] sm:$0xf] %v2903
        %3160 = vst [vmem:[%s218 + $0x1b0] sm:$0xf] %v2904
        %3161 = vst [vmem:[%s218 + $0x1b4] sm:$0xf] %v2905
        %3162 = vst [vmem:[%s218 + $0x1b8] sm:$0xf] %v2906
        %3163 = vst [vmem:[%s218 + $0x1bc] sm:$0xf] %v2907
        %3164 = vst [vmem:[%s218 + $0x1c0] sm:$0xf] %v2908
        %3165 = vst [vmem:[%s218 + $0x1c4] sm:$0xf] %v2909
        %3166 = vst [vmem:[%s218 + $0x1c8] sm:$0xf] %v2910
        %3167 = vst [vmem:[%s218 + $0x1cc] sm:$0xf] %v2911
        %3168 = vst [vmem:[%s218 + $0x1d0] sm:$0xf] %v2912
        %3169 = vst [vmem:[%s218 + $0x1d4] sm:$0xf] %v2913
        %3170 = vst [vmem:[%s218 + $0x1d8] sm:$0xf] %v2914
        %3171 = vst [vmem:[%s218 + $0x1dc] sm:$0xf] %v2915
        %3172 = vst [vmem:[%s218 + $0x1e0] sm:$0xf] %v2916
        %3173 = vst [vmem:[%s218 + $0x1e4] sm:$0xf] %v2917
        %3174 = vst [vmem:[%s218 + $0x1e8] sm:$0xf] %v2918
        %3175 = vst [vmem:[%s218 + $0x1ec] sm:$0xf] %v2919
        %3176 = vst [vmem:[%s218 + $0x1f0] sm:$0xf] %v2920
        %3177 = vst [vmem:[%s218 + $0x1f4] sm:$0xf] %v2921
        %3178 = vst [vmem:[%s218 + $0x1f8] sm:$0xf] %v2922
        %3179 = vst [vmem:[%s218 + $0x1fc] sm:$0xf] %v2923
        %3180 = vst [vmem:[%s218 + $0x200] sm:$0xf] %v2924
        %3181 = vst [vmem:[%s218 + $0x204] sm:$0xf] %v2925
        %3182 = vst [vmem:[%s218 + $0x208] sm:$0xf] %v2926
        %3183 = vst [vmem:[%s218 + $0x20c] sm:$0xf] %v2927
        %3184 = vst [vmem:[%s218 + $0x210] sm:$0xf] %v2928
        %3185 = vst [vmem:[%s218 + $0x214] sm:$0xf] %v2929
        %3186 = vst [vmem:[%s218 + $0x218] sm:$0xf] %v2930
        %3187 = vst [vmem:[%s218 + $0x21c] sm:$0xf] %v2931
        %3188 = vst [vmem:[%s218 + $0x220] sm:$0xf] %v2932
        %3189 = vst [vmem:[%s218 + $0x224] sm:$0xf] %v2933
        %3190 = vst [vmem:[%s218 + $0x228] sm:$0xf] %v2934
        %3191 = vst [vmem:[%s218 + $0x22c] sm:$0xf] %v2935
        %3192 = vst [vmem:[%s218 + $0x230] sm:$0xf] %v2936
        %3193 = vst [vmem:[%s218 + $0x234] sm:$0xf] %v2937
        %3194 = vst [vmem:[%s218 + $0x238] sm:$0xf] %v2938
        %3195 = vst [vmem:[%s218 + $0x23c] sm:$0xf] %v2939
        %3196 = vst [vmem:[%s218 + $0x240] sm:$0xf] %v2940
        %3197 = vst [vmem:[%s218 + $0x244] sm:$0xf] %v2941
        %3198 = vst [vmem:[%s218 + $0x248] sm:$0xf] %v2942
        %3199 = vst [vmem:[%s218 + $0x24c] sm:$0xf] %v2943
        %3200 = vst [vmem:[%s218 + $0x250] sm:$0xf] %v2944
        %3201 = vst [vmem:[%s218 + $0x254] sm:$0xf] %v2945
        %3202 = vst [vmem:[%s218 + $0x258] sm:$0xf] %v2946
        %3203 = vst [vmem:[%s218 + $0x25c] sm:$0xf] %v2947
        %3204 = vst [vmem:[%s218 + $0x260] sm:$0xf] %v2948
        %3205 = vst [vmem:[%s218 + $0x264] sm:$0xf] %v2949
        %3206 = vst [vmem:[%s218 + $0x268] sm:$0xf] %v2950
        %3207 = vst [vmem:[%s218 + $0x26c] sm:$0xf] %v2951
        %3208 = vst [vmem:[%s218 + $0x270] sm:$0xf] %v2952
        %3209 = vst [vmem:[%s218 + $0x274] sm:$0xf] %v2953
        %3210 = vst [vmem:[%s218 + $0x278] sm:$0xf] %v2954
        %3211 = vst [vmem:[%s218 + $0x27c] sm:$0xf] %v2955
        %3212 = vst [vmem:[%s218 + $0x280] sm:$0xf] %v2956
        %3213 = vst [vmem:[%s218 + $0x284] sm:$0xf] %v2957
        %3214 = vst [vmem:[%s218 + $0x288] sm:$0xf] %v2958
        %3215 = vst [vmem:[%s218 + $0x28c] sm:$0xf] %v2959
        %3216 = vst [vmem:[%s218 + $0x290] sm:$0xf] %v2960
        %3217 = vst [vmem:[%s218 + $0x294] sm:$0xf] %v2961
        %3218 = vst [vmem:[%s218 + $0x298] sm:$0xf] %v2962
        %3219 = vst [vmem:[%s218 + $0x29c] sm:$0xf] %v2963
        %3220 = vst [vmem:[%s218 + $0x2a0] sm:$0xf] %v2964
        %3221 = vst [vmem:[%s218 + $0x2a4] sm:$0xf] %v2965
        %3222 = vst [vmem:[%s218 + $0x2a8] sm:$0xf] %v2966
        %3223 = vst [vmem:[%s218 + $0x2ac] sm:$0xf] %v2967
        %3224 = vst [vmem:[%s218 + $0x2b0] sm:$0xf] %v2968
        %3225 = vst [vmem:[%s218 + $0x2b4] sm:$0xf] %v2969
        %3226 = vst [vmem:[%s218 + $0x2b8] sm:$0xf] %v2970
        %3227 = vst [vmem:[%s218 + $0x2bc] sm:$0xf] %v2971
        %3228 = vst [vmem:[%s218 + $0x2c0] sm:$0xf] %v2972
        %3229 = vst [vmem:[%s218 + $0x2c4] sm:$0xf] %v2973
        %3230 = vst [vmem:[%s218 + $0x2c8] sm:$0xf] %v2974
        %3231 = vst [vmem:[%s218 + $0x2cc] sm:$0xf] %v2975
        %3232 = vst [vmem:[%s218 + $0x2d0] sm:$0xf] %v2976
        %3233 = vst [vmem:[%s218 + $0x2d4] sm:$0xf] %v2977
        %3234 = vst [vmem:[%s218 + $0x2d8] sm:$0xf] %v2978
        %3235 = vst [vmem:[%s218 + $0x2dc] sm:$0xf] %v2979
        %3236 = vst [vmem:[%s218 + $0x2e0] sm:$0xf] %v2980
        %3237 = vst [vmem:[%s218 + $0x2e4] sm:$0xf] %v2981
        %3238 = vst [vmem:[%s218 + $0x2e8] sm:$0xf] %v2982
        %3239 = vst [vmem:[%s218 + $0x2ec] sm:$0xf] %v2983
        %3240 = vst [vmem:[%s218 + $0x2f0] sm:$0xf] %v2984
        %3241 = vst [vmem:[%s218 + $0x2f4] sm:$0xf] %v2985
        %3242 = vst [vmem:[%s218 + $0x2f8] sm:$0xf] %v2986
        %3243 = vst [vmem:[%s218 + $0x2fc] sm:$0xf] %v2987
        %3244 = vst [vmem:[%s218 + $0x300] sm:$0xf] %v2988
        %3245 = vst [vmem:[%s218 + $0x304] sm:$0xf] %v2989
        %3246 = vst [vmem:[%s218 + $0x308] sm:$0xf] %v2990
        %3247 = vst [vmem:[%s218 + $0x30c] sm:$0xf] %v2991
        %3248 = vst [vmem:[%s218 + $0x310] sm:$0xf] %v2992
        %3249 = vst [vmem:[%s218 + $0x314] sm:$0xf] %v2993
        %3250 = vst [vmem:[%s218 + $0x318] sm:$0xf] %v2994
        %3251 = vst [vmem:[%s218 + $0x31c] sm:$0xf] %v2995
        %3252 = vst [vmem:[%s218 + $0x320] sm:$0xf] %v2996
        %3253 = vst [vmem:[%s218 + $0x324] sm:$0xf] %v2997
        %3254 = vst [vmem:[%s218 + $0x328] sm:$0xf] %v2998
        %3255 = vst [vmem:[%s218 + $0x32c] sm:$0xf] %v2999
        %3256 = vst [vmem:[%s218 + $0x330] sm:$0xf] %v3000
        %3257 = vst [vmem:[%s218 + $0x334] sm:$0xf] %v3001
        %3258 = vst [vmem:[%s218 + $0x338] sm:$0xf] %v3002
        %3259 = vst [vmem:[%s218 + $0x33c] sm:$0xf] %v3003
        %3260 = vst [vmem:[%s218 + $0x340] sm:$0xf] %v3004
        %3261 = vst [vmem:[%s218 + $0x344] sm:$0xf] %v3005
        %3262 = vst [vmem:[%s218 + $0x348] sm:$0xf] %v3006
        %3263 = vst [vmem:[%s218 + $0x34c] sm:$0xf] %v3007
        %3264 = vst [vmem:[%s218 + $0x350] sm:$0xf] %v3008
        %3265 = vst [vmem:[%s218 + $0x354] sm:$0xf] %v3009
        %3266 = vst [vmem:[%s218 + $0x358] sm:$0xf] %v3010
        %3267 = vst [vmem:[%s218 + $0x35c] sm:$0xf] %v3011
        %3268 = vst [vmem:[%s218 + $0x360] sm:$0xf] %v3012
        %3269 = vst [vmem:[%s218 + $0x364] sm:$0xf] %v3013
        %3270 = vst [vmem:[%s218 + $0x368] sm:$0xf] %v3014
        %3271 = vst [vmem:[%s218 + $0x36c] sm:$0xf] %v3015
        %3272 = vst [vmem:[%s218 + $0x370] sm:$0xf] %v3016
        %3273 = vst [vmem:[%s218 + $0x374] sm:$0xf] %v3017
        %3274 = vst [vmem:[%s218 + $0x378] sm:$0xf] %v3018
        %3275 = vst [vmem:[%s218 + $0x37c] sm:$0xf] %v3019
        %3276 = vst [vmem:[%s218 + $0x380] sm:$0xf] %v3020
        %3277 = vst [vmem:[%s218 + $0x384] sm:$0xf] %v3021
        %3278 = vst [vmem:[%s218 + $0x388] sm:$0xf] %v3022
        %3279 = vst [vmem:[%s218 + $0x38c] sm:$0xf] %v3023
        %3280 = vst [vmem:[%s218 + $0x390] sm:$0xf] %v3024
        %3281 = vst [vmem:[%s218 + $0x394] sm:$0xf] %v3025
        %3282 = vst [vmem:[%s218 + $0x398] sm:$0xf] %v3026
        %3283 = vst [vmem:[%s218 + $0x39c] sm:$0xf] %v3027
        %3284 = vst [vmem:[%s218 + $0x3a0] sm:$0xf] %v3028
        %3285 = vst [vmem:[%s218 + $0x3a4] sm:$0xf] %v3029
        %3286 = vst [vmem:[%s218 + $0x3a8] sm:$0xf] %v3030
        %3287 = vst [vmem:[%s218 + $0x3ac] sm:$0xf] %v3031
        %3288 = vst [vmem:[%s218 + $0x3b0] sm:$0xf] %v3032
        %3289 = vst [vmem:[%s218 + $0x3b4] sm:$0xf] %v3033
        %3290 = vst [vmem:[%s218 + $0x3b8] sm:$0xf] %v3034
        %3291 = vst [vmem:[%s218 + $0x3bc] sm:$0xf] %v3035
        %3292 = vst [vmem:[%s218 + $0x3c0] sm:$0xf] %v3036
        %3293 = vst [vmem:[%s218 + $0x3c4] sm:$0xf] %v3037
        %3294 = vst [vmem:[%s218 + $0x3c8] sm:$0xf] %v3038
        %3295 = vst [vmem:[%s218 + $0x3cc] sm:$0xf] %v3039
        %3296 = vst [vmem:[%s218 + $0x3d0] sm:$0xf] %v3040
        %3297 = vst [vmem:[%s218 + $0x3d4] sm:$0xf] %v3041
        %3298 = vst [vmem:[%s218 + $0x3d8] sm:$0xf] %v3042
        %3299 = vst [vmem:[%s218 + $0x3dc] sm:$0xf] %v3043
        %3300 = vst [vmem:[%s218 + $0x3e0] sm:$0xf] %v3044
        %3301 = vst [vmem:[%s218 + $0x3e4] sm:$0xf] %v3045
        %3302 = vst [vmem:[%s218 + $0x3e8] sm:$0xf] %v3046
        %3303 = vst [vmem:[%s218 + $0x3ec] sm:$0xf] %v3047
        %3304 = vst [vmem:[%s218 + $0x3f0] sm:$0xf] %v3048
        %3305 = vst [vmem:[%s218 + $0x3f4] sm:$0xf] %v3049
        %3306 = vst [vmem:[%s218 + $0x3f8] sm:$0xf] %v3050
        %3307 = vst [vmem:[%s218 + $0x3fc] sm:$0xf] %v3051
      $region40: #{generator_forward.8} parent=27 // pred_fallthru
        _
      %p3308 = scmp.lt.s32.totalorder %s18, 0
      %s3309 = scalar_select %p3308, %s18, 0
      %s3310 = smul.addr %s3309, 4
      %s3311 = scalar_lea.vmem %s2, %s3310
      // Predicated region
      $region41: #{generator_forward.8} parent=27 // pred_check
        %p3312 = pneg %p108
      $region42: #{generator_forward.8} parent=27 // pred_check_branch
        %3314 = sbr.rel (%p3312) target = $region44
      $region43: #{generator_forward.8} parent=27 // pred_region
        _
      $region44: #{generator_forward.8} parent=27 // pred_fallthru
        _
      // Predicated region
      $region45: #{generator_forward.8} parent=27 // pred_check
        %p3315 = pneg %p108
      $region46: #{generator_forward.8} parent=27 // pred_check_branch
        %3317 = sbr.rel (%p3315) target = $region48
      $region47: #{generator_forward.8} parent=27 // pred_region
        %p3318 = scmp.lt.s32.totalorder %s18, 0
        %s3319 = scalar_select %p3318, %s18, 0
        %s3320 = smul.addr %s3319, 4
        %s3321 = scalar_lea.vmem %s2, %s3320
      $region48: #{generator_forward.8} parent=27 // pred_fallthru
        _
    $region28: #{generator_forward.8} parent=5 // pred_fallthru
      _
    %p3322 = scmp.le.s32.totalorder 2, %s8
    // Predicated region
    $region49: #{generator_forward.8} parent=5 // pred_check
      %p3323 = pneg %p3322
    $region50: #{generator_forward.8} parent=5 // pred_check_branch
      %3325 = sbr.rel (%p3323) target = $region52
    $region51: #{generator_forward.8} parent=5 // pred_region
      %s3326 = ssub.s32 %s8, 2
    $region52: #{generator_forward.8} parent=5 // pred_fallthru
      _
  $region6: #{generator_forward.8} parent=0 // loop_footer
    %s12 = sadd.s32 1, %s8
  $region7: #{generator_forward.8} parent=0 // loop_footer_branch
    %7 = sbr.rel target = $region3
  $region8: #{generator_forward.8} parent=0 // loop_exit
    _

// kernel: generator_forward.9
$region0: #{generator_forward.9}
  #allocation0 [shape = 'u32[]', space=smem, size = 0x4, offset = 0x4, fixed_abs, tag = 'smem constant byte address 0x4 - core index']
  #allocation1 [shape = 'u32[72,128]{1,0:T(1,128)}', space=vmem, size = 0x9000, scoped, tag = 'internal scratch']
  %s0 = inlined_call_operand.vmem [shape: bf16[4,2048,64], index: 0, kind: input, shape index: {}]
  %s1 = inlined_call_operand.vmem [shape: bf16[4,64,128], index: 1, kind: input, shape index: {}]
  %s2 = inlined_call_operand.vmem [shape: bf16[4,2048,128], index: 2, kind: output, shape index: {}]
  %s3 = sld [smem:[#allocation0]]
  $region41: #{generator_forward.9} parent=0
    _
  %s5 = ssub.s32 1, %s3
  %s6 = scalar_select 0, %s5, %s3
  loop: start=0, step=1, limit=10
  $region2: #{generator_forward.9} parent=0 // loop_pre_header
    _
  $region3: #{generator_forward.9} parent=0 // loop_header
    %s8 = sphi 0, %s12
    %p9 = scmp.ge.s32.totalorder %s8, 10
    %s15 = sphi 0, %s27
    %s16 = sphi 0, %s23
    %s17 = sphi 0, %s15
    %s18 = sphi 0, %s16
    %s19 = sphi 0, %s17
    %s20 = sphi 0, %s18
    %s32 = sphi 0, %s34
    %s35 = sphi 0, %s32
    %s36 = sphi 0, %s35
    %s52 = sphi 0, %s36
    %s58 = sphi 0, %s60
    %s61 = sphi 0, %s58
    %s62 = sphi 0, %s61
    %s78 = sphi 0, %s62
    %s86 = sphi 0, %s88
    %s89 = sphi 0, %s86
    %s90 = sphi 0, %s89
    %s106 = sphi 0, %s90
  $region4: #{generator_forward.9} parent=0 // loop_header_branch
    %11 = sbr.rel (%p9) target = $region8
  $region5: #{generator_forward.9} parent=0 // loop_body
    %s13 = ssub.s32 %s8, 1
    %s14 = ssub.s32 %s8, 2
    %s21 = sadd.s32 1, %s16
    %p22 = scmp.ge.s32.totalorder %s21, 2
    %s23 = scalar_select %p22, 0, %s21
    %s24 = sadd.s32 1, %s15
    %s25 = scalar_select %p22, %s24, %s15
    %p26 = scmp.ge.s32.totalorder %s25, 4
    %s27 = scalar_select %p26, 0, %s25
    %s28 = ssub.s32 %s15, %s27
    %s29 = ssub.s32 %s16, %s23
    %s30 = sor.u32 %s28, %s29
    %p31 = scmp.eq.s32.totalorder %s30, 0
    %s33 = sadd.s32 %s32, 1
    %s34 = scalar_select %p31, %s32, %s33
    %p37 = pneg %p31
    %p38 = scmp.eq.s32.totalorder %s8, 7
    %p39 = por %p37, %p38
    %p40 = scmp.ne.s32.totalorder %s32, %s35
    %p41 = scmp.eq.s32.totalorder %s8, 0
    %p42 = por %p40, %p41
    %p43 = scmp.ne.s32.totalorder %s32, %s35
    %p44 = scmp.eq.s32.totalorder %s13, 7
    %p45 = por %p43, %p44
    %p46 = scmp.ne.s32.totalorder %s35, %s36
    %p47 = scmp.eq.s32.totalorder %s13, 0
    %p48 = por %p46, %p47
    %p49 = scmp.ne.s32.totalorder %s35, %s36
    %p50 = scmp.eq.s32.totalorder %s14, 7
    %p51 = por %p49, %p50
    %p53 = scmp.ne.s32.totalorder %s36, %s52
    %p54 = scmp.eq.s32.totalorder %s14, 0
    %p55 = por %p53, %p54
    %s56 = ssub.s32 %s15, %s27
    %p57 = scmp.eq.s32.totalorder %s56, 0
    %s59 = sadd.s32 %s58, 1
    %s60 = scalar_select %p57, %s58, %s59
    %p63 = pneg %p57
    %p64 = scmp.eq.s32.totalorder %s8, 7
    %p65 = por %p63, %p64
    %p66 = scmp.ne.s32.totalorder %s58, %s61
    %p67 = scmp.eq.s32.totalorder %s8, 0
    %p68 = por %p66, %p67
    %p69 = scmp.ne.s32.totalorder %s58, %s61
    %p70 = scmp.eq.s32.totalorder %s13, 7
    %p71 = por %p69, %p70
    %p72 = scmp.ne.s32.totalorder %s61, %s62
    %p73 = scmp.eq.s32.totalorder %s13, 0
    %p74 = por %p72, %p73
    %p75 = scmp.ne.s32.totalorder %s61, %s62
    %p76 = scmp.eq.s32.totalorder %s14, 7
    %p77 = por %p75, %p76
    %p79 = scmp.ne.s32.totalorder %s62, %s78
    %p80 = scmp.eq.s32.totalorder %s14, 0
    %p81 = por %p79, %p80
    %s82 = ssub.s32 %s15, %s27
    %s83 = ssub.s32 %s16, %s23
    %s84 = sor.u32 %s82, %s83
    %p85 = scmp.eq.s32.totalorder %s84, 0
    %s87 = sadd.s32 %s86, 1
    %s88 = scalar_select %p85, %s86, %s87
    %p91 = pneg %p85
    %p92 = scmp.eq.s32.totalorder %s8, 7
    %p93 = por %p91, %p92
    %p94 = scmp.ne.s32.totalorder %s86, %s89
    %p95 = scmp.eq.s32.totalorder %s8, 0
    %p96 = por %p94, %p95
    %p97 = scmp.ne.s32.totalorder %s86, %s89
    %p98 = scmp.eq.s32.totalorder %s13, 7
    %p99 = por %p97, %p98
    %p100 = scmp.ne.s32.totalorder %s89, %s90
    %p101 = scmp.eq.s32.totalorder %s13, 0
    %p102 = por %p100, %p101
    %p103 = scmp.ne.s32.totalorder %s89, %s90
    %p104 = scmp.eq.s32.totalorder %s14, 7
    %p105 = por %p103, %p104
    %p107 = scmp.ne.s32.totalorder %s90, %s106
    %p108 = scmp.eq.s32.totalorder %s14, 0
    %p109 = por %p107, %p108
    %p110 = scmp.le.s32.totalorder 1, %s8
    %p111 = scmp.lt.s32.totalorder %s8, 9
    %p112 = pnand %p110, %p111
    %p113 = pneg %p112
    // Predicated region
    $region9: #{generator_forward.9} parent=5 // pred_check
      _
    $region10: #{generator_forward.9} parent=5 // pred_check_branch
      %115 = sbr.rel (%p112) target = $region12
    $region11: #{generator_forward.9} parent=5 // pred_region
      %s116 = ssub.s32 %s8, 1
    $region12: #{generator_forward.9} parent=5 // pred_fallthru
      _
    %p117 = scmp.lt.s32.totalorder %s8, 8
    // Predicated region
    $region13: #{generator_forward.9} parent=5 // pred_check
      %p118 = pneg %p117
    $region14: #{generator_forward.9} parent=5 // pred_check_branch
      %120 = sbr.rel (%p118) target = $region16
    $region15: #{generator_forward.9} parent=5 // pred_region
      // Predicated region
      $region17: #{generator_forward.9} parent=15 // pred_check
        %p121 = pneg %p42
      $region18: #{generator_forward.9} parent=15 // pred_check_branch
        %123 = sbr.rel (%p121) target = $region20
      $region19: #{generator_forward.9} parent=15 // pred_region
        %s124 = smul.u32 128, %s16
        %p125 = scmp.lt.s32.totalorder %s15, 3
        %s126 = scalar_select %p125, %s15, 3
        %p127 = scmp.lt.s32.totalorder %s124, 255
        %s128 = scalar_select %p127, %s124, 255
        %s129 = smul.addr %s126, 256
        %s130 = sadd.s32 %s128, %s129
        %s131 = smul.addr %s130, 4
        %s132 = scalar_lea.vmem %s0, %s131
        %s133 = smul.u32 128, %s16
      $region20: #{generator_forward.9} parent=15 // pred_fallthru
        _
      // Predicated region
      $region21: #{generator_forward.9} parent=15 // pred_check
        %p134 = pneg %p68
      $region22: #{generator_forward.9} parent=15 // pred_check_branch
        %136 = sbr.rel (%p134) target = $region24
      $region23: #{generator_forward.9} parent=15 // pred_region
        %p137 = scmp.lt.s32.totalorder %s15, 3
        %s138 = scalar_select %p137, %s15, 3
        %s139 = smul.addr %s138, 8
        %s140 = smul.addr %s139, 4
        %s141 = scalar_lea.vmem %s1, %s140
      $region24: #{generator_forward.9} parent=15 // pred_fallthru
        _
    $region16: #{generator_forward.9} parent=5 // pred_fallthru
      _
    %p142 = scmp.le.s32.totalorder 1, %s8
    %p143 = scmp.lt.s32.totalorder %s8, 9
    %p144 = pnand %p142, %p143
    %p145 = pneg %p144
    // Predicated region
    $region25: #{generator_forward.9} parent=5 // pred_check
      _
    $region26: #{generator_forward.9} parent=5 // pred_check_branch
      %147 = sbr.rel (%p144) target = $region28
    $region27: #{generator_forward.9} parent=5 // pred_region
      %s148 = ssub.s32 %s8, 1
      %s149 = smul.u32 128, %s18
      %p150 = scmp.lt.s32.totalorder %s17, 3
      %s151 = scalar_select %p150, %s17, 3
      %p152 = scmp.lt.s32.totalorder %s149, 255
      %s153 = scalar_select %p152, %s149, 255
      %s154 = smul.addr %s151, 256
      %s155 = sadd.s32 %s153, %s154
      %s156 = smul.addr %s155, 4
      %s157 = scalar_lea.vmem %s0, %s156
      %p158 = pneg %p48
      %p159 = pneg %p45
      %p160 = scmp.lt.s32.totalorder %s17, 3
      %s161 = scalar_select %p160, %s17, 3
      %s162 = smul.addr %s161, 8
      %s163 = smul.addr %s162, 4
      %s164 = scalar_lea.vmem %s1, %s163
      %p165 = pneg %p74
      %p166 = pneg %p71
      %p167 = pneg %p102
      %p168 = pneg %p99
      %s169 = smul.u32 128, %s18
      %p170 = scmp.lt.s32.totalorder %s17, 3
      %s171 = scalar_select %p170, %s17, 3
      %p172 = scmp.lt.s32.totalorder %s169, 255
      %s173 = scalar_select %p172, %s169, 255
      %s174 = smul.addr %s171, 256
      %s175 = sadd.s32 %s173, %s174
      %s176 = smul.addr %s175, 4
      %s177 = scalar_lea.vmem %s2, %s176
      %s178 = smul.u32 128, %s18
      %p179 = scmp.lt.s32.totalorder %s17, 3
      %s180 = scalar_select %p179, %s17, 3
      %p181 = scmp.lt.s32.totalorder %s178, 255
      %s182 = scalar_select %p181, %s178, 255
      %s183 = smul.addr %s180, 256
      %s184 = sadd.s32 %s182, %s183
      %s185 = smul.addr %s184, 4
      %s186 = scalar_lea.vmem %s0, %s185
      %s187 = smul.u32 128, %s18
      %p188 = scmp.lt.s32.totalorder %s17, 3
      %s189 = scalar_select %p188, %s17, 3
      %s190 = smul.addr %s189, 8
      %s191 = smul.addr %s190, 4
      %s192 = scalar_lea.vmem %s1, %s191
      %s193 = smul.u32 128, %s18
      %p194 = scmp.lt.s32.totalorder %s17, 3
      %s195 = scalar_select %p194, %s17, 3
      %p196 = scmp.lt.s32.totalorder %s193, 255
      %s197 = scalar_select %p196, %s193, 255
      %s198 = smul.addr %s195, 256
      %s199 = sadd.s32 %s197, %s198
      %s200 = smul.addr %s199, 4
      %s201 = scalar_lea.vmem %s2, %s200
      %s202 = smul.u32 128, %s18
      %v204 = vld [vmem:[%s186] sm:$0xf]
      %v205 = vld [vmem:[%s186 + $0x4] sm:$0xf]
      %v206 = vld [vmem:[%s186 + $0x8] sm:$0xf]
      %v207 = vld [vmem:[%s186 + $0xc] sm:$0xf]
      %v208 = vld [vmem:[%s186 + $0x10] sm:$0xf]
      %v209 = vld [vmem:[%s186 + $0x14] sm:$0xf]
      %v210 = vld [vmem:[%s186 + $0x18] sm:$0xf]
      %v211 = vld [vmem:[%s186 + $0x1c] sm:$0xf]
      %v212 = vld [vmem:[%s186 + $0x20] sm:$0xf]
      %v213 = vld [vmem:[%s186 + $0x24] sm:$0xf]
      %v214 = vld [vmem:[%s186 + $0x28] sm:$0xf]
      %v215 = vld [vmem:[%s186 + $0x2c] sm:$0xf]
      %v216 = vld [vmem:[%s186 + $0x30] sm:$0xf]
      %v217 = vld [vmem:[%s186 + $0x34] sm:$0xf]
      %v218 = vld [vmem:[%s186 + $0x38] sm:$0xf]
      %v219 = vld [vmem:[%s186 + $0x3c] sm:$0xf]
      %v220 = vld [vmem:[%s186 + $0x40] sm:$0xf]
      %v221 = vld [vmem:[%s186 + $0x44] sm:$0xf]
      %v222 = vld [vmem:[%s186 + $0x48] sm:$0xf]
      %v223 = vld [vmem:[%s186 + $0x4c] sm:$0xf]
      %v224 = vld [vmem:[%s186 + $0x50] sm:$0xf]
      %v225 = vld [vmem:[%s186 + $0x54] sm:$0xf]
      %v226 = vld [vmem:[%s186 + $0x58] sm:$0xf]
      %v227 = vld [vmem:[%s186 + $0x5c] sm:$0xf]
      %v228 = vld [vmem:[%s186 + $0x60] sm:$0xf]
      %v229 = vld [vmem:[%s186 + $0x64] sm:$0xf]
      %v230 = vld [vmem:[%s186 + $0x68] sm:$0xf]
      %v231 = vld [vmem:[%s186 + $0x6c] sm:$0xf]
      %v232 = vld [vmem:[%s186 + $0x70] sm:$0xf]
      %v233 = vld [vmem:[%s186 + $0x74] sm:$0xf]
      %v234 = vld [vmem:[%s186 + $0x78] sm:$0xf]
      %v235 = vld [vmem:[%s186 + $0x7c] sm:$0xf]
      %v236 = vld [vmem:[%s186 + $0x80] sm:$0xf]
      %v237 = vld [vmem:[%s186 + $0x84] sm:$0xf]
      %v238 = vld [vmem:[%s186 + $0x88] sm:$0xf]
      %v239 = vld [vmem:[%s186 + $0x8c] sm:$0xf]
      %v240 = vld [vmem:[%s186 + $0x90] sm:$0xf]
      %v241 = vld [vmem:[%s186 + $0x94] sm:$0xf]
      %v242 = vld [vmem:[%s186 + $0x98] sm:$0xf]
      %v243 = vld [vmem:[%s186 + $0x9c] sm:$0xf]
      %v244 = vld [vmem:[%s186 + $0xa0] sm:$0xf]
      %v245 = vld [vmem:[%s186 + $0xa4] sm:$0xf]
      %v246 = vld [vmem:[%s186 + $0xa8] sm:$0xf]
      %v247 = vld [vmem:[%s186 + $0xac] sm:$0xf]
      %v248 = vld [vmem:[%s186 + $0xb0] sm:$0xf]
      %v249 = vld [vmem:[%s186 + $0xb4] sm:$0xf]
      %v250 = vld [vmem:[%s186 + $0xb8] sm:$0xf]
      %v251 = vld [vmem:[%s186 + $0xbc] sm:$0xf]
      %v252 = vld [vmem:[%s186 + $0xc0] sm:$0xf]
      %v253 = vld [vmem:[%s186 + $0xc4] sm:$0xf]
      %v254 = vld [vmem:[%s186 + $0xc8] sm:$0xf]
      %v255 = vld [vmem:[%s186 + $0xcc] sm:$0xf]
      %v256 = vld [vmem:[%s186 + $0xd0] sm:$0xf]
      %v257 = vld [vmem:[%s186 + $0xd4] sm:$0xf]
      %v258 = vld [vmem:[%s186 + $0xd8] sm:$0xf]
      %v259 = vld [vmem:[%s186 + $0xdc] sm:$0xf]
      %v260 = vld [vmem:[%s186 + $0xe0] sm:$0xf]
      %v261 = vld [vmem:[%s186 + $0xe4] sm:$0xf]
      %v262 = vld [vmem:[%s186 + $0xe8] sm:$0xf]
      %v263 = vld [vmem:[%s186 + $0xec] sm:$0xf]
      %v264 = vld [vmem:[%s186 + $0xf0] sm:$0xf]
      %v265 = vld [vmem:[%s186 + $0xf4] sm:$0xf]
      %v266 = vld [vmem:[%s186 + $0xf8] sm:$0xf]
      %v267 = vld [vmem:[%s186 + $0xfc] sm:$0xf]
      %v268 = vld [vmem:[%s186 + $0x100] sm:$0xf]
      %v269 = vld [vmem:[%s186 + $0x104] sm:$0xf]
      %v270 = vld [vmem:[%s186 + $0x108] sm:$0xf]
      %v271 = vld [vmem:[%s186 + $0x10c] sm:$0xf]
      %v272 = vld [vmem:[%s186 + $0x110] sm:$0xf]
      %v273 = vld [vmem:[%s186 + $0x114] sm:$0xf]
      %v274 = vld [vmem:[%s186 + $0x118] sm:$0xf]
      %v275 = vld [vmem:[%s186 + $0x11c] sm:$0xf]
      %v276 = vld [vmem:[%s186 + $0x120] sm:$0xf]
      %v277 = vld [vmem:[%s186 + $0x124] sm:$0xf]
      %v278 = vld [vmem:[%s186 + $0x128] sm:$0xf]
      %v279 = vld [vmem:[%s186 + $0x12c] sm:$0xf]
      %v280 = vld [vmem:[%s186 + $0x130] sm:$0xf]
      %v281 = vld [vmem:[%s186 + $0x134] sm:$0xf]
      %v282 = vld [vmem:[%s186 + $0x138] sm:$0xf]
      %v283 = vld [vmem:[%s186 + $0x13c] sm:$0xf]
      %v284 = vld [vmem:[%s186 + $0x140] sm:$0xf]
      %v285 = vld [vmem:[%s186 + $0x144] sm:$0xf]
      %v286 = vld [vmem:[%s186 + $0x148] sm:$0xf]
      %v287 = vld [vmem:[%s186 + $0x14c] sm:$0xf]
      %v288 = vld [vmem:[%s186 + $0x150] sm:$0xf]
      %v289 = vld [vmem:[%s186 + $0x154] sm:$0xf]
      %v290 = vld [vmem:[%s186 + $0x158] sm:$0xf]
      %v291 = vld [vmem:[%s186 + $0x15c] sm:$0xf]
      %v292 = vld [vmem:[%s186 + $0x160] sm:$0xf]
      %v293 = vld [vmem:[%s186 + $0x164] sm:$0xf]
      %v294 = vld [vmem:[%s186 + $0x168] sm:$0xf]
      %v295 = vld [vmem:[%s186 + $0x16c] sm:$0xf]
      %v296 = vld [vmem:[%s186 + $0x170] sm:$0xf]
      %v297 = vld [vmem:[%s186 + $0x174] sm:$0xf]
      %v298 = vld [vmem:[%s186 + $0x178] sm:$0xf]
      %v299 = vld [vmem:[%s186 + $0x17c] sm:$0xf]
      %v300 = vld [vmem:[%s186 + $0x180] sm:$0xf]
      %v301 = vld [vmem:[%s186 + $0x184] sm:$0xf]
      %v302 = vld [vmem:[%s186 + $0x188] sm:$0xf]
      %v303 = vld [vmem:[%s186 + $0x18c] sm:$0xf]
      %v304 = vld [vmem:[%s186 + $0x190] sm:$0xf]
      %v305 = vld [vmem:[%s186 + $0x194] sm:$0xf]
      %v306 = vld [vmem:[%s186 + $0x198] sm:$0xf]
      %v307 = vld [vmem:[%s186 + $0x19c] sm:$0xf]
      %v308 = vld [vmem:[%s186 + $0x1a0] sm:$0xf]
      %v309 = vld [vmem:[%s186 + $0x1a4] sm:$0xf]
      %v310 = vld [vmem:[%s186 + $0x1a8] sm:$0xf]
      %v311 = vld [vmem:[%s186 + $0x1ac] sm:$0xf]
      %v312 = vld [vmem:[%s186 + $0x1b0] sm:$0xf]
      %v313 = vld [vmem:[%s186 + $0x1b4] sm:$0xf]
      %v314 = vld [vmem:[%s186 + $0x1b8] sm:$0xf]
      %v315 = vld [vmem:[%s186 + $0x1bc] sm:$0xf]
      %v316 = vld [vmem:[%s186 + $0x1c0] sm:$0xf]
      %v317 = vld [vmem:[%s186 + $0x1c4] sm:$0xf]
      %v318 = vld [vmem:[%s186 + $0x1c8] sm:$0xf]
      %v319 = vld [vmem:[%s186 + $0x1cc] sm:$0xf]
      %v320 = vld [vmem:[%s186 + $0x1d0] sm:$0xf]
      %v321 = vld [vmem:[%s186 + $0x1d4] sm:$0xf]
      %v322 = vld [vmem:[%s186 + $0x1d8] sm:$0xf]
      %v323 = vld [vmem:[%s186 + $0x1dc] sm:$0xf]
      %v324 = vld [vmem:[%s186 + $0x1e0] sm:$0xf]
      %v325 = vld [vmem:[%s186 + $0x1e4] sm:$0xf]
      %v326 = vld [vmem:[%s186 + $0x1e8] sm:$0xf]
      %v327 = vld [vmem:[%s186 + $0x1ec] sm:$0xf]
      %v328 = vld [vmem:[%s186 + $0x1f0] sm:$0xf]
      %v329 = vld [vmem:[%s186 + $0x1f4] sm:$0xf]
      %v330 = vld [vmem:[%s186 + $0x1f8] sm:$0xf]
      %v331 = vld [vmem:[%s186 + $0x1fc] sm:$0xf]
      %v332 = vld [vmem:[%s192] sm:$0xf]
      %v333 = vld [vmem:[%s192 + $0x4] sm:$0xf]
      %v334 = vld [vmem:[%s192 + $0x8] sm:$0xf]
      %v335 = vld [vmem:[%s192 + $0xc] sm:$0xf]
      %v336 = vld [vmem:[%s192 + $0x10] sm:$0xf]
      %v337 = vld [vmem:[%s192 + $0x14] sm:$0xf]
      %v338 = vld [vmem:[%s192 + $0x18] sm:$0xf]
      %v339 = vld [vmem:[%s192 + $0x1c] sm:$0xf]
      %v468 = vunpack.c.l.b16 %v204
      %v469 = vunpack.c.l.b16 %v205
      %v470 = vunpack.c.l.b16 %v206
      %v471 = vunpack.c.l.b16 %v207
      %v472 = vunpack.c.l.b16 %v208
      %v473 = vunpack.c.l.b16 %v209
      %v474 = vunpack.c.l.b16 %v210
      %v475 = vunpack.c.l.b16 %v211
      %v476 = vunpack.c.l.b16 %v212
      %v477 = vunpack.c.l.b16 %v213
      %v478 = vunpack.c.l.b16 %v214
      %v479 = vunpack.c.l.b16 %v215
      %v480 = vunpack.c.l.b16 %v216
      %v481 = vunpack.c.l.b16 %v217
      %v482 = vunpack.c.l.b16 %v218
      %v483 = vunpack.c.l.b16 %v219
      %v484 = vunpack.c.l.b16 %v220
      %v485 = vunpack.c.l.b16 %v221
      %v486 = vunpack.c.l.b16 %v222
      %v487 = vunpack.c.l.b16 %v223
      %v488 = vunpack.c.l.b16 %v224
      %v489 = vunpack.c.l.b16 %v225
      %v490 = vunpack.c.l.b16 %v226
      %v491 = vunpack.c.l.b16 %v227
      %v492 = vunpack.c.l.b16 %v228
      %v493 = vunpack.c.l.b16 %v229
      %v494 = vunpack.c.l.b16 %v230
      %v495 = vunpack.c.l.b16 %v231
      %v496 = vunpack.c.l.b16 %v232
      %v497 = vunpack.c.l.b16 %v233
      %v498 = vunpack.c.l.b16 %v234
      %v499 = vunpack.c.l.b16 %v235
      %v500 = vunpack.c.l.b16 %v236
      %v501 = vunpack.c.l.b16 %v237
      %v502 = vunpack.c.l.b16 %v238
      %v503 = vunpack.c.l.b16 %v239
      %v504 = vunpack.c.l.b16 %v240
      %v505 = vunpack.c.l.b16 %v241
      %v506 = vunpack.c.l.b16 %v242
      %v507 = vunpack.c.l.b16 %v243
      %v508 = vunpack.c.l.b16 %v244
      %v509 = vunpack.c.l.b16 %v245
      %v510 = vunpack.c.l.b16 %v246
      %v511 = vunpack.c.l.b16 %v247
      %v512 = vunpack.c.l.b16 %v248
      %v513 = vunpack.c.l.b16 %v249
      %v514 = vunpack.c.l.b16 %v250
      %v515 = vunpack.c.l.b16 %v251
      %v516 = vunpack.c.l.b16 %v252
      %v517 = vunpack.c.l.b16 %v253
      %v518 = vunpack.c.l.b16 %v254
      %v519 = vunpack.c.l.b16 %v255
      %v520 = vunpack.c.l.b16 %v256
      %v521 = vunpack.c.l.b16 %v257
      %v522 = vunpack.c.l.b16 %v258
      %v523 = vunpack.c.l.b16 %v259
      %v524 = vunpack.c.l.b16 %v260
      %v525 = vunpack.c.l.b16 %v261
      %v526 = vunpack.c.l.b16 %v262
      %v527 = vunpack.c.l.b16 %v263
      %v528 = vunpack.c.l.b16 %v264
      %v529 = vunpack.c.l.b16 %v265
      %v530 = vunpack.c.l.b16 %v266
      %v531 = vunpack.c.l.b16 %v267
      %v532 = vunpack.c.l.b16 %v268
      %v533 = vunpack.c.l.b16 %v269
      %v534 = vunpack.c.l.b16 %v270
      %v535 = vunpack.c.l.b16 %v271
      %v536 = vunpack.c.l.b16 %v272
      %v537 = vunpack.c.l.b16 %v273
      %v538 = vunpack.c.l.b16 %v274
      %v539 = vunpack.c.l.b16 %v275
      %v540 = vunpack.c.l.b16 %v276
      %v541 = vunpack.c.l.b16 %v277
      %v542 = vunpack.c.l.b16 %v278
      %v543 = vunpack.c.l.b16 %v279
      %v544 = vunpack.c.l.b16 %v280
      %v545 = vunpack.c.l.b16 %v281
      %v546 = vunpack.c.l.b16 %v282
      %v547 = vunpack.c.l.b16 %v283
      %v548 = vunpack.c.l.b16 %v284
      %v549 = vunpack.c.l.b16 %v285
      %v550 = vunpack.c.l.b16 %v286
      %v551 = vunpack.c.l.b16 %v287
      %v552 = vunpack.c.l.b16 %v288
      %v553 = vunpack.c.l.b16 %v289
      %v554 = vunpack.c.l.b16 %v290
      %v555 = vunpack.c.l.b16 %v291
      %v556 = vunpack.c.l.b16 %v292
      %v557 = vunpack.c.l.b16 %v293
      %v558 = vunpack.c.l.b16 %v294
      %v559 = vunpack.c.l.b16 %v295
      %v560 = vunpack.c.l.b16 %v296
      %v561 = vunpack.c.l.b16 %v297
      %v562 = vunpack.c.l.b16 %v298
      %v563 = vunpack.c.l.b16 %v299
      %v564 = vunpack.c.l.b16 %v300
      %v565 = vunpack.c.l.b16 %v301
      %v566 = vunpack.c.l.b16 %v302
      %v567 = vunpack.c.l.b16 %v303
      %v568 = vunpack.c.l.b16 %v304
      %v569 = vunpack.c.l.b16 %v305
      %v570 = vunpack.c.l.b16 %v306
      %v571 = vunpack.c.l.b16 %v307
      %v572 = vunpack.c.l.b16 %v308
      %v573 = vunpack.c.l.b16 %v309
      %v574 = vunpack.c.l.b16 %v310
      %v575 = vunpack.c.l.b16 %v311
      %v576 = vunpack.c.l.b16 %v312
      %v577 = vunpack.c.l.b16 %v313
      %v578 = vunpack.c.l.b16 %v314
      %v579 = vunpack.c.l.b16 %v315
      %v580 = vunpack.c.l.b16 %v316
      %v581 = vunpack.c.l.b16 %v317
      %v582 = vunpack.c.l.b16 %v318
      %v583 = vunpack.c.l.b16 %v319
      %v584 = vunpack.c.l.b16 %v320
      %v585 = vunpack.c.l.b16 %v321
      %v586 = vunpack.c.l.b16 %v322
      %v587 = vunpack.c.l.b16 %v323
      %v588 = vunpack.c.l.b16 %v324
      %v589 = vunpack.c.l.b16 %v325
      %v590 = vunpack.c.l.b16 %v326
      %v591 = vunpack.c.l.b16 %v327
      %v592 = vunpack.c.l.b16 %v328
      %v593 = vunpack.c.l.b16 %v329
      %v594 = vunpack.c.l.b16 %v330
      %v595 = vunpack.c.l.b16 %v331
      %v596 = vpack.c.b16 %v469, %v468
      %v597 = vpack.c.b16 %v471, %v470
      %v598 = vpack.c.b16 %v473, %v472
      %v599 = vpack.c.b16 %v475, %v474
      %v600 = vpack.c.b16 %v477, %v476
      %v601 = vpack.c.b16 %v479, %v478
      %v602 = vpack.c.b16 %v481, %v480
      %v603 = vpack.c.b16 %v483, %v482
      %v604 = vpack.c.b16 %v485, %v484
      %v605 = vpack.c.b16 %v487, %v486
      %v606 = vpack.c.b16 %v489, %v488
      %v607 = vpack.c.b16 %v491, %v490
      %v608 = vpack.c.b16 %v493, %v492
      %v609 = vpack.c.b16 %v495, %v494
      %v610 = vpack.c.b16 %v497, %v496
      %v611 = vpack.c.b16 %v499, %v498
      %v612 = vpack.c.b16 %v501, %v500
      %v613 = vpack.c.b16 %v503, %v502
      %v614 = vpack.c.b16 %v505, %v504
      %v615 = vpack.c.b16 %v507, %v506
      %v616 = vpack.c.b16 %v509, %v508
      %v617 = vpack.c.b16 %v511, %v510
      %v618 = vpack.c.b16 %v513, %v512
      %v619 = vpack.c.b16 %v515, %v514
      %v620 = vpack.c.b16 %v517, %v516
      %v621 = vpack.c.b16 %v519, %v518
      %v622 = vpack.c.b16 %v521, %v520
      %v623 = vpack.c.b16 %v523, %v522
      %v624 = vpack.c.b16 %v525, %v524
      %v625 = vpack.c.b16 %v527, %v526
      %v626 = vpack.c.b16 %v529, %v528
      %v627 = vpack.c.b16 %v531, %v530
      %v628 = vpack.c.b16 %v533, %v532
      %v629 = vpack.c.b16 %v535, %v534
      %v630 = vpack.c.b16 %v537, %v536
      %v631 = vpack.c.b16 %v539, %v538
      %v632 = vpack.c.b16 %v541, %v540
      %v633 = vpack.c.b16 %v543, %v542
      %v634 = vpack.c.b16 %v545, %v544
      %v635 = vpack.c.b16 %v547, %v546
      %v636 = vpack.c.b16 %v549, %v548
      %v637 = vpack.c.b16 %v551, %v550
      %v638 = vpack.c.b16 %v553, %v552
      %v639 = vpack.c.b16 %v555, %v554
      %v640 = vpack.c.b16 %v557, %v556
      %v641 = vpack.c.b16 %v559, %v558
      %v642 = vpack.c.b16 %v561, %v560
      %v643 = vpack.c.b16 %v563, %v562
      %v644 = vpack.c.b16 %v565, %v564
      %v645 = vpack.c.b16 %v567, %v566
      %v646 = vpack.c.b16 %v569, %v568
      %v647 = vpack.c.b16 %v571, %v570
      %v648 = vpack.c.b16 %v573, %v572
      %v649 = vpack.c.b16 %v575, %v574
      %v650 = vpack.c.b16 %v577, %v576
      %v651 = vpack.c.b16 %v579, %v578
      %v652 = vpack.c.b16 %v581, %v580
      %v653 = vpack.c.b16 %v583, %v582
      %v654 = vpack.c.b16 %v585, %v584
      %v655 = vpack.c.b16 %v587, %v586
      %v656 = vpack.c.b16 %v589, %v588
      %v657 = vpack.c.b16 %v591, %v590
      %v658 = vpack.c.b16 %v593, %v592
      %v659 = vpack.c.b16 %v595, %v594
      %v668 = vunpack.c.l.b16 %v332
      %v669 = vunpack.c.l.b16 %v333
      %v670 = vunpack.c.l.b16 %v334
      %v671 = vunpack.c.l.b16 %v335
      %v672 = vunpack.c.l.b16 %v336
      %v673 = vunpack.c.l.b16 %v337
      %v674 = vunpack.c.l.b16 %v338
      %v675 = vunpack.c.l.b16 %v339
      %v676 = vpack.c.b16 %v669, %v668
      %v677 = vpack.c.b16 %v671, %v670
      %v678 = vpack.c.b16 %v673, %v672
      %v679 = vpack.c.b16 %v675, %v674
      %vm684 = vcmask 523264
      %v686 = vsel %vm684, %v596, 0
      %v689 = vsel %vm684, %v597, 0
      %v692 = vsel %vm684, %v598, 0
      %v695 = vsel %vm684, %v599, 0
      %v698 = vsel %vm684, %v600, 0
      %v701 = vsel %vm684, %v601, 0
      %v704 = vsel %vm684, %v602, 0
      %v707 = vsel %vm684, %v603, 0
      %v710 = vsel %vm684, %v604, 0
      %v713 = vsel %vm684, %v605, 0
      %v716 = vsel %vm684, %v606, 0
      %v719 = vsel %vm684, %v607, 0
      %v722 = vsel %vm684, %v608, 0
      %v725 = vsel %vm684, %v609, 0
      %v728 = vsel %vm684, %v610, 0
      %v731 = vsel %vm684, %v611, 0
      %v734 = vsel %vm684, %v612, 0
      %v737 = vsel %vm684, %v613, 0
      %v740 = vsel %vm684, %v614, 0
      %v743 = vsel %vm684, %v615, 0
      %v746 = vsel %vm684, %v616, 0
      %v749 = vsel %vm684, %v617, 0
      %v752 = vsel %vm684, %v618, 0
      %v755 = vsel %vm684, %v619, 0
      %v758 = vsel %vm684, %v620, 0
      %v761 = vsel %vm684, %v621, 0
      %v764 = vsel %vm684, %v622, 0
      %v767 = vsel %vm684, %v623, 0
      %v770 = vsel %vm684, %v624, 0
      %v773 = vsel %vm684, %v625, 0
      %v776 = vsel %vm684, %v626, 0
      %v779 = vsel %vm684, %v627, 0
      %v782 = vsel %vm684, %v628, 0
      %v785 = vsel %vm684, %v629, 0
      %v788 = vsel %vm684, %v630, 0
      %v791 = vsel %vm684, %v631, 0
      %v794 = vsel %vm684, %v632, 0
      %v797 = vsel %vm684, %v633, 0
      %v800 = vsel %vm684, %v634, 0
      %v803 = vsel %vm684, %v635, 0
      %v806 = vsel %vm684, %v636, 0
      %v809 = vsel %vm684, %v637, 0
      %v812 = vsel %vm684, %v638, 0
      %v815 = vsel %vm684, %v639, 0
      %v818 = vsel %vm684, %v640, 0
      %v821 = vsel %vm684, %v641, 0
      %v824 = vsel %vm684, %v642, 0
      %v827 = vsel %vm684, %v643, 0
      %v830 = vsel %vm684, %v644, 0
      %v833 = vsel %vm684, %v645, 0
      %v836 = vsel %vm684, %v646, 0
      %v839 = vsel %vm684, %v647, 0
      %v842 = vsel %vm684, %v648, 0
      %v845 = vsel %vm684, %v649, 0
      %v848 = vsel %vm684, %v650, 0
      %v851 = vsel %vm684, %v651, 0
      %v854 = vsel %vm684, %v652, 0
      %v857 = vsel %vm684, %v653, 0
      %v860 = vsel %vm684, %v654, 0
      %v863 = vsel %vm684, %v655, 0
      %v866 = vsel %vm684, %v656, 0
      %v869 = vsel %vm684, %v657, 0
      %v872 = vsel %vm684, %v658, 0
      %v875 = vsel %vm684, %v659, 0
      %877 = vmatpush.bf16.msra.mxu0 0
      %878 = vmatpush.bf16.msra.mxu0 0
      %879 = vmatpush.bf16.msra.mxu0 0
      %880 = vmatpush.bf16.msra.mxu0 0
      %881 = vmatpush.bf16.msra.mxu0 %v679
      %882 = vmatpush.bf16.msra.mxu0 %v678
      %883 = vmatpush.bf16.msra.mxu0 %v677
      %884 = vmatpush.bf16.msra.mxu0 %v676
      %885 = vmatmul.bf16.gmra.mxu0 %v686
      %v886 = vpop.f32.mrf.mxu0
      %v887 = vadd.f32 0.0, %v886
      %v888 = vpop.f32.mrf.mxu0
      %v889 = vadd.f32 0.0, %v888
      %890 = vmatmul.bf16.gmra.mxu0 %v689
      %v891 = vpop.f32.mrf.mxu0
      %v892 = vadd.f32 0.0, %v891
      %v893 = vpop.f32.mrf.mxu0
      %v894 = vadd.f32 0.0, %v893
      %895 = vmatmul.bf16.gmra.mxu0 %v692
      %v896 = vpop.f32.mrf.mxu0
      %v897 = vadd.f32 0.0, %v896
      %v898 = vpop.f32.mrf.mxu0
      %v899 = vadd.f32 0.0, %v898
      %900 = vmatmul.bf16.gmra.mxu0 %v695
      %v901 = vpop.f32.mrf.mxu0
      %v902 = vadd.f32 0.0, %v901
      %v903 = vpop.f32.mrf.mxu0
      %v904 = vadd.f32 0.0, %v903
      %905 = vmatmul.bf16.gmra.mxu0 %v698
      %v906 = vpop.f32.mrf.mxu0
      %v907 = vadd.f32 0.0, %v906
      %v908 = vpop.f32.mrf.mxu0
      %v909 = vadd.f32 0.0, %v908
      %910 = vmatmul.bf16.gmra.mxu0 %v701
      %v911 = vpop.f32.mrf.mxu0
      %v912 = vadd.f32 0.0, %v911
      %v913 = vpop.f32.mrf.mxu0
      %v914 = vadd.f32 0.0, %v913
      %915 = vmatmul.bf16.gmra.mxu0 %v704
      %v916 = vpop.f32.mrf.mxu0
      %v917 = vadd.f32 0.0, %v916
      %v918 = vpop.f32.mrf.mxu0
      %v919 = vadd.f32 0.0, %v918
      %920 = vmatmul.bf16.gmra.mxu0 %v707
      %v921 = vpop.f32.mrf.mxu0
      %v922 = vadd.f32 0.0, %v921
      %v923 = vpop.f32.mrf.mxu0
      %v924 = vadd.f32 0.0, %v923
      %925 = vmatmul.bf16.gmra.mxu0 %v710
      %v926 = vpop.f32.mrf.mxu0
      %v927 = vadd.f32 0.0, %v926
      %v928 = vpop.f32.mrf.mxu0
      %v929 = vadd.f32 0.0, %v928
      %930 = vmatmul.bf16.gmra.mxu0 %v713
      %v931 = vpop.f32.mrf.mxu0
      %v932 = vadd.f32 0.0, %v931
      %v933 = vpop.f32.mrf.mxu0
      %v934 = vadd.f32 0.0, %v933
      %935 = vmatmul.bf16.gmra.mxu0 %v716
      %v936 = vpop.f32.mrf.mxu0
      %v937 = vadd.f32 0.0, %v936
      %v938 = vpop.f32.mrf.mxu0
      %v939 = vadd.f32 0.0, %v938
      %940 = vmatmul.bf16.gmra.mxu0 %v719
      %v941 = vpop.f32.mrf.mxu0
      %v942 = vadd.f32 0.0, %v941
      %v943 = vpop.f32.mrf.mxu0
      %v944 = vadd.f32 0.0, %v943
      %945 = vmatmul.bf16.gmra.mxu0 %v722
      %v946 = vpop.f32.mrf.mxu0
      %v947 = vadd.f32 0.0, %v946
      %v948 = vpop.f32.mrf.mxu0
      %v949 = vadd.f32 0.0, %v948
      %950 = vmatmul.bf16.gmra.mxu0 %v725
      %v951 = vpop.f32.mrf.mxu0
      %v952 = vadd.f32 0.0, %v951
      %v953 = vpop.f32.mrf.mxu0
      %v954 = vadd.f32 0.0, %v953
      %955 = vmatmul.bf16.gmra.mxu0 %v728
      %v956 = vpop.f32.mrf.mxu0
      %v957 = vadd.f32 0.0, %v956
      %v958 = vpop.f32.mrf.mxu0
      %v959 = vadd.f32 0.0, %v958
      %960 = vmatmul.bf16.gmra.mxu0 %v731
      %v961 = vpop.f32.mrf.mxu0
      %v962 = vadd.f32 0.0, %v961
      %v963 = vpop.f32.mrf.mxu0
      %v964 = vadd.f32 0.0, %v963
      %965 = vmatmul.bf16.gmra.mxu0 %v734
      %v966 = vpop.f32.mrf.mxu0
      %v967 = vadd.f32 0.0, %v966
      %v968 = vpop.f32.mrf.mxu0
      %v969 = vadd.f32 0.0, %v968
      %970 = vmatmul.bf16.gmra.mxu0 %v737
      %v971 = vpop.f32.mrf.mxu0
      %v972 = vadd.f32 0.0, %v971
      %v973 = vpop.f32.mrf.mxu0
      %v974 = vadd.f32 0.0, %v973
      %975 = vmatmul.bf16.gmra.mxu0 %v740
      %v976 = vpop.f32.mrf.mxu0
      %v977 = vadd.f32 0.0, %v976
      %v978 = vpop.f32.mrf.mxu0
      %v979 = vadd.f32 0.0, %v978
      %980 = vmatmul.bf16.gmra.mxu0 %v743
      %v981 = vpop.f32.mrf.mxu0
      %v982 = vadd.f32 0.0, %v981
      %v983 = vpop.f32.mrf.mxu0
      %v984 = vadd.f32 0.0, %v983
      %985 = vmatmul.bf16.gmra.mxu0 %v746
      %v986 = vpop.f32.mrf.mxu0
      %v987 = vadd.f32 0.0, %v986
      %v988 = vpop.f32.mrf.mxu0
      %v989 = vadd.f32 0.0, %v988
      %990 = vmatmul.bf16.gmra.mxu0 %v749
      %v991 = vpop.f32.mrf.mxu0
      %v992 = vadd.f32 0.0, %v991
      %v993 = vpop.f32.mrf.mxu0
      %v994 = vadd.f32 0.0, %v993
      %995 = vmatmul.bf16.gmra.mxu0 %v752
      %v996 = vpop.f32.mrf.mxu0
      %v997 = vadd.f32 0.0, %v996
      %v998 = vpop.f32.mrf.mxu0
      %v999 = vadd.f32 0.0, %v998
      %1000 = vmatmul.bf16.gmra.mxu0 %v755
      %v1001 = vpop.f32.mrf.mxu0
      %v1002 = vadd.f32 0.0, %v1001
      %v1003 = vpop.f32.mrf.mxu0
      %v1004 = vadd.f32 0.0, %v1003
      %1005 = vmatmul.bf16.gmra.mxu0 %v758
      %v1006 = vpop.f32.mrf.mxu0
      %v1007 = vadd.f32 0.0, %v1006
      %v1008 = vpop.f32.mrf.mxu0
      %v1009 = vadd.f32 0.0, %v1008
      %1010 = vmatmul.bf16.gmra.mxu0 %v761
      %v1011 = vpop.f32.mrf.mxu0
      %v1012 = vadd.f32 0.0, %v1011
      %v1013 = vpop.f32.mrf.mxu0
      %v1014 = vadd.f32 0.0, %v1013
      %1015 = vmatmul.bf16.gmra.mxu0 %v764
      %v1016 = vpop.f32.mrf.mxu0
      %v1017 = vadd.f32 0.0, %v1016
      %v1018 = vpop.f32.mrf.mxu0
      %v1019 = vadd.f32 0.0, %v1018
      %1020 = vmatmul.bf16.gmra.mxu0 %v767
      %v1021 = vpop.f32.mrf.mxu0
      %v1022 = vadd.f32 0.0, %v1021
      %v1023 = vpop.f32.mrf.mxu0
      %v1024 = vadd.f32 0.0, %v1023
      %1025 = vmatmul.bf16.gmra.mxu0 %v770
      %v1026 = vpop.f32.mrf.mxu0
      %v1027 = vadd.f32 0.0, %v1026
      %v1028 = vpop.f32.mrf.mxu0
      %v1029 = vadd.f32 0.0, %v1028
      %1030 = vmatmul.bf16.gmra.mxu0 %v773
      %v1031 = vpop.f32.mrf.mxu0
      %v1032 = vadd.f32 0.0, %v1031
      %v1033 = vpop.f32.mrf.mxu0
      %v1034 = vadd.f32 0.0, %v1033
      %1035 = vmatmul.bf16.gmra.mxu0 %v776
      %v1036 = vpop.f32.mrf.mxu0
      %v1037 = vadd.f32 0.0, %v1036
      %v1038 = vpop.f32.mrf.mxu0
      %v1039 = vadd.f32 0.0, %v1038
      %1040 = vmatmul.bf16.gmra.mxu0 %v779
      %v1041 = vpop.f32.mrf.mxu0
      %v1042 = vadd.f32 0.0, %v1041
      %v1043 = vpop.f32.mrf.mxu0
      %v1044 = vadd.f32 0.0, %v1043
      %1045 = vmatmul.bf16.gmra.mxu0 %v782
      %v1046 = vpop.f32.mrf.mxu0
      %v1047 = vadd.f32 0.0, %v1046
      %v1048 = vpop.f32.mrf.mxu0
      %v1049 = vadd.f32 0.0, %v1048
      %1050 = vmatmul.bf16.gmra.mxu0 %v785
      %v1051 = vpop.f32.mrf.mxu0
      %v1052 = vadd.f32 0.0, %v1051
      %v1053 = vpop.f32.mrf.mxu0
      %v1054 = vadd.f32 0.0, %v1053
      %1055 = vmatmul.bf16.gmra.mxu0 %v788
      %v1056 = vpop.f32.mrf.mxu0
      %v1057 = vadd.f32 0.0, %v1056
      %v1058 = vpop.f32.mrf.mxu0
      %v1059 = vadd.f32 0.0, %v1058
      %1060 = vmatmul.bf16.gmra.mxu0 %v791
      %v1061 = vpop.f32.mrf.mxu0
      %v1062 = vadd.f32 0.0, %v1061
      %v1063 = vpop.f32.mrf.mxu0
      %v1064 = vadd.f32 0.0, %v1063
      %1065 = vmatmul.bf16.gmra.mxu0 %v794
      %v1066 = vpop.f32.mrf.mxu0
      %v1067 = vadd.f32 0.0, %v1066
      %v1068 = vpop.f32.mrf.mxu0
      %v1069 = vadd.f32 0.0, %v1068
      %1070 = vmatmul.bf16.gmra.mxu0 %v797
      %v1071 = vpop.f32.mrf.mxu0
      %v1072 = vadd.f32 0.0, %v1071
      %v1073 = vpop.f32.mrf.mxu0
      %v1074 = vadd.f32 0.0, %v1073
      %1075 = vmatmul.bf16.gmra.mxu0 %v800
      %v1076 = vpop.f32.mrf.mxu0
      %v1077 = vadd.f32 0.0, %v1076
      %v1078 = vpop.f32.mrf.mxu0
      %v1079 = vadd.f32 0.0, %v1078
      %1080 = vmatmul.bf16.gmra.mxu0 %v803
      %v1081 = vpop.f32.mrf.mxu0
      %v1082 = vadd.f32 0.0, %v1081
      %v1083 = vpop.f32.mrf.mxu0
      %v1084 = vadd.f32 0.0, %v1083
      %1085 = vmatmul.bf16.gmra.mxu0 %v806
      %v1086 = vpop.f32.mrf.mxu0
      %v1087 = vadd.f32 0.0, %v1086
      %v1088 = vpop.f32.mrf.mxu0
      %v1089 = vadd.f32 0.0, %v1088
      %1090 = vmatmul.bf16.gmra.mxu0 %v809
      %v1091 = vpop.f32.mrf.mxu0
      %v1092 = vadd.f32 0.0, %v1091
      %v1093 = vpop.f32.mrf.mxu0
      %v1094 = vadd.f32 0.0, %v1093
      %1095 = vmatmul.bf16.gmra.mxu0 %v812
      %v1096 = vpop.f32.mrf.mxu0
      %v1097 = vadd.f32 0.0, %v1096
      %v1098 = vpop.f32.mrf.mxu0
      %v1099 = vadd.f32 0.0, %v1098
      %1100 = vmatmul.bf16.gmra.mxu0 %v815
      %v1101 = vpop.f32.mrf.mxu0
      %v1102 = vadd.f32 0.0, %v1101
      %v1103 = vpop.f32.mrf.mxu0
      %v1104 = vadd.f32 0.0, %v1103
      %1105 = vmatmul.bf16.gmra.mxu0 %v818
      %v1106 = vpop.f32.mrf.mxu0
      %v1107 = vadd.f32 0.0, %v1106
      %v1108 = vpop.f32.mrf.mxu0
      %v1109 = vadd.f32 0.0, %v1108
      %1110 = vmatmul.bf16.gmra.mxu0 %v821
      %v1111 = vpop.f32.mrf.mxu0
      %v1112 = vadd.f32 0.0, %v1111
      %v1113 = vpop.f32.mrf.mxu0
      %v1114 = vadd.f32 0.0, %v1113
      %1115 = vmatmul.bf16.gmra.mxu0 %v824
      %v1116 = vpop.f32.mrf.mxu0
      %v1117 = vadd.f32 0.0, %v1116
      %v1118 = vpop.f32.mrf.mxu0
      %v1119 = vadd.f32 0.0, %v1118
      %1120 = vmatmul.bf16.gmra.mxu0 %v827
      %v1121 = vpop.f32.mrf.mxu0
      %v1122 = vadd.f32 0.0, %v1121
      %v1123 = vpop.f32.mrf.mxu0
      %v1124 = vadd.f32 0.0, %v1123
      %1125 = vmatmul.bf16.gmra.mxu0 %v830
      %v1126 = vpop.f32.mrf.mxu0
      %v1127 = vadd.f32 0.0, %v1126
      %v1128 = vpop.f32.mrf.mxu0
      %v1129 = vadd.f32 0.0, %v1128
      %1130 = vmatmul.bf16.gmra.mxu0 %v833
      %v1131 = vpop.f32.mrf.mxu0
      %v1132 = vadd.f32 0.0, %v1131
      %v1133 = vpop.f32.mrf.mxu0
      %v1134 = vadd.f32 0.0, %v1133
      %1135 = vmatmul.bf16.gmra.mxu0 %v836
      %v1136 = vpop.f32.mrf.mxu0
      %v1137 = vadd.f32 0.0, %v1136
      %v1138 = vpop.f32.mrf.mxu0
      %v1139 = vadd.f32 0.0, %v1138
      %1140 = vmatmul.bf16.gmra.mxu0 %v839
      %v1141 = vpop.f32.mrf.mxu0
      %v1142 = vadd.f32 0.0, %v1141
      %v1143 = vpop.f32.mrf.mxu0
      %v1144 = vadd.f32 0.0, %v1143
      %1145 = vmatmul.bf16.gmra.mxu0 %v842
      %v1146 = vpop.f32.mrf.mxu0
      %v1147 = vadd.f32 0.0, %v1146
      %v1148 = vpop.f32.mrf.mxu0
      %v1149 = vadd.f32 0.0, %v1148
      %1150 = vmatmul.bf16.gmra.mxu0 %v845
      %v1151 = vpop.f32.mrf.mxu0
      %v1152 = vadd.f32 0.0, %v1151
      %v1153 = vpop.f32.mrf.mxu0
      %v1154 = vadd.f32 0.0, %v1153
      %1155 = vmatmul.bf16.gmra.mxu0 %v848
      %v1156 = vpop.f32.mrf.mxu0
      %v1157 = vadd.f32 0.0, %v1156
      %v1158 = vpop.f32.mrf.mxu0
      %v1159 = vadd.f32 0.0, %v1158
      %1160 = vmatmul.bf16.gmra.mxu0 %v851
      %v1161 = vpop.f32.mrf.mxu0
      %v1162 = vadd.f32 0.0, %v1161
      %v1163 = vpop.f32.mrf.mxu0
      %v1164 = vadd.f32 0.0, %v1163
      %1165 = vmatmul.bf16.gmra.mxu0 %v854
      %v1166 = vpop.f32.mrf.mxu0
      %v1167 = vadd.f32 0.0, %v1166
      %v1168 = vpop.f32.mrf.mxu0
      %v1169 = vadd.f32 0.0, %v1168
      %1170 = vmatmul.bf16.gmra.mxu0 %v857
      %v1171 = vpop.f32.mrf.mxu0
      %v1172 = vadd.f32 0.0, %v1171
      %v1173 = vpop.f32.mrf.mxu0
      %v1174 = vadd.f32 0.0, %v1173
      %1175 = vmatmul.bf16.gmra.mxu0 %v860
      %v1176 = vpop.f32.mrf.mxu0
      %v1177 = vadd.f32 0.0, %v1176
      %v1178 = vpop.f32.mrf.mxu0
      %v1179 = vadd.f32 0.0, %v1178
      %1180 = vmatmul.bf16.gmra.mxu0 %v863
      %v1181 = vpop.f32.mrf.mxu0
      %v1182 = vadd.f32 0.0, %v1181
      %v1183 = vpop.f32.mrf.mxu0
      %v1184 = vadd.f32 0.0, %v1183
      %1185 = vmatmul.bf16.gmra.mxu0 %v866
      %v1186 = vpop.f32.mrf.mxu0
      %v1187 = vadd.f32 0.0, %v1186
      %v1188 = vpop.f32.mrf.mxu0
      %v1189 = vadd.f32 0.0, %v1188
      %1190 = vmatmul.bf16.gmra.mxu0 %v869
      %v1191 = vpop.f32.mrf.mxu0
      %v1192 = vadd.f32 0.0, %v1191
      %v1193 = vpop.f32.mrf.mxu0
      %v1194 = vadd.f32 0.0, %v1193
      %1195 = vmatmul.bf16.gmra.mxu0 %v872
      %v1196 = vpop.f32.mrf.mxu0
      %v1197 = vadd.f32 0.0, %v1196
      %v1198 = vpop.f32.mrf.mxu0
      %v1199 = vadd.f32 0.0, %v1198
      %1200 = vmatmul.bf16.gmra.mxu0 %v875
      %v1201 = vpop.f32.mrf.mxu0
      %v1202 = vadd.f32 0.0, %v1201
      %v1203 = vpop.f32.mrf.mxu0
      %v1204 = vadd.f32 0.0, %v1203
      %1205 = vdwg.mxu0
      %v1206 = vtanh.pop %v887
      %v1207 = vtanh.pop %v889
      %v1208 = vtanh.pop %v892
      %v1209 = vtanh.pop %v894
      %v1210 = vtanh.pop %v897
      %v1211 = vtanh.pop %v899
      %v1212 = vtanh.pop %v902
      %v1213 = vtanh.pop %v904
      %v1214 = vtanh.pop %v907
      %v1215 = vtanh.pop %v909
      %v1216 = vtanh.pop %v912
      %v1217 = vtanh.pop %v914
      %v1218 = vtanh.pop %v917
      %v1219 = vtanh.pop %v919
      %v1220 = vtanh.pop %v922
      %v1221 = vtanh.pop %v924
      %v1222 = vtanh.pop %v927
      %v1223 = vtanh.pop %v929
      %v1224 = vtanh.pop %v932
      %v1225 = vtanh.pop %v934
      %v1226 = vtanh.pop %v937
      %v1227 = vtanh.pop %v939
      %v1228 = vtanh.pop %v942
      %v1229 = vtanh.pop %v944
      %v1230 = vtanh.pop %v947
      %v1231 = vtanh.pop %v949
      %v1232 = vtanh.pop %v952
      %v1233 = vtanh.pop %v954
      %v1234 = vtanh.pop %v957
      %v1235 = vtanh.pop %v959
      %v1236 = vtanh.pop %v962
      %v1237 = vtanh.pop %v964
      %v1238 = vtanh.pop %v967
      %v1239 = vtanh.pop %v969
      %v1240 = vtanh.pop %v972
      %v1241 = vtanh.pop %v974
      %v1242 = vtanh.pop %v977
      %v1243 = vtanh.pop %v979
      %v1244 = vtanh.pop %v982
      %v1245 = vtanh.pop %v984
      %v1246 = vtanh.pop %v987
      %v1247 = vtanh.pop %v989
      %v1248 = vtanh.pop %v992
      %v1249 = vtanh.pop %v994
      %v1250 = vtanh.pop %v997
      %v1251 = vtanh.pop %v999
      %v1252 = vtanh.pop %v1002
      %v1253 = vtanh.pop %v1004
      %v1254 = vtanh.pop %v1007
      %v1255 = vtanh.pop %v1009
      %v1256 = vtanh.pop %v1012
      %v1257 = vtanh.pop %v1014
      %v1258 = vtanh.pop %v1017
      %v1259 = vtanh.pop %v1019
      %v1260 = vtanh.pop %v1022
      %v1261 = vtanh.pop %v1024
      %v1262 = vtanh.pop %v1027
      %v1263 = vtanh.pop %v1029
      %v1264 = vtanh.pop %v1032
      %v1265 = vtanh.pop %v1034
      %v1266 = vtanh.pop %v1037
      %v1267 = vtanh.pop %v1039
      %v1268 = vtanh.pop %v1042
      %v1269 = vtanh.pop %v1044
      %v1270 = vtanh.pop %v1047
      %v1271 = vtanh.pop %v1049
      %v1272 = vtanh.pop %v1052
      %v1273 = vtanh.pop %v1054
      %v1274 = vtanh.pop %v1057
      %v1275 = vtanh.pop %v1059
      %v1276 = vtanh.pop %v1062
      %v1277 = vtanh.pop %v1064
      %v1278 = vtanh.pop %v1067
      %v1279 = vtanh.pop %v1069
      %v1280 = vtanh.pop %v1072
      %v1281 = vtanh.pop %v1074
      %v1282 = vtanh.pop %v1077
      %v1283 = vtanh.pop %v1079
      %v1284 = vtanh.pop %v1082
      %v1285 = vtanh.pop %v1084
      %v1286 = vtanh.pop %v1087
      %v1287 = vtanh.pop %v1089
      %v1288 = vtanh.pop %v1092
      %v1289 = vtanh.pop %v1094
      %v1290 = vtanh.pop %v1097
      %v1291 = vtanh.pop %v1099
      %v1292 = vtanh.pop %v1102
      %v1293 = vtanh.pop %v1104
      %v1294 = vtanh.pop %v1107
      %v1295 = vtanh.pop %v1109
      %v1296 = vtanh.pop %v1112
      %v1297 = vtanh.pop %v1114
      %v1298 = vtanh.pop %v1117
      %v1299 = vtanh.pop %v1119
      %v1300 = vtanh.pop %v1122
      %v1301 = vtanh.pop %v1124
      %v1302 = vtanh.pop %v1127
      %v1303 = vtanh.pop %v1129
      %v1304 = vtanh.pop %v1132
      %v1305 = vtanh.pop %v1134
      %v1306 = vtanh.pop %v1137
      %v1307 = vtanh.pop %v1139
      %v1308 = vtanh.pop %v1142
      %v1309 = vtanh.pop %v1144
      %v1310 = vtanh.pop %v1147
      %v1311 = vtanh.pop %v1149
      %v1312 = vtanh.pop %v1152
      %v1313 = vtanh.pop %v1154
      %v1314 = vtanh.pop %v1157
      %v1315 = vtanh.pop %v1159
      %v1316 = vtanh.pop %v1162
      %v1317 = vtanh.pop %v1164
      %v1318 = vtanh.pop %v1167
      %v1319 = vtanh.pop %v1169
      %v1320 = vtanh.pop %v1172
      %v1321 = vtanh.pop %v1174
      %v1322 = vtanh.pop %v1177
      %v1323 = vtanh.pop %v1179
      %v1324 = vtanh.pop %v1182
      %v1325 = vtanh.pop %v1184
      %v1326 = vtanh.pop %v1187
      %v1327 = vtanh.pop %v1189
      %v1328 = vtanh.pop %v1192
      %v1329 = vtanh.pop %v1194
      %v1330 = vtanh.pop %v1197
      %v1331 = vtanh.pop %v1199
      %v1332 = vtanh.pop %v1202
      %v1333 = vtanh.pop %v1204
      %v1334 = vmul.f32 %v1206, 0.5
      %v1335 = vmul.f32 %v1207, 0.5
      %v1336 = vmul.f32 %v1208, 0.5
      %v1337 = vmul.f32 %v1209, 0.5
      %v1338 = vmul.f32 %v1210, 0.5
      %v1339 = vmul.f32 %v1211, 0.5
      %v1340 = vmul.f32 %v1212, 0.5
      %v1341 = vmul.f32 %v1213, 0.5
      %v1342 = vmul.f32 %v1214, 0.5
      %v1343 = vmul.f32 %v1215, 0.5
      %v1344 = vmul.f32 %v1216, 0.5
      %v1345 = vmul.f32 %v1217, 0.5
      %v1346 = vmul.f32 %v1218, 0.5
      %v1347 = vmul.f32 %v1219, 0.5
      %v1348 = vmul.f32 %v1220, 0.5
      %v1349 = vmul.f32 %v1221, 0.5
      %v1350 = vmul.f32 %v1222, 0.5
      %v1351 = vmul.f32 %v1223, 0.5
      %v1352 = vmul.f32 %v1224, 0.5
      %v1353 = vmul.f32 %v1225, 0.5
      %v1354 = vmul.f32 %v1226, 0.5
      %v1355 = vmul.f32 %v1227, 0.5
      %v1356 = vmul.f32 %v1228, 0.5
      %v1357 = vmul.f32 %v1229, 0.5
      %v1358 = vmul.f32 %v1230, 0.5
      %v1359 = vmul.f32 %v1231, 0.5
      %v1360 = vmul.f32 %v1232, 0.5
      %v1361 = vmul.f32 %v1233, 0.5
      %v1362 = vmul.f32 %v1234, 0.5
      %v1363 = vmul.f32 %v1235, 0.5
      %v1364 = vmul.f32 %v1236, 0.5
      %v1365 = vmul.f32 %v1237, 0.5
      %v1366 = vmul.f32 %v1238, 0.5
      %v1367 = vmul.f32 %v1239, 0.5
      %v1368 = vmul.f32 %v1240, 0.5
      %v1369 = vmul.f32 %v1241, 0.5
      %v1370 = vmul.f32 %v1242, 0.5
      %v1371 = vmul.f32 %v1243, 0.5
      %v1372 = vmul.f32 %v1244, 0.5
      %v1373 = vmul.f32 %v1245, 0.5
      %v1374 = vmul.f32 %v1246, 0.5
      %v1375 = vmul.f32 %v1247, 0.5
      %v1376 = vmul.f32 %v1248, 0.5
      %v1377 = vmul.f32 %v1249, 0.5
      %v1378 = vmul.f32 %v1250, 0.5
      %v1379 = vmul.f32 %v1251, 0.5
      %v1380 = vmul.f32 %v1252, 0.5
      %v1381 = vmul.f32 %v1253, 0.5
      %v1382 = vmul.f32 %v1254, 0.5
      %v1383 = vmul.f32 %v1255, 0.5
      %v1384 = vmul.f32 %v1256, 0.5
      %v1385 = vmul.f32 %v1257, 0.5
      %v1386 = vmul.f32 %v1258, 0.5
      %v1387 = vmul.f32 %v1259, 0.5
      %v1388 = vmul.f32 %v1260, 0.5
      %v1389 = vmul.f32 %v1261, 0.5
      %v1390 = vmul.f32 %v1262, 0.5
      %v1391 = vmul.f32 %v1263, 0.5
      %v1392 = vmul.f32 %v1264, 0.5
      %v1393 = vmul.f32 %v1265, 0.5
      %v1394 = vmul.f32 %v1266, 0.5
      %v1395 = vmul.f32 %v1267, 0.5
      %v1396 = vmul.f32 %v1268, 0.5
      %v1397 = vmul.f32 %v1269, 0.5
      %v1398 = vmul.f32 %v1270, 0.5
      %v1399 = vmul.f32 %v1271, 0.5
      %v1400 = vmul.f32 %v1272, 0.5
      %v1401 = vmul.f32 %v1273, 0.5
      %v1402 = vmul.f32 %v1274, 0.5
      %v1403 = vmul.f32 %v1275, 0.5
      %v1404 = vmul.f32 %v1276, 0.5
      %v1405 = vmul.f32 %v1277, 0.5
      %v1406 = vmul.f32 %v1278, 0.5
      %v1407 = vmul.f32 %v1279, 0.5
      %v1408 = vmul.f32 %v1280, 0.5
      %v1409 = vmul.f32 %v1281, 0.5
      %v1410 = vmul.f32 %v1282, 0.5
      %v1411 = vmul.f32 %v1283, 0.5
      %v1412 = vmul.f32 %v1284, 0.5
      %v1413 = vmul.f32 %v1285, 0.5
      %v1414 = vmul.f32 %v1286, 0.5
      %v1415 = vmul.f32 %v1287, 0.5
      %v1416 = vmul.f32 %v1288, 0.5
      %v1417 = vmul.f32 %v1289, 0.5
      %v1418 = vmul.f32 %v1290, 0.5
      %v1419 = vmul.f32 %v1291, 0.5
      %v1420 = vmul.f32 %v1292, 0.5
      %v1421 = vmul.f32 %v1293, 0.5
      %v1422 = vmul.f32 %v1294, 0.5
      %v1423 = vmul.f32 %v1295, 0.5
      %v1424 = vmul.f32 %v1296, 0.5
      %v1425 = vmul.f32 %v1297, 0.5
      %v1426 = vmul.f32 %v1298, 0.5
      %v1427 = vmul.f32 %v1299, 0.5
      %v1428 = vmul.f32 %v1300, 0.5
      %v1429 = vmul.f32 %v1301, 0.5
      %v1430 = vmul.f32 %v1302, 0.5
      %v1431 = vmul.f32 %v1303, 0.5
      %v1432 = vmul.f32 %v1304, 0.5
      %v1433 = vmul.f32 %v1305, 0.5
      %v1434 = vmul.f32 %v1306, 0.5
      %v1435 = vmul.f32 %v1307, 0.5
      %v1436 = vmul.f32 %v1308, 0.5
      %v1437 = vmul.f32 %v1309, 0.5
      %v1438 = vmul.f32 %v1310, 0.5
      %v1439 = vmul.f32 %v1311, 0.5
      %v1440 = vmul.f32 %v1312, 0.5
      %v1441 = vmul.f32 %v1313, 0.5
      %v1442 = vmul.f32 %v1314, 0.5
      %v1443 = vmul.f32 %v1315, 0.5
      %v1444 = vmul.f32 %v1316, 0.5
      %v1445 = vmul.f32 %v1317, 0.5
      %v1446 = vmul.f32 %v1318, 0.5
      %v1447 = vmul.f32 %v1319, 0.5
      %v1448 = vmul.f32 %v1320, 0.5
      %v1449 = vmul.f32 %v1321, 0.5
      %v1450 = vmul.f32 %v1322, 0.5
      %v1451 = vmul.f32 %v1323, 0.5
      %v1452 = vmul.f32 %v1324, 0.5
      %v1453 = vmul.f32 %v1325, 0.5
      %v1454 = vmul.f32 %v1326, 0.5
      %v1455 = vmul.f32 %v1327, 0.5
      %v1456 = vmul.f32 %v1328, 0.5
      %v1457 = vmul.f32 %v1329, 0.5
      %v1458 = vmul.f32 %v1330, 0.5
      %v1459 = vmul.f32 %v1331, 0.5
      %v1460 = vmul.f32 %v1332, 0.5
      %v1461 = vmul.f32 %v1333, 0.5
      %v1462 = vadd.f32 %v1334, 0.5
      %v1463 = vadd.f32 %v1335, 0.5
      %v1464 = vadd.f32 %v1336, 0.5
      %v1465 = vadd.f32 %v1337, 0.5
      %v1466 = vadd.f32 %v1338, 0.5
      %v1467 = vadd.f32 %v1339, 0.5
      %v1468 = vadd.f32 %v1340, 0.5
      %v1469 = vadd.f32 %v1341, 0.5
      %v1470 = vadd.f32 %v1342, 0.5
      %v1471 = vadd.f32 %v1343, 0.5
      %v1472 = vadd.f32 %v1344, 0.5
      %v1473 = vadd.f32 %v1345, 0.5
      %v1474 = vadd.f32 %v1346, 0.5
      %v1475 = vadd.f32 %v1347, 0.5
      %v1476 = vadd.f32 %v1348, 0.5
      %v1477 = vadd.f32 %v1349, 0.5
      %v1478 = vadd.f32 %v1350, 0.5
      %v1479 = vadd.f32 %v1351, 0.5
      %v1480 = vadd.f32 %v1352, 0.5
      %v1481 = vadd.f32 %v1353, 0.5
      %v1482 = vadd.f32 %v1354, 0.5
      %v1483 = vadd.f32 %v1355, 0.5
      %v1484 = vadd.f32 %v1356, 0.5
      %v1485 = vadd.f32 %v1357, 0.5
      %v1486 = vadd.f32 %v1358, 0.5
      %v1487 = vadd.f32 %v1359, 0.5
      %v1488 = vadd.f32 %v1360, 0.5
      %v1489 = vadd.f32 %v1361, 0.5
      %v1490 = vadd.f32 %v1362, 0.5
      %v1491 = vadd.f32 %v1363, 0.5
      %v1492 = vadd.f32 %v1364, 0.5
      %v1493 = vadd.f32 %v1365, 0.5
      %v1494 = vadd.f32 %v1366, 0.5
      %v1495 = vadd.f32 %v1367, 0.5
      %v1496 = vadd.f32 %v1368, 0.5
      %v1497 = vadd.f32 %v1369, 0.5
      %v1498 = vadd.f32 %v1370, 0.5
      %v1499 = vadd.f32 %v1371, 0.5
      %v1500 = vadd.f32 %v1372, 0.5
      %v1501 = vadd.f32 %v1373, 0.5
      %v1502 = vadd.f32 %v1374, 0.5
      %v1503 = vadd.f32 %v1375, 0.5
      %v1504 = vadd.f32 %v1376, 0.5
      %v1505 = vadd.f32 %v1377, 0.5
      %v1506 = vadd.f32 %v1378, 0.5
      %v1507 = vadd.f32 %v1379, 0.5
      %v1508 = vadd.f32 %v1380, 0.5
      %v1509 = vadd.f32 %v1381, 0.5
      %v1510 = vadd.f32 %v1382, 0.5
      %v1511 = vadd.f32 %v1383, 0.5
      %v1512 = vadd.f32 %v1384, 0.5
      %v1513 = vadd.f32 %v1385, 0.5
      %v1514 = vadd.f32 %v1386, 0.5
      %v1515 = vadd.f32 %v1387, 0.5
      %v1516 = vadd.f32 %v1388, 0.5
      %v1517 = vadd.f32 %v1389, 0.5
      %v1518 = vadd.f32 %v1390, 0.5
      %v1519 = vadd.f32 %v1391, 0.5
      %v1520 = vadd.f32 %v1392, 0.5
      %v1521 = vadd.f32 %v1393, 0.5
      %v1522 = vadd.f32 %v1394, 0.5
      %v1523 = vadd.f32 %v1395, 0.5
      %v1524 = vadd.f32 %v1396, 0.5
      %v1525 = vadd.f32 %v1397, 0.5
      %v1526 = vadd.f32 %v1398, 0.5
      %v1527 = vadd.f32 %v1399, 0.5
      %v1528 = vadd.f32 %v1400, 0.5
      %v1529 = vadd.f32 %v1401, 0.5
      %v1530 = vadd.f32 %v1402, 0.5
      %v1531 = vadd.f32 %v1403, 0.5
      %v1532 = vadd.f32 %v1404, 0.5
      %v1533 = vadd.f32 %v1405, 0.5
      %v1534 = vadd.f32 %v1406, 0.5
      %v1535 = vadd.f32 %v1407, 0.5
      %v1536 = vadd.f32 %v1408, 0.5
      %v1537 = vadd.f32 %v1409, 0.5
      %v1538 = vadd.f32 %v1410, 0.5
      %v1539 = vadd.f32 %v1411, 0.5
      %v1540 = vadd.f32 %v1412, 0.5
      %v1541 = vadd.f32 %v1413, 0.5
      %v1542 = vadd.f32 %v1414, 0.5
      %v1543 = vadd.f32 %v1415, 0.5
      %v1544 = vadd.f32 %v1416, 0.5
      %v1545 = vadd.f32 %v1417, 0.5
      %v1546 = vadd.f32 %v1418, 0.5
      %v1547 = vadd.f32 %v1419, 0.5
      %v1548 = vadd.f32 %v1420, 0.5
      %v1549 = vadd.f32 %v1421, 0.5
      %v1550 = vadd.f32 %v1422, 0.5
      %v1551 = vadd.f32 %v1423, 0.5
      %v1552 = vadd.f32 %v1424, 0.5
      %v1553 = vadd.f32 %v1425, 0.5
      %v1554 = vadd.f32 %v1426, 0.5
      %v1555 = vadd.f32 %v1427, 0.5
      %v1556 = vadd.f32 %v1428, 0.5
      %v1557 = vadd.f32 %v1429, 0.5
      %v1558 = vadd.f32 %v1430, 0.5
      %v1559 = vadd.f32 %v1431, 0.5
      %v1560 = vadd.f32 %v1432, 0.5
      %v1561 = vadd.f32 %v1433, 0.5
      %v1562 = vadd.f32 %v1434, 0.5
      %v1563 = vadd.f32 %v1435, 0.5
      %v1564 = vadd.f32 %v1436, 0.5
      %v1565 = vadd.f32 %v1437, 0.5
      %v1566 = vadd.f32 %v1438, 0.5
      %v1567 = vadd.f32 %v1439, 0.5
      %v1568 = vadd.f32 %v1440, 0.5
      %v1569 = vadd.f32 %v1441, 0.5
      %v1570 = vadd.f32 %v1442, 0.5
      %v1571 = vadd.f32 %v1443, 0.5
      %v1572 = vadd.f32 %v1444, 0.5
      %v1573 = vadd.f32 %v1445, 0.5
      %v1574 = vadd.f32 %v1446, 0.5
      %v1575 = vadd.f32 %v1447, 0.5
      %v1576 = vadd.f32 %v1448, 0.5
      %v1577 = vadd.f32 %v1449, 0.5
      %v1578 = vadd.f32 %v1450, 0.5
      %v1579 = vadd.f32 %v1451, 0.5
      %v1580 = vadd.f32 %v1452, 0.5
      %v1581 = vadd.f32 %v1453, 0.5
      %v1582 = vadd.f32 %v1454, 0.5
      %v1583 = vadd.f32 %v1455, 0.5
      %v1584 = vadd.f32 %v1456, 0.5
      %v1585 = vadd.f32 %v1457, 0.5
      %v1586 = vadd.f32 %v1458, 0.5
      %v1587 = vadd.f32 %v1459, 0.5
      %v1588 = vadd.f32 %v1460, 0.5
      %v1589 = vadd.f32 %v1461, 0.5
      %v1590 = vpack.c.bf16 %v1462, %v1462
      %v1591 = vpack.c.bf16 %v1463, %v1463
      %v1592 = vpack.c.bf16 %v1464, %v1464
      %v1593 = vpack.c.bf16 %v1465, %v1465
      %v1594 = vpack.c.bf16 %v1466, %v1466
      %v1595 = vpack.c.bf16 %v1467, %v1467
      %v1596 = vpack.c.bf16 %v1468, %v1468
      %v1597 = vpack.c.bf16 %v1469, %v1469
      %v1598 = vpack.c.bf16 %v1470, %v1470
      %v1599 = vpack.c.bf16 %v1471, %v1471
      %v1600 = vpack.c.bf16 %v1472, %v1472
      %v1601 = vpack.c.bf16 %v1473, %v1473
      %v1602 = vpack.c.bf16 %v1474, %v1474
      %v1603 = vpack.c.bf16 %v1475, %v1475
      %v1604 = vpack.c.bf16 %v1476, %v1476
      %v1605 = vpack.c.bf16 %v1477, %v1477
      %v1606 = vpack.c.bf16 %v1478, %v1478
      %v1607 = vpack.c.bf16 %v1479, %v1479
      %v1608 = vpack.c.bf16 %v1480, %v1480
      %v1609 = vpack.c.bf16 %v1481, %v1481
      %v1610 = vpack.c.bf16 %v1482, %v1482
      %v1611 = vpack.c.bf16 %v1483, %v1483
      %v1612 = vpack.c.bf16 %v1484, %v1484
      %v1613 = vpack.c.bf16 %v1485, %v1485
      %v1614 = vpack.c.bf16 %v1486, %v1486
      %v1615 = vpack.c.bf16 %v1487, %v1487
      %v1616 = vpack.c.bf16 %v1488, %v1488
      %v1617 = vpack.c.bf16 %v1489, %v1489
      %v1618 = vpack.c.bf16 %v1490, %v1490
      %v1619 = vpack.c.bf16 %v1491, %v1491
      %v1620 = vpack.c.bf16 %v1492, %v1492
      %v1621 = vpack.c.bf16 %v1493, %v1493
      %v1622 = vpack.c.bf16 %v1494, %v1494
      %v1623 = vpack.c.bf16 %v1495, %v1495
      %v1624 = vpack.c.bf16 %v1496, %v1496
      %v1625 = vpack.c.bf16 %v1497, %v1497
      %v1626 = vpack.c.bf16 %v1498, %v1498
      %v1627 = vpack.c.bf16 %v1499, %v1499
      %v1628 = vpack.c.bf16 %v1500, %v1500
      %v1629 = vpack.c.bf16 %v1501, %v1501
      %v1630 = vpack.c.bf16 %v1502, %v1502
      %v1631 = vpack.c.bf16 %v1503, %v1503
      %v1632 = vpack.c.bf16 %v1504, %v1504
      %v1633 = vpack.c.bf16 %v1505, %v1505
      %v1634 = vpack.c.bf16 %v1506, %v1506
      %v1635 = vpack.c.bf16 %v1507, %v1507
      %v1636 = vpack.c.bf16 %v1508, %v1508
      %v1637 = vpack.c.bf16 %v1509, %v1509
      %v1638 = vpack.c.bf16 %v1510, %v1510
      %v1639 = vpack.c.bf16 %v1511, %v1511
      %v1640 = vpack.c.bf16 %v1512, %v1512
      %v1641 = vpack.c.bf16 %v1513, %v1513
      %v1642 = vpack.c.bf16 %v1514, %v1514
      %v1643 = vpack.c.bf16 %v1515, %v1515
      %v1644 = vpack.c.bf16 %v1516, %v1516
      %v1645 = vpack.c.bf16 %v1517, %v1517
      %v1646 = vpack.c.bf16 %v1518, %v1518
      %v1647 = vpack.c.bf16 %v1519, %v1519
      %v1648 = vpack.c.bf16 %v1520, %v1520
      %v1649 = vpack.c.bf16 %v1521, %v1521
      %v1650 = vpack.c.bf16 %v1522, %v1522
      %v1651 = vpack.c.bf16 %v1523, %v1523
      %v1652 = vpack.c.bf16 %v1524, %v1524
      %v1653 = vpack.c.bf16 %v1525, %v1525
      %v1654 = vpack.c.bf16 %v1526, %v1526
      %v1655 = vpack.c.bf16 %v1527, %v1527
      %v1656 = vpack.c.bf16 %v1528, %v1528
      %v1657 = vpack.c.bf16 %v1529, %v1529
      %v1658 = vpack.c.bf16 %v1530, %v1530
      %v1659 = vpack.c.bf16 %v1531, %v1531
      %v1660 = vpack.c.bf16 %v1532, %v1532
      %v1661 = vpack.c.bf16 %v1533, %v1533
      %v1662 = vpack.c.bf16 %v1534, %v1534
      %v1663 = vpack.c.bf16 %v1535, %v1535
      %v1664 = vpack.c.bf16 %v1536, %v1536
      %v1665 = vpack.c.bf16 %v1537, %v1537
      %v1666 = vpack.c.bf16 %v1538, %v1538
      %v1667 = vpack.c.bf16 %v1539, %v1539
      %v1668 = vpack.c.bf16 %v1540, %v1540
      %v1669 = vpack.c.bf16 %v1541, %v1541
      %v1670 = vpack.c.bf16 %v1542, %v1542
      %v1671 = vpack.c.bf16 %v1543, %v1543
      %v1672 = vpack.c.bf16 %v1544, %v1544
      %v1673 = vpack.c.bf16 %v1545, %v1545
      %v1674 = vpack.c.bf16 %v1546, %v1546
      %v1675 = vpack.c.bf16 %v1547, %v1547
      %v1676 = vpack.c.bf16 %v1548, %v1548
      %v1677 = vpack.c.bf16 %v1549, %v1549
      %v1678 = vpack.c.bf16 %v1550, %v1550
      %v1679 = vpack.c.bf16 %v1551, %v1551
      %v1680 = vpack.c.bf16 %v1552, %v1552
      %v1681 = vpack.c.bf16 %v1553, %v1553
      %v1682 = vpack.c.bf16 %v1554, %v1554
      %v1683 = vpack.c.bf16 %v1555, %v1555
      %v1684 = vpack.c.bf16 %v1556, %v1556
      %v1685 = vpack.c.bf16 %v1557, %v1557
      %v1686 = vpack.c.bf16 %v1558, %v1558
      %v1687 = vpack.c.bf16 %v1559, %v1559
      %v1688 = vpack.c.bf16 %v1560, %v1560
      %v1689 = vpack.c.bf16 %v1561, %v1561
      %v1690 = vpack.c.bf16 %v1562, %v1562
      %v1691 = vpack.c.bf16 %v1563, %v1563
      %v1692 = vpack.c.bf16 %v1564, %v1564
      %v1693 = vpack.c.bf16 %v1565, %v1565
      %v1694 = vpack.c.bf16 %v1566, %v1566
      %v1695 = vpack.c.bf16 %v1567, %v1567
      %v1696 = vpack.c.bf16 %v1568, %v1568
      %v1697 = vpack.c.bf16 %v1569, %v1569
      %v1698 = vpack.c.bf16 %v1570, %v1570
      %v1699 = vpack.c.bf16 %v1571, %v1571
      %v1700 = vpack.c.bf16 %v1572, %v1572
      %v1701 = vpack.c.bf16 %v1573, %v1573
      %v1702 = vpack.c.bf16 %v1574, %v1574
      %v1703 = vpack.c.bf16 %v1575, %v1575
      %v1704 = vpack.c.bf16 %v1576, %v1576
      %v1705 = vpack.c.bf16 %v1577, %v1577
      %v1706 = vpack.c.bf16 %v1578, %v1578
      %v1707 = vpack.c.bf16 %v1579, %v1579
      %v1708 = vpack.c.bf16 %v1580, %v1580
      %v1709 = vpack.c.bf16 %v1581, %v1581
      %v1710 = vpack.c.bf16 %v1582, %v1582
      %v1711 = vpack.c.bf16 %v1583, %v1583
      %v1712 = vpack.c.bf16 %v1584, %v1584
      %v1713 = vpack.c.bf16 %v1585, %v1585
      %v1714 = vpack.c.bf16 %v1586, %v1586
      %v1715 = vpack.c.bf16 %v1587, %v1587
      %v1716 = vpack.c.bf16 %v1588, %v1588
      %v1717 = vpack.c.bf16 %v1589, %v1589
      %1718 = vst [vmem:[%s201] sm:$0xf] %v1590
      %1719 = vst [vmem:[%s201 + $0x4] sm:$0xf] %v1591
      %1720 = vst [vmem:[%s201 + $0x8] sm:$0xf] %v1592
      %1721 = vst [vmem:[%s201 + $0xc] sm:$0xf] %v1593
      %1722 = vst [vmem:[%s201 + $0x10] sm:$0xf] %v1594
      %1723 = vst [vmem:[%s201 + $0x14] sm:$0xf] %v1595
      %1724 = vst [vmem:[%s201 + $0x18] sm:$0xf] %v1596
      %1725 = vst [vmem:[%s201 + $0x1c] sm:$0xf] %v1597
      %1726 = vst [vmem:[%s201 + $0x20] sm:$0xf] %v1598
      %1727 = vst [vmem:[%s201 + $0x24] sm:$0xf] %v1599
      %1728 = vst [vmem:[%s201 + $0x28] sm:$0xf] %v1600
      %1729 = vst [vmem:[%s201 + $0x2c] sm:$0xf] %v1601
      %1730 = vst [vmem:[%s201 + $0x30] sm:$0xf] %v1602
      %1731 = vst [vmem:[%s201 + $0x34] sm:$0xf] %v1603
      %1732 = vst [vmem:[%s201 + $0x38] sm:$0xf] %v1604
      %1733 = vst [vmem:[%s201 + $0x3c] sm:$0xf] %v1605
      %1734 = vst [vmem:[%s201 + $0x40] sm:$0xf] %v1606
      %1735 = vst [vmem:[%s201 + $0x44] sm:$0xf] %v1607
      %1736 = vst [vmem:[%s201 + $0x48] sm:$0xf] %v1608
      %1737 = vst [vmem:[%s201 + $0x4c] sm:$0xf] %v1609
      %1738 = vst [vmem:[%s201 + $0x50] sm:$0xf] %v1610
      %1739 = vst [vmem:[%s201 + $0x54] sm:$0xf] %v1611
      %1740 = vst [vmem:[%s201 + $0x58] sm:$0xf] %v1612
      %1741 = vst [vmem:[%s201 + $0x5c] sm:$0xf] %v1613
      %1742 = vst [vmem:[%s201 + $0x60] sm:$0xf] %v1614
      %1743 = vst [vmem:[%s201 + $0x64] sm:$0xf] %v1615
      %1744 = vst [vmem:[%s201 + $0x68] sm:$0xf] %v1616
      %1745 = vst [vmem:[%s201 + $0x6c] sm:$0xf] %v1617
      %1746 = vst [vmem:[%s201 + $0x70] sm:$0xf] %v1618
      %1747 = vst [vmem:[%s201 + $0x74] sm:$0xf] %v1619
      %1748 = vst [vmem:[%s201 + $0x78] sm:$0xf] %v1620
      %1749 = vst [vmem:[%s201 + $0x7c] sm:$0xf] %v1621
      %1750 = vst [vmem:[%s201 + $0x80] sm:$0xf] %v1622
      %1751 = vst [vmem:[%s201 + $0x84] sm:$0xf] %v1623
      %1752 = vst [vmem:[%s201 + $0x88] sm:$0xf] %v1624
      %1753 = vst [vmem:[%s201 + $0x8c] sm:$0xf] %v1625
      %1754 = vst [vmem:[%s201 + $0x90] sm:$0xf] %v1626
      %1755 = vst [vmem:[%s201 + $0x94] sm:$0xf] %v1627
      %1756 = vst [vmem:[%s201 + $0x98] sm:$0xf] %v1628
      %1757 = vst [vmem:[%s201 + $0x9c] sm:$0xf] %v1629
      %1758 = vst [vmem:[%s201 + $0xa0] sm:$0xf] %v1630
      %1759 = vst [vmem:[%s201 + $0xa4] sm:$0xf] %v1631
      %1760 = vst [vmem:[%s201 + $0xa8] sm:$0xf] %v1632
      %1761 = vst [vmem:[%s201 + $0xac] sm:$0xf] %v1633
      %1762 = vst [vmem:[%s201 + $0xb0] sm:$0xf] %v1634
      %1763 = vst [vmem:[%s201 + $0xb4] sm:$0xf] %v1635
      %1764 = vst [vmem:[%s201 + $0xb8] sm:$0xf] %v1636
      %1765 = vst [vmem:[%s201 + $0xbc] sm:$0xf] %v1637
      %1766 = vst [vmem:[%s201 + $0xc0] sm:$0xf] %v1638
      %1767 = vst [vmem:[%s201 + $0xc4] sm:$0xf] %v1639
      %1768 = vst [vmem:[%s201 + $0xc8] sm:$0xf] %v1640
      %1769 = vst [vmem:[%s201 + $0xcc] sm:$0xf] %v1641
      %1770 = vst [vmem:[%s201 + $0xd0] sm:$0xf] %v1642
      %1771 = vst [vmem:[%s201 + $0xd4] sm:$0xf] %v1643
      %1772 = vst [vmem:[%s201 + $0xd8] sm:$0xf] %v1644
      %1773 = vst [vmem:[%s201 + $0xdc] sm:$0xf] %v1645
      %1774 = vst [vmem:[%s201 + $0xe0] sm:$0xf] %v1646
      %1775 = vst [vmem:[%s201 + $0xe4] sm:$0xf] %v1647
      %1776 = vst [vmem:[%s201 + $0xe8] sm:$0xf] %v1648
      %1777 = vst [vmem:[%s201 + $0xec] sm:$0xf] %v1649
      %1778 = vst [vmem:[%s201 + $0xf0] sm:$0xf] %v1650
      %1779 = vst [vmem:[%s201 + $0xf4] sm:$0xf] %v1651
      %1780 = vst [vmem:[%s201 + $0xf8] sm:$0xf] %v1652
      %1781 = vst [vmem:[%s201 + $0xfc] sm:$0xf] %v1653
      %1782 = vst [vmem:[%s201 + $0x100] sm:$0xf] %v1654
      %1783 = vst [vmem:[%s201 + $0x104] sm:$0xf] %v1655
      %1784 = vst [vmem:[%s201 + $0x108] sm:$0xf] %v1656
      %1785 = vst [vmem:[%s201 + $0x10c] sm:$0xf] %v1657
      %1786 = vst [vmem:[%s201 + $0x110] sm:$0xf] %v1658
      %1787 = vst [vmem:[%s201 + $0x114] sm:$0xf] %v1659
      %1788 = vst [vmem:[%s201 + $0x118] sm:$0xf] %v1660
      %1789 = vst [vmem:[%s201 + $0x11c] sm:$0xf] %v1661
      %1790 = vst [vmem:[%s201 + $0x120] sm:$0xf] %v1662
      %1791 = vst [vmem:[%s201 + $0x124] sm:$0xf] %v1663
      %1792 = vst [vmem:[%s201 + $0x128] sm:$0xf] %v1664
      %1793 = vst [vmem:[%s201 + $0x12c] sm:$0xf] %v1665
      %1794 = vst [vmem:[%s201 + $0x130] sm:$0xf] %v1666
      %1795 = vst [vmem:[%s201 + $0x134] sm:$0xf] %v1667
      %1796 = vst [vmem:[%s201 + $0x138] sm:$0xf] %v1668
      %1797 = vst [vmem:[%s201 + $0x13c] sm:$0xf] %v1669
      %1798 = vst [vmem:[%s201 + $0x140] sm:$0xf] %v1670
      %1799 = vst [vmem:[%s201 + $0x144] sm:$0xf] %v1671
      %1800 = vst [vmem:[%s201 + $0x148] sm:$0xf] %v1672
      %1801 = vst [vmem:[%s201 + $0x14c] sm:$0xf] %v1673
      %1802 = vst [vmem:[%s201 + $0x150] sm:$0xf] %v1674
      %1803 = vst [vmem:[%s201 + $0x154] sm:$0xf] %v1675
      %1804 = vst [vmem:[%s201 + $0x158] sm:$0xf] %v1676
      %1805 = vst [vmem:[%s201 + $0x15c] sm:$0xf] %v1677
      %1806 = vst [vmem:[%s201 + $0x160] sm:$0xf] %v1678
      %1807 = vst [vmem:[%s201 + $0x164] sm:$0xf] %v1679
      %1808 = vst [vmem:[%s201 + $0x168] sm:$0xf] %v1680
      %1809 = vst [vmem:[%s201 + $0x16c] sm:$0xf] %v1681
      %1810 = vst [vmem:[%s201 + $0x170] sm:$0xf] %v1682
      %1811 = vst [vmem:[%s201 + $0x174] sm:$0xf] %v1683
      %1812 = vst [vmem:[%s201 + $0x178] sm:$0xf] %v1684
      %1813 = vst [vmem:[%s201 + $0x17c] sm:$0xf] %v1685
      %1814 = vst [vmem:[%s201 + $0x180] sm:$0xf] %v1686
      %1815 = vst [vmem:[%s201 + $0x184] sm:$0xf] %v1687
      %1816 = vst [vmem:[%s201 + $0x188] sm:$0xf] %v1688
      %1817 = vst [vmem:[%s201 + $0x18c] sm:$0xf] %v1689
      %1818 = vst [vmem:[%s201 + $0x190] sm:$0xf] %v1690
      %1819 = vst [vmem:[%s201 + $0x194] sm:$0xf] %v1691
      %1820 = vst [vmem:[%s201 + $0x198] sm:$0xf] %v1692
      %1821 = vst [vmem:[%s201 + $0x19c] sm:$0xf] %v1693
      %1822 = vst [vmem:[%s201 + $0x1a0] sm:$0xf] %v1694
      %1823 = vst [vmem:[%s201 + $0x1a4] sm:$0xf] %v1695
      %1824 = vst [vmem:[%s201 + $0x1a8] sm:$0xf] %v1696
      %1825 = vst [vmem:[%s201 + $0x1ac] sm:$0xf] %v1697
      %1826 = vst [vmem:[%s201 + $0x1b0] sm:$0xf] %v1698
      %1827 = vst [vmem:[%s201 + $0x1b4] sm:$0xf] %v1699
      %1828 = vst [vmem:[%s201 + $0x1b8] sm:$0xf] %v1700
      %1829 = vst [vmem:[%s201 + $0x1bc] sm:$0xf] %v1701
      %1830 = vst [vmem:[%s201 + $0x1c0] sm:$0xf] %v1702
      %1831 = vst [vmem:[%s201 + $0x1c4] sm:$0xf] %v1703
      %1832 = vst [vmem:[%s201 + $0x1c8] sm:$0xf] %v1704
      %1833 = vst [vmem:[%s201 + $0x1cc] sm:$0xf] %v1705
      %1834 = vst [vmem:[%s201 + $0x1d0] sm:$0xf] %v1706
      %1835 = vst [vmem:[%s201 + $0x1d4] sm:$0xf] %v1707
      %1836 = vst [vmem:[%s201 + $0x1d8] sm:$0xf] %v1708
      %1837 = vst [vmem:[%s201 + $0x1dc] sm:$0xf] %v1709
      %1838 = vst [vmem:[%s201 + $0x1e0] sm:$0xf] %v1710
      %1839 = vst [vmem:[%s201 + $0x1e4] sm:$0xf] %v1711
      %1840 = vst [vmem:[%s201 + $0x1e8] sm:$0xf] %v1712
      %1841 = vst [vmem:[%s201 + $0x1ec] sm:$0xf] %v1713
      %1842 = vst [vmem:[%s201 + $0x1f0] sm:$0xf] %v1714
      %1843 = vst [vmem:[%s201 + $0x1f4] sm:$0xf] %v1715
      %1844 = vst [vmem:[%s201 + $0x1f8] sm:$0xf] %v1716
      %1845 = vst [vmem:[%s201 + $0x1fc] sm:$0xf] %v1717
      %s1846 = smul.u32 128, %s18
      %p1847 = scmp.lt.s32.totalorder %s17, 3
      %s1848 = scalar_select %p1847, %s17, 3
      %p1849 = scmp.lt.s32.totalorder %s1846, 255
      %s1850 = scalar_select %p1849, %s1846, 255
      %s1851 = smul.addr %s1848, 256
      %s1852 = sadd.s32 %s1850, %s1851
      %s1853 = smul.addr %s1852, 4
      %s1854 = scalar_lea.vmem %s2, %s1853
      // Predicated region
      $region29: #{generator_forward.9} parent=27 // pred_check
        %p1855 = pneg %p99
      $region30: #{generator_forward.9} parent=27 // pred_check_branch
        %1857 = sbr.rel (%p1855) target = $region32
      $region31: #{generator_forward.9} parent=27 // pred_region
        %s1858 = smul.u32 128, %s18
      $region32: #{generator_forward.9} parent=27 // pred_fallthru
        _
    $region28: #{generator_forward.9} parent=5 // pred_fallthru
      _
    %p1859 = scmp.le.s32.totalorder 2, %s8
    // Predicated region
    $region33: #{generator_forward.9} parent=5 // pred_check
      %p1860 = pneg %p1859
    $region34: #{generator_forward.9} parent=5 // pred_check_branch
      %1862 = sbr.rel (%p1860) target = $region36
    $region35: #{generator_forward.9} parent=5 // pred_region
      %s1863 = ssub.s32 %s8, 2
      // Predicated region
      $region37: #{generator_forward.9} parent=35 // pred_check
        %p1864 = pneg %p105
      $region38: #{generator_forward.9} parent=35 // pred_check_branch
        %1866 = sbr.rel (%p1864) target = $region40
      $region39: #{generator_forward.9} parent=35 // pred_region
        %s1867 = smul.u32 128, %s20
        %p1868 = scmp.lt.s32.totalorder %s19, 3
        %s1869 = scalar_select %p1868, %s19, 3
        %p1870 = scmp.lt.s32.totalorder %s1867, 255
        %s1871 = scalar_select %p1870, %s1867, 255
        %s1872 = smul.addr %s1869, 256
        %s1873 = sadd.s32 %s1871, %s1872
        %s1874 = smul.addr %s1873, 4
        %s1875 = scalar_lea.vmem %s2, %s1874
      $region40: #{generator_forward.9} parent=35 // pred_fallthru
        _
    $region36: #{generator_forward.9} parent=5 // pred_fallthru
      _
  $region6: #{generator_forward.9} parent=0 // loop_footer
    %s12 = sadd.s32 1, %s8
  $region7: #{generator_forward.9} parent=0 // loop_footer_branch
    %7 = sbr.rel target = $region3
  $region8: #{generator_forward.9} parent=0 // loop_exit
    _

</llo_original>
